<compile_context>
chip_gen: v7x
topology: tpu7x:2x2x1
jax: 0.10.0
libtpu: 0.0.40
codegen_flags: <defaults>
</compile_context>

<pallas_src>
import functools
import math

import numpy as np
import jax
import jax.numpy as jnp
from jax.experimental import pallas as pl
from jax.experimental.pallas import tpu as pltpu


# ----------------------------------------------------------------------------
# Pass 1: node features.  One grid step == one (batch, target tile).
# ----------------------------------------------------------------------------
def _node_kernel(h_ref, x_t_ref, nm_t_ref, q_t_ref, kv_ref, de_ref, am_ref,
                 la_ref, te_ref, tew_ref,
                 gin_w_ref, gin_b_ref, we01_ref,
                 ffw1_ref, ffb1_ref, ffw2_ref, ffb2_ref,
                 gng_ref, gnb_ref, mg_ref, mgt_ref, mh_ref, mht_ref,
                 hnode_ref, hsum_ref, *, num_heads, tile_n):
  f32, bf16 = jnp.float32, jnp.bfloat16
  TN = tile_n
  t = pl.program_id(1)
  row0 = pl.multiple_of(t * TN, TN)

  h = h_ref[0]                              # [N, D]   conditioned nodes (src)
  h_t = h_ref[0, pl.ds(row0, TN), :]        # [TN, D]  conditioned nodes (tgt)
  x_t = x_t_ref[0]                          # [TN, D]  original feats (residual)
  nm_t = nm_t_ref[0]                        # [TN, 1]  node mask (targets)
  q_t = q_t_ref[0]                          # [TN, D]  hoisted h @ wq (f32)
  kv = kv_ref[0]                            # [N, 2D]  hoisted h @ [wk|wv] (f32)
  de = de_ref[0]                            # [N, TN, D] bf16 edge tile (src,tgt)
  am = am_ref[0, 0].astype(f32)             # [N, TN]  adjacency mask
  la = la_ref[0, 0].astype(f32)             # [N, TN]  local-edge mask
  te = te_ref[0]                            # [1, D]   t_edge(act(temb))
  tew = tew_ref[0]                          # [1, 2D]  te @ [we0|we1]

  N, _, D = de.shape
  H = num_heads
  C = D // H
  G = mg_ref.shape[1]
  inv_cg = 1.0 / float(D // G)
  eps = 1e-6

  def dot32(a, b):
    return jnp.dot(a, b, preferred_element_type=f32)

  def group_norm_rows(v, gamma, beta):
    # torch GroupNorm on [M, D] rows; two-pass (x - mean)^2 variance, f32 stats.
    mean_c = dot32(dot32(v, mg_ref[...]) * inv_cg, mgt_ref[...])
    d = v - mean_c
    var_c = dot32(dot32(d * d, mg_ref[...]) * inv_cg, mgt_ref[...])
    return d * jax.lax.rsqrt(var_c + eps) * gamma + beta

  # ---- local GINE conv (dense over the local edge mask, eps = 0) ----------
  # f32 conditioned-edge slab is built only for this path (attention reads the
  # bf16 block directly below).
  he_g = (de.astype(f32) + te[None, :, :]) * am[:, :, None]      # [N, TN, D]
  msg = jnp.maximum(h[:, None, :] + he_g, 0.0) * la[:, :, None]  # [src, tgt, D]
  aggr = jnp.sum(msg, axis=0)                                    # [TN, D]
  gw = gin_w_ref[...]
  z = jnp.maximum(dot32((aggr + h_t).astype(bf16), gw[0]) + gin_b_ref[0:1, :],
                  0.0)
  hloc = dot32(z.astype(bf16), gw[1]) + gin_b_ref[1:2, :]
  hloc = x_t + hloc * nm_t
  hloc = group_norm_rows(hloc, gng_ref[0:1, :], gnb_ref[0:1, :])

  # ---- global edge-gated multi-head attention (full-lane formulation) ------
  # ee = ((de + te) * am) @ [we0|we1] == am_row * (de @ W + te @ W); the row
  # mask is dropped entirely because the softmax is masked explicitly (scores
  # forced to -inf and alpha *= am), so masked e0/e1 values never contribute.
  k = kv[:, :D]
  v = kv[:, D:]
  ee = (dot32(de.reshape(N * TN, D), we01_ref[...]) + tew).reshape(N, TN, 2 * D)
  e0 = ee[:, :, :D]
  e1 = jax.nn.sigmoid(ee[:, :, D:])

  # full-D-lane elementwise work; head reduction / broadcast via one-hot matmuls
  prod = e0 * k[:, None, :] * q_t[None, :, :]                    # [N, TN, D]
  sc = dot32(prod.reshape(N * TN, D), mh_ref[...]).reshape(N, TN, H)
  am3 = am[:, :, None]
  sc = jnp.where(am3 > 0.0, sc * (1.0 / math.sqrt(C)), -1e30)
  smax = jnp.max(sc, axis=0, keepdims=True)                      # [1, TN, H]
  pnum = jnp.exp(sc - smax) * am3
  den = jnp.sum(pnum, axis=0, keepdims=True)
  alpha = pnum * pl.reciprocal(jnp.maximum(den, 1e-30), approx=True)
  alpha_d = dot32(alpha.reshape(N * TN, H), mht_ref[...]).reshape(N, TN, D)
  out = jnp.sum(alpha_d * e1 * v[:, None, :], axis=0)            # [TN, D]
  hattn = x_t + out
  hattn = group_norm_rows(hattn, gng_ref[1:2, :], gnb_ref[1:2, :])

  # ---- combine, node FFN, final node GroupNorm -----------------------------
  hsum = (hloc + hattn) * nm_t
  zf = jnp.maximum(dot32(hsum.astype(bf16), ffw1_ref[...]) + ffb1_ref[...], 0.0)
  ffn = dot32(zf.astype(bf16), ffw2_ref[...]) + ffb2_ref[...]
  hnode = group_norm_rows(hsum + ffn, gng_ref[2:3, :], gnb_ref[2:3, :]) * nm_t
  hnode_ref[0] = hnode.astype(hnode_ref.dtype)
  hsum_ref[0] = hsum.astype(hsum_ref.dtype)


# ----------------------------------------------------------------------------
# Pass 2: edge features.  grid = (B, 2, T): phase 0 = global GroupNorm stats,
# phase 1 = recompute tile, normalize, mask, write (bf16).
# ----------------------------------------------------------------------------
def _edge_kernel(u_ref, de_ref, am_ref, ffw4_ref, ffb4_ref,
                 gng_ref, gnb_ref, mg_ref, mgt_ref,
                 e_out_ref, stats_ref, *, tile_n):
  f32, bf16 = jnp.float32, jnp.bfloat16
  ph = pl.program_id(1)
  t = pl.program_id(2)
  TN = tile_n
  row0 = pl.multiple_of(t * TN, TN)

  u = u_ref[0]                          # [N, 2D]  hsum @ ff_w3 + ff_b3/2
  u_t = u_ref[0, pl.ds(row0, TN), :]    # [TN, 2D]
  de = de_ref[0]                        # [N, TN, D] bf16
  N, _, D = de.shape
  G = mg_ref.shape[1]

  @pl.when(jnp.logical_and(ph == 0, t == 0))
  def _init():
    stats_ref[...] = jnp.zeros_like(stats_ref)

  # eres = dense_edge + FFN_edge(hsum_i + hsum_j).  The first FFN linear is
  # distributed through the sum (u precomputed in the wrapper, with b3 split
  # as b3/2 + b3/2), so only the second linear remains as a big matmul and it
  # is cheap enough to recompute in both phases.
  zf = jnp.maximum(u[:, None, :] + u_t[None, :, :], 0.0)          # [N, TN, 2D]
  ffe = jnp.dot(zf.reshape(N * TN, 2 * D).astype(bf16), ffw4_ref[...],
                preferred_element_type=f32) + ffb4_ref[...]
  eres = de.reshape(N * TN, D).astype(f32) + ffe                  # [N*TN, D]

  @pl.when(ph == 0)
  def _accumulate():
    # f32 per-channel sum / sum-of-squares for the global edge GroupNorm.
    stats_ref[0:1, :] = stats_ref[0:1, :] + jnp.sum(eres, axis=0, keepdims=True)
    stats_ref[1:2, :] = stats_ref[1:2, :] + jnp.sum(eres * eres, axis=0,
                                                    keepdims=True)

  @pl.when(ph == 1)
  def _normalize():
    am = am_ref[0, 0].astype(f32)                                 # [N, TN]
    # GroupNorm over (D/G channels x N x N) per batch element (padded entries
    # included, matching the dense torch reference).  Stats stay f32.
    inv_cnt = 1.0 / float((D // G) * N * N)
    mean_g = jnp.dot(stats_ref[0:1, :], mg_ref[...],
                     preferred_element_type=f32) * inv_cnt        # [1, G]
    ex2_g = jnp.dot(stats_ref[1:2, :], mg_ref[...],
                    preferred_element_type=f32) * inv_cnt
    var_g = jnp.maximum(ex2_g - mean_g * mean_g, 0.0)
    mean_c = jnp.dot(mean_g, mgt_ref[...], preferred_element_type=f32)  # [1, D]
    inv_c = jnp.dot(jax.lax.rsqrt(var_g + 1e-6), mgt_ref[...],
                    preferred_element_type=f32)
    en = (eres - mean_c) * inv_c * gng_ref[...] + gnb_ref[...]
    e_out_ref[0] = (en.reshape(N, TN, D) * am[:, :, None]).astype(e_out_ref.dtype)


# ----------------------------------------------------------------------------
# Generation-aware VMEM limit + tile selection.
# ----------------------------------------------------------------------------
def _vmem_limit_and_tile(N, D):
  try:
    phys = int(pltpu.get_tpu_info().vmem_capacity_bytes)
  except Exception:
    phys = 64 * 1024 * 1024                 # conservative default (v7x per-TC)
  # leave ~1/8 (min 8 MiB) headroom for compiler scratch / semaphores:
  # 128 MiB parts (v5e/v6e) -> 112 MiB, 64 MiB parts (v7x) -> 56 MiB.
  vmem_limit = max(phys - max(phys // 8, 8 * 1024 * 1024), 32 * 1024 * 1024)
  # per-element live-set of the [N, TILE_N, D] slabs (worst of the two passes:
  # double-buffered bf16 de block, f32 he/msg/ee/prod temps in pass 1, the
  # 2D-wide f32 z + bf16 copy in pass 2, double-buffered bf16 e_out block),
  # plus a reserve for weights, the [N, D]/[N, 2D] full blocks and scratch.
  per_elem = 36
  budget = max(int(vmem_limit * 0.7) - 6 * 1024 * 1024, 2 * 1024 * 1024)
  cands = sorted({c for c in range(8, N, 8) if N % c == 0} | {N})
  fitting = [c for c in cands if per_elem * N * c * D <= budget]
  # largest fitting tile: lane-dense TN, fewer grid steps, full MXU M dim.
  # TODO(synk): source-axis tiling (online softmax / running GINE aggregation)
  # for very large N where even the smallest target tile does not fit.
  tile_n = max(fitting) if fitting else min(cands)
  return vmem_limit, tile_n


# ----------------------------------------------------------------------------
# Wrapper: glue (tiny temb / projection matmuls, packing, tiling) + two calls.
# ----------------------------------------------------------------------------
def hybrid_mp_block(x, dense_edge, local_adj, node_mask, adj_mask, temb, params,
                    num_heads=8, tile_n=None, edge_out_dtype=jnp.bfloat16):
  """x: [B*N, D]; dense_edge: [B, N, N, D] (src, tgt); local_adj / adj_mask:
  [B, N, N] (trailing size-1 dim also accepted); node_mask: [B, N]."""
  f32, bf16 = jnp.float32, jnp.bfloat16
  B, N, _, D = dense_edge.shape
  if adj_mask.ndim == 4:
    adj_mask = adj_mask[..., 0]
  if local_adj.ndim == 4:
    local_adj = local_adj[..., 0]
  H = num_heads
  C = D // H
  G = min(D // 4, 32)

  vmem_limit, auto_tile = _vmem_limit_and_tile(N, D)
  if tile_n is None:
    tile_n = auto_tile
  assert N % tile_n == 0 and (tile_n == N or tile_n % 8 == 0)
  TN = tile_n
  T = N // TN

  relu = lambda u: jnp.maximum(u, 0.0)
  # tiny per-batch glue (O(B*N*D^2)): time-embedding projections, conditioning,
  # and the hoisted q/k/v attention projections.
  act_t = relu(temb)
  tn = act_t @ params["wt_node"] + params["bt_node"]               # [B, D]
  te = (act_t @ params["wt_edge"] + params["bt_edge"]).reshape(B, 1, D)
  x3 = x.reshape(B, N, D).astype(f32)
  nm = node_mask.reshape(B, N, 1).astype(f32)
  h_cond = (x3 + tn[:, None, :]) * nm                              # [B, N, D]

  de_bf = dense_edge.astype(bf16)          # bf16 HBM / DMA for the big operand

  wkv = jnp.concatenate([params["wk"], params["wv"]], axis=1)
  q = h_cond @ params["wq"]                                        # [B, N, D]
  kv = h_cond @ wkv                                                # [B, N, 2D]
  we01 = jnp.concatenate([params["we0"], params["we1"]], axis=1)
  tew = te @ we01                                                  # [B, 1, 2D]
  we01_bf = we01.astype(bf16)

  def tile_mask(m):                        # [B, N, N] -> [B, T, N, TN] (bf16)
    return m.astype(bf16).reshape(B, N, T, TN).transpose(0, 2, 1, 3)
  am_t = tile_mask(adj_mask)
  la_t = tile_mask(local_adj)

  # packed weights: bf16 for the big MXU operands, f32 biases / norm params.
  gin_w = jnp.stack([params["gin_w1"], params["gin_w2"]]).astype(bf16)
  gin_b = jnp.stack([params["gin_b1"], params["gin_b2"]]).astype(f32)
  ffw1 = params["ff_w1"].astype(bf16)
  ffb1 = params["ff_b1"].reshape(1, 2 * D).astype(f32)
  ffw2 = params["ff_w2"].astype(bf16)
  ffb2 = params["ff_b2"].reshape(1, D).astype(f32)
  ffw4 = params["ff_w4"].astype(bf16)
  ffb4 = params["ff_b4"].reshape(1, D).astype(f32)
  gng_n = params["gn_gamma"][0:3].astype(f32)
  gnb_n = params["gn_beta"][0:3].astype(f32)
  gng_e = params["gn_gamma"][3:4].astype(f32)
  gnb_e = params["gn_beta"][3:4].astype(f32)

  ch = jnp.arange(D)
  mg = (ch[:, None] // (D // G) == jnp.arange(G)[None, :]).astype(f32)  # [D, G]
  mgt = mg.T
  mh = (ch[:, None] // C == jnp.arange(H)[None, :]).astype(f32)         # [D, H]
  mht = mh.T

  def rep(a):
    nd = a.ndim
    return pl.BlockSpec(a.shape, lambda *_, nd=nd: (0,) * nd)
  # TODO(synk): the constant-index weight blocks are still double-buffered;
  # pl.Buffered(1) would reclaim a few MiB at large D on 64 MiB parts.

  # ---------------- pass 1: nodes (GINE + attention + node FFN) -------------
  k1_in_specs = [
      pl.BlockSpec((1, N, D), lambda b, t: (b, 0, 0)),            # h_cond (src)
      pl.BlockSpec((1, TN, D), lambda b, t: (b, t, 0)),           # x residual
      pl.BlockSpec((1, TN, 1), lambda b, t: (b, t, 0)),           # node mask
      pl.BlockSpec((1, TN, D), lambda b, t: (b, t, 0)),           # q (targets)
      pl.BlockSpec((1, N, 2 * D), lambda b, t: (b, 0, 0)),        # kv (sources)
      pl.BlockSpec((1, N, TN, D), lambda b, t: (b, 0, t, 0)),     # dense edge
      pl.BlockSpec((1, 1, N, TN), lambda b, t: (b, t, 0, 0)),     # adj mask
      pl.BlockSpec((1, 1, N, TN), lambda b, t: (b, t, 0, 0)),     # local mask
      pl.BlockSpec((1, 1, D), lambda b, t: (b, 0, 0)),            # t_edge(temb)
      pl.BlockSpec((1, 1, 2 * D), lambda b, t: (b, 0, 0)),        # te @ [we0|we1]
      rep(gin_w), rep(gin_b), rep(we01_bf),
      rep(ffw1), rep(ffb1), rep(ffw2), rep(ffb2),
      rep(gng_n), rep(gnb_n), rep(mg), rep(mgt), rep(mh), rep(mht),
  ]
  k1_out_specs = (pl.BlockSpec((1, TN, D), lambda b, t: (b, t, 0)),
                  pl.BlockSpec((1, TN, D), lambda b, t: (b, t, 0)))
  k1_out_shape = (jax.ShapeDtypeStruct((B, N, D), f32),
                  jax.ShapeDtypeStruct((B, N, D), f32))
  cost1 = pl.CostEstimate(
      flops=int(B * (4 * N * N * D * D + 4 * N * N * D * H + 24 * N * D * D)),
      transcendentals=int(B * N * N * (D + H)),
      bytes_accessed=int(B * (2 * N * N * D + 4 * N * N + 32 * N * D)))
  hnode, hsum = pl.pallas_call(
      functools.partial(_node_kernel, num_heads=H, tile_n=TN),
      grid=(B, T),
      in_specs=k1_in_specs,
      out_specs=k1_out_specs,
      out_shape=k1_out_shape,
      compiler_params=pltpu.CompilerParams(
          dimension_semantics=("parallel", "parallel"),
          vmem_limit_bytes=vmem_limit),
      cost_estimate=cost1,
  )(h_cond, x3, nm, q, kv, de_bf, am_t, la_t, te, tew,
    gin_w, gin_b, we01_bf, ffw1, ffb1, ffw2, ffb2,
    gng_n, gnb_n, mg, mgt, mh, mht)

  # ------------- pass 2: edges (edge FFN + global edge GroupNorm) -----------
  # first edge-FFN linear distributed through hsum_i + hsum_j (tiny matmul):
  # relu((hs_i + hs_j) @ W3 + b3) == relu(u_i + u_j) with u = hs @ W3 + b3/2.
  u = hsum @ params["ff_w3"] + 0.5 * params["ff_b3"].reshape(1, 1, 2 * D)

  k2_in_specs = [
      pl.BlockSpec((1, N, 2 * D), lambda b, p, t: (b, 0, 0)),      # u (sources)
      pl.BlockSpec((1, N, TN, D), lambda b, p, t: (b, 0, t, 0)),   # dense edge
      pl.BlockSpec((1, 1, N, TN), lambda b, p, t: (b, t, 0, 0)),   # adj mask
      rep(ffw4), rep(ffb4), rep(gng_e), rep(gnb_e), rep(mg), rep(mgt),
  ]
  # During the stats phase (p=0) the first tile's output block stays resident
  # and is only written at (p=1, t=0); every block's visits stay consecutive,
  # so revisit semantics hold (verified: tiled T>1, B>1 path runs correctly).
  k2_out_spec = pl.BlockSpec((1, N, TN, D), lambda b, p, t: (b, 0, p * t, 0))
  cost2 = pl.CostEstimate(
      flops=int(B * 8 * N * N * D * D),
      transcendentals=0,
      bytes_accessed=int(B * (6 * N * N * D + 4 * N * N + 16 * N * D)))
  e_out = pl.pallas_call(
      functools.partial(_edge_kernel, tile_n=TN),
      grid=(B, 2, T),
      in_specs=k2_in_specs,
      out_specs=k2_out_spec,
      out_shape=jax.ShapeDtypeStruct((B, N, N, D), edge_out_dtype),
      scratch_shapes=[pltpu.VMEM((2, D), f32)],
      compiler_params=pltpu.CompilerParams(
          dimension_semantics=("parallel", "arbitrary", "arbitrary"),
          vmem_limit_bytes=vmem_limit),
      cost_estimate=cost2,
  )(u, de_bf, am_t, ffw4, ffb4, gng_e, gnb_e, mg, mgt)

  return hnode.reshape(B * N, D), e_out


# ----------------------------------------------------------------------------
# Deterministic parameter init (synthetic; shapes follow the module __init__).
# ----------------------------------------------------------------------------
def init_params(key, D, temb_dim):
  ks = jax.random.split(key, 23)
  w = lambda k, shape, fan: jax.random.normal(k, shape, jnp.float32) / math.sqrt(fan)
  b = lambda k, shape: 0.01 * jax.random.normal(k, shape, jnp.float32)
  p = {}
  p["wt_node"], p["bt_node"] = w(ks[0], (temb_dim, D), temb_dim), b(ks[1], (D,))
  p["wt_edge"], p["bt_edge"] = w(ks[2], (temb_dim, D), temb_dim), b(ks[3], (D,))
  p["gin_w1"], p["gin_b1"] = w(ks[4], (D, D), D), b(ks[5], (D,))
  p["gin_w2"], p["gin_b2"] = w(ks[6], (D, D), D), b(ks[7], (D,))
  p["wq"], p["wk"], p["wv"] = (w(ks[8], (D, D), D), w(ks[9], (D, D), D),
                               w(ks[10], (D, D), D))
  p["we0"], p["we1"] = w(ks[11], (D, D), D), w(ks[12], (D, D), D)
  p["ff_w1"], p["ff_b1"] = w(ks[13], (D, 2 * D), D), b(ks[14], (2 * D,))
  p["ff_w2"], p["ff_b2"] = w(ks[15], (2 * D, D), 2 * D), b(ks[16], (D,))
  p["ff_w3"], p["ff_b3"] = w(ks[17], (D, 2 * D), D), b(ks[18], (2 * D,))
  p["ff_w4"], p["ff_b4"] = w(ks[19], (2 * D, D), 2 * D), b(ks[20], (D,))
  p["gn_gamma"] = 1.0 + 0.1 * jax.random.normal(ks[21], (4, D), jnp.float32)
  p["gn_beta"] = 0.1 * jax.random.normal(ks[22], (4, D), jnp.float32)
  return p


# ----------------------------------------------------------------------------
# Pure-JAX f32 reference (mirrors the PyTorch forward semantics).
# ----------------------------------------------------------------------------
def reference_forward(x, dense_edge, local_adj, node_mask, adj_mask, temb, p,
                      num_heads):
  B, N, _, D = dense_edge.shape
  H, C, G = num_heads, D // num_heads, min(D // 4, 32)
  relu = lambda u: jnp.maximum(u, 0.0)
  nm = node_mask[:, :, None]
  am4 = adj_mask[..., None]
  la4 = local_adj[..., None]

  def gn_rows(v, gamma, beta):
    M = v.shape[0]
    vg = v.reshape(M, G, D // G)
    m = vg.mean(axis=-1, keepdims=True)
    var = ((vg - m) ** 2).mean(axis=-1, keepdims=True)
    return ((vg - m) / jnp.sqrt(var + 1e-6)).reshape(M, D) * gamma + beta

  tn = relu(temb) @ p["wt_node"] + p["bt_node"]
  te = relu(temb) @ p["wt_edge"] + p["bt_edge"]
  x3 = x.reshape(B, N, D)
  h_edge = (dense_edge + te[:, None, None, :]) * am4
  h = (x3 + tn[:, None, :]) * nm

  msg = relu(h[:, :, None, :] + h_edge) * la4
  aggr = msg.sum(axis=1)
  hloc = relu((aggr + h) @ p["gin_w1"] + p["gin_b1"]) @ p["gin_w2"] + p["gin_b2"]
  hloc = x3 + hloc * nm
  hloc = gn_rows(hloc.reshape(B * N, D), p["gn_gamma"][0],
                 p["gn_beta"][0]).reshape(B, N, D)

  q = (h @ p["wq"]).reshape(B, N, H, C)
  k = (h @ p["wk"]).reshape(B, N, H, C)
  v = (h @ p["wv"]).reshape(B, N, H, C)
  e0 = (h_edge @ p["we0"]).reshape(B, N, N, H, C)
  e1 = jax.nn.sigmoid(h_edge @ p["we1"]).reshape(B, N, N, H, C)
  score = jnp.einsum("bthc,bahc,bathc->bath", q, k, e0) / math.sqrt(C)
  score = jnp.where(am4 > 0, score, -1e30)
  smax = score.max(axis=1, keepdims=True)
  pe = jnp.exp(score - smax) * am4
  den = pe.sum(axis=1, keepdims=True)
  alpha = pe / jnp.maximum(den, 1e-30)
  out = jnp.einsum("bath,bahc,bathc->bthc", alpha, v, e1).reshape(B, N, D)
  hattn = x3 + out
  hattn = gn_rows(hattn.reshape(B * N, D), p["gn_gamma"][1],
                  p["gn_beta"][1]).reshape(B, N, D)

  hsum = (hloc + hattn) * nm
  he_new = hsum[:, None, :, :] + hsum[:, :, None, :]
  ffn = relu(hsum @ p["ff_w1"] + p["ff_b1"]) @ p["ff_w2"] + p["ff_b2"]
  hnode = gn_rows((hsum + ffn).reshape(B * N, D),
                  p["gn_gamma"][2], p["gn_beta"][2]).reshape(B, N, D) * nm

  ffe = relu(he_new @ p["ff_w3"] + p["ff_b3"]) @ p["ff_w4"] + p["ff_b4"]
  enew = dense_edge + ffe
  eg = enew.reshape(B, N, N, G, D // G)
  m = eg.mean(axis=(1, 2, 4), keepdims=True)
  var = ((eg - m) ** 2).mean(axis=(1, 2, 4), keepdims=True)
  en = ((eg - m) / jnp.sqrt(var + 1e-6)).reshape(B, N, N, D)
  eout = (en * p["gn_gamma"][3] + p["gn_beta"][3]) * am4
  return hnode.reshape(B * N, D), eout


if __name__ == "__main__":
  key = jax.random.PRNGKey(0)
  B, N, D, H, temb_dim = 2, 16, 32, 8, 16
  k1, k2, k3, k4, kp = jax.random.split(key, 5)

  counts = jnp.array([16, 11])
  node_mask = (jnp.arange(N)[None, :] < counts[:, None]).astype(jnp.float32)  # [B,N]
  adj_mask = node_mask[:, :, None] * node_mask[:, None, :]                    # [B,N,N]
  local_adj = jax.random.bernoulli(k4, 0.5, (B, N, N)).astype(jnp.float32) * adj_mask

  x = jax.random.normal(k1, (B * N, D), jnp.float32)
  dense_edge = jax.random.normal(k2, (B, N, N, D), jnp.float32)
  temb = jax.random.normal(k3, (B, temb_dim), jnp.float32)
  params = init_params(kp, D, temb_dim)

  # tile_n=8 forces T=2 target tiles so the tiled / phased paths are exercised.
  fn = jax.jit(functools.partial(hybrid_mp_block, num_heads=H, tile_n=8))
  h_out, e_out = fn(x, dense_edge, local_adj, node_mask, adj_mask, temb, params)
  jax.block_until_ready((h_out, e_out))

  # reference consumes the same bf16-stored dense_edge the kernel uses;
  # weights / arithmetic stay f32.  Tolerance covers the kernel's bf16 MXU
  # operands (f32 accumulation), the approximate softmax reciprocal, and the
  # bf16 edge output.
  de_ref = dense_edge.astype(jnp.bfloat16).astype(jnp.float32)
  h_ref, e_ref = reference_forward(x, de_ref, local_adj, node_mask, adj_mask,
                                   temb, params, H)
  np.testing.assert_allclose(np.asarray(h_out), np.asarray(h_ref),
                             rtol=5e-2, atol=5e-2)
  np.testing.assert_allclose(np.asarray(e_out.astype(jnp.float32)),
                             np.asarray(e_ref), rtol=5e-2, atol=5e-2)
  print("KERNEL_OK")
</pallas_src>

<mosaic_0001>
module attributes {stable_mosaic.version = 11 : i64} {
  func.func @_edge_kernel(%arg0: i32, %arg1: i32, %arg2: i32, %arg3: memref<1x16x64xf32, #tpu.memory_space<vmem>>, %arg4: memref<1x16x8x32xbf16, #tpu.memory_space<vmem>>, %arg5: memref<1x1x16x8xbf16, #tpu.memory_space<vmem>>, %arg6: memref<64x32xbf16, #tpu.memory_space<vmem>>, %arg7: memref<1x32xf32, #tpu.memory_space<vmem>>, %arg8: memref<1x32xf32, #tpu.memory_space<vmem>>, %arg9: memref<1x32xf32, #tpu.memory_space<vmem>>, %arg10: memref<32x8xf32, #tpu.memory_space<vmem>>, %arg11: memref<8x32xf32, #tpu.memory_space<vmem>>, %arg12: memref<1x16x8x32xbf16, #tpu.memory_space<vmem>>, %arg13: memref<2x32xf32, #tpu.memory_space<vmem>>) attributes {dimension_semantics = [#tpu.dimension_semantics<parallel>, #tpu.dimension_semantics<arbitrary>, #tpu.dimension_semantics<arbitrary>], iteration_bounds = array<i64: 2, 2, 2>, scalar_prefetch = 0 : i64, scratch_operands = 1 : i64, tpu.core_type = #tpu.core_type<tc>, window_params = [{transform_indices = @transform_0, window_bounds = array<i64: 1, 16, 64>}, {transform_indices = @transform_1, window_bounds = array<i64: 1, 16, 8, 32>}, {transform_indices = @transform_2, window_bounds = array<i64: 1, 1, 16, 8>}, {pipeline_mode = #tpu.pipeline_mode<synchronous>, transform_indices = @transform_3, window_bounds = array<i64: 64, 32>}, {pipeline_mode = #tpu.pipeline_mode<synchronous>, transform_indices = @transform_4, window_bounds = array<i64: 1, 32>}, {pipeline_mode = #tpu.pipeline_mode<synchronous>, transform_indices = @transform_5, window_bounds = array<i64: 1, 32>}, {pipeline_mode = #tpu.pipeline_mode<synchronous>, transform_indices = @transform_6, window_bounds = array<i64: 1, 32>}, {pipeline_mode = #tpu.pipeline_mode<synchronous>, transform_indices = @transform_7, window_bounds = array<i64: 32, 8>}, {pipeline_mode = #tpu.pipeline_mode<synchronous>, transform_indices = @transform_8, window_bounds = array<i64: 8, 32>}, {transform_indices = @transform_9, window_bounds = array<i64: 1, 16, 8, 32>}]} {
    %c8_i32 = arith.constant 8 : i32
    %0 = arith.muli %arg2, %c8_i32 : i32
    %1 = tpu.assume_multiple %0, 8 : i32
    %c0 = arith.constant 0 : index
    %c0_0 = arith.constant 0 : index
    %c0_1 = arith.constant 0 : index
    %2 = vector.load %arg3[%c0, %c0_0, %c0_1] : memref<1x16x64xf32, #tpu.memory_space<vmem>>, vector<1x16x64xf32>
    %3 = vector.shape_cast %2 : vector<1x16x64xf32> to vector<16x64xf32>
    %c0_2 = arith.constant 0 : index
    %4 = arith.index_cast %1 : i32 to index
    %c0_3 = arith.constant 0 : index
    %5 = vector.load %arg3[%c0_2, %4, %c0_3] : memref<1x16x64xf32, #tpu.memory_space<vmem>>, vector<1x8x64xf32>
    %6 = vector.shape_cast %5 : vector<1x8x64xf32> to vector<8x64xf32>
    %c0_4 = arith.constant 0 : index
    %c0_5 = arith.constant 0 : index
    %c0_6 = arith.constant 0 : index
    %c0_7 = arith.constant 0 : index
    %7 = vector.load %arg4[%c0_4, %c0_5, %c0_6, %c0_7] : memref<1x16x8x32xbf16, #tpu.memory_space<vmem>>, vector<1x16x8x32xbf16>
    %8 = vector.shape_cast %7 : vector<1x16x8x32xbf16> to vector<16x8x32xbf16>
    %c0_i32 = arith.constant 0 : i32
    %9 = arith.cmpi eq, %arg1, %c0_i32 : i32
    %c0_i32_8 = arith.constant 0 : i32
    %10 = arith.cmpi eq, %arg2, %c0_i32_8 : i32
    %11 = arith.andi %9, %10 : i1
    %12 = arith.extui %11 : i1 to i32
    %c0_i32_9 = arith.constant 0 : i32
    %13 = arith.cmpi ne, %12, %c0_i32_9 : i32
    scf.if %13 {
      %cst_18 = arith.constant 0.000000e+00 : f32
      %37 = vector.broadcast %cst_18 : f32 to vector<2x32xf32>
      %c0_19 = arith.constant 0 : index
      %c0_20 = arith.constant 0 : index
      %38 = vector.load %arg13[%c0_19, %c0_20] : memref<2x32xf32, #tpu.memory_space<vmem>>, vector<2x32xf32>
      tpu.vector_store %arg13[%c0_19, %c0_20], %37 {strides = array<i32>} : memref<2x32xf32, #tpu.memory_space<vmem>>, vector<2x32xf32>,
    } else {
    }
    %14 = vector.shape_cast %3 : vector<16x64xf32> to vector<16x1x64xf32>
    %15 = vector.shape_cast %6 : vector<8x64xf32> to vector<1x8x64xf32>
    %16 = vector.broadcast %14 : vector<16x1x64xf32> to vector<16x8x64xf32>
    %17 = vector.broadcast %15 : vector<1x8x64xf32> to vector<16x8x64xf32>
    %18 = arith.addf %16, %17 : vector<16x8x64xf32>
    %cst = arith.constant 0.000000e+00 : f32
    %19 = vector.broadcast %cst : f32 to vector<16x8x64xf32>
    %20 = arith.maximumf %18, %19 : vector<16x8x64xf32>
    %21 = vector.shape_cast %20 : vector<16x8x64xf32> to vector<128x64xf32>
    %22 = arith.truncf %21 : vector<128x64xf32> to vector<128x64xbf16>
    %c0_10 = arith.constant 0 : index
    %c0_11 = arith.constant 0 : index
    %23 = vector.load %arg6[%c0_10, %c0_11] : memref<64x32xbf16, #tpu.memory_space<vmem>>, vector<64x32xbf16>
    %cst_12 = arith.constant dense<0.000000e+00> : vector<128x32xf32>
    %24 = tpu.matmul %22, %23, %cst_12 {dimension_numbers = #tpu.dot_dimension_numbers<[1], [0], [0], [1], [0, 0, 1, 1], [], []>} : vector<128x64xbf16>, vector<64x32xbf16>, vector<128x32xf32> -> vector<128x32xf32>
    %c0_13 = arith.constant 0 : index
    %c0_14 = arith.constant 0 : index
    %25 = vector.load %arg7[%c0_13, %c0_14] : memref<1x32xf32, #tpu.memory_space<vmem>>, vector<1x32xf32>
    %26 = vector.broadcast %25 : vector<1x32xf32> to vector<128x32xf32>
    %27 = arith.addf %24, %26 : vector<128x32xf32>
    %28 = vector.shape_cast %8 : vector<16x8x32xbf16> to vector<128x32xbf16>
    %29 = arith.extf %28 : vector<128x32xbf16> to vector<128x32xf32>
    %30 = arith.addf %29, %27 : vector<128x32xf32>
    %c0_i32_15 = arith.constant 0 : i32
    %31 = arith.cmpi eq, %arg1, %c0_i32_15 : i32
    %32 = arith.extui %31 : i1 to i32
    %c0_i32_16 = arith.constant 0 : i32
    %33 = arith.cmpi ne, %32, %c0_i32_16 : i32
    scf.if %33 {
      %c0_18 = arith.constant 0 : index
      %c0_19 = arith.constant 0 : index
      %37 = vector.load %arg13[%c0_18, %c0_19] : memref<2x32xf32, #tpu.memory_space<vmem>>, vector<1x32xf32>
      %cst_20 = arith.constant dense<0.000000e+00> : vector<32xf32>
      %38 = vector.multi_reduction <add>, %30, %cst_20 [0] : vector<128x32xf32> to vector<32xf32>
      %39 = vector.shape_cast %38 : vector<32xf32> to vector<1x32xf32>
      %40 = arith.addf %37, %39 : vector<1x32xf32>
      %c0_21 = arith.constant 0 : index
      %c0_22 = arith.constant 0 : index
      %41 = vector.load %arg13[%c0_21, %c0_22] : memref<2x32xf32, #tpu.memory_space<vmem>>, vector<1x32xf32>
      tpu.vector_store %arg13[%c0_21, %c0_22], %40 {strides = array<i32>} : memref<2x32xf32, #tpu.memory_space<vmem>>, vector<1x32xf32>,
      %c1 = arith.constant 1 : index
      %c0_23 = arith.constant 0 : index
      %42 = vector.load %arg13[%c1, %c0_23] : memref<2x32xf32, #tpu.memory_space<vmem>>, vector<1x32xf32>
      %43 = arith.mulf %30, %30 : vector<128x32xf32>
      %cst_24 = arith.constant dense<0.000000e+00> : vector<32xf32>
      %44 = vector.multi_reduction <add>, %43, %cst_24 [0] : vector<128x32xf32> to vector<32xf32>
      %45 = vector.shape_cast %44 : vector<32xf32> to vector<1x32xf32>
      %46 = arith.addf %42, %45 : vector<1x32xf32>
      %c1_25 = arith.constant 1 : index
      %c0_26 = arith.constant 0 : index
      %47 = vector.load %arg13[%c1_25, %c0_26] : memref<2x32xf32, #tpu.memory_space<vmem>>, vector<1x32xf32>
      tpu.vector_store %arg13[%c1_25, %c0_26], %46 {strides = array<i32>} : memref<2x32xf32, #tpu.memory_space<vmem>>, vector<1x32xf32>,
    } else {
    }
    %c1_i32 = arith.constant 1 : i32
    %34 = arith.cmpi eq, %arg1, %c1_i32 : i32
    %35 = arith.extui %34 : i1 to i32
    %c0_i32_17 = arith.constant 0 : i32
    %36 = arith.cmpi ne, %35, %c0_i32_17 : i32
    scf.if %36 {
      %c0_18 = arith.constant 0 : index
      %c0_19 = arith.constant 0 : index
      %c0_20 = arith.constant 0 : index
      %c0_21 = arith.constant 0 : index
      %37 = vector.load %arg5[%c0_18, %c0_19, %c0_20, %c0_21] : memref<1x1x16x8xbf16, #tpu.memory_space<vmem>>, vector<1x1x16x8xbf16>
      %38 = vector.shape_cast %37 : vector<1x1x16x8xbf16> to vector<16x8xbf16>
      %39 = arith.extf %38 : vector<16x8xbf16> to vector<16x8xf32>
      %c0_22 = arith.constant 0 : index
      %c0_23 = arith.constant 0 : index
      %40 = vector.load %arg13[%c0_22, %c0_23] : memref<2x32xf32, #tpu.memory_space<vmem>>, vector<1x32xf32>
      %c0_24 = arith.constant 0 : index
      %c0_25 = arith.constant 0 : index
      %41 = vector.load %arg10[%c0_24, %c0_25] : memref<32x8xf32, #tpu.memory_space<vmem>>, vector<32x8xf32>
      %cst_26 = arith.constant dense<0.000000e+00> : vector<1x8xf32>
      %42 = tpu.matmul %40, %41, %cst_26 {dimension_numbers = #tpu.dot_dimension_numbers<[1], [0], [0], [1], [0, 0, 1, 1], [], []>} : vector<1x32xf32>, vector<32x8xf32>, vector<1x8xf32> -> vector<1x8xf32>
      %cst_27 = arith.constant 9.765625E-4 : f32
      %43 = vector.broadcast %cst_27 : f32 to vector<1x8xf32>
      %44 = arith.mulf %42, %43 : vector<1x8xf32>
      %c1 = arith.constant 1 : index
      %c0_28 = arith.constant 0 : index
      %45 = vector.load %arg13[%c1, %c0_28] : memref<2x32xf32, #tpu.memory_space<vmem>>, vector<1x32xf32>
      %c0_29 = arith.constant 0 : index
      %c0_30 = arith.constant 0 : index
      %46 = vector.load %arg10[%c0_29, %c0_30] : memref<32x8xf32, #tpu.memory_space<vmem>>, vector<32x8xf32>
      %cst_31 = arith.constant dense<0.000000e+00> : vector<1x8xf32>
      %47 = tpu.matmul %45, %46, %cst_31 {dimension_numbers = #tpu.dot_dimension_numbers<[1], [0], [0], [1], [0, 0, 1, 1], [], []>} : vector<1x32xf32>, vector<32x8xf32>, vector<1x8xf32> -> vector<1x8xf32>
      %cst_32 = arith.constant 9.765625E-4 : f32
      %48 = vector.broadcast %cst_32 : f32 to vector<1x8xf32>
      %49 = arith.mulf %47, %48 : vector<1x8xf32>
      %50 = arith.mulf %44, %44 : vector<1x8xf32>
      %51 = arith.subf %49, %50 : vector<1x8xf32>
      %cst_33 = arith.constant 0.000000e+00 : f32
      %52 = vector.broadcast %cst_33 : f32 to vector<1x8xf32>
      %53 = arith.maximumf %51, %52 : vector<1x8xf32>
      %c0_34 = arith.constant 0 : index
      %c0_35 = arith.constant 0 : index
      %54 = vector.load %arg11[%c0_34, %c0_35] : memref<8x32xf32, #tpu.memory_space<vmem>>, vector<8x32xf32>
      %cst_36 = arith.constant dense<0.000000e+00> : vector<1x32xf32>
      %55 = tpu.matmul %44, %54, %cst_36 {dimension_numbers = #tpu.dot_dimension_numbers<[1], [0], [0], [1], [0, 0, 1, 1], [], []>} : vector<1x8xf32>, vector<8x32xf32>, vector<1x32xf32> -> vector<1x32xf32>
      %cst_37 = arith.constant 9.99999997E-7 : f32
      %56 = vector.broadcast %cst_37 : f32 to vector<1x8xf32>
      %57 = arith.addf %53, %56 : vector<1x8xf32>
      %58 = math.rsqrt %57 : vector<1x8xf32>
      %c0_38 = arith.constant 0 : index
      %c0_39 = arith.constant 0 : index
      %59 = vector.load %arg11[%c0_38, %c0_39] : memref<8x32xf32, #tpu.memory_space<vmem>>, vector<8x32xf32>
      %cst_40 = arith.constant dense<0.000000e+00> : vector<1x32xf32>
      %60 = tpu.matmul %58, %59, %cst_40 {dimension_numbers = #tpu.dot_dimension_numbers<[1], [0], [0], [1], [0, 0, 1, 1], [], []>} : vector<1x8xf32>, vector<8x32xf32>, vector<1x32xf32> -> vector<1x32xf32>
      %61 = vector.broadcast %55 : vector<1x32xf32> to vector<128x32xf32>
      %62 = arith.subf %30, %61 : vector<128x32xf32>
      %63 = vector.broadcast %60 : vector<1x32xf32> to vector<128x32xf32>
      %64 = arith.mulf %62, %63 : vector<128x32xf32>
      %c0_41 = arith.constant 0 : index
      %c0_42 = arith.constant 0 : index
      %65 = vector.load %arg8[%c0_41, %c0_42] : memref<1x32xf32, #tpu.memory_space<vmem>>, vector<1x32xf32>
      %66 = vector.broadcast %65 : vector<1x32xf32> to vector<128x32xf32>
      %67 = arith.mulf %64, %66 : vector<128x32xf32>
      %c0_43 = arith.constant 0 : index
      %c0_44 = arith.constant 0 : index
      %68 = vector.load %arg9[%c0_43, %c0_44] : memref<1x32xf32, #tpu.memory_space<vmem>>, vector<1x32xf32>
      %69 = vector.broadcast %68 : vector<1x32xf32> to vector<128x32xf32>
      %70 = arith.addf %67, %69 : vector<128x32xf32>
      %71 = vector.shape_cast %70 : vector<128x32xf32> to vector<16x8x32xf32>
      %72 = vector.shape_cast %39 : vector<16x8xf32> to vector<16x8x1xf32>
      %73 = vector.broadcast %72 : vector<16x8x1xf32> to vector<16x8x32xf32>
      %74 = arith.mulf %71, %73 : vector<16x8x32xf32>
      %75 = arith.truncf %74 : vector<16x8x32xf32> to vector<16x8x32xbf16>
      %c0_45 = arith.constant 0 : index
      %c0_46 = arith.constant 0 : index
      %c0_47 = arith.constant 0 : index
      %c0_48 = arith.constant 0 : index
      %76 = vector.load %arg12[%c0_45, %c0_46, %c0_47, %c0_48] : memref<1x16x8x32xbf16, #tpu.memory_space<vmem>>, vector<1x16x8x32xbf16>
      %77 = vector.shape_cast %76 : vector<1x16x8x32xbf16> to vector<16x8x32xbf16>
      %78 = vector.shape_cast %75 : vector<16x8x32xbf16> to vector<1x16x8x32xbf16>
      tpu.vector_store %arg12[%c0_45, %c0_46, %c0_47, %c0_48], %78 {strides = array<i32>} : memref<1x16x8x32xbf16, #tpu.memory_space<vmem>>, vector<1x16x8x32xbf16>,
    } else {
    }
    return
  }
  func.func @transform_0(%arg0: i32, %arg1: i32, %arg2: i32) -> (i32, i32, i32) {
    %c0_i32 = arith.constant 0 : i32
    %c0_i32_0 = arith.constant 0 : i32
    %c0_i32_1 = arith.constant 0 : i32
    return %arg0, %c0_i32, %c0_i32_0 : i32, i32, i32
  }
  func.func @transform_1(%arg0: i32, %arg1: i32, %arg2: i32) -> (i32, i32, i32, i32) {
    %c0_i32 = arith.constant 0 : i32
    %c0_i32_0 = arith.constant 0 : i32
    %c0_i32_1 = arith.constant 0 : i32
    return %arg0, %c0_i32, %arg2, %c0_i32_0 : i32, i32, i32, i32
  }
  func.func @transform_2(%arg0: i32, %arg1: i32, %arg2: i32) -> (i32, i32, i32, i32) {
    %c0_i32 = arith.constant 0 : i32
    %c0_i32_0 = arith.constant 0 : i32
    %c0_i32_1 = arith.constant 0 : i32
    return %arg0, %arg2, %c0_i32, %c0_i32_0 : i32, i32, i32, i32
  }
  func.func @transform_3(%arg0: i32, %arg1: i32, %arg2: i32) -> (i32, i32) {
    %c0_i32 = arith.constant 0 : i32
    %c0_i32_0 = arith.constant 0 : i32
    %c0_i32_1 = arith.constant 0 : i32
    return %c0_i32, %c0_i32_0 : i32, i32
  }
  func.func @transform_4(%arg0: i32, %arg1: i32, %arg2: i32) -> (i32, i32) {
    %c0_i32 = arith.constant 0 : i32
    %c0_i32_0 = arith.constant 0 : i32
    %c0_i32_1 = arith.constant 0 : i32
    return %c0_i32, %c0_i32_0 : i32, i32
  }
  func.func @transform_5(%arg0: i32, %arg1: i32, %arg2: i32) -> (i32, i32) {
    %c0_i32 = arith.constant 0 : i32
    %c0_i32_0 = arith.constant 0 : i32
    %c0_i32_1 = arith.constant 0 : i32
    return %c0_i32, %c0_i32_0 : i32, i32
  }
  func.func @transform_6(%arg0: i32, %arg1: i32, %arg2: i32) -> (i32, i32) {
    %c0_i32 = arith.constant 0 : i32
    %c0_i32_0 = arith.constant 0 : i32
    %c0_i32_1 = arith.constant 0 : i32
    return %c0_i32, %c0_i32_0 : i32, i32
  }
  func.func @transform_7(%arg0: i32, %arg1: i32, %arg2: i32) -> (i32, i32) {
    %c0_i32 = arith.constant 0 : i32
    %c0_i32_0 = arith.constant 0 : i32
    %c0_i32_1 = arith.constant 0 : i32
    return %c0_i32, %c0_i32_0 : i32, i32
  }
  func.func @transform_8(%arg0: i32, %arg1: i32, %arg2: i32) -> (i32, i32) {
    %c0_i32 = arith.constant 0 : i32
    %c0_i32_0 = arith.constant 0 : i32
    %c0_i32_1 = arith.constant 0 : i32
    return %c0_i32, %c0_i32_0 : i32, i32
  }
  func.func @transform_9(%arg0: i32, %arg1: i32, %arg2: i32) -> (i32, i32, i32, i32) {
    %0 = arith.muli %arg1, %arg2 : i32
    %c0_i32 = arith.constant 0 : i32
    %c0_i32_0 = arith.constant 0 : i32
    %c0_i32_1 = arith.constant 0 : i32
    return %arg0, %c0_i32, %0, %c0_i32_0 : i32, i32, i32, i32
  }
}

module attributes {stable_mosaic.version = 11 : i64} {
  func.func @_node_kernel(%arg0: i32, %arg1: i32, %arg2: memref<1x16x32xf32, #tpu.memory_space<vmem>>, %arg3: memref<1x8x32xf32, #tpu.memory_space<vmem>>, %arg4: memref<1x8x1xf32, #tpu.memory_space<vmem>>, %arg5: memref<1x8x32xf32, #tpu.memory_space<vmem>>, %arg6: memref<1x16x64xf32, #tpu.memory_space<vmem>>, %arg7: memref<1x16x8x32xbf16, #tpu.memory_space<vmem>>, %arg8: memref<1x1x16x8xbf16, #tpu.memory_space<vmem>>, %arg9: memref<1x1x16x8xbf16, #tpu.memory_space<vmem>>, %arg10: memref<1x1x32xf32, #tpu.memory_space<vmem>>, %arg11: memref<1x1x64xf32, #tpu.memory_space<vmem>>, %arg12: memref<2x32x32xbf16, #tpu.memory_space<vmem>>, %arg13: memref<2x32xf32, #tpu.memory_space<vmem>>, %arg14: memref<32x64xbf16, #tpu.memory_space<vmem>>, %arg15: memref<32x64xbf16, #tpu.memory_space<vmem>>, %arg16: memref<1x64xf32, #tpu.memory_space<vmem>>, %arg17: memref<64x32xbf16, #tpu.memory_space<vmem>>, %arg18: memref<1x32xf32, #tpu.memory_space<vmem>>, %arg19: memref<3x32xf32, #tpu.memory_space<vmem>>, %arg20: memref<3x32xf32, #tpu.memory_space<vmem>>, %arg21: memref<32x8xf32, #tpu.memory_space<vmem>>, %arg22: memref<8x32xf32, #tpu.memory_space<vmem>>, %arg23: memref<32x8xf32, #tpu.memory_space<vmem>>, %arg24: memref<8x32xf32, #tpu.memory_space<vmem>>, %arg25: memref<1x8x32xf32, #tpu.memory_space<vmem>>, %arg26: memref<1x8x32xf32, #tpu.memory_space<vmem>>) attributes {dimension_semantics = [#tpu.dimension_semantics<parallel>, #tpu.dimension_semantics<parallel>], iteration_bounds = array<i64: 2, 2>, scalar_prefetch = 0 : i64, scratch_operands = 0 : i64, tpu.core_type = #tpu.core_type<tc>, window_params = [{transform_indices = @transform_0, window_bounds = array<i64: 1, 16, 32>}, {transform_indices = @transform_1, window_bounds = array<i64: 1, 8, 32>}, {transform_indices = @transform_2, window_bounds = array<i64: 1, 8, 1>}, {transform_indices = @transform_3, window_bounds = array<i64: 1, 8, 32>}, {transform_indices = @transform_4, window_bounds = array<i64: 1, 16, 64>}, {transform_indices = @transform_5, window_bounds = array<i64: 1, 16, 8, 32>}, {transform_indices = @transform_6, window_bounds = array<i64: 1, 1, 16, 8>}, {transform_indices = @transform_7, window_bounds = array<i64: 1, 1, 16, 8>}, {transform_indices = @transform_8, window_bounds = array<i64: 1, 1, 32>}, {transform_indices = @transform_9, window_bounds = array<i64: 1, 1, 64>}, {pipeline_mode = #tpu.pipeline_mode<synchronous>, transform_indices = @transform_10, window_bounds = array<i64: 2, 32, 32>}, {pipeline_mode = #tpu.pipeline_mode<synchronous>, transform_indices = @transform_11, window_bounds = array<i64: 2, 32>}, {pipeline_mode = #tpu.pipeline_mode<synchronous>, transform_indices = @transform_12, window_bounds = array<i64: 32, 64>}, {pipeline_mode = #tpu.pipeline_mode<synchronous>, transform_indices = @transform_13, window_bounds = array<i64: 32, 64>}, {pipeline_mode = #tpu.pipeline_mode<synchronous>, transform_indices = @transform_14, window_bounds = array<i64: 1, 64>}, {pipeline_mode = #tpu.pipeline_mode<synchronous>, transform_indices = @transform_15, window_bounds = array<i64: 64, 32>}, {pipeline_mode = #tpu.pipeline_mode<synchronous>, transform_indices = @transform_16, window_bounds = array<i64: 1, 32>}, {pipeline_mode = #tpu.pipeline_mode<synchronous>, transform_indices = @transform_17, window_bounds = array<i64: 3, 32>}, {pipeline_mode = #tpu.pipeline_mode<synchronous>, transform_indices = @transform_18, window_bounds = array<i64: 3, 32>}, {pipeline_mode = #tpu.pipeline_mode<synchronous>, transform_indices = @transform_19, window_bounds = array<i64: 32, 8>}, {pipeline_mode = #tpu.pipeline_mode<synchronous>, transform_indices = @transform_20, window_bounds = array<i64: 8, 32>}, {pipeline_mode = #tpu.pipeline_mode<synchronous>, transform_indices = @transform_21, window_bounds = array<i64: 32, 8>}, {pipeline_mode = #tpu.pipeline_mode<synchronous>, transform_indices = @transform_22, window_bounds = array<i64: 8, 32>}, {transform_indices = @transform_23, window_bounds = array<i64: 1, 8, 32>}, {transform_indices = @transform_24, window_bounds = array<i64: 1, 8, 32>}]} {
    %c8_i32 = arith.constant 8 : i32
    %0 = arith.muli %arg1, %c8_i32 : i32
    %1 = tpu.assume_multiple %0, 8 : i32
    %c0 = arith.constant 0 : index
    %c0_0 = arith.constant 0 : index
    %c0_1 = arith.constant 0 : index
    %2 = vector.load %arg2[%c0, %c0_0, %c0_1] : memref<1x16x32xf32, #tpu.memory_space<vmem>>, vector<1x16x32xf32>
    %3 = vector.shape_cast %2 : vector<1x16x32xf32> to vector<16x32xf32>
    %c0_2 = arith.constant 0 : index
    %4 = arith.index_cast %1 : i32 to index
    %c0_3 = arith.constant 0 : index
    %5 = vector.load %arg2[%c0_2, %4, %c0_3] : memref<1x16x32xf32, #tpu.memory_space<vmem>>, vector<1x8x32xf32>
    %6 = vector.shape_cast %5 : vector<1x8x32xf32> to vector<8x32xf32>
    %c0_4 = arith.constant 0 : index
    %c0_5 = arith.constant 0 : index
    %c0_6 = arith.constant 0 : index
    %7 = vector.load %arg3[%c0_4, %c0_5, %c0_6] : memref<1x8x32xf32, #tpu.memory_space<vmem>>, vector<1x8x32xf32>
    %8 = vector.shape_cast %7 : vector<1x8x32xf32> to vector<8x32xf32>
    %c0_7 = arith.constant 0 : index
    %c0_8 = arith.constant 0 : index
    %c0_9 = arith.constant 0 : index
    %9 = vector.load %arg4[%c0_7, %c0_8, %c0_9] : memref<1x8x1xf32, #tpu.memory_space<vmem>>, vector<1x8x1xf32>
    %10 = vector.shape_cast %9 : vector<1x8x1xf32> to vector<8x1xf32>
    %c0_10 = arith.constant 0 : index
    %c0_11 = arith.constant 0 : index
    %c0_12 = arith.constant 0 : index
    %11 = vector.load %arg5[%c0_10, %c0_11, %c0_12] : memref<1x8x32xf32, #tpu.memory_space<vmem>>, vector<1x8x32xf32>
    %12 = vector.shape_cast %11 : vector<1x8x32xf32> to vector<8x32xf32>
    %c0_13 = arith.constant 0 : index
    %c0_14 = arith.constant 0 : index
    %c0_15 = arith.constant 0 : index
    %13 = vector.load %arg6[%c0_13, %c0_14, %c0_15] : memref<1x16x64xf32, #tpu.memory_space<vmem>>, vector<1x16x64xf32>
    %14 = vector.shape_cast %13 : vector<1x16x64xf32> to vector<16x64xf32>
    %c0_16 = arith.constant 0 : index
    %c0_17 = arith.constant 0 : index
    %c0_18 = arith.constant 0 : index
    %c0_19 = arith.constant 0 : index
    %15 = vector.load %arg7[%c0_16, %c0_17, %c0_18, %c0_19] : memref<1x16x8x32xbf16, #tpu.memory_space<vmem>>, vector<1x16x8x32xbf16>
    %16 = vector.shape_cast %15 : vector<1x16x8x32xbf16> to vector<16x8x32xbf16>
    %c0_20 = arith.constant 0 : index
    %c0_21 = arith.constant 0 : index
    %c0_22 = arith.constant 0 : index
    %c0_23 = arith.constant 0 : index
    %17 = vector.load %arg8[%c0_20, %c0_21, %c0_22, %c0_23] : memref<1x1x16x8xbf16, #tpu.memory_space<vmem>>, vector<1x1x16x8xbf16>
    %18 = vector.shape_cast %17 : vector<1x1x16x8xbf16> to vector<16x8xbf16>
    %19 = arith.extf %18 : vector<16x8xbf16> to vector<16x8xf32>
    %c0_24 = arith.constant 0 : index
    %c0_25 = arith.constant 0 : index
    %c0_26 = arith.constant 0 : index
    %c0_27 = arith.constant 0 : index
    %20 = vector.load %arg9[%c0_24, %c0_25, %c0_26, %c0_27] : memref<1x1x16x8xbf16, #tpu.memory_space<vmem>>, vector<1x1x16x8xbf16>
    %21 = vector.shape_cast %20 : vector<1x1x16x8xbf16> to vector<16x8xbf16>
    %22 = arith.extf %21 : vector<16x8xbf16> to vector<16x8xf32>
    %c0_28 = arith.constant 0 : index
    %c0_29 = arith.constant 0 : index
    %c0_30 = arith.constant 0 : index
    %23 = vector.load %arg10[%c0_28, %c0_29, %c0_30] : memref<1x1x32xf32, #tpu.memory_space<vmem>>, vector<1x1x32xf32>
    %24 = vector.shape_cast %23 : vector<1x1x32xf32> to vector<1x32xf32>
    %c0_31 = arith.constant 0 : index
    %c0_32 = arith.constant 0 : index
    %c0_33 = arith.constant 0 : index
    %25 = vector.load %arg11[%c0_31, %c0_32, %c0_33] : memref<1x1x64xf32, #tpu.memory_space<vmem>>, vector<1x1x64xf32>
    %26 = vector.shape_cast %25 : vector<1x1x64xf32> to vector<1x64xf32>
    %27 = arith.extf %16 : vector<16x8x32xbf16> to vector<16x8x32xf32>
    %28 = vector.shape_cast %24 : vector<1x32xf32> to vector<1x1x32xf32>
    %29 = vector.broadcast %28 : vector<1x1x32xf32> to vector<16x8x32xf32>
    %30 = arith.addf %27, %29 : vector<16x8x32xf32>
    %31 = vector.shape_cast %19 : vector<16x8xf32> to vector<16x8x1xf32>
    %32 = vector.broadcast %31 : vector<16x8x1xf32> to vector<16x8x32xf32>
    %33 = arith.mulf %30, %32 : vector<16x8x32xf32>
    %34 = vector.shape_cast %3 : vector<16x32xf32> to vector<16x1x32xf32>
    %35 = vector.broadcast %34 : vector<16x1x32xf32> to vector<16x8x32xf32>
    %36 = arith.addf %35, %33 : vector<16x8x32xf32>
    %cst = arith.constant 0.000000e+00 : f32
    %37 = vector.broadcast %cst : f32 to vector<16x8x32xf32>
    %38 = arith.maximumf %36, %37 : vector<16x8x32xf32>
    %39 = vector.shape_cast %22 : vector<16x8xf32> to vector<16x8x1xf32>
    %40 = vector.broadcast %39 : vector<16x8x1xf32> to vector<16x8x32xf32>
    %41 = arith.mulf %38, %40 : vector<16x8x32xf32>
    %cst_34 = arith.constant dense<0.000000e+00> : vector<8x32xf32>
    %42 = vector.multi_reduction <add>, %41, %cst_34 [0] : vector<16x8x32xf32> to vector<8x32xf32>
    %c0_35 = arith.constant 0 : index
    %c0_36 = arith.constant 0 : index
    %c0_37 = arith.constant 0 : index
    %43 = vector.load %arg12[%c0_35, %c0_36, %c0_37] : memref<2x32x32xbf16, #tpu.memory_space<vmem>>, vector<2x32x32xbf16>
    %44 = arith.addf %42, %6 : vector<8x32xf32>
    %45 = arith.truncf %44 : vector<8x32xf32> to vector<8x32xbf16>
    %46 = vector.extract_strided_slice %43 {offsets = [0, 0, 0], sizes = [1, 32, 32], strides = [1, 1, 1]} : vector<2x32x32xbf16> to vector<1x32x32xbf16>
    %47 = vector.shape_cast %46 : vector<1x32x32xbf16> to vector<32x32xbf16>
    %cst_38 = arith.constant dense<0.000000e+00> : vector<8x32xf32>
    %48 = tpu.matmul %45, %47, %cst_38 {dimension_numbers = #tpu.dot_dimension_numbers<[1], [0], [0], [1], [0, 0, 1, 1], [], []>} : vector<8x32xbf16>, vector<32x32xbf16>, vector<8x32xf32> -> vector<8x32xf32>
    %c0_39 = arith.constant 0 : index
    %c0_40 = arith.constant 0 : index
    %49 = vector.load %arg13[%c0_39, %c0_40] : memref<2x32xf32, #tpu.memory_space<vmem>>, vector<1x32xf32>
    %50 = vector.broadcast %49 : vector<1x32xf32> to vector<8x32xf32>
    %51 = arith.addf %48, %50 : vector<8x32xf32>
    %cst_41 = arith.constant 0.000000e+00 : f32
    %52 = vector.broadcast %cst_41 : f32 to vector<8x32xf32>
    %53 = arith.maximumf %51, %52 : vector<8x32xf32>
    %54 = arith.truncf %53 : vector<8x32xf32> to vector<8x32xbf16>
    %55 = vector.extract_strided_slice %43 {offsets = [1, 0, 0], sizes = [1, 32, 32], strides = [1, 1, 1]} : vector<2x32x32xbf16> to vector<1x32x32xbf16>
    %56 = vector.shape_cast %55 : vector<1x32x32xbf16> to vector<32x32xbf16>
    %cst_42 = arith.constant dense<0.000000e+00> : vector<8x32xf32>
    %57 = tpu.matmul %54, %56, %cst_42 {dimension_numbers = #tpu.dot_dimension_numbers<[1], [0], [0], [1], [0, 0, 1, 1], [], []>} : vector<8x32xbf16>, vector<32x32xbf16>, vector<8x32xf32> -> vector<8x32xf32>
    %c1 = arith.constant 1 : index
    %c0_43 = arith.constant 0 : index
    %58 = vector.load %arg13[%c1, %c0_43] : memref<2x32xf32, #tpu.memory_space<vmem>>, vector<1x32xf32>
    %59 = vector.broadcast %58 : vector<1x32xf32> to vector<8x32xf32>
    %60 = arith.addf %57, %59 : vector<8x32xf32>
    %61 = vector.broadcast %10 : vector<8x1xf32> to vector<8x32xf32>
    %62 = arith.mulf %60, %61 : vector<8x32xf32>
    %63 = arith.addf %8, %62 : vector<8x32xf32>
    %c0_44 = arith.constant 0 : index
    %c0_45 = arith.constant 0 : index
    %64 = vector.load %arg19[%c0_44, %c0_45] : memref<3x32xf32, #tpu.memory_space<vmem>>, vector<1x32xf32>
    %c0_46 = arith.constant 0 : index
    %c0_47 = arith.constant 0 : index
    %65 = vector.load %arg20[%c0_46, %c0_47] : memref<3x32xf32, #tpu.memory_space<vmem>>, vector<1x32xf32>
    %c0_48 = arith.constant 0 : index
    %c0_49 = arith.constant 0 : index
    %66 = vector.load %arg21[%c0_48, %c0_49] : memref<32x8xf32, #tpu.memory_space<vmem>>, vector<32x8xf32>
    %cst_50 = arith.constant dense<0.000000e+00> : vector<8x8xf32>
    %67 = tpu.matmul %63, %66, %cst_50 {dimension_numbers = #tpu.dot_dimension_numbers<[1], [0], [0], [1], [0, 0, 1, 1], [], []>} : vector<8x32xf32>, vector<32x8xf32>, vector<8x8xf32> -> vector<8x8xf32>
    %cst_51 = arith.constant 2.500000e-01 : f32
    %68 = vector.broadcast %cst_51 : f32 to vector<8x8xf32>
    %69 = arith.mulf %67, %68 : vector<8x8xf32>
    %c0_52 = arith.constant 0 : index
    %c0_53 = arith.constant 0 : index
    %70 = vector.load %arg22[%c0_52, %c0_53] : memref<8x32xf32, #tpu.memory_space<vmem>>, vector<8x32xf32>
    %cst_54 = arith.constant dense<0.000000e+00> : vector<8x32xf32>
    %71 = tpu.matmul %69, %70, %cst_54 {dimension_numbers = #tpu.dot_dimension_numbers<[1], [0], [0], [1], [0, 0, 1, 1], [], []>} : vector<8x8xf32>, vector<8x32xf32>, vector<8x32xf32> -> vector<8x32xf32>
    %72 = arith.subf %63, %71 : vector<8x32xf32>
    %73 = arith.mulf %72, %72 : vector<8x32xf32>
    %c0_55 = arith.constant 0 : index
    %c0_56 = arith.constant 0 : index
    %74 = vector.load %arg21[%c0_55, %c0_56] : memref<32x8xf32, #tpu.memory_space<vmem>>, vector<32x8xf32>
    %cst_57 = arith.constant dense<0.000000e+00> : vector<8x8xf32>
    %75 = tpu.matmul %73, %74, %cst_57 {dimension_numbers = #tpu.dot_dimension_numbers<[1], [0], [0], [1], [0, 0, 1, 1], [], []>} : vector<8x32xf32>, vector<32x8xf32>, vector<8x8xf32> -> vector<8x8xf32>
    %cst_58 = arith.constant 2.500000e-01 : f32
    %76 = vector.broadcast %cst_58 : f32 to vector<8x8xf32>
    %77 = arith.mulf %75, %76 : vector<8x8xf32>
    %c0_59 = arith.constant 0 : index
    %c0_60 = arith.constant 0 : index
    %78 = vector.load %arg22[%c0_59, %c0_60] : memref<8x32xf32, #tpu.memory_space<vmem>>, vector<8x32xf32>
    %cst_61 = arith.constant dense<0.000000e+00> : vector<8x32xf32>
    %79 = tpu.matmul %77, %78, %cst_61 {dimension_numbers = #tpu.dot_dimension_numbers<[1], [0], [0], [1], [0, 0, 1, 1], [], []>} : vector<8x8xf32>, vector<8x32xf32>, vector<8x32xf32> -> vector<8x32xf32>
    %cst_62 = arith.constant 9.99999997E-7 : f32
    %80 = vector.broadcast %cst_62 : f32 to vector<8x32xf32>
    %81 = arith.addf %79, %80 : vector<8x32xf32>
    %82 = math.rsqrt %81 : vector<8x32xf32>
    %83 = arith.mulf %72, %82 : vector<8x32xf32>
    %84 = vector.broadcast %64 : vector<1x32xf32> to vector<8x32xf32>
    %85 = arith.mulf %83, %84 : vector<8x32xf32>
    %86 = vector.broadcast %65 : vector<1x32xf32> to vector<8x32xf32>
    %87 = arith.addf %85, %86 : vector<8x32xf32>
    %88 = vector.extract_strided_slice %14 {offsets = [0, 0], sizes = [16, 32], strides = [1, 1]} : vector<16x64xf32> to vector<16x32xf32>
    %89 = vector.extract_strided_slice %14 {offsets = [0, 32], sizes = [16, 32], strides = [1, 1]} : vector<16x64xf32> to vector<16x32xf32>
    %90 = vector.shape_cast %16 : vector<16x8x32xbf16> to vector<128x32xbf16>
    %c0_63 = arith.constant 0 : index
    %c0_64 = arith.constant 0 : index
    %91 = vector.load %arg14[%c0_63, %c0_64] : memref<32x64xbf16, #tpu.memory_space<vmem>>, vector<32x64xbf16>
    %cst_65 = arith.constant dense<0.000000e+00> : vector<128x64xf32>
    %92 = tpu.matmul %90, %91, %cst_65 {dimension_numbers = #tpu.dot_dimension_numbers<[1], [0], [0], [1], [0, 0, 1, 1], [], []>} : vector<128x32xbf16>, vector<32x64xbf16>, vector<128x64xf32> -> vector<128x64xf32>
    %93 = vector.broadcast %26 : vector<1x64xf32> to vector<128x64xf32>
    %94 = arith.addf %92, %93 : vector<128x64xf32>
    %95 = vector.shape_cast %94 : vector<128x64xf32> to vector<16x8x64xf32>
    %96 = vector.extract_strided_slice %95 {offsets = [0, 0, 0], sizes = [16, 8, 32], strides = [1, 1, 1]} : vector<16x8x64xf32> to vector<16x8x32xf32>
    %97 = vector.extract_strided_slice %95 {offsets = [0, 0, 32], sizes = [16, 8, 32], strides = [1, 1, 1]} : vector<16x8x64xf32> to vector<16x8x32xf32>
    %98 = arith.negf %97 : vector<16x8x32xf32>
    %99 = math.exp %98 : vector<16x8x32xf32>
    %cst_66 = arith.constant 1.000000e+00 : f32
    %100 = vector.broadcast %cst_66 : f32 to vector<16x8x32xf32>
    %101 = arith.addf %100, %99 : vector<16x8x32xf32>
    %102 = arith.divf %100, %101 : vector<16x8x32xf32>
    %103 = vector.shape_cast %88 : vector<16x32xf32> to vector<16x1x32xf32>
    %104 = vector.broadcast %103 : vector<16x1x32xf32> to vector<16x8x32xf32>
    %105 = arith.mulf %96, %104 : vector<16x8x32xf32>
    %106 = vector.shape_cast %12 : vector<8x32xf32> to vector<1x8x32xf32>
    %107 = vector.broadcast %106 : vector<1x8x32xf32> to vector<16x8x32xf32>
    %108 = arith.mulf %105, %107 : vector<16x8x32xf32>
    %109 = vector.shape_cast %108 : vector<16x8x32xf32> to vector<128x32xf32>
    %c0_67 = arith.constant 0 : index
    %c0_68 = arith.constant 0 : index
    %110 = vector.load %arg23[%c0_67, %c0_68] : memref<32x8xf32, #tpu.memory_space<vmem>>, vector<32x8xf32>
    %cst_69 = arith.constant dense<0.000000e+00> : vector<128x8xf32>
    %111 = tpu.matmul %109, %110, %cst_69 {dimension_numbers = #tpu.dot_dimension_numbers<[1], [0], [0], [1], [0, 0, 1, 1], [], []>} : vector<128x32xf32>, vector<32x8xf32>, vector<128x8xf32> -> vector<128x8xf32>
    %112 = vector.shape_cast %111 : vector<128x8xf32> to vector<16x8x8xf32>
    %113 = vector.shape_cast %19 : vector<16x8xf32> to vector<16x8x1xf32>
    %cst_70 = arith.constant 0.000000e+00 : f32
    %114 = vector.broadcast %cst_70 : f32 to vector<16x8x1xf32>
    %115 = arith.cmpf ogt, %113, %114 : vector<16x8x1xf32>
    %cst_71 = arith.constant 5.000000e-01 : f32
    %116 = vector.broadcast %cst_71 : f32 to vector<16x8x8xf32>
    %117 = arith.mulf %112, %116 : vector<16x8x8xf32>
    %cst_72 = arith.constant -1.000000e+30 : f32
    %118 = vector.shape_cast %115 : vector<16x8x1xi1> to vector<16x8x1xi1>
    %119 = vector.broadcast %118 : vector<16x8x1xi1> to vector<16x8x8xi1>
    %120 = vector.broadcast %cst_72 : f32 to vector<16x8x8xf32>
    %121 = arith.select %119, %117, %120 : vector<16x8x8xi1>, vector<16x8x8xf32>
    %cst_73 = arith.constant dense<0xFF800000> : vector<8x8xf32>
    %122 = vector.multi_reduction <maximumf>, %121, %cst_73 [0] : vector<16x8x8xf32> to vector<8x8xf32>
    %123 = vector.shape_cast %122 : vector<8x8xf32> to vector<1x8x8xf32>
    %124 = vector.broadcast %123 : vector<1x8x8xf32> to vector<16x8x8xf32>
    %125 = arith.subf %121, %124 : vector<16x8x8xf32>
    %126 = math.exp %125 : vector<16x8x8xf32>
    %127 = vector.broadcast %113 : vector<16x8x1xf32> to vector<16x8x8xf32>
    %128 = arith.mulf %126, %127 : vector<16x8x8xf32>
    %cst_74 = arith.constant dense<0.000000e+00> : vector<8x8xf32>
    %129 = vector.multi_reduction <add>, %128, %cst_74 [0] : vector<16x8x8xf32> to vector<8x8xf32>
    %130 = vector.shape_cast %129 : vector<8x8xf32> to vector<1x8x8xf32>
    %cst_75 = arith.constant 1.000000e-30 : f32
    %131 = vector.broadcast %cst_75 : f32 to vector<1x8x8xf32>
    %132 = arith.maximumf %130, %131 : vector<1x8x8xf32>
    %133 = tpu.reciprocal %132 {approx = true} : vector<1x8x8xf32> -> vector<1x8x8xf32>
    %134 = vector.broadcast %133 : vector<1x8x8xf32> to vector<16x8x8xf32>
    %135 = arith.mulf %128, %134 : vector<16x8x8xf32>
    %136 = vector.shape_cast %135 : vector<16x8x8xf32> to vector<128x8xf32>
    %c0_76 = arith.constant 0 : index
    %c0_77 = arith.constant 0 : index
    %137 = vector.load %arg24[%c0_76, %c0_77] : memref<8x32xf32, #tpu.memory_space<vmem>>, vector<8x32xf32>
    %cst_78 = arith.constant dense<0.000000e+00> : vector<128x32xf32>
    %138 = tpu.matmul %136, %137, %cst_78 {dimension_numbers = #tpu.dot_dimension_numbers<[1], [0], [0], [1], [0, 0, 1, 1], [], []>} : vector<128x8xf32>, vector<8x32xf32>, vector<128x32xf32> -> vector<128x32xf32>
    %139 = vector.shape_cast %138 : vector<128x32xf32> to vector<16x8x32xf32>
    %140 = arith.mulf %139, %102 : vector<16x8x32xf32>
    %141 = vector.shape_cast %89 : vector<16x32xf32> to vector<16x1x32xf32>
    %142 = vector.broadcast %141 : vector<16x1x32xf32> to vector<16x8x32xf32>
    %143 = arith.mulf %140, %142 : vector<16x8x32xf32>
    %cst_79 = arith.constant dense<0.000000e+00> : vector<8x32xf32>
    %144 = vector.multi_reduction <add>, %143, %cst_79 [0] : vector<16x8x32xf32> to vector<8x32xf32>
    %145 = arith.addf %8, %144 : vector<8x32xf32>
    %c1_80 = arith.constant 1 : index
    %c0_81 = arith.constant 0 : index
    %146 = vector.load %arg19[%c1_80, %c0_81] : memref<3x32xf32, #tpu.memory_space<vmem>>, vector<1x32xf32>
    %c1_82 = arith.constant 1 : index
    %c0_83 = arith.constant 0 : index
    %147 = vector.load %arg20[%c1_82, %c0_83] : memref<3x32xf32, #tpu.memory_space<vmem>>, vector<1x32xf32>
    %c0_84 = arith.constant 0 : index
    %c0_85 = arith.constant 0 : index
    %148 = vector.load %arg21[%c0_84, %c0_85] : memref<32x8xf32, #tpu.memory_space<vmem>>, vector<32x8xf32>
    %cst_86 = arith.constant dense<0.000000e+00> : vector<8x8xf32>
    %149 = tpu.matmul %145, %148, %cst_86 {dimension_numbers = #tpu.dot_dimension_numbers<[1], [0], [0], [1], [0, 0, 1, 1], [], []>} : vector<8x32xf32>, vector<32x8xf32>, vector<8x8xf32> -> vector<8x8xf32>
    %cst_87 = arith.constant 2.500000e-01 : f32
    %150 = vector.broadcast %cst_87 : f32 to vector<8x8xf32>
    %151 = arith.mulf %149, %150 : vector<8x8xf32>
    %c0_88 = arith.constant 0 : index
    %c0_89 = arith.constant 0 : index
    %152 = vector.load %arg22[%c0_88, %c0_89] : memref<8x32xf32, #tpu.memory_space<vmem>>, vector<8x32xf32>
    %cst_90 = arith.constant dense<0.000000e+00> : vector<8x32xf32>
    %153 = tpu.matmul %151, %152, %cst_90 {dimension_numbers = #tpu.dot_dimension_numbers<[1], [0], [0], [1], [0, 0, 1, 1], [], []>} : vector<8x8xf32>, vector<8x32xf32>, vector<8x32xf32> -> vector<8x32xf32>
    %154 = arith.subf %145, %153 : vector<8x32xf32>
    %155 = arith.mulf %154, %154 : vector<8x32xf32>
    %c0_91 = arith.constant 0 : index
    %c0_92 = arith.constant 0 : index
    %156 = vector.load %arg21[%c0_91, %c0_92] : memref<32x8xf32, #tpu.memory_space<vmem>>, vector<32x8xf32>
    %cst_93 = arith.constant dense<0.000000e+00> : vector<8x8xf32>
    %157 = tpu.matmul %155, %156, %cst_93 {dimension_numbers = #tpu.dot_dimension_numbers<[1], [0], [0], [1], [0, 0, 1, 1], [], []>} : vector<8x32xf32>, vector<32x8xf32>, vector<8x8xf32> -> vector<8x8xf32>
    %cst_94 = arith.constant 2.500000e-01 : f32
    %158 = vector.broadcast %cst_94 : f32 to vector<8x8xf32>
    %159 = arith.mulf %157, %158 : vector<8x8xf32>
    %c0_95 = arith.constant 0 : index
    %c0_96 = arith.constant 0 : index
    %160 = vector.load %arg22[%c0_95, %c0_96] : memref<8x32xf32, #tpu.memory_space<vmem>>, vector<8x32xf32>
    %cst_97 = arith.constant dense<0.000000e+00> : vector<8x32xf32>
    %161 = tpu.matmul %159, %160, %cst_97 {dimension_numbers = #tpu.dot_dimension_numbers<[1], [0], [0], [1], [0, 0, 1, 1], [], []>} : vector<8x8xf32>, vector<8x32xf32>, vector<8x32xf32> -> vector<8x32xf32>
    %cst_98 = arith.constant 9.99999997E-7 : f32
    %162 = vector.broadcast %cst_98 : f32 to vector<8x32xf32>
    %163 = arith.addf %161, %162 : vector<8x32xf32>
    %164 = math.rsqrt %163 : vector<8x32xf32>
    %165 = arith.mulf %154, %164 : vector<8x32xf32>
    %166 = vector.broadcast %146 : vector<1x32xf32> to vector<8x32xf32>
    %167 = arith.mulf %165, %166 : vector<8x32xf32>
    %168 = vector.broadcast %147 : vector<1x32xf32> to vector<8x32xf32>
    %169 = arith.addf %167, %168 : vector<8x32xf32>
    %170 = arith.addf %87, %169 : vector<8x32xf32>
    %171 = vector.broadcast %10 : vector<8x1xf32> to vector<8x32xf32>
    %172 = arith.mulf %170, %171 : vector<8x32xf32>
    %173 = arith.truncf %172 : vector<8x32xf32> to vector<8x32xbf16>
    %c0_99 = arith.constant 0 : index
    %c0_100 = arith.constant 0 : index
    %174 = vector.load %arg15[%c0_99, %c0_100] : memref<32x64xbf16, #tpu.memory_space<vmem>>, vector<32x64xbf16>
    %cst_101 = arith.constant dense<0.000000e+00> : vector<8x64xf32>
    %175 = tpu.matmul %173, %174, %cst_101 {dimension_numbers = #tpu.dot_dimension_numbers<[1], [0], [0], [1], [0, 0, 1, 1], [], []>} : vector<8x32xbf16>, vector<32x64xbf16>, vector<8x64xf32> -> vector<8x64xf32>
    %c0_102 = arith.constant 0 : index
    %c0_103 = arith.constant 0 : index
    %176 = vector.load %arg16[%c0_102, %c0_103] : memref<1x64xf32, #tpu.memory_space<vmem>>, vector<1x64xf32>
    %177 = vector.broadcast %176 : vector<1x64xf32> to vector<8x64xf32>
    %178 = arith.addf %175, %177 : vector<8x64xf32>
    %cst_104 = arith.constant 0.000000e+00 : f32
    %179 = vector.broadcast %cst_104 : f32 to vector<8x64xf32>
    %180 = arith.maximumf %178, %179 : vector<8x64xf32>
    %181 = arith.truncf %180 : vector<8x64xf32> to vector<8x64xbf16>
    %c0_105 = arith.constant 0 : index
    %c0_106 = arith.constant 0 : index
    %182 = vector.load %arg17[%c0_105, %c0_106] : memref<64x32xbf16, #tpu.memory_space<vmem>>, vector<64x32xbf16>
    %cst_107 = arith.constant dense<0.000000e+00> : vector<8x32xf32>
    %183 = tpu.matmul %181, %182, %cst_107 {dimension_numbers = #tpu.dot_dimension_numbers<[1], [0], [0], [1], [0, 0, 1, 1], [], []>} : vector<8x64xbf16>, vector<64x32xbf16>, vector<8x32xf32> -> vector<8x32xf32>
    %c0_108 = arith.constant 0 : index
    %c0_109 = arith.constant 0 : index
    %184 = vector.load %arg18[%c0_108, %c0_109] : memref<1x32xf32, #tpu.memory_space<vmem>>, vector<1x32xf32>
    %185 = vector.broadcast %184 : vector<1x32xf32> to vector<8x32xf32>
    %186 = arith.addf %183, %185 : vector<8x32xf32>
    %187 = arith.addf %172, %186 : vector<8x32xf32>
    %c2 = arith.constant 2 : index
    %c0_110 = arith.constant 0 : index
    %188 = vector.load %arg19[%c2, %c0_110] : memref<3x32xf32, #tpu.memory_space<vmem>>, vector<1x32xf32>
    %c2_111 = arith.constant 2 : index
    %c0_112 = arith.constant 0 : index
    %189 = vector.load %arg20[%c2_111, %c0_112] : memref<3x32xf32, #tpu.memory_space<vmem>>, vector<1x32xf32>
    %c0_113 = arith.constant 0 : index
    %c0_114 = arith.constant 0 : index
    %190 = vector.load %arg21[%c0_113, %c0_114] : memref<32x8xf32, #tpu.memory_space<vmem>>, vector<32x8xf32>
    %cst_115 = arith.constant dense<0.000000e+00> : vector<8x8xf32>
    %191 = tpu.matmul %187, %190, %cst_115 {dimension_numbers = #tpu.dot_dimension_numbers<[1], [0], [0], [1], [0, 0, 1, 1], [], []>} : vector<8x32xf32>, vector<32x8xf32>, vector<8x8xf32> -> vector<8x8xf32>
    %cst_116 = arith.constant 2.500000e-01 : f32
    %192 = vector.broadcast %cst_116 : f32 to vector<8x8xf32>
    %193 = arith.mulf %191, %192 : vector<8x8xf32>
    %c0_117 = arith.constant 0 : index
    %c0_118 = arith.constant 0 : index
    %194 = vector.load %arg22[%c0_117, %c0_118] : memref<8x32xf32, #tpu.memory_space<vmem>>, vector<8x32xf32>
    %cst_119 = arith.constant dense<0.000000e+00> : vector<8x32xf32>
    %195 = tpu.matmul %193, %194, %cst_119 {dimension_numbers = #tpu.dot_dimension_numbers<[1], [0], [0], [1], [0, 0, 1, 1], [], []>} : vector<8x8xf32>, vector<8x32xf32>, vector<8x32xf32> -> vector<8x32xf32>
    %196 = arith.subf %187, %195 : vector<8x32xf32>
    %197 = arith.mulf %196, %196 : vector<8x32xf32>
    %c0_120 = arith.constant 0 : index
    %c0_121 = arith.constant 0 : index
    %198 = vector.load %arg21[%c0_120, %c0_121] : memref<32x8xf32, #tpu.memory_space<vmem>>, vector<32x8xf32>
    %cst_122 = arith.constant dense<0.000000e+00> : vector<8x8xf32>
    %199 = tpu.matmul %197, %198, %cst_122 {dimension_numbers = #tpu.dot_dimension_numbers<[1], [0], [0], [1], [0, 0, 1, 1], [], []>} : vector<8x32xf32>, vector<32x8xf32>, vector<8x8xf32> -> vector<8x8xf32>
    %cst_123 = arith.constant 2.500000e-01 : f32
    %200 = vector.broadcast %cst_123 : f32 to vector<8x8xf32>
    %201 = arith.mulf %199, %200 : vector<8x8xf32>
    %c0_124 = arith.constant 0 : index
    %c0_125 = arith.constant 0 : index
    %202 = vector.load %arg22[%c0_124, %c0_125] : memref<8x32xf32, #tpu.memory_space<vmem>>, vector<8x32xf32>
    %cst_126 = arith.constant dense<0.000000e+00> : vector<8x32xf32>
    %203 = tpu.matmul %201, %202, %cst_126 {dimension_numbers = #tpu.dot_dimension_numbers<[1], [0], [0], [1], [0, 0, 1, 1], [], []>} : vector<8x8xf32>, vector<8x32xf32>, vector<8x32xf32> -> vector<8x32xf32>
    %cst_127 = arith.constant 9.99999997E-7 : f32
    %204 = vector.broadcast %cst_127 : f32 to vector<8x32xf32>
    %205 = arith.addf %203, %204 : vector<8x32xf32>
    %206 = math.rsqrt %205 : vector<8x32xf32>
    %207 = arith.mulf %196, %206 : vector<8x32xf32>
    %208 = vector.broadcast %188 : vector<1x32xf32> to vector<8x32xf32>
    %209 = arith.mulf %207, %208 : vector<8x32xf32>
    %210 = vector.broadcast %189 : vector<1x32xf32> to vector<8x32xf32>
    %211 = arith.addf %209, %210 : vector<8x32xf32>
    %212 = vector.broadcast %10 : vector<8x1xf32> to vector<8x32xf32>
    %213 = arith.mulf %211, %212 : vector<8x32xf32>
    %c0_128 = arith.constant 0 : index
    %c0_129 = arith.constant 0 : index
    %c0_130 = arith.constant 0 : index
    %214 = vector.load %arg25[%c0_128, %c0_129, %c0_130] : memref<1x8x32xf32, #tpu.memory_space<vmem>>, vector<1x8x32xf32>
    %215 = vector.shape_cast %214 : vector<1x8x32xf32> to vector<8x32xf32>
    %216 = vector.shape_cast %213 : vector<8x32xf32> to vector<1x8x32xf32>
    tpu.vector_store %arg25[%c0_128, %c0_129, %c0_130], %216 {strides = array<i32>} : memref<1x8x32xf32, #tpu.memory_space<vmem>>, vector<1x8x32xf32>,
    %c0_131 = arith.constant 0 : index
    %c0_132 = arith.constant 0 : index
    %c0_133 = arith.constant 0 : index
    %217 = vector.load %arg26[%c0_131, %c0_132, %c0_133] : memref<1x8x32xf32, #tpu.memory_space<vmem>>, vector<1x8x32xf32>
    %218 = vector.shape_cast %217 : vector<1x8x32xf32> to vector<8x32xf32>
    %219 = vector.shape_cast %172 : vector<8x32xf32> to vector<1x8x32xf32>
    tpu.vector_store %arg26[%c0_131, %c0_132, %c0_133], %219 {strides = array<i32>} : memref<1x8x32xf32, #tpu.memory_space<vmem>>, vector<1x8x32xf32>,
    return
  }
  func.func @transform_0(%arg0: i32, %arg1: i32) -> (i32, i32, i32) {
    %c0_i32 = arith.constant 0 : i32
    %c0_i32_0 = arith.constant 0 : i32
    %c0_i32_1 = arith.constant 0 : i32
    return %arg0, %c0_i32, %c0_i32_0 : i32, i32, i32
  }
  func.func @transform_1(%arg0: i32, %arg1: i32) -> (i32, i32, i32) {
    %c0_i32 = arith.constant 0 : i32
    %c0_i32_0 = arith.constant 0 : i32
    return %arg0, %arg1, %c0_i32 : i32, i32, i32
  }
  func.func @transform_2(%arg0: i32, %arg1: i32) -> (i32, i32, i32) {
    %c0_i32 = arith.constant 0 : i32
    %c0_i32_0 = arith.constant 0 : i32
    return %arg0, %arg1, %c0_i32 : i32, i32, i32
  }
  func.func @transform_3(%arg0: i32, %arg1: i32) -> (i32, i32, i32) {
    %c0_i32 = arith.constant 0 : i32
    %c0_i32_0 = arith.constant 0 : i32
    return %arg0, %arg1, %c0_i32 : i32, i32, i32
  }
  func.func @transform_4(%arg0: i32, %arg1: i32) -> (i32, i32, i32) {
    %c0_i32 = arith.constant 0 : i32
    %c0_i32_0 = arith.constant 0 : i32
    %c0_i32_1 = arith.constant 0 : i32
    return %arg0, %c0_i32, %c0_i32_0 : i32, i32, i32
  }
  func.func @transform_5(%arg0: i32, %arg1: i32) -> (i32, i32, i32, i32) {
    %c0_i32 = arith.constant 0 : i32
    %c0_i32_0 = arith.constant 0 : i32
    %c0_i32_1 = arith.constant 0 : i32
    return %arg0, %c0_i32, %arg1, %c0_i32_0 : i32, i32, i32, i32
  }
  func.func @transform_6(%arg0: i32, %arg1: i32) -> (i32, i32, i32, i32) {
    %c0_i32 = arith.constant 0 : i32
    %c0_i32_0 = arith.constant 0 : i32
    %c0_i32_1 = arith.constant 0 : i32
    return %arg0, %arg1, %c0_i32, %c0_i32_0 : i32, i32, i32, i32
  }
  func.func @transform_7(%arg0: i32, %arg1: i32) -> (i32, i32, i32, i32) {
    %c0_i32 = arith.constant 0 : i32
    %c0_i32_0 = arith.constant 0 : i32
    %c0_i32_1 = arith.constant 0 : i32
    return %arg0, %arg1, %c0_i32, %c0_i32_0 : i32, i32, i32, i32
  }
  func.func @transform_8(%arg0: i32, %arg1: i32) -> (i32, i32, i32) {
    %c0_i32 = arith.constant 0 : i32
    %c0_i32_0 = arith.constant 0 : i32
    %c0_i32_1 = arith.constant 0 : i32
    return %arg0, %c0_i32, %c0_i32_0 : i32, i32, i32
  }
  func.func @transform_9(%arg0: i32, %arg1: i32) -> (i32, i32, i32) {
    %c0_i32 = arith.constant 0 : i32
    %c0_i32_0 = arith.constant 0 : i32
    %c0_i32_1 = arith.constant 0 : i32
    return %arg0, %c0_i32, %c0_i32_0 : i32, i32, i32
  }
  func.func @transform_10(%arg0: i32, %arg1: i32) -> (i32, i32, i32) {
    %c0_i32 = arith.constant 0 : i32
    %c0_i32_0 = arith.constant 0 : i32
    %c0_i32_1 = arith.constant 0 : i32
    %c0_i32_2 = arith.constant 0 : i32
    return %c0_i32, %c0_i32_0, %c0_i32_1 : i32, i32, i32
  }
  func.func @transform_11(%arg0: i32, %arg1: i32) -> (i32, i32) {
    %c0_i32 = arith.constant 0 : i32
    %c0_i32_0 = arith.constant 0 : i32
    %c0_i32_1 = arith.constant 0 : i32
    return %c0_i32, %c0_i32_0 : i32, i32
  }
  func.func @transform_12(%arg0: i32, %arg1: i32) -> (i32, i32) {
    %c0_i32 = arith.constant 0 : i32
    %c0_i32_0 = arith.constant 0 : i32
    %c0_i32_1 = arith.constant 0 : i32
    return %c0_i32, %c0_i32_0 : i32, i32
  }
  func.func @transform_13(%arg0: i32, %arg1: i32) -> (i32, i32) {
    %c0_i32 = arith.constant 0 : i32
    %c0_i32_0 = arith.constant 0 : i32
    %c0_i32_1 = arith.constant 0 : i32
    return %c0_i32, %c0_i32_0 : i32, i32
  }
  func.func @transform_14(%arg0: i32, %arg1: i32) -> (i32, i32) {
    %c0_i32 = arith.constant 0 : i32
    %c0_i32_0 = arith.constant 0 : i32
    %c0_i32_1 = arith.constant 0 : i32
    return %c0_i32, %c0_i32_0 : i32, i32
  }
  func.func @transform_15(%arg0: i32, %arg1: i32) -> (i32, i32) {
    %c0_i32 = arith.constant 0 : i32
    %c0_i32_0 = arith.constant 0 : i32
    %c0_i32_1 = arith.constant 0 : i32
    return %c0_i32, %c0_i32_0 : i32, i32
  }
  func.func @transform_16(%arg0: i32, %arg1: i32) -> (i32, i32) {
    %c0_i32 = arith.constant 0 : i32
    %c0_i32_0 = arith.constant 0 : i32
    %c0_i32_1 = arith.constant 0 : i32
    return %c0_i32, %c0_i32_0 : i32, i32
  }
  func.func @transform_17(%arg0: i32, %arg1: i32) -> (i32, i32) {
    %c0_i32 = arith.constant 0 : i32
    %c0_i32_0 = arith.constant 0 : i32
    %c0_i32_1 = arith.constant 0 : i32
    return %c0_i32, %c0_i32_0 : i32, i32
  }
  func.func @transform_18(%arg0: i32, %arg1: i32) -> (i32, i32) {
    %c0_i32 = arith.constant 0 : i32
    %c0_i32_0 = arith.constant 0 : i32
    %c0_i32_1 = arith.constant 0 : i32
    return %c0_i32, %c0_i32_0 : i32, i32
  }
  func.func @transform_19(%arg0: i32, %arg1: i32) -> (i32, i32) {
    %c0_i32 = arith.constant 0 : i32
    %c0_i32_0 = arith.constant 0 : i32
    %c0_i32_1 = arith.constant 0 : i32
    return %c0_i32, %c0_i32_0 : i32, i32
  }
  func.func @transform_20(%arg0: i32, %arg1: i32) -> (i32, i32) {
    %c0_i32 = arith.constant 0 : i32
    %c0_i32_0 = arith.constant 0 : i32
    %c0_i32_1 = arith.constant 0 : i32
    return %c0_i32, %c0_i32_0 : i32, i32
  }
  func.func @transform_21(%arg0: i32, %arg1: i32) -> (i32, i32) {
    %c0_i32 = arith.constant 0 : i32
    %c0_i32_0 = arith.constant 0 : i32
    %c0_i32_1 = arith.constant 0 : i32
    return %c0_i32, %c0_i32_0 : i32, i32
  }
  func.func @transform_22(%arg0: i32, %arg1: i32) -> (i32, i32) {
    %c0_i32 = arith.constant 0 : i32
    %c0_i32_0 = arith.constant 0 : i32
    %c0_i32_1 = arith.constant 0 : i32
    return %c0_i32, %c0_i32_0 : i32, i32
  }
  func.func @transform_23(%arg0: i32, %arg1: i32) -> (i32, i32, i32) {
    %c0_i32 = arith.constant 0 : i32
    %c0_i32_0 = arith.constant 0 : i32
    return %arg0, %arg1, %c0_i32 : i32, i32, i32
  }
  func.func @transform_24(%arg0: i32, %arg1: i32) -> (i32, i32, i32) {
    %c0_i32 = arith.constant 0 : i32
    %c0_i32_0 = arith.constant 0 : i32
    return %arg0, %arg1, %c0_i32 : i32, i32, i32
  }
}

</mosaic_0001>

<llo_original>
// kernel: hybrid_mp_block.3
$region0: #{hybrid_mp_block.3}
  #allocation0 [shape = 'u32[]', space=smem, size = 0x4, offset = 0x4, fixed_abs, tag = 'smem constant byte address 0x4 - core index']
  #allocation1 [shape = 'u32[144,128]{1,0:T(1,128)}', space=vmem, size = 0x12000, scoped, tag = 'internal scratch']
  #allocation2 [shape = 'f32[2,32]{1,0:T(2,128)}', space=vmem, size = 0x400, scoped, tag = 'scratch operand']
  %s0 = inlined_call_operand.vmem [shape: f32[2,16,64], index: 0, kind: input, shape index: {}]
  %s1 = inlined_call_operand.vmem [shape: bf16[2,16,16,32], index: 1, kind: input, shape index: {}]
  %s2 = inlined_call_operand.vmem [shape: bf16[2,2,16,8], index: 2, kind: input, shape index: {}]
  %s3 = inlined_call_operand.vmem [shape: bf16[64,32], index: 3, kind: input, shape index: {}]
  %s4 = inlined_call_operand.vmem [shape: f32[1,32], index: 4, kind: input, shape index: {}]
  %s5 = inlined_call_operand.vmem [shape: f32[1,32], index: 5, kind: input, shape index: {}]
  %s6 = inlined_call_operand.vmem [shape: f32[1,32], index: 6, kind: input, shape index: {}]
  %s7 = inlined_call_operand.vmem [shape: f32[32,8], index: 7, kind: input, shape index: {}]
  %s8 = inlined_call_operand.vmem [shape: f32[8,32], index: 8, kind: input, shape index: {}]
  %s9 = inlined_call_operand.hbm [shape: bf16[2,16,16,32], index: 9, kind: output, shape index: {}]
  %s10 = sld [smem:[#allocation0]]
  $region122: #{hybrid_mp_block.3} parent=0
    _
  %s12 = ssub.s32 1, %s10
  %s13 = scalar_select 0, %s12, %s10
  $region1: #{hybrid_mp_block.3} parent=0
    #allocation3 [shape = 'u8[65536]{0}', space=vmem, size = 0x10000, scoped, tag = 'input window, operand 1']
    #allocation4 [shape = 'u8[65536]{0}', space=vmem, size = 0x10000, scoped, tag = 'output window, operand 0']
    #allocation5 [shape = 's32[2]{0}', space=sflag, size = 0x8, scoped, tag = 'scoped memory for hybrid_mp_block.3']
    %14 = vsyncpa [#allocation5], 0
    %s15 = scalar_lea.sflag [#allocation5], 1
    %16 = vsyncpa %s15, 0
    loop: start=0, step=1, limit=10
    $region2: #{hybrid_mp_block.3} parent=1 // loop_pre_header
      _
    $region3: #{hybrid_mp_block.3} parent=1 // loop_header
      %s18 = sphi 0, %s22
      %p19 = scmp.ge.s32.totalorder %s18, 10
      %s25 = sphi 0, %s44
      %s26 = sphi 0, %s40
      %s27 = sphi 0, %s36
      %s28 = sphi 0, %s25
      %s29 = sphi 0, %s26
      %s30 = sphi 0, %s27
      %s31 = sphi 0, %s28
      %s32 = sphi 0, %s29
      %s33 = sphi 0, %s30
      %s47 = sphi 0, %s49
      %s50 = sphi 0, %s47
      %s51 = sphi 0, %s50
      %s67 = sphi 0, %s51
      %s75 = sphi 0, %s77
      %s78 = sphi 0, %s75
      %s79 = sphi 0, %s78
      %s95 = sphi 0, %s79
      %s103 = sphi 0, %s105
      %s106 = sphi 0, %s103
      %s107 = sphi 0, %s106
      %s123 = sphi 0, %s107
      %s127 = sphi 0, %s127
      %s129 = sphi 0, %s127
      %s130 = sphi 0, %s129
      %s144 = sphi 0, %s130
      %s148 = sphi 0, %s148
      %s150 = sphi 0, %s148
      %s151 = sphi 0, %s150
      %s165 = sphi 0, %s151
      %s169 = sphi 0, %s169
      %s171 = sphi 0, %s169
      %s172 = sphi 0, %s171
      %s186 = sphi 0, %s172
      %s190 = sphi 0, %s190
      %s192 = sphi 0, %s190
      %s193 = sphi 0, %s192
      %s207 = sphi 0, %s193
      %s211 = sphi 0, %s211
      %s213 = sphi 0, %s211
      %s214 = sphi 0, %s213
      %s228 = sphi 0, %s214
      %s232 = sphi 0, %s232
      %s234 = sphi 0, %s232
      %s235 = sphi 0, %s234
      %s249 = sphi 0, %s235
      %s259 = sphi 0, %s261
      %s262 = sphi 0, %s259
      %s263 = sphi 0, %s262
      %s279 = sphi 0, %s263
    $region4: #{hybrid_mp_block.3} parent=1 // loop_header_branch
      %21 = sbr.rel (%p19) target = $region8
    $region5: #{hybrid_mp_block.3} parent=1 // loop_body
      %s23 = ssub.s32 %s18, 1
      %s24 = ssub.s32 %s18, 2
      %s34 = sadd.s32 1, %s27
      %p35 = scmp.ge.s32.totalorder %s34, 2
      %s36 = scalar_select %p35, 0, %s34
      %s37 = sadd.s32 1, %s26
      %s38 = scalar_select %p35, %s37, %s26
      %p39 = scmp.ge.s32.totalorder %s38, 2
      %s40 = scalar_select %p39, 0, %s38
      %s41 = sadd.s32 1, %s25
      %s42 = scalar_select %p39, %s41, %s25
      %p43 = scmp.ge.s32.totalorder %s42, 2
      %s44 = scalar_select %p43, 0, %s42
      %s45 = ssub.s32 %s25, %s44
      %p46 = scmp.eq.s32.totalorder %s45, 0
      %s48 = sadd.s32 %s47, 1
      %s49 = scalar_select %p46, %s47, %s48
      %p52 = pneg %p46
      %p53 = scmp.eq.s32.totalorder %s18, 7
      %p54 = por %p52, %p53
      %p55 = scmp.ne.s32.totalorder %s47, %s50
      %p56 = scmp.eq.s32.totalorder %s18, 0
      %p57 = por %p55, %p56
      %p58 = scmp.ne.s32.totalorder %s47, %s50
      %p59 = scmp.eq.s32.totalorder %s23, 7
      %p60 = por %p58, %p59
      %p61 = scmp.ne.s32.totalorder %s50, %s51
      %p62 = scmp.eq.s32.totalorder %s23, 0
      %p63 = por %p61, %p62
      %p64 = scmp.ne.s32.totalorder %s50, %s51
      %p65 = scmp.eq.s32.totalorder %s24, 7
      %p66 = por %p64, %p65
      %p68 = scmp.ne.s32.totalorder %s51, %s67
      %p69 = scmp.eq.s32.totalorder %s24, 0
      %p70 = por %p68, %p69
      %s71 = ssub.s32 %s25, %s44
      %s72 = ssub.s32 %s27, %s36
      %s73 = sor.u32 %s71, %s72
      %p74 = scmp.eq.s32.totalorder %s73, 0
      %s76 = sadd.s32 %s75, 1
      %s77 = scalar_select %p74, %s75, %s76
      %p80 = pneg %p74
      %p81 = scmp.eq.s32.totalorder %s18, 7
      %p82 = por %p80, %p81
      %p83 = scmp.ne.s32.totalorder %s75, %s78
      %p84 = scmp.eq.s32.totalorder %s18, 0
      %p85 = por %p83, %p84
      %p86 = scmp.ne.s32.totalorder %s75, %s78
      %p87 = scmp.eq.s32.totalorder %s23, 7
      %p88 = por %p86, %p87
      %p89 = scmp.ne.s32.totalorder %s78, %s79
      %p90 = scmp.eq.s32.totalorder %s23, 0
      %p91 = por %p89, %p90
      %p92 = scmp.ne.s32.totalorder %s78, %s79
      %p93 = scmp.eq.s32.totalorder %s24, 7
      %p94 = por %p92, %p93
      %p96 = scmp.ne.s32.totalorder %s79, %s95
      %p97 = scmp.eq.s32.totalorder %s24, 0
      %p98 = por %p96, %p97
      %s99 = ssub.s32 %s25, %s44
      %s100 = ssub.s32 %s27, %s36
      %s101 = sor.u32 %s99, %s100
      %p102 = scmp.eq.s32.totalorder %s101, 0
      %s104 = sadd.s32 %s103, 1
      %s105 = scalar_select %p102, %s103, %s104
      %p108 = pneg %p102
      %p109 = scmp.eq.s32.totalorder %s18, 7
      %p110 = por %p108, %p109
      %p111 = scmp.ne.s32.totalorder %s103, %s106
      %p112 = scmp.eq.s32.totalorder %s18, 0
      %p113 = por %p111, %p112
      %p114 = scmp.ne.s32.totalorder %s103, %s106
      %p115 = scmp.eq.s32.totalorder %s23, 7
      %p116 = por %p114, %p115
      %p117 = scmp.ne.s32.totalorder %s106, %s107
      %p118 = scmp.eq.s32.totalorder %s23, 0
      %p119 = por %p117, %p118
      %p120 = scmp.ne.s32.totalorder %s106, %s107
      %p121 = scmp.eq.s32.totalorder %s24, 7
      %p122 = por %p120, %p121
      %p124 = scmp.ne.s32.totalorder %s107, %s123
      %p125 = scmp.eq.s32.totalorder %s24, 0
      %p126 = por %p124, %p125
      %s128 = sadd.s32 %s127, 1
      %p131 = scmp.eq.s32.totalorder %s18, 7
      %p132 = scmp.ne.s32.totalorder %s127, %s129
      %p133 = scmp.eq.s32.totalorder %s18, 0
      %p134 = por %p132, %p133
      %p135 = scmp.ne.s32.totalorder %s127, %s129
      %p136 = scmp.eq.s32.totalorder %s23, 7
      %p137 = por %p135, %p136
      %p138 = scmp.ne.s32.totalorder %s129, %s130
      %p139 = scmp.eq.s32.totalorder %s23, 0
      %p140 = por %p138, %p139
      %p141 = scmp.ne.s32.totalorder %s129, %s130
      %p142 = scmp.eq.s32.totalorder %s24, 7
      %p143 = por %p141, %p142
      %p145 = scmp.ne.s32.totalorder %s130, %s144
      %p146 = scmp.eq.s32.totalorder %s24, 0
      %p147 = por %p145, %p146
      %s149 = sadd.s32 %s148, 1
      %p152 = scmp.eq.s32.totalorder %s18, 7
      %p153 = scmp.ne.s32.totalorder %s148, %s150
      %p154 = scmp.eq.s32.totalorder %s18, 0
      %p155 = por %p153, %p154
      %p156 = scmp.ne.s32.totalorder %s148, %s150
      %p157 = scmp.eq.s32.totalorder %s23, 7
      %p158 = por %p156, %p157
      %p159 = scmp.ne.s32.totalorder %s150, %s151
      %p160 = scmp.eq.s32.totalorder %s23, 0
      %p161 = por %p159, %p160
      %p162 = scmp.ne.s32.totalorder %s150, %s151
      %p163 = scmp.eq.s32.totalorder %s24, 7
      %p164 = por %p162, %p163
      %p166 = scmp.ne.s32.totalorder %s151, %s165
      %p167 = scmp.eq.s32.totalorder %s24, 0
      %p168 = por %p166, %p167
      %s170 = sadd.s32 %s169, 1
      %p173 = scmp.eq.s32.totalorder %s18, 7
      %p174 = scmp.ne.s32.totalorder %s169, %s171
      %p175 = scmp.eq.s32.totalorder %s18, 0
      %p176 = por %p174, %p175
      %p177 = scmp.ne.s32.totalorder %s169, %s171
      %p178 = scmp.eq.s32.totalorder %s23, 7
      %p179 = por %p177, %p178
      %p180 = scmp.ne.s32.totalorder %s171, %s172
      %p181 = scmp.eq.s32.totalorder %s23, 0
      %p182 = por %p180, %p181
      %p183 = scmp.ne.s32.totalorder %s171, %s172
      %p184 = scmp.eq.s32.totalorder %s24, 7
      %p185 = por %p183, %p184
      %p187 = scmp.ne.s32.totalorder %s172, %s186
      %p188 = scmp.eq.s32.totalorder %s24, 0
      %p189 = por %p187, %p188
      %s191 = sadd.s32 %s190, 1
      %p194 = scmp.eq.s32.totalorder %s18, 7
      %p195 = scmp.ne.s32.totalorder %s190, %s192
      %p196 = scmp.eq.s32.totalorder %s18, 0
      %p197 = por %p195, %p196
      %p198 = scmp.ne.s32.totalorder %s190, %s192
      %p199 = scmp.eq.s32.totalorder %s23, 7
      %p200 = por %p198, %p199
      %p201 = scmp.ne.s32.totalorder %s192, %s193
      %p202 = scmp.eq.s32.totalorder %s23, 0
      %p203 = por %p201, %p202
      %p204 = scmp.ne.s32.totalorder %s192, %s193
      %p205 = scmp.eq.s32.totalorder %s24, 7
      %p206 = por %p204, %p205
      %p208 = scmp.ne.s32.totalorder %s193, %s207
      %p209 = scmp.eq.s32.totalorder %s24, 0
      %p210 = por %p208, %p209
      %s212 = sadd.s32 %s211, 1
      %p215 = scmp.eq.s32.totalorder %s18, 7
      %p216 = scmp.ne.s32.totalorder %s211, %s213
      %p217 = scmp.eq.s32.totalorder %s18, 0
      %p218 = por %p216, %p217
      %p219 = scmp.ne.s32.totalorder %s211, %s213
      %p220 = scmp.eq.s32.totalorder %s23, 7
      %p221 = por %p219, %p220
      %p222 = scmp.ne.s32.totalorder %s213, %s214
      %p223 = scmp.eq.s32.totalorder %s23, 0
      %p224 = por %p222, %p223
      %p225 = scmp.ne.s32.totalorder %s213, %s214
      %p226 = scmp.eq.s32.totalorder %s24, 7
      %p227 = por %p225, %p226
      %p229 = scmp.ne.s32.totalorder %s214, %s228
      %p230 = scmp.eq.s32.totalorder %s24, 0
      %p231 = por %p229, %p230
      %s233 = sadd.s32 %s232, 1
      %p236 = scmp.eq.s32.totalorder %s18, 7
      %p237 = scmp.ne.s32.totalorder %s232, %s234
      %p238 = scmp.eq.s32.totalorder %s18, 0
      %p239 = por %p237, %p238
      %p240 = scmp.ne.s32.totalorder %s232, %s234
      %p241 = scmp.eq.s32.totalorder %s23, 7
      %p242 = por %p240, %p241
      %p243 = scmp.ne.s32.totalorder %s234, %s235
      %p244 = scmp.eq.s32.totalorder %s23, 0
      %p245 = por %p243, %p244
      %p246 = scmp.ne.s32.totalorder %s234, %s235
      %p247 = scmp.eq.s32.totalorder %s24, 7
      %p248 = por %p246, %p247
      %p250 = scmp.ne.s32.totalorder %s235, %s249
      %p251 = scmp.eq.s32.totalorder %s24, 0
      %p252 = por %p250, %p251
      %s253 = smul.u32 %s26, %s27
      %s254 = smul.u32 %s40, %s36
      %s255 = ssub.s32 %s25, %s44
      %s256 = ssub.s32 %s253, %s254
      %s257 = sor.u32 %s255, %s256
      %p258 = scmp.eq.s32.totalorder %s257, 0
      %s260 = sadd.s32 %s259, 1
      %s261 = scalar_select %p258, %s259, %s260
      %p264 = pneg %p258
      %p265 = scmp.eq.s32.totalorder %s18, 7
      %p266 = por %p264, %p265
      %p267 = scmp.ne.s32.totalorder %s259, %s262
      %p268 = scmp.eq.s32.totalorder %s18, 0
      %p269 = por %p267, %p268
      %p270 = scmp.ne.s32.totalorder %s259, %s262
      %p271 = scmp.eq.s32.totalorder %s23, 7
      %p272 = por %p270, %p271
      %p273 = scmp.ne.s32.totalorder %s262, %s263
      %p274 = scmp.eq.s32.totalorder %s23, 0
      %p275 = por %p273, %p274
      %p276 = scmp.ne.s32.totalorder %s262, %s263
      %p277 = scmp.eq.s32.totalorder %s24, 7
      %p278 = por %p276, %p277
      %p280 = scmp.ne.s32.totalorder %s263, %s279
      %p281 = scmp.eq.s32.totalorder %s24, 0
      %p282 = por %p280, %p281
      %p283 = scmp.le.s32.totalorder 1, %s18
      %p284 = scmp.lt.s32.totalorder %s18, 9
      %p285 = pnand %p283, %p284
      %p286 = pneg %p285
      // Predicated region
      $region9: #{hybrid_mp_block.3} parent=5 // pred_check
        _
      $region10: #{hybrid_mp_block.3} parent=5 // pred_check_branch
        %288 = sbr.rel (%p285) target = $region12
      $region11: #{hybrid_mp_block.3} parent=5 // pred_region
        %s289 = ssub.s32 %s18, 1
        // Predicated region
        $region13: #{hybrid_mp_block.3} parent=11 // pred_check
          %p290 = pneg %p140
        $region14: #{hybrid_mp_block.3} parent=11 // pred_check_branch
          %292 = sbr.rel (%p290) target = $region16
        $region15: #{hybrid_mp_block.3} parent=11 // pred_region
          _
        $region16: #{hybrid_mp_block.3} parent=11 // pred_fallthru
          _
        // Predicated region
        $region17: #{hybrid_mp_block.3} parent=11 // pred_check
          %p293 = pneg %p161
        $region18: #{hybrid_mp_block.3} parent=11 // pred_check_branch
          %295 = sbr.rel (%p293) target = $region20
        $region19: #{hybrid_mp_block.3} parent=11 // pred_region
          _
        $region20: #{hybrid_mp_block.3} parent=11 // pred_fallthru
          _
        // Predicated region
        $region21: #{hybrid_mp_block.3} parent=11 // pred_check
          %p296 = pneg %p182
        $region22: #{hybrid_mp_block.3} parent=11 // pred_check_branch
          %298 = sbr.rel (%p296) target = $region24
        $region23: #{hybrid_mp_block.3} parent=11 // pred_region
          _
        $region24: #{hybrid_mp_block.3} parent=11 // pred_fallthru
          _
        // Predicated region
        $region25: #{hybrid_mp_block.3} parent=11 // pred_check
          %p299 = pneg %p203
        $region26: #{hybrid_mp_block.3} parent=11 // pred_check_branch
          %301 = sbr.rel (%p299) target = $region28
        $region27: #{hybrid_mp_block.3} parent=11 // pred_region
          _
        $region28: #{hybrid_mp_block.3} parent=11 // pred_fallthru
          _
        // Predicated region
        $region29: #{hybrid_mp_block.3} parent=11 // pred_check
          %p302 = pneg %p224
        $region30: #{hybrid_mp_block.3} parent=11 // pred_check_branch
          %304 = sbr.rel (%p302) target = $region32
        $region31: #{hybrid_mp_block.3} parent=11 // pred_region
          _
        $region32: #{hybrid_mp_block.3} parent=11 // pred_fallthru
          _
        // Predicated region
        $region33: #{hybrid_mp_block.3} parent=11 // pred_check
          %p305 = pneg %p245
        $region34: #{hybrid_mp_block.3} parent=11 // pred_check_branch
          %307 = sbr.rel (%p305) target = $region36
        $region35: #{hybrid_mp_block.3} parent=11 // pred_region
          _
        $region36: #{hybrid_mp_block.3} parent=11 // pred_fallthru
          _
      $region12: #{hybrid_mp_block.3} parent=5 // pred_fallthru
        _
      %p308 = scmp.lt.s32.totalorder %s18, 8
      // Predicated region
      $region37: #{hybrid_mp_block.3} parent=5 // pred_check
        %p309 = pneg %p308
      $region38: #{hybrid_mp_block.3} parent=5 // pred_check_branch
        %311 = sbr.rel (%p309) target = $region40
      $region39: #{hybrid_mp_block.3} parent=5 // pred_region
        // Predicated region
        $region41: #{hybrid_mp_block.3} parent=39 // pred_check
          %p312 = pneg %p57
        $region42: #{hybrid_mp_block.3} parent=39 // pred_check_branch
          %314 = sbr.rel (%p312) target = $region44
        $region43: #{hybrid_mp_block.3} parent=39 // pred_region
          %p315 = scmp.lt.s32.totalorder %s25, 1
          %s316 = scalar_select %p315, %s25, 1
          %s317 = smul.addr %s316, 2
          %s318 = smul.addr %s317, 8
          %s319 = scalar_lea.vmem %s0, %s318
        $region44: #{hybrid_mp_block.3} parent=39 // pred_fallthru
          _
        // Predicated region
        $region45: #{hybrid_mp_block.3} parent=39 // pred_check
          %p320 = pneg %p85
        $region46: #{hybrid_mp_block.3} parent=39 // pred_check_branch
          %322 = sbr.rel (%p320) target = $region48
        $region47: #{hybrid_mp_block.3} parent=39 // pred_region
          %s323 = sand.u32 %s75, 1
          %s324 = sand.u32 %s75, 1
          %s325 = smul.addr %s324, 64
          %s326 = scalar_lea.vmem [#allocation3], %s325
          %s327 = smul.addr %s25, 32
          %s328 = sadd.s32 %s27, %s327
          %s329 = smul.addr %s328, 4
          %s330 = scalar_lea.vmem %s1, %s329
          // Predicated region
          $region49: #{hybrid_mp_block.3} parent=47 // pred_check
            _
          $region50: #{hybrid_mp_block.3} parent=47 // pred_check_branch
            %332 = sbr.rel (0) target = $region52
          $region51: #{hybrid_mp_block.3} parent=47 // pred_region
            // Predicated region
            $region53: #{hybrid_mp_block.3} parent=51 // pred_check
              _
            $region54: #{hybrid_mp_block.3} parent=51 // pred_check_branch
              %334 = sbr.rel target = $region56
            $region55: #{hybrid_mp_block.3} parent=51 // pred_region
              // Predicated region
              $region68: #{hybrid_mp_block.3} parent=55 // pred_check
                _
              $region69: #{hybrid_mp_block.3} parent=55 // pred_check_branch
                %379 = sbr.rel (0) target = $region71
              $region70: #{hybrid_mp_block.3} parent=55 // pred_region
                loop: start=0, step=1, limit=1
                $region72: #{hybrid_mp_block.3} parent=70 // loop_pre_header
                  _
                $region73: #{hybrid_mp_block.3} parent=70 // loop_header
                  %s381 = sphi 0, %s385
                  %p382 = scmp.ge.s32.totalorder %s381, 1
                  %s386 = sphi %s330, %s330
                  %s387 = sphi %s326, %s326
                $region74: #{hybrid_mp_block.3} parent=70 // loop_header_branch
                  %384 = sbr.rel (%p382) target = $region78
                $region75: #{hybrid_mp_block.3} parent=70 // loop_body
                  _
                $region76: #{hybrid_mp_block.3} parent=70 // loop_footer
                  %s385 = sadd.s32 1, %s381
                $region77: #{hybrid_mp_block.3} parent=70 // loop_footer_branch
                  %380 = sbr.rel target = $region73
                $region78: #{hybrid_mp_block.3} parent=70 // loop_exit
                  _
                loop: start=0, step=1, limit=1
                $region79: #{hybrid_mp_block.3} parent=70 // loop_pre_header
                  _
                $region80: #{hybrid_mp_block.3} parent=70 // loop_header
                  %s390 = sphi 0, %s394
                  %p391 = scmp.ge.s32.totalorder %s390, 1
                  %s395 = sphi %s330, %s330
                  %s396 = sphi %s326, %s326
                $region81: #{hybrid_mp_block.3} parent=70 // loop_header_branch
                  %393 = sbr.rel (%p391) target = $region85
                $region82: #{hybrid_mp_block.3} parent=70 // loop_body
                  %v397 = vld [vmem:[%s395] sm:$0xf]
                  %398 = vst [vmem:[%s396] sm:$0xf] %v397
                  %v399 = vld [vmem:[%s395 + $0x8] sm:$0xf]
                  %400 = vst [vmem:[%s396 + $0x4] sm:$0xf] %v399
                  %v401 = vld [vmem:[%s395 + $0x10] sm:$0xf]
                  %402 = vst [vmem:[%s396 + $0x8] sm:$0xf] %v401
                  %v403 = vld [vmem:[%s395 + $0x18] sm:$0xf]
                  %404 = vst [vmem:[%s396 + $0xc] sm:$0xf] %v403
                  %v405 = vld [vmem:[%s395 + $0x20] sm:$0xf]
                  %406 = vst [vmem:[%s396 + $0x10] sm:$0xf] %v405
                  %v407 = vld [vmem:[%s395 + $0x28] sm:$0xf]
                  %408 = vst [vmem:[%s396 + $0x14] sm:$0xf] %v407
                  %v409 = vld [vmem:[%s395 + $0x30] sm:$0xf]
                  %410 = vst [vmem:[%s396 + $0x18] sm:$0xf] %v409
                  %v411 = vld [vmem:[%s395 + $0x38] sm:$0xf]
                  %412 = vst [vmem:[%s396 + $0x1c] sm:$0xf] %v411
                  %v413 = vld [vmem:[%s395 + $0x40] sm:$0xf]
                  %414 = vst [vmem:[%s396 + $0x20] sm:$0xf] %v413
                  %v415 = vld [vmem:[%s395 + $0x48] sm:$0xf]
                  %416 = vst [vmem:[%s396 + $0x24] sm:$0xf] %v415
                  %v417 = vld [vmem:[%s395 + $0x50] sm:$0xf]
                  %418 = vst [vmem:[%s396 + $0x28] sm:$0xf] %v417
                  %v419 = vld [vmem:[%s395 + $0x58] sm:$0xf]
                  %420 = vst [vmem:[%s396 + $0x2c] sm:$0xf] %v419
                  %v421 = vld [vmem:[%s395 + $0x60] sm:$0xf]
                  %422 = vst [vmem:[%s396 + $0x30] sm:$0xf] %v421
                  %v423 = vld [vmem:[%s395 + $0x68] sm:$0xf]
                  %424 = vst [vmem:[%s396 + $0x34] sm:$0xf] %v423
                  %v425 = vld [vmem:[%s395 + $0x70] sm:$0xf]
                  %426 = vst [vmem:[%s396 + $0x38] sm:$0xf] %v425
                  %v427 = vld [vmem:[%s395 + $0x78] sm:$0xf]
                  %428 = vst [vmem:[%s396 + $0x3c] sm:$0xf] %v427
                $region83: #{hybrid_mp_block.3} parent=70 // loop_footer
                  %s394 = sadd.s32 1, %s390
                $region84: #{hybrid_mp_block.3} parent=70 // loop_footer_branch
                  %389 = sbr.rel target = $region80
                $region85: #{hybrid_mp_block.3} parent=70 // loop_exit
                  _
              $region71: #{hybrid_mp_block.3} parent=55 // pred_fallthru
                _
            $region56: #{hybrid_mp_block.3} parent=51 // pred_fallthru
              _
            // Predicated region
            $region57: #{hybrid_mp_block.3} parent=51 // pred_check
              _
            $region58: #{hybrid_mp_block.3} parent=51 // pred_check_branch
              %336 = sbr.rel (0) target = $region60
            $region59: #{hybrid_mp_block.3} parent=51 // pred_region
              loop: start=0, step=1, limit=1
              $region61: #{hybrid_mp_block.3} parent=59 // loop_pre_header
                _
              $region62: #{hybrid_mp_block.3} parent=59 // loop_header
                %s339 = sphi 0, %s343
                %p340 = scmp.ge.s32.totalorder %s339, 1
                %s344 = sphi %s330, %s330
                %s345 = sphi %s326, %s326
              $region63: #{hybrid_mp_block.3} parent=59 // loop_header_branch
                %342 = sbr.rel (%p340) target = $region67
              $region64: #{hybrid_mp_block.3} parent=59 // loop_body
                %v346 = vld [vmem:[%s344] sm:$0xf]
                %347 = vst [vmem:[%s345] sm:$0xf] %v346
                %v348 = vld [vmem:[%s344 + $0x8] sm:$0xf]
                %349 = vst [vmem:[%s345 + $0x4] sm:$0xf] %v348
                %v350 = vld [vmem:[%s344 + $0x10] sm:$0xf]
                %351 = vst [vmem:[%s345 + $0x8] sm:$0xf] %v350
                %v352 = vld [vmem:[%s344 + $0x18] sm:$0xf]
                %353 = vst [vmem:[%s345 + $0xc] sm:$0xf] %v352
                %v354 = vld [vmem:[%s344 + $0x20] sm:$0xf]
                %355 = vst [vmem:[%s345 + $0x10] sm:$0xf] %v354
                %v356 = vld [vmem:[%s344 + $0x28] sm:$0xf]
                %357 = vst [vmem:[%s345 + $0x14] sm:$0xf] %v356
                %v358 = vld [vmem:[%s344 + $0x30] sm:$0xf]
                %359 = vst [vmem:[%s345 + $0x18] sm:$0xf] %v358
                %v360 = vld [vmem:[%s344 + $0x38] sm:$0xf]
                %361 = vst [vmem:[%s345 + $0x1c] sm:$0xf] %v360
                %v362 = vld [vmem:[%s344 + $0x40] sm:$0xf]
                %363 = vst [vmem:[%s345 + $0x20] sm:$0xf] %v362
                %v364 = vld [vmem:[%s344 + $0x48] sm:$0xf]
                %365 = vst [vmem:[%s345 + $0x24] sm:$0xf] %v364
                %v366 = vld [vmem:[%s344 + $0x50] sm:$0xf]
                %367 = vst [vmem:[%s345 + $0x28] sm:$0xf] %v366
                %v368 = vld [vmem:[%s344 + $0x58] sm:$0xf]
                %369 = vst [vmem:[%s345 + $0x2c] sm:$0xf] %v368
                %v370 = vld [vmem:[%s344 + $0x60] sm:$0xf]
                %371 = vst [vmem:[%s345 + $0x30] sm:$0xf] %v370
                %v372 = vld [vmem:[%s344 + $0x68] sm:$0xf]
                %373 = vst [vmem:[%s345 + $0x34] sm:$0xf] %v372
                %v374 = vld [vmem:[%s344 + $0x70] sm:$0xf]
                %375 = vst [vmem:[%s345 + $0x38] sm:$0xf] %v374
                %v376 = vld [vmem:[%s344 + $0x78] sm:$0xf]
                %377 = vst [vmem:[%s345 + $0x3c] sm:$0xf] %v376
              $region65: #{hybrid_mp_block.3} parent=59 // loop_footer
                %s343 = sadd.s32 1, %s339
              $region66: #{hybrid_mp_block.3} parent=59 // loop_footer_branch
                %338 = sbr.rel target = $region62
              $region67: #{hybrid_mp_block.3} parent=59 // loop_exit
                _
            $region60: #{hybrid_mp_block.3} parent=51 // pred_fallthru
              _
          $region52: #{hybrid_mp_block.3} parent=47 // pred_fallthru
            _
          %429 = vnop
        $region48: #{hybrid_mp_block.3} parent=39 // pred_fallthru
          _
        // Predicated region
        $region86: #{hybrid_mp_block.3} parent=39 // pred_check
          %p430 = pneg %p113
        $region87: #{hybrid_mp_block.3} parent=39 // pred_check_branch
          %432 = sbr.rel (%p430) target = $region89
        $region88: #{hybrid_mp_block.3} parent=39 // pred_region
          %p433 = scmp.lt.s32.totalorder %s25, 1
          %s434 = scalar_select %p433, %s25, 1
          %p435 = scmp.lt.s32.totalorder %s27, 1
          %s436 = scalar_select %p435, %s27, 1
          %s437 = smul.addr %s436, 2
          %s438 = smul.addr %s434, 4
          %s439 = sadd.s32 %s437, %s438
          %s440 = smul.addr %s439, 4
          %s441 = scalar_lea.vmem %s2, %s440
        $region89: #{hybrid_mp_block.3} parent=39 // pred_fallthru
          _
      $region40: #{hybrid_mp_block.3} parent=5 // pred_fallthru
        _
      %p442 = scmp.le.s32.totalorder 1, %s18
      %p443 = scmp.lt.s32.totalorder %s18, 9
      %p444 = pnand %p442, %p443
      %p445 = pneg %p444
      // Predicated region
      $region90: #{hybrid_mp_block.3} parent=5 // pred_check
        _
      $region91: #{hybrid_mp_block.3} parent=5 // pred_check_branch
        %447 = sbr.rel (%p444) target = $region93
      $region92: #{hybrid_mp_block.3} parent=5 // pred_region
        %s448 = ssub.s32 %s18, 1
        %s449 = sand.u32 %s78, 1
        %s450 = sand.u32 %s78, 1
        %s451 = smul.addr %s450, 64
        %s452 = scalar_lea.vmem [#allocation3], %s451
        // Predicated region
        $region94: #{hybrid_mp_block.3} parent=92 // pred_check
          %p453 = pneg %p91
        $region95: #{hybrid_mp_block.3} parent=92 // pred_check_branch
          %455 = sbr.rel (%p453) target = $region97
        $region96: #{hybrid_mp_block.3} parent=92 // pred_region
          _
        $region97: #{hybrid_mp_block.3} parent=92 // pred_fallthru
          _
        %p456 = scmp.lt.s32.totalorder %s28, 1
        %s457 = scalar_select %p456, %s28, 1
        %s458 = smul.addr %s457, 2
        %s459 = smul.addr %s458, 8
        %s460 = scalar_lea.vmem %s0, %s459
        %p461 = pneg %p63
        %p462 = pneg %p60
        %s463 = sand.u32 %s78, 1
        %s464 = sand.u32 %s78, 1
        %s465 = smul.addr %s464, 64
        %s466 = scalar_lea.vmem [#allocation3], %s465
        %p467 = pneg %p91
        %p468 = pneg %p88
        %p469 = scmp.lt.s32.totalorder %s28, 1
        %s470 = scalar_select %p469, %s28, 1
        %p471 = scmp.lt.s32.totalorder %s30, 1
        %s472 = scalar_select %p471, %s30, 1
        %s473 = smul.addr %s472, 2
        %s474 = smul.addr %s470, 4
        %s475 = sadd.s32 %s473, %s474
        %s476 = smul.addr %s475, 4
        %s477 = scalar_lea.vmem %s2, %s476
        %p478 = pneg %p119
        %p479 = pneg %p116
        %p480 = pneg %p140
        %p481 = pneg %p137
        %p482 = pneg %p161
        %p483 = pneg %p158
        %p484 = pneg %p182
        %p485 = pneg %p179
        %p486 = pneg %p203
        %p487 = pneg %p200
        %p488 = pneg %p224
        %p489 = pneg %p221
        %p490 = pneg %p245
        %p491 = pneg %p242
        %p492 = pneg %p275
        %p493 = pneg %p272
        %s494 = sand.u32 %s262, 1
        %s495 = scalar_lea.sflag [#allocation5], %s494
        %s496 = sand.u32 %s262, 1
        %s497 = smul.addr %s496, 64
        %s498 = scalar_lea.vmem [#allocation4], %s497
        %p499 = scmp.lt.s32.totalorder %s28, 1
        %s500 = scalar_select %p499, %s28, 1
        %s501 = smul.addr %s500, 2
        %s502 = smul.addr %s501, 8
        %s503 = scalar_lea.vmem %s0, %s502
        %p504 = scmp.lt.s32.totalorder %s28, 1
        %s505 = scalar_select %p504, %s28, 1
        %p506 = scmp.lt.s32.totalorder %s30, 1
        %s507 = scalar_select %p506, %s30, 1
        %s508 = smul.addr %s507, 2
        %s509 = smul.addr %s505, 4
        %s510 = sadd.s32 %s508, %s509
        %s511 = smul.addr %s510, 4
        %s512 = scalar_lea.vmem %s2, %s511
        %s513 = smul.u32 %s29, %s30
        %s515 = smul.u32 %s30, 8
        %v516 = vld [vmem:[%s503] sm:$0xff]
        %v517 = vld [vmem:[%s503 + $0x8] sm:$0xff]
        %s518 = scalar_lea.vmem %s503, %s515
        %v519 = vld [vmem:[%s518] sm:$0xff]
        %v520 = vld [vmem:[%s452] sm:$0xf]
        %v521 = vld [vmem:[%s452 + $0x4] sm:$0xf]
        %v522 = vld [vmem:[%s452 + $0x8] sm:$0xf]
        %v523 = vld [vmem:[%s452 + $0xc] sm:$0xf]
        %v524 = vld [vmem:[%s452 + $0x10] sm:$0xf]
        %v525 = vld [vmem:[%s452 + $0x14] sm:$0xf]
        %v526 = vld [vmem:[%s452 + $0x18] sm:$0xf]
        %v527 = vld [vmem:[%s452 + $0x1c] sm:$0xf]
        %v528 = vld [vmem:[%s452 + $0x20] sm:$0xf]
        %v529 = vld [vmem:[%s452 + $0x24] sm:$0xf]
        %v530 = vld [vmem:[%s452 + $0x28] sm:$0xf]
        %v531 = vld [vmem:[%s452 + $0x2c] sm:$0xf]
        %v532 = vld [vmem:[%s452 + $0x30] sm:$0xf]
        %v533 = vld [vmem:[%s452 + $0x34] sm:$0xf]
        %v534 = vld [vmem:[%s452 + $0x38] sm:$0xf]
        %v535 = vld [vmem:[%s452 + $0x3c] sm:$0xf]
        %p536 = scmp.eq.s32.totalorder %s29, 0
        %p537 = scmp.eq.s32.totalorder %s30, 0
        %p538 = pnand %p536, %p537
        %p539 = pneg %p538
        // Predicated region
        $region98: #{hybrid_mp_block.3} parent=92 // pred_check
          _
        $region99: #{hybrid_mp_block.3} parent=92 // pred_check_branch
          %541 = sbr.rel (%p538) target = $region101
        $region100: #{hybrid_mp_block.3} parent=92 // pred_region
          %vm542 = vcmask 254976
          %543 = vst.msk [vmem:[#allocation2] sm:$0x3] %vm542, 0.0
        $region101: #{hybrid_mp_block.3} parent=92 // pred_fallthru
          _
        %v546 = vcombine.high %v516, %v516
        %v548 = vunpack.c.l.s4 1966171168
        %v549 = vunpack.c.0.s8 %v548
        %v550 = vlaneseq
        %v551 = vshrl.u32 %v550, 7
        %v552 = vsub.s32 %v549, %v551
        %v553 = vrot.slane %v516, %v552
        %v555 = vunpack.c.l.s4 1966171168
        %v556 = vunpack.c.0.s8 %v555
        %v557 = vlaneseq
        %v558 = vshrl.u32 %v557, 7
        %v559 = vsub.s32 %v556, %v558
        %v560 = vrot.slane %v546, %v559
        %v561 = vcombine.high %v553, %v553
        %v562 = vcombine.high %v560, %v560
        %v564 = vunpack.c.l.s4 1966171168
        %v565 = vunpack.c.0.s8 %v564
        %v566 = vlaneseq
        %v567 = vshrl.u32 %v566, 7
        %v568 = vsub.s32 %v565, %v567
        %v569 = vrot.slane %v553, %v568
        %v571 = vunpack.c.l.s4 1966171168
        %v572 = vunpack.c.0.s8 %v571
        %v573 = vlaneseq
        %v574 = vshrl.u32 %v573, 7
        %v575 = vsub.s32 %v572, %v574
        %v576 = vrot.slane %v560, %v575
        %v578 = vunpack.c.l.s4 1966171168
        %v579 = vunpack.c.0.s8 %v578
        %v580 = vlaneseq
        %v581 = vshrl.u32 %v580, 7
        %v582 = vsub.s32 %v579, %v581
        %v583 = vrot.slane %v561, %v582
        %v585 = vunpack.c.l.s4 1966171168
        %v586 = vunpack.c.0.s8 %v585
        %v587 = vlaneseq
        %v588 = vshrl.u32 %v587, 7
        %v589 = vsub.s32 %v586, %v588
        %v590 = vrot.slane %v562, %v589
        %v591 = vcombine.high %v569, %v569
        %v592 = vcombine.high %v576, %v576
        %v593 = vcombine.high %v583, %v583
        %v594 = vcombine.high %v590, %v590
        %v595 = vcombine.high %v517, %v517
        %v597 = vunpack.c.l.s4 1966171168
        %v598 = vunpack.c.0.s8 %v597
        %v599 = vlaneseq
        %v600 = vshrl.u32 %v599, 7
        %v601 = vsub.s32 %v598, %v600
        %v602 = vrot.slane %v517, %v601
        %v604 = vunpack.c.l.s4 1966171168
        %v605 = vunpack.c.0.s8 %v604
        %v606 = vlaneseq
        %v607 = vshrl.u32 %v606, 7
        %v608 = vsub.s32 %v605, %v607
        %v609 = vrot.slane %v595, %v608
        %v610 = vcombine.high %v602, %v602
        %v611 = vcombine.high %v609, %v609
        %v613 = vunpack.c.l.s4 1966171168
        %v614 = vunpack.c.0.s8 %v613
        %v615 = vlaneseq
        %v616 = vshrl.u32 %v615, 7
        %v617 = vsub.s32 %v614, %v616
        %v618 = vrot.slane %v602, %v617
        %v620 = vunpack.c.l.s4 1966171168
        %v621 = vunpack.c.0.s8 %v620
        %v622 = vlaneseq
        %v623 = vshrl.u32 %v622, 7
        %v624 = vsub.s32 %v621, %v623
        %v625 = vrot.slane %v609, %v624
        %v627 = vunpack.c.l.s4 1966171168
        %v628 = vunpack.c.0.s8 %v627
        %v629 = vlaneseq
        %v630 = vshrl.u32 %v629, 7
        %v631 = vsub.s32 %v628, %v630
        %v632 = vrot.slane %v610, %v631
        %v634 = vunpack.c.l.s4 1966171168
        %v635 = vunpack.c.0.s8 %v634
        %v636 = vlaneseq
        %v637 = vshrl.u32 %v636, 7
        %v638 = vsub.s32 %v635, %v637
        %v639 = vrot.slane %v611, %v638
        %v640 = vcombine.high %v618, %v618
        %v641 = vcombine.high %v625, %v625
        %v642 = vcombine.high %v632, %v632
        %v643 = vcombine.high %v639, %v639
        %v644 = vlaneseq
        %v645 = vshrl.u32 %v644, 7
        %v646 = vsub.s32 0, %v645
        %v647 = vrot.slane %v569, %v646
        %v648 = vlaneseq
        %v649 = vshrl.u32 %v648, 7
        %v650 = vsub.s32 0, %v649
        %v651 = vrot.slane %v583, %v650
        %v652 = vlaneseq
        %v653 = vshrl.u32 %v652, 7
        %v654 = vsub.s32 0, %v653
        %v655 = vrot.slane %v591, %v654
        %v656 = vlaneseq
        %v657 = vshrl.u32 %v656, 7
        %v658 = vsub.s32 0, %v657
        %v659 = vrot.slane %v593, %v658
        %v660 = vlaneseq
        %v661 = vshrl.u32 %v660, 7
        %v662 = vsub.s32 0, %v661
        %v663 = vrot.slane %v576, %v662
        %v664 = vlaneseq
        %v665 = vshrl.u32 %v664, 7
        %v666 = vsub.s32 0, %v665
        %v667 = vrot.slane %v590, %v666
        %v668 = vlaneseq
        %v669 = vshrl.u32 %v668, 7
        %v670 = vsub.s32 0, %v669
        %v671 = vrot.slane %v592, %v670
        %v672 = vlaneseq
        %v673 = vshrl.u32 %v672, 7
        %v674 = vsub.s32 0, %v673
        %v675 = vrot.slane %v594, %v674
        %v676 = vlaneseq
        %v677 = vshrl.u32 %v676, 7
        %v678 = vsub.s32 0, %v677
        %v679 = vrot.slane %v618, %v678
        %v680 = vlaneseq
        %v681 = vshrl.u32 %v680, 7
        %v682 = vsub.s32 0, %v681
        %v683 = vrot.slane %v632, %v682
        %v684 = vlaneseq
        %v685 = vshrl.u32 %v684, 7
        %v686 = vsub.s32 0, %v685
        %v687 = vrot.slane %v640, %v686
        %v688 = vlaneseq
        %v689 = vshrl.u32 %v688, 7
        %v690 = vsub.s32 0, %v689
        %v691 = vrot.slane %v642, %v690
        %v692 = vlaneseq
        %v693 = vshrl.u32 %v692, 7
        %v694 = vsub.s32 0, %v693
        %v695 = vrot.slane %v625, %v694
        %v696 = vlaneseq
        %v697 = vshrl.u32 %v696, 7
        %v698 = vsub.s32 0, %v697
        %v699 = vrot.slane %v639, %v698
        %v700 = vlaneseq
        %v701 = vshrl.u32 %v700, 7
        %v702 = vsub.s32 0, %v701
        %v703 = vrot.slane %v641, %v702
        %v704 = vlaneseq
        %v705 = vshrl.u32 %v704, 7
        %v706 = vsub.s32 0, %v705
        %v707 = vrot.slane %v643, %v706
        %v724 = vadd.f32 %v647, %v519
        %v725 = vadd.f32 %v651, %v519
        %v726 = vadd.f32 %v655, %v519
        %v727 = vadd.f32 %v659, %v519
        %v728 = vadd.f32 %v663, %v519
        %v729 = vadd.f32 %v667, %v519
        %v730 = vadd.f32 %v671, %v519
        %v731 = vadd.f32 %v675, %v519
        %v732 = vadd.f32 %v679, %v519
        %v733 = vadd.f32 %v683, %v519
        %v734 = vadd.f32 %v687, %v519
        %v735 = vadd.f32 %v691, %v519
        %v736 = vadd.f32 %v695, %v519
        %v737 = vadd.f32 %v699, %v519
        %v738 = vadd.f32 %v703, %v519
        %v739 = vadd.f32 %v707, %v519
        %v740 = vmax.f32 %v724, 0.0
        %v741 = vmax.f32 %v725, 0.0
        %v742 = vmax.f32 %v726, 0.0
        %v743 = vmax.f32 %v727, 0.0
        %v744 = vmax.f32 %v728, 0.0
        %v745 = vmax.f32 %v729, 0.0
        %v746 = vmax.f32 %v730, 0.0
        %v747 = vmax.f32 %v731, 0.0
        %v748 = vmax.f32 %v732, 0.0
        %v749 = vmax.f32 %v733, 0.0
        %v750 = vmax.f32 %v734, 0.0
        %v751 = vmax.f32 %v735, 0.0
        %v752 = vmax.f32 %v736, 0.0
        %v753 = vmax.f32 %v737, 0.0
        %v754 = vmax.f32 %v738, 0.0
        %v755 = vmax.f32 %v739, 0.0
        %v756 = vpack.c.bf16 %v741, %v740
        %v757 = vpack.c.bf16 %v743, %v742
        %v758 = vpack.c.bf16 %v745, %v744
        %v759 = vpack.c.bf16 %v747, %v746
        %v760 = vpack.c.bf16 %v749, %v748
        %v761 = vpack.c.bf16 %v751, %v750
        %v762 = vpack.c.bf16 %v753, %v752
        %v763 = vpack.c.bf16 %v755, %v754
        %v764 = vld [vmem:[%s3] sm:$0xf]
        %v765 = vld [vmem:[%s3 + $0x4] sm:$0xf]
        %v766 = vld [vmem:[%s3 + $0x8] sm:$0xf]
        %v767 = vld [vmem:[%s3 + $0xc] sm:$0xf]
        %v768 = vld [vmem:[%s3 + $0x10] sm:$0xf]
        %v769 = vld [vmem:[%s3 + $0x14] sm:$0xf]
        %v770 = vld [vmem:[%s3 + $0x18] sm:$0xf]
        %v771 = vld [vmem:[%s3 + $0x1c] sm:$0xf]
        %v772 = vld [vmem:[%s4] sm:$0x1]
        %v774 = vlaneseq
        %v775 = vshrl.u32 %v774, 7
        %v776 = vsub.s32 0, %v775
        %v777 = vrot.slane %v772, %v776
        %v787 = vunpack.c.l.b16 %v764
        %v788 = vunpack.c.l.b16 %v765
        %v789 = vunpack.c.l.b16 %v766
        %v790 = vunpack.c.l.b16 %v767
        %v791 = vunpack.c.l.b16 %v768
        %v792 = vunpack.c.l.b16 %v769
        %v793 = vunpack.c.l.b16 %v770
        %v794 = vunpack.c.l.b16 %v771
        %v795 = vpack.c.b16 %v788, %v787
        %v796 = vpack.c.b16 %v790, %v789
        %v797 = vpack.c.b16 %v792, %v791
        %v798 = vpack.c.b16 %v794, %v793
        %vm803 = vcmask 523264
        %v805 = vsel %vm803, %v756, 0
        %v808 = vsel %vm803, %v757, 0
        %v811 = vsel %vm803, %v758, 0
        %v814 = vsel %vm803, %v759, 0
        %v817 = vsel %vm803, %v760, 0
        %v820 = vsel %vm803, %v761, 0
        %v823 = vsel %vm803, %v762, 0
        %v826 = vsel %vm803, %v763, 0
        %828 = vmatprep.subr.bf16.mxu0 0
        %829 = vmatpush1.bf16.msra.mxu0 %v795
        %830 = vmatprep.subr.bf16.mxu0 0
        %831 = vmatpush1.bf16.msra.mxu0 %v796
        %832 = vmatprep.subr.bf16.mxu0 0
        %833 = vmatpush1.bf16.msra.mxu0 %v797
        %834 = vmatprep.subr.bf16.mxu0 0
        %835 = vmatpush1.bf16.msra.mxu0 %v798
        %836 = vmatprep.subr.bf16.mxu0 0
        %837 = vmatpush1.bf16.msra.mxu0 0
        %838 = vmatprep.subr.bf16.mxu0 0
        %839 = vmatpush1.bf16.msra.mxu0 0
        %840 = vmatprep.subr.bf16.mxu0 0
        %841 = vmatpush1.bf16.msra.mxu0 0
        %842 = vmatprep.subr.bf16.mxu0 0
        %843 = vmatpush1.bf16.msra.mxu0 0
        %844 = vmatprep.subr.bf16.mxu0 0
        %845 = vmatpush1.bf16.msra.mxu0 0
        %846 = vmatprep.subr.bf16.mxu0 0
        %847 = vmatpush1.bf16.msra.mxu0 0
        %848 = vmatprep.subr.bf16.mxu0 0
        %849 = vmatpush1.bf16.msra.mxu0 0
        %850 = vmatprep.subr.bf16.mxu0 0
        %851 = vmatpush1.bf16.msra.mxu0 0
        %852 = vmatprep.subr.bf16.mxu0 0
        %853 = vmatpush1.bf16.msra.mxu0 0
        %854 = vmatprep.subr.bf16.mxu0 0
        %855 = vmatpush1.bf16.msra.mxu0 0
        %856 = vmatprep.subr.bf16.mxu0 0
        %857 = vmatpush1.bf16.msra.mxu0 0
        %858 = vmatprep.subr.bf16.mxu0 0
        %859 = vmatpush1.bf16.msra.mxu0 0
        %860 = vmatprep.mubr.bf16.mxu0 0
        %861 = vmatmul.mubr.bf16.gmra.mrb[0].mxu0 %v805
        %v862 = vpop.f32.mrb[0].mxu0
        %v863 = vadd.f32 %v777, %v862
        %v864 = vpop.f32.mrb[0].mxu0
        %v865 = vpop.f32.mrb[0].mxu0
        %v866 = vadd.f32 %v777, %v865
        %v867 = vpop.f32.mrb[0].mxu0
        %868 = vmatprep.mubr.bf16.mxu0 0
        %869 = vmatmul.mubr.bf16.gmra.mrb[0].mxu0 %v808
        %v870 = vpop.f32.mrb[0].mxu0
        %v871 = vadd.f32 %v777, %v870
        %v872 = vpop.f32.mrb[0].mxu0
        %v873 = vpop.f32.mrb[0].mxu0
        %v874 = vadd.f32 %v777, %v873
        %v875 = vpop.f32.mrb[0].mxu0
        %876 = vmatprep.mubr.bf16.mxu0 0
        %877 = vmatmul.mubr.bf16.gmra.mrb[0].mxu0 %v811
        %v878 = vpop.f32.mrb[0].mxu0
        %v879 = vadd.f32 %v777, %v878
        %v880 = vpop.f32.mrb[0].mxu0
        %v881 = vpop.f32.mrb[0].mxu0
        %v882 = vadd.f32 %v777, %v881
        %v883 = vpop.f32.mrb[0].mxu0
        %884 = vmatprep.mubr.bf16.mxu0 0
        %885 = vmatmul.mubr.bf16.gmra.mrb[0].mxu0 %v814
        %v886 = vpop.f32.mrb[0].mxu0
        %v887 = vadd.f32 %v777, %v886
        %v888 = vpop.f32.mrb[0].mxu0
        %v889 = vpop.f32.mrb[0].mxu0
        %v890 = vadd.f32 %v777, %v889
        %v891 = vpop.f32.mrb[0].mxu0
        %892 = vmatprep.mubr.bf16.mxu0 0
        %893 = vmatmul.mubr.bf16.gmra.mrb[0].mxu0 %v817
        %v894 = vpop.f32.mrb[0].mxu0
        %v895 = vadd.f32 %v777, %v894
        %v896 = vpop.f32.mrb[0].mxu0
        %v897 = vpop.f32.mrb[0].mxu0
        %v898 = vadd.f32 %v777, %v897
        %v899 = vpop.f32.mrb[0].mxu0
        %900 = vmatprep.mubr.bf16.mxu0 0
        %901 = vmatmul.mubr.bf16.gmra.mrb[0].mxu0 %v820
        %v902 = vpop.f32.mrb[0].mxu0
        %v903 = vadd.f32 %v777, %v902
        %v904 = vpop.f32.mrb[0].mxu0
        %v905 = vpop.f32.mrb[0].mxu0
        %v906 = vadd.f32 %v777, %v905
        %v907 = vpop.f32.mrb[0].mxu0
        %908 = vmatprep.mubr.bf16.mxu0 0
        %909 = vmatmul.mubr.bf16.gmra.mrb[0].mxu0 %v823
        %v910 = vpop.f32.mrb[0].mxu0
        %v911 = vadd.f32 %v777, %v910
        %v912 = vpop.f32.mrb[0].mxu0
        %v913 = vpop.f32.mrb[0].mxu0
        %v914 = vadd.f32 %v777, %v913
        %v915 = vpop.f32.mrb[0].mxu0
        %916 = vmatprep.mubr.bf16.mxu0 0
        %917 = vmatmul.mubr.bf16.gmra.mrb[0].mxu0 %v826
        %v918 = vpop.f32.mrb[0].mxu0
        %v919 = vadd.f32 %v777, %v918
        %v920 = vpop.f32.mrb[0].mxu0
        %v921 = vpop.f32.mrb[0].mxu0
        %v922 = vadd.f32 %v777, %v921
        %v923 = vpop.f32.mrb[0].mxu0
        %924 = vdwg.mxu0
        %v925 = vunpack.c.l.bf16 %v520
        %v926 = vunpack.c.l.bf16 %v521
        %v927 = vunpack.c.l.bf16 %v522
        %v928 = vunpack.c.l.bf16 %v523
        %v929 = vunpack.c.l.bf16 %v524
        %v930 = vunpack.c.l.bf16 %v525
        %v931 = vunpack.c.l.bf16 %v526
        %v932 = vunpack.c.l.bf16 %v527
        %v933 = vunpack.c.l.bf16 %v528
        %v934 = vunpack.c.l.bf16 %v529
        %v935 = vunpack.c.l.bf16 %v530
        %v936 = vunpack.c.l.bf16 %v531
        %v937 = vunpack.c.l.bf16 %v532
        %v938 = vunpack.c.l.bf16 %v533
        %v939 = vunpack.c.l.bf16 %v534
        %v940 = vunpack.c.l.bf16 %v535
        %v941 = vadd.f32 %v925, %v863
        %v942 = vadd.f32 %v926, %v866
        %v943 = vadd.f32 %v927, %v871
        %v944 = vadd.f32 %v928, %v874
        %v945 = vadd.f32 %v929, %v879
        %v946 = vadd.f32 %v930, %v882
        %v947 = vadd.f32 %v931, %v887
        %v948 = vadd.f32 %v932, %v890
        %v949 = vadd.f32 %v933, %v895
        %v950 = vadd.f32 %v934, %v898
        %v951 = vadd.f32 %v935, %v903
        %v952 = vadd.f32 %v936, %v906
        %v953 = vadd.f32 %v937, %v911
        %v954 = vadd.f32 %v938, %v914
        %v955 = vadd.f32 %v939, %v919
        %v956 = vadd.f32 %v940, %v922
        // Predicated region
        $region102: #{hybrid_mp_block.3} parent=92 // pred_check
          %p957 = pneg %p536
        $region103: #{hybrid_mp_block.3} parent=92 // pred_check_branch
          %959 = sbr.rel (%p957) target = $region105
        $region104: #{hybrid_mp_block.3} parent=92 // pred_region
          %v960 = vld [vmem:[#allocation2] sm:$0x1]
          %vm961 = vcmask 261120
          %v962 = vsel %vm961, %v941, 0.0
          %v963 = vsel %vm961, %v942, 0.0
          %v964 = vadd.f32 %v962, %v963
          %v965 = vsel %vm961, %v943, 0.0
          %v966 = vadd.f32 %v964, %v965
          %v967 = vsel %vm961, %v944, 0.0
          %v968 = vadd.f32 %v966, %v967
          %v969 = vsel %vm961, %v945, 0.0
          %v970 = vadd.f32 %v968, %v969
          %v971 = vsel %vm961, %v946, 0.0
          %v972 = vadd.f32 %v970, %v971
          %v973 = vsel %vm961, %v947, 0.0
          %v974 = vadd.f32 %v972, %v973
          %v975 = vsel %vm961, %v948, 0.0
          %v976 = vadd.f32 %v974, %v975
          %v977 = vsel %vm961, %v949, 0.0
          %v978 = vadd.f32 %v976, %v977
          %v979 = vsel %vm961, %v950, 0.0
          %v980 = vadd.f32 %v978, %v979
          %v981 = vsel %vm961, %v951, 0.0
          %v982 = vadd.f32 %v980, %v981
          %v983 = vsel %vm961, %v952, 0.0
          %v984 = vadd.f32 %v982, %v983
          %v985 = vsel %vm961, %v953, 0.0
          %v986 = vadd.f32 %v984, %v985
          %v987 = vsel %vm961, %v954, 0.0
          %v988 = vadd.f32 %v986, %v987
          %v989 = vsel %vm961, %v955, 0.0
          %v990 = vadd.f32 %v988, %v989
          %v991 = vsel %vm961, %v956, 0.0
          %v992 = vadd.f32 %v990, %v991
          %v993 = vrot.slane %v992, 4
          %v994 = vadd.f32 %v992, %v993
          %v995 = vrot.slane %v994, 2
          %v996 = vadd.f32 %v994, %v995
          %v997 = vrot.slane %v996, 1
          %v998 = vadd.f32 %v996, %v997
          %v999 = vadd.f32 %v960, %v998
          %vm1000 = vcmask 253952
          %1001 = vst.msk [vmem:[#allocation2] sm:$0x1] %vm1000, %v999
          %v1002 = vld [vmem:[#allocation2 + $0x1] sm:$0x1]
          %v1003 = vmul.f32 %v941, %v941
          %v1004 = vmul.f32 %v942, %v942
          %v1005 = vmul.f32 %v943, %v943
          %v1006 = vmul.f32 %v944, %v944
          %v1007 = vmul.f32 %v945, %v945
          %v1008 = vmul.f32 %v946, %v946
          %v1009 = vmul.f32 %v947, %v947
          %v1010 = vmul.f32 %v948, %v948
          %v1011 = vmul.f32 %v949, %v949
          %v1012 = vmul.f32 %v950, %v950
          %v1013 = vmul.f32 %v951, %v951
          %v1014 = vmul.f32 %v952, %v952
          %v1015 = vmul.f32 %v953, %v953
          %v1016 = vmul.f32 %v954, %v954
          %v1017 = vmul.f32 %v955, %v955
          %v1018 = vmul.f32 %v956, %v956
          %v1019 = vsel %vm961, %v1003, 0.0
          %v1020 = vsel %vm961, %v1004, 0.0
          %v1021 = vadd.f32 %v1019, %v1020
          %v1022 = vsel %vm961, %v1005, 0.0
          %v1023 = vadd.f32 %v1021, %v1022
          %v1024 = vsel %vm961, %v1006, 0.0
          %v1025 = vadd.f32 %v1023, %v1024
          %v1026 = vsel %vm961, %v1007, 0.0
          %v1027 = vadd.f32 %v1025, %v1026
          %v1028 = vsel %vm961, %v1008, 0.0
          %v1029 = vadd.f32 %v1027, %v1028
          %v1030 = vsel %vm961, %v1009, 0.0
          %v1031 = vadd.f32 %v1029, %v1030
          %v1032 = vsel %vm961, %v1010, 0.0
          %v1033 = vadd.f32 %v1031, %v1032
          %v1034 = vsel %vm961, %v1011, 0.0
          %v1035 = vadd.f32 %v1033, %v1034
          %v1036 = vsel %vm961, %v1012, 0.0
          %v1037 = vadd.f32 %v1035, %v1036
          %v1038 = vsel %vm961, %v1013, 0.0
          %v1039 = vadd.f32 %v1037, %v1038
          %v1040 = vsel %vm961, %v1014, 0.0
          %v1041 = vadd.f32 %v1039, %v1040
          %v1042 = vsel %vm961, %v1015, 0.0
          %v1043 = vadd.f32 %v1041, %v1042
          %v1044 = vsel %vm961, %v1016, 0.0
          %v1045 = vadd.f32 %v1043, %v1044
          %v1046 = vsel %vm961, %v1017, 0.0
          %v1047 = vadd.f32 %v1045, %v1046
          %v1048 = vsel %vm961, %v1018, 0.0
          %v1049 = vadd.f32 %v1047, %v1048
          %v1050 = vrot.slane %v1049, 4
          %v1051 = vadd.f32 %v1049, %v1050
          %v1052 = vrot.slane %v1051, 2
          %v1053 = vadd.f32 %v1051, %v1052
          %v1054 = vrot.slane %v1053, 1
          %v1055 = vadd.f32 %v1053, %v1054
          %v1056 = vadd.f32 %v1002, %v1055
          %1057 = vst.msk [vmem:[#allocation2 + $0x1] sm:$0x1] %vm1000, %v1056
        $region105: #{hybrid_mp_block.3} parent=92 // pred_fallthru
          _
        %p1058 = scmp.eq.s32.totalorder %s29, 1
        // Predicated region
        $region106: #{hybrid_mp_block.3} parent=92 // pred_check
          %p1059 = pneg %p1058
        $region107: #{hybrid_mp_block.3} parent=92 // pred_check_branch
          %1061 = sbr.rel (%p1059) target = $region109
        $region108: #{hybrid_mp_block.3} parent=92 // pred_region
          %v1062 = vld [vmem:[%s512] sm:$0xf]
          %v1063 = vld [vmem:[%s512 + $0x4] sm:$0xf]
          %v1064 = vunpack.c.l.bf16 %v1062
          %v1065 = vunpack.c.l.bf16 %v1063
          %v1066 = vld [vmem:[#allocation2] sm:$0x1]
          %v1067 = vld [vmem:[%s7] sm:$0xff]
          %v1068 = vld [vmem:[%s7 + $0x8] sm:$0xff]
          %v1069 = vld [vmem:[%s7 + $0x10] sm:$0xff]
          %v1070 = vld [vmem:[%s7 + $0x18] sm:$0xff]
          %vm1071 = vcmask 261120
          %v1073 = vsel %vm1071, %v1066, 0
          %1075 = vmatprep.subr.mxu0 0.0
          %1076 = vmatpush1.msra.mxu0 %v1067
          %1077 = vmatprep.subr.mxu0 0.0
          %1078 = vmatpush1.msra.mxu0 %v1068
          %1079 = vmatprep.subr.mxu0 0.0
          %1080 = vmatpush1.msra.mxu0 %v1069
          %1081 = vmatprep.subr.mxu0 0.0
          %1082 = vmatpush1.msra.mxu0 %v1070
          %1083 = vmatprep.subr.mxu0 0.0
          %1084 = vmatpush1.msra.mxu0 0.0
          %1085 = vmatprep.subr.mxu0 0.0
          %1086 = vmatpush1.msra.mxu0 0.0
          %1087 = vmatprep.subr.mxu0 0.0
          %1088 = vmatpush1.msra.mxu0 0.0
          %1089 = vmatprep.subr.mxu0 0.0
          %1090 = vmatpush1.msra.mxu0 0.0
          %1091 = vmatprep.subr.mxu0 0.0
          %1092 = vmatpush1.msra.mxu0 0.0
          %1093 = vmatprep.subr.mxu0 0.0
          %1094 = vmatpush1.msra.mxu0 0.0
          %1095 = vmatprep.subr.mxu0 0.0
          %1096 = vmatpush1.msra.mxu0 0.0
          %1097 = vmatprep.subr.mxu0 0.0
          %1098 = vmatpush1.msra.mxu0 0.0
          %1099 = vmatprep.subr.mxu0 0.0
          %1100 = vmatpush1.msra.mxu0 0.0
          %1101 = vmatprep.subr.mxu0 0.0
          %1102 = vmatpush1.msra.mxu0 0.0
          %1103 = vmatprep.subr.mxu0 0.0
          %1104 = vmatpush1.msra.mxu0 0.0
          %1105 = vmatprep.subr.mxu0 0.0
          %1106 = vmatpush1.msra.mxu0 0.0
          %1107 = vmatprep.subr.mxu0 0.0
          %1108 = vmatpush1.msra.mxu0 0.0
          %1109 = vmatprep.subr.mxu0 0.0
          %1110 = vmatpush1.msra.mxu0 0.0
          %1111 = vmatprep.subr.mxu0 0.0
          %1112 = vmatpush1.msra.mxu0 0.0
          %1113 = vmatprep.subr.mxu0 0.0
          %1114 = vmatpush1.msra.mxu0 0.0
          %1115 = vmatprep.subr.mxu0 0.0
          %1116 = vmatpush1.msra.mxu0 0.0
          %1117 = vmatprep.subr.mxu0 0.0
          %1118 = vmatpush1.msra.mxu0 0.0
          %1119 = vmatprep.subr.mxu0 0.0
          %1120 = vmatpush1.msra.mxu0 0.0
          %1121 = vmatprep.subr.mxu0 0.0
          %1122 = vmatpush1.msra.mxu0 0.0
          %1123 = vmatprep.subr.mxu0 0.0
          %1124 = vmatpush1.msra.mxu0 0.0
          %1125 = vmatprep.subr.mxu0 0.0
          %1126 = vmatpush1.msra.mxu0 0.0
          %1127 = vmatprep.subr.mxu0 0.0
          %1128 = vmatpush1.msra.mxu0 0.0
          %1129 = vmatprep.subr.mxu0 0.0
          %1130 = vmatpush1.msra.mxu0 0.0
          %1131 = vmatprep.subr.mxu0 0.0
          %1132 = vmatpush1.msra.mxu0 0.0
          %1133 = vmatprep.subr.mxu0 0.0
          %1134 = vmatpush1.msra.mxu0 0.0
          %1135 = vmatprep.subr.mxu0 0.0
          %1136 = vmatpush1.msra.mxu0 0.0
          %1137 = vmatprep.subr.mxu0 0.0
          %1138 = vmatpush1.msra.mxu0 0.0
          %1139 = vmatprep.mubr.f32.mxu0 0.0
          %1140 = vmatmul.mubr.f32.gmra.mrb[0].mxu0 %v1073
          %v1141 = vpop.f32.mrb[0].mxu0
          %v1142 = vadd.f32 0.0, %v1141
          %v1143 = vpop.f32.mrb[0].mxu0
          %1144 = vdwg.mxu0
          %v1145 = vmul.f32 %v1142, 0.0009765625
          %v1146 = vld [vmem:[#allocation2 + $0x1] sm:$0x1]
          %v1148 = vsel %vm1071, %v1146, 0
          %1150 = vmatprep.subr.mxu0 0.0
          %1151 = vmatpush1.msra.mxu0 %v1067
          %1152 = vmatprep.subr.mxu0 0.0
          %1153 = vmatpush1.msra.mxu0 %v1068
          %1154 = vmatprep.subr.mxu0 0.0
          %1155 = vmatpush1.msra.mxu0 %v1069
          %1156 = vmatprep.subr.mxu0 0.0
          %1157 = vmatpush1.msra.mxu0 %v1070
          %1158 = vmatprep.subr.mxu0 0.0
          %1159 = vmatpush1.msra.mxu0 0.0
          %1160 = vmatprep.subr.mxu0 0.0
          %1161 = vmatpush1.msra.mxu0 0.0
          %1162 = vmatprep.subr.mxu0 0.0
          %1163 = vmatpush1.msra.mxu0 0.0
          %1164 = vmatprep.subr.mxu0 0.0
          %1165 = vmatpush1.msra.mxu0 0.0
          %1166 = vmatprep.subr.mxu0 0.0
          %1167 = vmatpush1.msra.mxu0 0.0
          %1168 = vmatprep.subr.mxu0 0.0
          %1169 = vmatpush1.msra.mxu0 0.0
          %1170 = vmatprep.subr.mxu0 0.0
          %1171 = vmatpush1.msra.mxu0 0.0
          %1172 = vmatprep.subr.mxu0 0.0
          %1173 = vmatpush1.msra.mxu0 0.0
          %1174 = vmatprep.subr.mxu0 0.0
          %1175 = vmatpush1.msra.mxu0 0.0
          %1176 = vmatprep.subr.mxu0 0.0
          %1177 = vmatpush1.msra.mxu0 0.0
          %1178 = vmatprep.subr.mxu0 0.0
          %1179 = vmatpush1.msra.mxu0 0.0
          %1180 = vmatprep.subr.mxu0 0.0
          %1181 = vmatpush1.msra.mxu0 0.0
          %1182 = vmatprep.subr.mxu0 0.0
          %1183 = vmatpush1.msra.mxu0 0.0
          %1184 = vmatprep.subr.mxu0 0.0
          %1185 = vmatpush1.msra.mxu0 0.0
          %1186 = vmatprep.subr.mxu0 0.0
          %1187 = vmatpush1.msra.mxu0 0.0
          %1188 = vmatprep.subr.mxu0 0.0
          %1189 = vmatpush1.msra.mxu0 0.0
          %1190 = vmatprep.subr.mxu0 0.0
          %1191 = vmatpush1.msra.mxu0 0.0
          %1192 = vmatprep.subr.mxu0 0.0
          %1193 = vmatpush1.msra.mxu0 0.0
          %1194 = vmatprep.subr.mxu0 0.0
          %1195 = vmatpush1.msra.mxu0 0.0
          %1196 = vmatprep.subr.mxu0 0.0
          %1197 = vmatpush1.msra.mxu0 0.0
          %1198 = vmatprep.subr.mxu0 0.0
          %1199 = vmatpush1.msra.mxu0 0.0
          %1200 = vmatprep.subr.mxu0 0.0
          %1201 = vmatpush1.msra.mxu0 0.0
          %1202 = vmatprep.subr.mxu0 0.0
          %1203 = vmatpush1.msra.mxu0 0.0
          %1204 = vmatprep.subr.mxu0 0.0
          %1205 = vmatpush1.msra.mxu0 0.0
          %1206 = vmatprep.subr.mxu0 0.0
          %1207 = vmatpush1.msra.mxu0 0.0
          %1208 = vmatprep.subr.mxu0 0.0
          %1209 = vmatpush1.msra.mxu0 0.0
          %1210 = vmatprep.subr.mxu0 0.0
          %1211 = vmatpush1.msra.mxu0 0.0
          %1212 = vmatprep.subr.mxu0 0.0
          %1213 = vmatpush1.msra.mxu0 0.0
          %1214 = vmatprep.mubr.f32.mxu0 0.0
          %1215 = vmatmul.mubr.f32.gmra.mrb[0].mxu0 %v1148
          %v1216 = vpop.f32.mrb[0].mxu0
          %v1217 = vadd.f32 0.0, %v1216
          %v1218 = vpop.f32.mrb[0].mxu0
          %1219 = vdwg.mxu0
          %v1220 = vmul.f32 %v1217, 0.0009765625
          %v1221 = vmul.f32 %v1145, %v1145
          %v1222 = vsub.f32 %v1220, %v1221
          %v1223 = vmax.f32 %v1222, 0.0
          %v1224 = vld [vmem:[%s8] sm:$0xff]
          %vm1225 = vcmask 64512
          %v1227 = vsel %vm1225, %v1145, 0
          %1229 = vmatprep.subr.mxu0 0.0
          %1230 = vmatpush1.msra.mxu0 %v1224
          %1231 = vmatprep.subr.mxu0 0.0
          %1232 = vmatpush1.msra.mxu0 0.0
          %1233 = vmatprep.subr.mxu0 0.0
          %1234 = vmatpush1.msra.mxu0 0.0
          %1235 = vmatprep.subr.mxu0 0.0
          %1236 = vmatpush1.msra.mxu0 0.0
          %1237 = vmatprep.subr.mxu0 0.0
          %1238 = vmatpush1.msra.mxu0 0.0
          %1239 = vmatprep.subr.mxu0 0.0
          %1240 = vmatpush1.msra.mxu0 0.0
          %1241 = vmatprep.subr.mxu0 0.0
          %1242 = vmatpush1.msra.mxu0 0.0
          %1243 = vmatprep.subr.mxu0 0.0
          %1244 = vmatpush1.msra.mxu0 0.0
          %1245 = vmatprep.subr.mxu0 0.0
          %1246 = vmatpush1.msra.mxu0 0.0
          %1247 = vmatprep.subr.mxu0 0.0
          %1248 = vmatpush1.msra.mxu0 0.0
          %1249 = vmatprep.subr.mxu0 0.0
          %1250 = vmatpush1.msra.mxu0 0.0
          %1251 = vmatprep.subr.mxu0 0.0
          %1252 = vmatpush1.msra.mxu0 0.0
          %1253 = vmatprep.subr.mxu0 0.0
          %1254 = vmatpush1.msra.mxu0 0.0
          %1255 = vmatprep.subr.mxu0 0.0
          %1256 = vmatpush1.msra.mxu0 0.0
          %1257 = vmatprep.subr.mxu0 0.0
          %1258 = vmatpush1.msra.mxu0 0.0
          %1259 = vmatprep.subr.mxu0 0.0
          %1260 = vmatpush1.msra.mxu0 0.0
          %1261 = vmatprep.subr.mxu0 0.0
          %1262 = vmatpush1.msra.mxu0 0.0
          %1263 = vmatprep.subr.mxu0 0.0
          %1264 = vmatpush1.msra.mxu0 0.0
          %1265 = vmatprep.subr.mxu0 0.0
          %1266 = vmatpush1.msra.mxu0 0.0
          %1267 = vmatprep.subr.mxu0 0.0
          %1268 = vmatpush1.msra.mxu0 0.0
          %1269 = vmatprep.subr.mxu0 0.0
          %1270 = vmatpush1.msra.mxu0 0.0
          %1271 = vmatprep.subr.mxu0 0.0
          %1272 = vmatpush1.msra.mxu0 0.0
          %1273 = vmatprep.subr.mxu0 0.0
          %1274 = vmatpush1.msra.mxu0 0.0
          %1275 = vmatprep.subr.mxu0 0.0
          %1276 = vmatpush1.msra.mxu0 0.0
          %1277 = vmatprep.subr.mxu0 0.0
          %1278 = vmatpush1.msra.mxu0 0.0
          %1279 = vmatprep.subr.mxu0 0.0
          %1280 = vmatpush1.msra.mxu0 0.0
          %1281 = vmatprep.subr.mxu0 0.0
          %1282 = vmatpush1.msra.mxu0 0.0
          %1283 = vmatprep.subr.mxu0 0.0
          %1284 = vmatpush1.msra.mxu0 0.0
          %1285 = vmatprep.subr.mxu0 0.0
          %1286 = vmatpush1.msra.mxu0 0.0
          %1287 = vmatprep.subr.mxu0 0.0
          %1288 = vmatpush1.msra.mxu0 0.0
          %1289 = vmatprep.subr.mxu0 0.0
          %1290 = vmatpush1.msra.mxu0 0.0
          %1291 = vmatprep.subr.mxu0 0.0
          %1292 = vmatpush1.msra.mxu0 0.0
          %1293 = vmatprep.mubr.f32.mxu0 0.0
          %1294 = vmatmul.mubr.f32.gmra.mrb[0].mxu0 %v1227
          %v1295 = vpop.f32.mrb[0].mxu0
          %v1296 = vadd.f32 0.0, %v1295
          %v1297 = vpop.f32.mrb[0].mxu0
          %1298 = vdwg.mxu0
          %v1299 = vadd.f32 %v1223, 1e-06
          %v1300 = vrsqrt.pop %v1299
          %v1302 = vsel %vm1225, %v1300, 0
          %1304 = vmatprep.subr.mxu0 0.0
          %1305 = vmatpush1.msra.mxu0 %v1224
          %1306 = vmatprep.subr.mxu0 0.0
          %1307 = vmatpush1.msra.mxu0 0.0
          %1308 = vmatprep.subr.mxu0 0.0
          %1309 = vmatpush1.msra.mxu0 0.0
          %1310 = vmatprep.subr.mxu0 0.0
          %1311 = vmatpush1.msra.mxu0 0.0
          %1312 = vmatprep.subr.mxu0 0.0
          %1313 = vmatpush1.msra.mxu0 0.0
          %1314 = vmatprep.subr.mxu0 0.0
          %1315 = vmatpush1.msra.mxu0 0.0
          %1316 = vmatprep.subr.mxu0 0.0
          %1317 = vmatpush1.msra.mxu0 0.0
          %1318 = vmatprep.subr.mxu0 0.0
          %1319 = vmatpush1.msra.mxu0 0.0
          %1320 = vmatprep.subr.mxu0 0.0
          %1321 = vmatpush1.msra.mxu0 0.0
          %1322 = vmatprep.subr.mxu0 0.0
          %1323 = vmatpush1.msra.mxu0 0.0
          %1324 = vmatprep.subr.mxu0 0.0
          %1325 = vmatpush1.msra.mxu0 0.0
          %1326 = vmatprep.subr.mxu0 0.0
          %1327 = vmatpush1.msra.mxu0 0.0
          %1328 = vmatprep.subr.mxu0 0.0
          %1329 = vmatpush1.msra.mxu0 0.0
          %1330 = vmatprep.subr.mxu0 0.0
          %1331 = vmatpush1.msra.mxu0 0.0
          %1332 = vmatprep.subr.mxu0 0.0
          %1333 = vmatpush1.msra.mxu0 0.0
          %1334 = vmatprep.subr.mxu0 0.0
          %1335 = vmatpush1.msra.mxu0 0.0
          %1336 = vmatprep.subr.mxu0 0.0
          %1337 = vmatpush1.msra.mxu0 0.0
          %1338 = vmatprep.subr.mxu0 0.0
          %1339 = vmatpush1.msra.mxu0 0.0
          %1340 = vmatprep.subr.mxu0 0.0
          %1341 = vmatpush1.msra.mxu0 0.0
          %1342 = vmatprep.subr.mxu0 0.0
          %1343 = vmatpush1.msra.mxu0 0.0
          %1344 = vmatprep.subr.mxu0 0.0
          %1345 = vmatpush1.msra.mxu0 0.0
          %1346 = vmatprep.subr.mxu0 0.0
          %1347 = vmatpush1.msra.mxu0 0.0
          %1348 = vmatprep.subr.mxu0 0.0
          %1349 = vmatpush1.msra.mxu0 0.0
          %1350 = vmatprep.subr.mxu0 0.0
          %1351 = vmatpush1.msra.mxu0 0.0
          %1352 = vmatprep.subr.mxu0 0.0
          %1353 = vmatpush1.msra.mxu0 0.0
          %1354 = vmatprep.subr.mxu0 0.0
          %1355 = vmatpush1.msra.mxu0 0.0
          %1356 = vmatprep.subr.mxu0 0.0
          %1357 = vmatpush1.msra.mxu0 0.0
          %1358 = vmatprep.subr.mxu0 0.0
          %1359 = vmatpush1.msra.mxu0 0.0
          %1360 = vmatprep.subr.mxu0 0.0
          %1361 = vmatpush1.msra.mxu0 0.0
          %1362 = vmatprep.subr.mxu0 0.0
          %1363 = vmatpush1.msra.mxu0 0.0
          %1364 = vmatprep.subr.mxu0 0.0
          %1365 = vmatpush1.msra.mxu0 0.0
          %1366 = vmatprep.subr.mxu0 0.0
          %1367 = vmatpush1.msra.mxu0 0.0
          %1368 = vmatprep.mubr.f32.mxu0 0.0
          %1369 = vmatmul.mubr.f32.gmra.mrb[0].mxu0 %v1302
          %v1370 = vpop.f32.mrb[0].mxu0
          %v1371 = vadd.f32 0.0, %v1370
          %v1372 = vpop.f32.mrb[0].mxu0
          %1373 = vdwg.mxu0
          %v1374 = vlaneseq
          %v1375 = vshrl.u32 %v1374, 7
          %v1376 = vsub.s32 0, %v1375
          %v1377 = vrot.slane %v1296, %v1376
          %v1378 = vsub.f32 %v941, %v1377
          %v1379 = vsub.f32 %v942, %v1377
          %v1380 = vsub.f32 %v943, %v1377
          %v1381 = vsub.f32 %v944, %v1377
          %v1382 = vsub.f32 %v945, %v1377
          %v1383 = vsub.f32 %v946, %v1377
          %v1384 = vsub.f32 %v947, %v1377
          %v1385 = vsub.f32 %v948, %v1377
          %v1386 = vsub.f32 %v949, %v1377
          %v1387 = vsub.f32 %v950, %v1377
          %v1388 = vsub.f32 %v951, %v1377
          %v1389 = vsub.f32 %v952, %v1377
          %v1390 = vsub.f32 %v953, %v1377
          %v1391 = vsub.f32 %v954, %v1377
          %v1392 = vsub.f32 %v955, %v1377
          %v1393 = vsub.f32 %v956, %v1377
          %v1394 = vlaneseq
          %v1395 = vshrl.u32 %v1394, 7
          %v1396 = vsub.s32 0, %v1395
          %v1397 = vrot.slane %v1371, %v1396
          %v1398 = vmul.f32 %v1378, %v1397
          %v1399 = vmul.f32 %v1379, %v1397
          %v1400 = vmul.f32 %v1380, %v1397
          %v1401 = vmul.f32 %v1381, %v1397
          %v1402 = vmul.f32 %v1382, %v1397
          %v1403 = vmul.f32 %v1383, %v1397
          %v1404 = vmul.f32 %v1384, %v1397
          %v1405 = vmul.f32 %v1385, %v1397
          %v1406 = vmul.f32 %v1386, %v1397
          %v1407 = vmul.f32 %v1387, %v1397
          %v1408 = vmul.f32 %v1388, %v1397
          %v1409 = vmul.f32 %v1389, %v1397
          %v1410 = vmul.f32 %v1390, %v1397
          %v1411 = vmul.f32 %v1391, %v1397
          %v1412 = vmul.f32 %v1392, %v1397
          %v1413 = vmul.f32 %v1393, %v1397
          %v1414 = vld [vmem:[%s5] sm:$0x1]
          %v1416 = vlaneseq
          %v1417 = vshrl.u32 %v1416, 7
          %v1418 = vsub.s32 0, %v1417
          %v1419 = vrot.slane %v1414, %v1418
          %v1421 = vmul.f32 %v1398, %v1419
          %v1422 = vmul.f32 %v1399, %v1419
          %v1423 = vmul.f32 %v1400, %v1419
          %v1424 = vmul.f32 %v1401, %v1419
          %v1425 = vmul.f32 %v1402, %v1419
          %v1426 = vmul.f32 %v1403, %v1419
          %v1427 = vmul.f32 %v1404, %v1419
          %v1428 = vmul.f32 %v1405, %v1419
          %v1429 = vmul.f32 %v1406, %v1419
          %v1430 = vmul.f32 %v1407, %v1419
          %v1431 = vmul.f32 %v1408, %v1419
          %v1432 = vmul.f32 %v1409, %v1419
          %v1433 = vmul.f32 %v1410, %v1419
          %v1434 = vmul.f32 %v1411, %v1419
          %v1435 = vmul.f32 %v1412, %v1419
          %v1436 = vmul.f32 %v1413, %v1419
          %v1437 = vld [vmem:[%s6] sm:$0x1]
          %v1439 = vlaneseq
          %v1440 = vshrl.u32 %v1439, 7
          %v1441 = vsub.s32 0, %v1440
          %v1442 = vrot.slane %v1437, %v1441
          %v1444 = vadd.f32 %v1421, %v1442
          %v1445 = vadd.f32 %v1422, %v1442
          %v1446 = vadd.f32 %v1423, %v1442
          %v1447 = vadd.f32 %v1424, %v1442
          %v1448 = vadd.f32 %v1425, %v1442
          %v1449 = vadd.f32 %v1426, %v1442
          %v1450 = vadd.f32 %v1427, %v1442
          %v1451 = vadd.f32 %v1428, %v1442
          %v1452 = vadd.f32 %v1429, %v1442
          %v1453 = vadd.f32 %v1430, %v1442
          %v1454 = vadd.f32 %v1431, %v1442
          %v1455 = vadd.f32 %v1432, %v1442
          %v1456 = vadd.f32 %v1433, %v1442
          %v1457 = vadd.f32 %v1434, %v1442
          %v1458 = vadd.f32 %v1435, %v1442
          %v1459 = vadd.f32 %v1436, %v1442
          %v1460 = vlaneseq
          %v1461 = vshrl.u32 %v1460, 7
          %v1462 = vsub.s32 0, %v1461
          %v1463 = vrot.slane %v1064, %v1462
          %1465 = vbcast.lane.b32.xlu0 %v1463, 256
          %v1466 = vpop.permute.xlu0 %1465
          %v1467 = vlaneseq
          %v1468 = vshrl.u32 %v1467, 7
          %v1469 = vsub.s32 1, %v1468
          %v1470 = vrot.slane %v1064, %v1469
          %1472 = vbcast.lane.b32.xlu0 %v1470, 256
          %v1473 = vpop.permute.xlu0 %1472
          %v1474 = vlaneseq
          %v1475 = vshrl.u32 %v1474, 7
          %v1476 = vsub.s32 2, %v1475
          %v1477 = vrot.slane %v1064, %v1476
          %1479 = vbcast.lane.b32.xlu0 %v1477, 256
          %v1480 = vpop.permute.xlu0 %1479
          %v1481 = vlaneseq
          %v1482 = vshrl.u32 %v1481, 7
          %v1483 = vsub.s32 3, %v1482
          %v1484 = vrot.slane %v1064, %v1483
          %1486 = vbcast.lane.b32.xlu0 %v1484, 256
          %v1487 = vpop.permute.xlu0 %1486
          %v1488 = vlaneseq
          %v1489 = vshrl.u32 %v1488, 7
          %v1490 = vsub.s32 4, %v1489
          %v1491 = vrot.slane %v1064, %v1490
          %1493 = vbcast.lane.b32.xlu0 %v1491, 256
          %v1494 = vpop.permute.xlu0 %1493
          %v1495 = vlaneseq
          %v1496 = vshrl.u32 %v1495, 7
          %v1497 = vsub.s32 5, %v1496
          %v1498 = vrot.slane %v1064, %v1497
          %1500 = vbcast.lane.b32.xlu0 %v1498, 256
          %v1501 = vpop.permute.xlu0 %1500
          %v1502 = vlaneseq
          %v1503 = vshrl.u32 %v1502, 7
          %v1504 = vsub.s32 6, %v1503
          %v1505 = vrot.slane %v1064, %v1504
          %1507 = vbcast.lane.b32.xlu0 %v1505, 256
          %v1508 = vpop.permute.xlu0 %1507
          %v1509 = vlaneseq
          %v1510 = vshrl.u32 %v1509, 7
          %v1511 = vsub.s32 7, %v1510
          %v1512 = vrot.slane %v1064, %v1511
          %1514 = vbcast.lane.b32.xlu0 %v1512, 256
          %v1515 = vpop.permute.xlu0 %1514
          %v1516 = vlaneseq
          %v1517 = vshrl.u32 %v1516, 7
          %v1518 = vsub.s32 0, %v1517
          %v1519 = vrot.slane %v1065, %v1518
          %1521 = vbcast.lane.b32.xlu0 %v1519, 256
          %v1522 = vpop.permute.xlu0 %1521
          %v1523 = vlaneseq
          %v1524 = vshrl.u32 %v1523, 7
          %v1525 = vsub.s32 1, %v1524
          %v1526 = vrot.slane %v1065, %v1525
          %1528 = vbcast.lane.b32.xlu0 %v1526, 256
          %v1529 = vpop.permute.xlu0 %1528
          %v1530 = vlaneseq
          %v1531 = vshrl.u32 %v1530, 7
          %v1532 = vsub.s32 2, %v1531
          %v1533 = vrot.slane %v1065, %v1532
          %1535 = vbcast.lane.b32.xlu0 %v1533, 256
          %v1536 = vpop.permute.xlu0 %1535
          %v1537 = vlaneseq
          %v1538 = vshrl.u32 %v1537, 7
          %v1539 = vsub.s32 3, %v1538
          %v1540 = vrot.slane %v1065, %v1539
          %1542 = vbcast.lane.b32.xlu0 %v1540, 256
          %v1543 = vpop.permute.xlu0 %1542
          %v1544 = vlaneseq
          %v1545 = vshrl.u32 %v1544, 7
          %v1546 = vsub.s32 4, %v1545
          %v1547 = vrot.slane %v1065, %v1546
          %1549 = vbcast.lane.b32.xlu0 %v1547, 256
          %v1550 = vpop.permute.xlu0 %1549
          %v1551 = vlaneseq
          %v1552 = vshrl.u32 %v1551, 7
          %v1553 = vsub.s32 5, %v1552
          %v1554 = vrot.slane %v1065, %v1553
          %1556 = vbcast.lane.b32.xlu0 %v1554, 256
          %v1557 = vpop.permute.xlu0 %1556
          %v1558 = vlaneseq
          %v1559 = vshrl.u32 %v1558, 7
          %v1560 = vsub.s32 6, %v1559
          %v1561 = vrot.slane %v1065, %v1560
          %1563 = vbcast.lane.b32.xlu0 %v1561, 256
          %v1564 = vpop.permute.xlu0 %1563
          %v1565 = vlaneseq
          %v1566 = vshrl.u32 %v1565, 7
          %v1567 = vsub.s32 7, %v1566
          %v1568 = vrot.slane %v1065, %v1567
          %1570 = vbcast.lane.b32.xlu0 %v1568, 256
          %v1571 = vpop.permute.xlu0 %1570
          %v1572 = vmul.f32 %v1444, %v1466
          %v1573 = vmul.f32 %v1445, %v1473
          %v1574 = vmul.f32 %v1446, %v1480
          %v1575 = vmul.f32 %v1447, %v1487
          %v1576 = vmul.f32 %v1448, %v1494
          %v1577 = vmul.f32 %v1449, %v1501
          %v1578 = vmul.f32 %v1450, %v1508
          %v1579 = vmul.f32 %v1451, %v1515
          %v1580 = vmul.f32 %v1452, %v1522
          %v1581 = vmul.f32 %v1453, %v1529
          %v1582 = vmul.f32 %v1454, %v1536
          %v1583 = vmul.f32 %v1455, %v1543
          %v1584 = vmul.f32 %v1456, %v1550
          %v1585 = vmul.f32 %v1457, %v1557
          %v1586 = vmul.f32 %v1458, %v1564
          %v1587 = vmul.f32 %v1459, %v1571
          %v1588 = vpack.c.bf16 %v1572, %v1572
          %v1589 = vpack.c.bf16 %v1573, %v1573
          %v1590 = vpack.c.bf16 %v1574, %v1574
          %v1591 = vpack.c.bf16 %v1575, %v1575
          %v1592 = vpack.c.bf16 %v1576, %v1576
          %v1593 = vpack.c.bf16 %v1577, %v1577
          %v1594 = vpack.c.bf16 %v1578, %v1578
          %v1595 = vpack.c.bf16 %v1579, %v1579
          %v1596 = vpack.c.bf16 %v1580, %v1580
          %v1597 = vpack.c.bf16 %v1581, %v1581
          %v1598 = vpack.c.bf16 %v1582, %v1582
          %v1599 = vpack.c.bf16 %v1583, %v1583
          %v1600 = vpack.c.bf16 %v1584, %v1584
          %v1601 = vpack.c.bf16 %v1585, %v1585
          %v1602 = vpack.c.bf16 %v1586, %v1586
          %v1603 = vpack.c.bf16 %v1587, %v1587
          %vm1604 = vcmask 257024
          %1605 = vst.msk [vmem:[%s498] sm:$0xf] %vm1604, %v1588
          %1606 = vst.msk [vmem:[%s498 + $0x4] sm:$0xf] %vm1604, %v1589
          %1607 = vst.msk [vmem:[%s498 + $0x8] sm:$0xf] %vm1604, %v1590
          %1608 = vst.msk [vmem:[%s498 + $0xc] sm:$0xf] %vm1604, %v1591
          %1609 = vst.msk [vmem:[%s498 + $0x10] sm:$0xf] %vm1604, %v1592
          %1610 = vst.msk [vmem:[%s498 + $0x14] sm:$0xf] %vm1604, %v1593
          %1611 = vst.msk [vmem:[%s498 + $0x18] sm:$0xf] %vm1604, %v1594
          %1612 = vst.msk [vmem:[%s498 + $0x1c] sm:$0xf] %vm1604, %v1595
          %1613 = vst.msk [vmem:[%s498 + $0x20] sm:$0xf] %vm1604, %v1596
          %1614 = vst.msk [vmem:[%s498 + $0x24] sm:$0xf] %vm1604, %v1597
          %1615 = vst.msk [vmem:[%s498 + $0x28] sm:$0xf] %vm1604, %v1598
          %1616 = vst.msk [vmem:[%s498 + $0x2c] sm:$0xf] %vm1604, %v1599
          %1617 = vst.msk [vmem:[%s498 + $0x30] sm:$0xf] %vm1604, %v1600
          %1618 = vst.msk [vmem:[%s498 + $0x34] sm:$0xf] %vm1604, %v1601
          %1619 = vst.msk [vmem:[%s498 + $0x38] sm:$0xf] %vm1604, %v1602
          %1620 = vst.msk [vmem:[%s498 + $0x3c] sm:$0xf] %vm1604, %v1603
        $region109: #{hybrid_mp_block.3} parent=92 // pred_fallthru
          _
        %s1621 = sand.u32 %s262, 1
        %s1622 = scalar_lea.sflag [#allocation5], %s1621
        %s1623 = sand.u32 %s262, 1
        %s1624 = smul.addr %s1623, 64
        %s1625 = scalar_lea.vmem [#allocation4], %s1624
        // Predicated region
        $region110: #{hybrid_mp_block.3} parent=92 // pred_check
          %p1626 = pneg %p272
        $region111: #{hybrid_mp_block.3} parent=92 // pred_check_branch
          %1628 = sbr.rel (%p1626) target = $region113
        $region112: #{hybrid_mp_block.3} parent=92 // pred_region
          %s1629 = smul.u32 %s29, %s30
          %s1631 = ssub.s32 1024, 1024
          %1632 = vsyncadd %s1622, %s1631
          %s1633 = smul.addr %s28, 32
          %s1634 = sadd.s32 %s1629, %s1633
          %s1635 = smul.addr %s1634, 64
          %s1636 = scalar_lea.hbm %s9, %s1635
          %s1637 = sshll.u32 %s1625, 4
          %s1638 = int_to_ptr.vmem [resolvable:$true] %s1637
          %1643 = dma.vmem_to_hbm [thread:$0]  %s1638, 1024, %s1636, %s1622, 64, 128, 4
        $region113: #{hybrid_mp_block.3} parent=92 // pred_fallthru
          _
      $region93: #{hybrid_mp_block.3} parent=5 // pred_fallthru
        _
      %p1644 = scmp.le.s32.totalorder 2, %s18
      // Predicated region
      $region114: #{hybrid_mp_block.3} parent=5 // pred_check
        %p1645 = pneg %p1644
      $region115: #{hybrid_mp_block.3} parent=5 // pred_check_branch
        %1647 = sbr.rel (%p1645) target = $region117
      $region116: #{hybrid_mp_block.3} parent=5 // pred_region
        %s1648 = ssub.s32 %s18, 2
        // Predicated region
        $region118: #{hybrid_mp_block.3} parent=116 // pred_check
          %p1649 = pneg %p278
        $region119: #{hybrid_mp_block.3} parent=116 // pred_check_branch
          %1651 = sbr.rel (%p1649) target = $region121
        $region120: #{hybrid_mp_block.3} parent=116 // pred_region
          %s1652 = sand.u32 %s263, 1
          %s1653 = scalar_lea.sflag [#allocation5], %s1652
          %s1654 = sand.u32 %s263, 1
          %s1655 = smul.addr %s1654, 64
          %s1656 = scalar_lea.vmem [#allocation4], %s1655
          %1657 = dma.done %s1653, 1024
        $region121: #{hybrid_mp_block.3} parent=116 // pred_fallthru
          _
      $region117: #{hybrid_mp_block.3} parent=5 // pred_fallthru
        _
    $region6: #{hybrid_mp_block.3} parent=1 // loop_footer
      %s22 = sadd.s32 1, %s18
    $region7: #{hybrid_mp_block.3} parent=1 // loop_footer_branch
      %17 = sbr.rel target = $region3
    $region8: #{hybrid_mp_block.3} parent=1 // loop_exit
      _
    %1658 = vsyncpa [#allocation5], 1
    %s1659 = scalar_lea.sflag [#allocation5], 1
    %1660 = vsyncpa %s1659, 1

// kernel: hybrid_mp_block.2
$region0: #{hybrid_mp_block.2}
  #allocation0 [shape = 'u32[]', space=smem, size = 0x4, offset = 0x4, fixed_abs, tag = 'smem constant byte address 0x4 - core index']
  #allocation1 [shape = 'u32[144,128]{1,0:T(1,128)}', space=vmem, size = 0x12000, scoped, tag = 'internal scratch']
  %s0 = inlined_call_operand.vmem [shape: f32[2,16,32], index: 0, kind: input, shape index: {}]
  %s1 = inlined_call_operand.vmem [shape: f32[2,16,32], index: 1, kind: input, shape index: {}]
  %s2 = inlined_call_operand.vmem [shape: f32[2,16,1], index: 2, kind: input, shape index: {}]
  %s3 = inlined_call_operand.vmem [shape: f32[2,16,32], index: 3, kind: input, shape index: {}]
  %s4 = inlined_call_operand.vmem [shape: f32[2,16,64], index: 4, kind: input, shape index: {}]
  %s5 = inlined_call_operand.vmem [shape: bf16[2,16,16,32], index: 5, kind: input, shape index: {}]
  %s6 = inlined_call_operand.vmem [shape: bf16[2,2,16,8], index: 6, kind: input, shape index: {}]
  %s7 = inlined_call_operand.vmem [shape: bf16[2,2,16,8], index: 7, kind: input, shape index: {}]
  %s8 = inlined_call_operand.vmem [shape: f32[2,1,32], index: 8, kind: input, shape index: {}]
  %s9 = inlined_call_operand.vmem [shape: f32[2,1,64], index: 9, kind: input, shape index: {}]
  %s10 = inlined_call_operand.vmem [shape: bf16[2,32,32], index: 10, kind: input, shape index: {}]
  %s11 = inlined_call_operand.vmem [shape: f32[2,32], index: 11, kind: input, shape index: {}]
  %s12 = inlined_call_operand.vmem [shape: bf16[32,64], index: 12, kind: input, shape index: {}]
  %s13 = inlined_call_operand.vmem [shape: bf16[32,64], index: 13, kind: input, shape index: {}]
  %s14 = inlined_call_operand.vmem [shape: f32[1,64], index: 14, kind: input, shape index: {}]
  %s15 = inlined_call_operand.vmem [shape: bf16[64,32], index: 15, kind: input, shape index: {}]
  %s16 = inlined_call_operand.vmem [shape: f32[1,32], index: 16, kind: input, shape index: {}]
  %s17 = inlined_call_operand.vmem [shape: f32[3,32], index: 17, kind: input, shape index: {}]
  %s18 = inlined_call_operand.vmem [shape: f32[3,32], index: 18, kind: input, shape index: {}]
  %s19 = inlined_call_operand.vmem [shape: f32[32,8], index: 19, kind: input, shape index: {}, may-alias: {19,21}]
  %s20 = inlined_call_operand.vmem [shape: f32[8,32], index: 20, kind: input, shape index: {}, may-alias: {20,22}]
  %s21 = inlined_call_operand.vmem [shape: f32[32,8], index: 21, kind: input, shape index: {}, may-alias: {19,21}]
  %s22 = inlined_call_operand.vmem [shape: f32[8,32], index: 22, kind: input, shape index: {}, may-alias: {20,22}]
  %s23 = inlined_call_operand.hbm [shape: f32[2,16,32], index: 23, kind: output, shape index: {0}]
  %s24 = inlined_call_operand.vmem [shape: f32[2,16,32], index: 24, kind: output, shape index: {1}]
  %25 = xla_tuple %s23, %s24
  %s26 = sld [smem:[#allocation0]]
  $region174: #{hybrid_mp_block.2} parent=0
    _
  %s28 = ssub.s32 1, %s26
  %s29 = scalar_select 0, %s28, %s26
  $region1: #{hybrid_mp_block.2} parent=0
    #allocation2 [shape = 'u8[65536]{0}', space=vmem, size = 0x10000, scoped, tag = 'input window, operand 5']
    #allocation3 [shape = 'u8[8192]{0}', space=vmem, size = 0x2000, scoped, tag = 'output window, operand 0']
    #allocation4 [shape = 's32[2]{0}', space=sflag, size = 0x8, scoped, tag = 'scoped memory for hybrid_mp_block.2']
    %30 = vsyncpa [#allocation4], 0
    %s31 = scalar_lea.sflag [#allocation4], 1
    %32 = vsyncpa %s31, 0
    loop: start=0, step=1, limit=6
    $region2: #{hybrid_mp_block.2} parent=1 // loop_pre_header
      _
    $region3: #{hybrid_mp_block.2} parent=1 // loop_header
      %s34 = sphi 0, %s38
      %p35 = scmp.ge.s32.totalorder %s34, 6
      %s41 = sphi 0, %s53
      %s42 = sphi 0, %s49
      %s43 = sphi 0, %s41
      %s44 = sphi 0, %s42
      %s45 = sphi 0, %s43
      %s46 = sphi 0, %s44
      %s56 = sphi 0, %s58
      %s59 = sphi 0, %s56
      %s60 = sphi 0, %s59
      %s76 = sphi 0, %s60
      %s84 = sphi 0, %s86
      %s87 = sphi 0, %s84
      %s88 = sphi 0, %s87
      %s104 = sphi 0, %s88
      %s112 = sphi 0, %s114
      %s115 = sphi 0, %s112
      %s116 = sphi 0, %s115
      %s132 = sphi 0, %s116
      %s140 = sphi 0, %s142
      %s143 = sphi 0, %s140
      %s144 = sphi 0, %s143
      %s160 = sphi 0, %s144
      %s166 = sphi 0, %s168
      %s169 = sphi 0, %s166
      %s170 = sphi 0, %s169
      %s186 = sphi 0, %s170
      %s194 = sphi 0, %s196
      %s197 = sphi 0, %s194
      %s198 = sphi 0, %s197
      %s214 = sphi 0, %s198
      %s222 = sphi 0, %s224
      %s225 = sphi 0, %s222
      %s226 = sphi 0, %s225
      %s242 = sphi 0, %s226
      %s250 = sphi 0, %s252
      %s253 = sphi 0, %s250
      %s254 = sphi 0, %s253
      %s270 = sphi 0, %s254
      %s276 = sphi 0, %s278
      %s279 = sphi 0, %s276
      %s280 = sphi 0, %s279
      %s296 = sphi 0, %s280
      %s302 = sphi 0, %s304
      %s305 = sphi 0, %s302
      %s306 = sphi 0, %s305
      %s322 = sphi 0, %s306
      %s326 = sphi 0, %s326
      %s328 = sphi 0, %s326
      %s329 = sphi 0, %s328
      %s343 = sphi 0, %s329
      %s347 = sphi 0, %s347
      %s349 = sphi 0, %s347
      %s350 = sphi 0, %s349
      %s364 = sphi 0, %s350
      %s368 = sphi 0, %s368
      %s370 = sphi 0, %s368
      %s371 = sphi 0, %s370
      %s385 = sphi 0, %s371
      %s389 = sphi 0, %s389
      %s391 = sphi 0, %s389
      %s392 = sphi 0, %s391
      %s406 = sphi 0, %s392
      %s410 = sphi 0, %s410
      %s412 = sphi 0, %s410
      %s413 = sphi 0, %s412
      %s427 = sphi 0, %s413
      %s431 = sphi 0, %s431
      %s433 = sphi 0, %s431
      %s434 = sphi 0, %s433
      %s448 = sphi 0, %s434
      %s452 = sphi 0, %s452
      %s454 = sphi 0, %s452
      %s455 = sphi 0, %s454
      %s469 = sphi 0, %s455
      %s473 = sphi 0, %s473
      %s475 = sphi 0, %s473
      %s476 = sphi 0, %s475
      %s490 = sphi 0, %s476
      %s494 = sphi 0, %s494
      %s496 = sphi 0, %s494
      %s497 = sphi 0, %s496
      %s511 = sphi 0, %s497
      %s515 = sphi 0, %s515
      %s517 = sphi 0, %s515
      %s518 = sphi 0, %s517
      %s532 = sphi 0, %s518
      %s536 = sphi 0, %s536
      %s538 = sphi 0, %s536
      %s539 = sphi 0, %s538
      %s553 = sphi 0, %s539
      %s557 = sphi 0, %s557
      %s559 = sphi 0, %s557
      %s560 = sphi 0, %s559
      %s574 = sphi 0, %s560
      %s578 = sphi 0, %s578
      %s580 = sphi 0, %s578
      %s581 = sphi 0, %s580
      %s595 = sphi 0, %s581
      %s603 = sphi 0, %s605
      %s606 = sphi 0, %s603
      %s607 = sphi 0, %s606
      %s623 = sphi 0, %s607
      %s631 = sphi 0, %s633
      %s634 = sphi 0, %s631
      %s635 = sphi 0, %s634
      %s651 = sphi 0, %s635
    $region4: #{hybrid_mp_block.2} parent=1 // loop_header_branch
      %37 = sbr.rel (%p35) target = $region8
    $region5: #{hybrid_mp_block.2} parent=1 // loop_body
      %s39 = ssub.s32 %s34, 1
      %s40 = ssub.s32 %s34, 2
      %s47 = sadd.s32 1, %s42
      %p48 = scmp.ge.s32.totalorder %s47, 2
      %s49 = scalar_select %p48, 0, %s47
      %s50 = sadd.s32 1, %s41
      %s51 = scalar_select %p48, %s50, %s41
      %p52 = scmp.ge.s32.totalorder %s51, 2
      %s53 = scalar_select %p52, 0, %s51
      %s54 = ssub.s32 %s41, %s53
      %p55 = scmp.eq.s32.totalorder %s54, 0
      %s57 = sadd.s32 %s56, 1
      %s58 = scalar_select %p55, %s56, %s57
      %p61 = pneg %p55
      %p62 = scmp.eq.s32.totalorder %s34, 3
      %p63 = por %p61, %p62
      %p64 = scmp.ne.s32.totalorder %s56, %s59
      %p65 = scmp.eq.s32.totalorder %s34, 0
      %p66 = por %p64, %p65
      %p67 = scmp.ne.s32.totalorder %s56, %s59
      %p68 = scmp.eq.s32.totalorder %s39, 3
      %p69 = por %p67, %p68
      %p70 = scmp.ne.s32.totalorder %s59, %s60
      %p71 = scmp.eq.s32.totalorder %s39, 0
      %p72 = por %p70, %p71
      %p73 = scmp.ne.s32.totalorder %s59, %s60
      %p74 = scmp.eq.s32.totalorder %s40, 3
      %p75 = por %p73, %p74
      %p77 = scmp.ne.s32.totalorder %s60, %s76
      %p78 = scmp.eq.s32.totalorder %s40, 0
      %p79 = por %p77, %p78
      %s80 = ssub.s32 %s41, %s53
      %s81 = ssub.s32 %s42, %s49
      %s82 = sor.u32 %s80, %s81
      %p83 = scmp.eq.s32.totalorder %s82, 0
      %s85 = sadd.s32 %s84, 1
      %s86 = scalar_select %p83, %s84, %s85
      %p89 = pneg %p83
      %p90 = scmp.eq.s32.totalorder %s34, 3
      %p91 = por %p89, %p90
      %p92 = scmp.ne.s32.totalorder %s84, %s87
      %p93 = scmp.eq.s32.totalorder %s34, 0
      %p94 = por %p92, %p93
      %p95 = scmp.ne.s32.totalorder %s84, %s87
      %p96 = scmp.eq.s32.totalorder %s39, 3
      %p97 = por %p95, %p96
      %p98 = scmp.ne.s32.totalorder %s87, %s88
      %p99 = scmp.eq.s32.totalorder %s39, 0
      %p100 = por %p98, %p99
      %p101 = scmp.ne.s32.totalorder %s87, %s88
      %p102 = scmp.eq.s32.totalorder %s40, 3
      %p103 = por %p101, %p102
      %p105 = scmp.ne.s32.totalorder %s88, %s104
      %p106 = scmp.eq.s32.totalorder %s40, 0
      %p107 = por %p105, %p106
      %s108 = ssub.s32 %s41, %s53
      %s109 = ssub.s32 %s42, %s49
      %s110 = sor.u32 %s108, %s109
      %p111 = scmp.eq.s32.totalorder %s110, 0
      %s113 = sadd.s32 %s112, 1
      %s114 = scalar_select %p111, %s112, %s113
      %p117 = pneg %p111
      %p118 = scmp.eq.s32.totalorder %s34, 3
      %p119 = por %p117, %p118
      %p120 = scmp.ne.s32.totalorder %s112, %s115
      %p121 = scmp.eq.s32.totalorder %s34, 0
      %p122 = por %p120, %p121
      %p123 = scmp.ne.s32.totalorder %s112, %s115
      %p124 = scmp.eq.s32.totalorder %s39, 3
      %p125 = por %p123, %p124
      %p126 = scmp.ne.s32.totalorder %s115, %s116
      %p127 = scmp.eq.s32.totalorder %s39, 0
      %p128 = por %p126, %p127
      %p129 = scmp.ne.s32.totalorder %s115, %s116
      %p130 = scmp.eq.s32.totalorder %s40, 3
      %p131 = por %p129, %p130
      %p133 = scmp.ne.s32.totalorder %s116, %s132
      %p134 = scmp.eq.s32.totalorder %s40, 0
      %p135 = por %p133, %p134
      %s136 = ssub.s32 %s41, %s53
      %s137 = ssub.s32 %s42, %s49
      %s138 = sor.u32 %s136, %s137
      %p139 = scmp.eq.s32.totalorder %s138, 0
      %s141 = sadd.s32 %s140, 1
      %s142 = scalar_select %p139, %s140, %s141
      %p145 = pneg %p139
      %p146 = scmp.eq.s32.totalorder %s34, 3
      %p147 = por %p145, %p146
      %p148 = scmp.ne.s32.totalorder %s140, %s143
      %p149 = scmp.eq.s32.totalorder %s34, 0
      %p150 = por %p148, %p149
      %p151 = scmp.ne.s32.totalorder %s140, %s143
      %p152 = scmp.eq.s32.totalorder %s39, 3
      %p153 = por %p151, %p152
      %p154 = scmp.ne.s32.totalorder %s143, %s144
      %p155 = scmp.eq.s32.totalorder %s39, 0
      %p156 = por %p154, %p155
      %p157 = scmp.ne.s32.totalorder %s143, %s144
      %p158 = scmp.eq.s32.totalorder %s40, 3
      %p159 = por %p157, %p158
      %p161 = scmp.ne.s32.totalorder %s144, %s160
      %p162 = scmp.eq.s32.totalorder %s40, 0
      %p163 = por %p161, %p162
      %s164 = ssub.s32 %s41, %s53
      %p165 = scmp.eq.s32.totalorder %s164, 0
      %s167 = sadd.s32 %s166, 1
      %s168 = scalar_select %p165, %s166, %s167
      %p171 = pneg %p165
      %p172 = scmp.eq.s32.totalorder %s34, 3
      %p173 = por %p171, %p172
      %p174 = scmp.ne.s32.totalorder %s166, %s169
      %p175 = scmp.eq.s32.totalorder %s34, 0
      %p176 = por %p174, %p175
      %p177 = scmp.ne.s32.totalorder %s166, %s169
      %p178 = scmp.eq.s32.totalorder %s39, 3
      %p179 = por %p177, %p178
      %p180 = scmp.ne.s32.totalorder %s169, %s170
      %p181 = scmp.eq.s32.totalorder %s39, 0
      %p182 = por %p180, %p181
      %p183 = scmp.ne.s32.totalorder %s169, %s170
      %p184 = scmp.eq.s32.totalorder %s40, 3
      %p185 = por %p183, %p184
      %p187 = scmp.ne.s32.totalorder %s170, %s186
      %p188 = scmp.eq.s32.totalorder %s40, 0
      %p189 = por %p187, %p188
      %s190 = ssub.s32 %s41, %s53
      %s191 = ssub.s32 %s42, %s49
      %s192 = sor.u32 %s190, %s191
      %p193 = scmp.eq.s32.totalorder %s192, 0
      %s195 = sadd.s32 %s194, 1
      %s196 = scalar_select %p193, %s194, %s195
      %p199 = pneg %p193
      %p200 = scmp.eq.s32.totalorder %s34, 3
      %p201 = por %p199, %p200
      %p202 = scmp.ne.s32.totalorder %s194, %s197
      %p203 = scmp.eq.s32.totalorder %s34, 0
      %p204 = por %p202, %p203
      %p205 = scmp.ne.s32.totalorder %s194, %s197
      %p206 = scmp.eq.s32.totalorder %s39, 3
      %p207 = por %p205, %p206
      %p208 = scmp.ne.s32.totalorder %s197, %s198
      %p209 = scmp.eq.s32.totalorder %s39, 0
      %p210 = por %p208, %p209
      %p211 = scmp.ne.s32.totalorder %s197, %s198
      %p212 = scmp.eq.s32.totalorder %s40, 3
      %p213 = por %p211, %p212
      %p215 = scmp.ne.s32.totalorder %s198, %s214
      %p216 = scmp.eq.s32.totalorder %s40, 0
      %p217 = por %p215, %p216
      %s218 = ssub.s32 %s41, %s53
      %s219 = ssub.s32 %s42, %s49
      %s220 = sor.u32 %s218, %s219
      %p221 = scmp.eq.s32.totalorder %s220, 0
      %s223 = sadd.s32 %s222, 1
      %s224 = scalar_select %p221, %s222, %s223
      %p227 = pneg %p221
      %p228 = scmp.eq.s32.totalorder %s34, 3
      %p229 = por %p227, %p228
      %p230 = scmp.ne.s32.totalorder %s222, %s225
      %p231 = scmp.eq.s32.totalorder %s34, 0
      %p232 = por %p230, %p231
      %p233 = scmp.ne.s32.totalorder %s222, %s225
      %p234 = scmp.eq.s32.totalorder %s39, 3
      %p235 = por %p233, %p234
      %p236 = scmp.ne.s32.totalorder %s225, %s226
      %p237 = scmp.eq.s32.totalorder %s39, 0
      %p238 = por %p236, %p237
      %p239 = scmp.ne.s32.totalorder %s225, %s226
      %p240 = scmp.eq.s32.totalorder %s40, 3
      %p241 = por %p239, %p240
      %p243 = scmp.ne.s32.totalorder %s226, %s242
      %p244 = scmp.eq.s32.totalorder %s40, 0
      %p245 = por %p243, %p244
      %s246 = ssub.s32 %s41, %s53
      %s247 = ssub.s32 %s42, %s49
      %s248 = sor.u32 %s246, %s247
      %p249 = scmp.eq.s32.totalorder %s248, 0
      %s251 = sadd.s32 %s250, 1
      %s252 = scalar_select %p249, %s250, %s251
      %p255 = pneg %p249
      %p256 = scmp.eq.s32.totalorder %s34, 3
      %p257 = por %p255, %p256
      %p258 = scmp.ne.s32.totalorder %s250, %s253
      %p259 = scmp.eq.s32.totalorder %s34, 0
      %p260 = por %p258, %p259
      %p261 = scmp.ne.s32.totalorder %s250, %s253
      %p262 = scmp.eq.s32.totalorder %s39, 3
      %p263 = por %p261, %p262
      %p264 = scmp.ne.s32.totalorder %s253, %s254
      %p265 = scmp.eq.s32.totalorder %s39, 0
      %p266 = por %p264, %p265
      %p267 = scmp.ne.s32.totalorder %s253, %s254
      %p268 = scmp.eq.s32.totalorder %s40, 3
      %p269 = por %p267, %p268
      %p271 = scmp.ne.s32.totalorder %s254, %s270
      %p272 = scmp.eq.s32.totalorder %s40, 0
      %p273 = por %p271, %p272
      %s274 = ssub.s32 %s41, %s53
      %p275 = scmp.eq.s32.totalorder %s274, 0
      %s277 = sadd.s32 %s276, 1
      %s278 = scalar_select %p275, %s276, %s277
      %p281 = pneg %p275
      %p282 = scmp.eq.s32.totalorder %s34, 3
      %p283 = por %p281, %p282
      %p284 = scmp.ne.s32.totalorder %s276, %s279
      %p285 = scmp.eq.s32.totalorder %s34, 0
      %p286 = por %p284, %p285
      %p287 = scmp.ne.s32.totalorder %s276, %s279
      %p288 = scmp.eq.s32.totalorder %s39, 3
      %p289 = por %p287, %p288
      %p290 = scmp.ne.s32.totalorder %s279, %s280
      %p291 = scmp.eq.s32.totalorder %s39, 0
      %p292 = por %p290, %p291
      %p293 = scmp.ne.s32.totalorder %s279, %s280
      %p294 = scmp.eq.s32.totalorder %s40, 3
      %p295 = por %p293, %p294
      %p297 = scmp.ne.s32.totalorder %s280, %s296
      %p298 = scmp.eq.s32.totalorder %s40, 0
      %p299 = por %p297, %p298
      %s300 = ssub.s32 %s41, %s53
      %p301 = scmp.eq.s32.totalorder %s300, 0
      %s303 = sadd.s32 %s302, 1
      %s304 = scalar_select %p301, %s302, %s303
      %p307 = pneg %p301
      %p308 = scmp.eq.s32.totalorder %s34, 3
      %p309 = por %p307, %p308
      %p310 = scmp.ne.s32.totalorder %s302, %s305
      %p311 = scmp.eq.s32.totalorder %s34, 0
      %p312 = por %p310, %p311
      %p313 = scmp.ne.s32.totalorder %s302, %s305
      %p314 = scmp.eq.s32.totalorder %s39, 3
      %p315 = por %p313, %p314
      %p316 = scmp.ne.s32.totalorder %s305, %s306
      %p317 = scmp.eq.s32.totalorder %s39, 0
      %p318 = por %p316, %p317
      %p319 = scmp.ne.s32.totalorder %s305, %s306
      %p320 = scmp.eq.s32.totalorder %s40, 3
      %p321 = por %p319, %p320
      %p323 = scmp.ne.s32.totalorder %s306, %s322
      %p324 = scmp.eq.s32.totalorder %s40, 0
      %p325 = por %p323, %p324
      %s327 = sadd.s32 %s326, 1
      %p330 = scmp.eq.s32.totalorder %s34, 3
      %p331 = scmp.ne.s32.totalorder %s326, %s328
      %p332 = scmp.eq.s32.totalorder %s34, 0
      %p333 = por %p331, %p332
      %p334 = scmp.ne.s32.totalorder %s326, %s328
      %p335 = scmp.eq.s32.totalorder %s39, 3
      %p336 = por %p334, %p335
      %p337 = scmp.ne.s32.totalorder %s328, %s329
      %p338 = scmp.eq.s32.totalorder %s39, 0
      %p339 = por %p337, %p338
      %p340 = scmp.ne.s32.totalorder %s328, %s329
      %p341 = scmp.eq.s32.totalorder %s40, 3
      %p342 = por %p340, %p341
      %p344 = scmp.ne.s32.totalorder %s329, %s343
      %p345 = scmp.eq.s32.totalorder %s40, 0
      %p346 = por %p344, %p345
      %s348 = sadd.s32 %s347, 1
      %p351 = scmp.eq.s32.totalorder %s34, 3
      %p352 = scmp.ne.s32.totalorder %s347, %s349
      %p353 = scmp.eq.s32.totalorder %s34, 0
      %p354 = por %p352, %p353
      %p355 = scmp.ne.s32.totalorder %s347, %s349
      %p356 = scmp.eq.s32.totalorder %s39, 3
      %p357 = por %p355, %p356
      %p358 = scmp.ne.s32.totalorder %s349, %s350
      %p359 = scmp.eq.s32.totalorder %s39, 0
      %p360 = por %p358, %p359
      %p361 = scmp.ne.s32.totalorder %s349, %s350
      %p362 = scmp.eq.s32.totalorder %s40, 3
      %p363 = por %p361, %p362
      %p365 = scmp.ne.s32.totalorder %s350, %s364
      %p366 = scmp.eq.s32.totalorder %s40, 0
      %p367 = por %p365, %p366
      %s369 = sadd.s32 %s368, 1
      %p372 = scmp.eq.s32.totalorder %s34, 3
      %p373 = scmp.ne.s32.totalorder %s368, %s370
      %p374 = scmp.eq.s32.totalorder %s34, 0
      %p375 = por %p373, %p374
      %p376 = scmp.ne.s32.totalorder %s368, %s370
      %p377 = scmp.eq.s32.totalorder %s39, 3
      %p378 = por %p376, %p377
      %p379 = scmp.ne.s32.totalorder %s370, %s371
      %p380 = scmp.eq.s32.totalorder %s39, 0
      %p381 = por %p379, %p380
      %p382 = scmp.ne.s32.totalorder %s370, %s371
      %p383 = scmp.eq.s32.totalorder %s40, 3
      %p384 = por %p382, %p383
      %p386 = scmp.ne.s32.totalorder %s371, %s385
      %p387 = scmp.eq.s32.totalorder %s40, 0
      %p388 = por %p386, %p387
      %s390 = sadd.s32 %s389, 1
      %p393 = scmp.eq.s32.totalorder %s34, 3
      %p394 = scmp.ne.s32.totalorder %s389, %s391
      %p395 = scmp.eq.s32.totalorder %s34, 0
      %p396 = por %p394, %p395
      %p397 = scmp.ne.s32.totalorder %s389, %s391
      %p398 = scmp.eq.s32.totalorder %s39, 3
      %p399 = por %p397, %p398
      %p400 = scmp.ne.s32.totalorder %s391, %s392
      %p401 = scmp.eq.s32.totalorder %s39, 0
      %p402 = por %p400, %p401
      %p403 = scmp.ne.s32.totalorder %s391, %s392
      %p404 = scmp.eq.s32.totalorder %s40, 3
      %p405 = por %p403, %p404
      %p407 = scmp.ne.s32.totalorder %s392, %s406
      %p408 = scmp.eq.s32.totalorder %s40, 0
      %p409 = por %p407, %p408
      %s411 = sadd.s32 %s410, 1
      %p414 = scmp.eq.s32.totalorder %s34, 3
      %p415 = scmp.ne.s32.totalorder %s410, %s412
      %p416 = scmp.eq.s32.totalorder %s34, 0
      %p417 = por %p415, %p416
      %p418 = scmp.ne.s32.totalorder %s410, %s412
      %p419 = scmp.eq.s32.totalorder %s39, 3
      %p420 = por %p418, %p419
      %p421 = scmp.ne.s32.totalorder %s412, %s413
      %p422 = scmp.eq.s32.totalorder %s39, 0
      %p423 = por %p421, %p422
      %p424 = scmp.ne.s32.totalorder %s412, %s413
      %p425 = scmp.eq.s32.totalorder %s40, 3
      %p426 = por %p424, %p425
      %p428 = scmp.ne.s32.totalorder %s413, %s427
      %p429 = scmp.eq.s32.totalorder %s40, 0
      %p430 = por %p428, %p429
      %s432 = sadd.s32 %s431, 1
      %p435 = scmp.eq.s32.totalorder %s34, 3
      %p436 = scmp.ne.s32.totalorder %s431, %s433
      %p437 = scmp.eq.s32.totalorder %s34, 0
      %p438 = por %p436, %p437
      %p439 = scmp.ne.s32.totalorder %s431, %s433
      %p440 = scmp.eq.s32.totalorder %s39, 3
      %p441 = por %p439, %p440
      %p442 = scmp.ne.s32.totalorder %s433, %s434
      %p443 = scmp.eq.s32.totalorder %s39, 0
      %p444 = por %p442, %p443
      %p445 = scmp.ne.s32.totalorder %s433, %s434
      %p446 = scmp.eq.s32.totalorder %s40, 3
      %p447 = por %p445, %p446
      %p449 = scmp.ne.s32.totalorder %s434, %s448
      %p450 = scmp.eq.s32.totalorder %s40, 0
      %p451 = por %p449, %p450
      %s453 = sadd.s32 %s452, 1
      %p456 = scmp.eq.s32.totalorder %s34, 3
      %p457 = scmp.ne.s32.totalorder %s452, %s454
      %p458 = scmp.eq.s32.totalorder %s34, 0
      %p459 = por %p457, %p458
      %p460 = scmp.ne.s32.totalorder %s452, %s454
      %p461 = scmp.eq.s32.totalorder %s39, 3
      %p462 = por %p460, %p461
      %p463 = scmp.ne.s32.totalorder %s454, %s455
      %p464 = scmp.eq.s32.totalorder %s39, 0
      %p465 = por %p463, %p464
      %p466 = scmp.ne.s32.totalorder %s454, %s455
      %p467 = scmp.eq.s32.totalorder %s40, 3
      %p468 = por %p466, %p467
      %p470 = scmp.ne.s32.totalorder %s455, %s469
      %p471 = scmp.eq.s32.totalorder %s40, 0
      %p472 = por %p470, %p471
      %s474 = sadd.s32 %s473, 1
      %p477 = scmp.eq.s32.totalorder %s34, 3
      %p478 = scmp.ne.s32.totalorder %s473, %s475
      %p479 = scmp.eq.s32.totalorder %s34, 0
      %p480 = por %p478, %p479
      %p481 = scmp.ne.s32.totalorder %s473, %s475
      %p482 = scmp.eq.s32.totalorder %s39, 3
      %p483 = por %p481, %p482
      %p484 = scmp.ne.s32.totalorder %s475, %s476
      %p485 = scmp.eq.s32.totalorder %s39, 0
      %p486 = por %p484, %p485
      %p487 = scmp.ne.s32.totalorder %s475, %s476
      %p488 = scmp.eq.s32.totalorder %s40, 3
      %p489 = por %p487, %p488
      %p491 = scmp.ne.s32.totalorder %s476, %s490
      %p492 = scmp.eq.s32.totalorder %s40, 0
      %p493 = por %p491, %p492
      %s495 = sadd.s32 %s494, 1
      %p498 = scmp.eq.s32.totalorder %s34, 3
      %p499 = scmp.ne.s32.totalorder %s494, %s496
      %p500 = scmp.eq.s32.totalorder %s34, 0
      %p501 = por %p499, %p500
      %p502 = scmp.ne.s32.totalorder %s494, %s496
      %p503 = scmp.eq.s32.totalorder %s39, 3
      %p504 = por %p502, %p503
      %p505 = scmp.ne.s32.totalorder %s496, %s497
      %p506 = scmp.eq.s32.totalorder %s39, 0
      %p507 = por %p505, %p506
      %p508 = scmp.ne.s32.totalorder %s496, %s497
      %p509 = scmp.eq.s32.totalorder %s40, 3
      %p510 = por %p508, %p509
      %p512 = scmp.ne.s32.totalorder %s497, %s511
      %p513 = scmp.eq.s32.totalorder %s40, 0
      %p514 = por %p512, %p513
      %s516 = sadd.s32 %s515, 1
      %p519 = scmp.eq.s32.totalorder %s34, 3
      %p520 = scmp.ne.s32.totalorder %s515, %s517
      %p521 = scmp.eq.s32.totalorder %s34, 0
      %p522 = por %p520, %p521
      %p523 = scmp.ne.s32.totalorder %s515, %s517
      %p524 = scmp.eq.s32.totalorder %s39, 3
      %p525 = por %p523, %p524
      %p526 = scmp.ne.s32.totalorder %s517, %s518
      %p527 = scmp.eq.s32.totalorder %s39, 0
      %p528 = por %p526, %p527
      %p529 = scmp.ne.s32.totalorder %s517, %s518
      %p530 = scmp.eq.s32.totalorder %s40, 3
      %p531 = por %p529, %p530
      %p533 = scmp.ne.s32.totalorder %s518, %s532
      %p534 = scmp.eq.s32.totalorder %s40, 0
      %p535 = por %p533, %p534
      %s537 = sadd.s32 %s536, 1
      %p540 = scmp.eq.s32.totalorder %s34, 3
      %p541 = scmp.ne.s32.totalorder %s536, %s538
      %p542 = scmp.eq.s32.totalorder %s34, 0
      %p543 = por %p541, %p542
      %p544 = scmp.ne.s32.totalorder %s536, %s538
      %p545 = scmp.eq.s32.totalorder %s39, 3
      %p546 = por %p544, %p545
      %p547 = scmp.ne.s32.totalorder %s538, %s539
      %p548 = scmp.eq.s32.totalorder %s39, 0
      %p549 = por %p547, %p548
      %p550 = scmp.ne.s32.totalorder %s538, %s539
      %p551 = scmp.eq.s32.totalorder %s40, 3
      %p552 = por %p550, %p551
      %p554 = scmp.ne.s32.totalorder %s539, %s553
      %p555 = scmp.eq.s32.totalorder %s40, 0
      %p556 = por %p554, %p555
      %s558 = sadd.s32 %s557, 1
      %p561 = scmp.eq.s32.totalorder %s34, 3
      %p562 = scmp.ne.s32.totalorder %s557, %s559
      %p563 = scmp.eq.s32.totalorder %s34, 0
      %p564 = por %p562, %p563
      %p565 = scmp.ne.s32.totalorder %s557, %s559
      %p566 = scmp.eq.s32.totalorder %s39, 3
      %p567 = por %p565, %p566
      %p568 = scmp.ne.s32.totalorder %s559, %s560
      %p569 = scmp.eq.s32.totalorder %s39, 0
      %p570 = por %p568, %p569
      %p571 = scmp.ne.s32.totalorder %s559, %s560
      %p572 = scmp.eq.s32.totalorder %s40, 3
      %p573 = por %p571, %p572
      %p575 = scmp.ne.s32.totalorder %s560, %s574
      %p576 = scmp.eq.s32.totalorder %s40, 0
      %p577 = por %p575, %p576
      %s579 = sadd.s32 %s578, 1
      %p582 = scmp.eq.s32.totalorder %s34, 3
      %p583 = scmp.ne.s32.totalorder %s578, %s580
      %p584 = scmp.eq.s32.totalorder %s34, 0
      %p585 = por %p583, %p584
      %p586 = scmp.ne.s32.totalorder %s578, %s580
      %p587 = scmp.eq.s32.totalorder %s39, 3
      %p588 = por %p586, %p587
      %p589 = scmp.ne.s32.totalorder %s580, %s581
      %p590 = scmp.eq.s32.totalorder %s39, 0
      %p591 = por %p589, %p590
      %p592 = scmp.ne.s32.totalorder %s580, %s581
      %p593 = scmp.eq.s32.totalorder %s40, 3
      %p594 = por %p592, %p593
      %p596 = scmp.ne.s32.totalorder %s581, %s595
      %p597 = scmp.eq.s32.totalorder %s40, 0
      %p598 = por %p596, %p597
      %s599 = ssub.s32 %s41, %s53
      %s600 = ssub.s32 %s42, %s49
      %s601 = sor.u32 %s599, %s600
      %p602 = scmp.eq.s32.totalorder %s601, 0
      %s604 = sadd.s32 %s603, 1
      %s605 = scalar_select %p602, %s603, %s604
      %p608 = pneg %p602
      %p609 = scmp.eq.s32.totalorder %s34, 3
      %p610 = por %p608, %p609
      %p611 = scmp.ne.s32.totalorder %s603, %s606
      %p612 = scmp.eq.s32.totalorder %s34, 0
      %p613 = por %p611, %p612
      %p614 = scmp.ne.s32.totalorder %s603, %s606
      %p615 = scmp.eq.s32.totalorder %s39, 3
      %p616 = por %p614, %p615
      %p617 = scmp.ne.s32.totalorder %s606, %s607
      %p618 = scmp.eq.s32.totalorder %s39, 0
      %p619 = por %p617, %p618
      %p620 = scmp.ne.s32.totalorder %s606, %s607
      %p621 = scmp.eq.s32.totalorder %s40, 3
      %p622 = por %p620, %p621
      %p624 = scmp.ne.s32.totalorder %s607, %s623
      %p625 = scmp.eq.s32.totalorder %s40, 0
      %p626 = por %p624, %p625
      %s627 = ssub.s32 %s41, %s53
      %s628 = ssub.s32 %s42, %s49
      %s629 = sor.u32 %s627, %s628
      %p630 = scmp.eq.s32.totalorder %s629, 0
      %s632 = sadd.s32 %s631, 1
      %s633 = scalar_select %p630, %s631, %s632
      %p636 = pneg %p630
      %p637 = scmp.eq.s32.totalorder %s34, 3
      %p638 = por %p636, %p637
      %p639 = scmp.ne.s32.totalorder %s631, %s634
      %p640 = scmp.eq.s32.totalorder %s34, 0
      %p641 = por %p639, %p640
      %p642 = scmp.ne.s32.totalorder %s631, %s634
      %p643 = scmp.eq.s32.totalorder %s39, 3
      %p644 = por %p642, %p643
      %p645 = scmp.ne.s32.totalorder %s634, %s635
      %p646 = scmp.eq.s32.totalorder %s39, 0
      %p647 = por %p645, %p646
      %p648 = scmp.ne.s32.totalorder %s634, %s635
      %p649 = scmp.eq.s32.totalorder %s40, 3
      %p650 = por %p648, %p649
      %p652 = scmp.ne.s32.totalorder %s635, %s651
      %p653 = scmp.eq.s32.totalorder %s40, 0
      %p654 = por %p652, %p653
      %p655 = scmp.le.s32.totalorder 1, %s34
      %p656 = scmp.lt.s32.totalorder %s34, 5
      %p657 = pnand %p655, %p656
      %p658 = pneg %p657
      // Predicated region
      $region9: #{hybrid_mp_block.2} parent=5 // pred_check
        _
      $region10: #{hybrid_mp_block.2} parent=5 // pred_check_branch
        %660 = sbr.rel (%p657) target = $region12
      $region11: #{hybrid_mp_block.2} parent=5 // pred_region
        %s661 = ssub.s32 %s34, 1
        // Predicated region
        $region13: #{hybrid_mp_block.2} parent=11 // pred_check
          %p662 = pneg %p339
        $region14: #{hybrid_mp_block.2} parent=11 // pred_check_branch
          %664 = sbr.rel (%p662) target = $region16
        $region15: #{hybrid_mp_block.2} parent=11 // pred_region
          _
        $region16: #{hybrid_mp_block.2} parent=11 // pred_fallthru
          _
        // Predicated region
        $region17: #{hybrid_mp_block.2} parent=11 // pred_check
          %p665 = pneg %p360
        $region18: #{hybrid_mp_block.2} parent=11 // pred_check_branch
          %667 = sbr.rel (%p665) target = $region20
        $region19: #{hybrid_mp_block.2} parent=11 // pred_region
          _
        $region20: #{hybrid_mp_block.2} parent=11 // pred_fallthru
          _
        // Predicated region
        $region21: #{hybrid_mp_block.2} parent=11 // pred_check
          %p668 = pneg %p381
        $region22: #{hybrid_mp_block.2} parent=11 // pred_check_branch
          %670 = sbr.rel (%p668) target = $region24
        $region23: #{hybrid_mp_block.2} parent=11 // pred_region
          _
        $region24: #{hybrid_mp_block.2} parent=11 // pred_fallthru
          _
        // Predicated region
        $region25: #{hybrid_mp_block.2} parent=11 // pred_check
          %p671 = pneg %p402
        $region26: #{hybrid_mp_block.2} parent=11 // pred_check_branch
          %673 = sbr.rel (%p671) target = $region28
        $region27: #{hybrid_mp_block.2} parent=11 // pred_region
          _
        $region28: #{hybrid_mp_block.2} parent=11 // pred_fallthru
          _
        // Predicated region
        $region29: #{hybrid_mp_block.2} parent=11 // pred_check
          %p674 = pneg %p423
        $region30: #{hybrid_mp_block.2} parent=11 // pred_check_branch
          %676 = sbr.rel (%p674) target = $region32
        $region31: #{hybrid_mp_block.2} parent=11 // pred_region
          _
        $region32: #{hybrid_mp_block.2} parent=11 // pred_fallthru
          _
        // Predicated region
        $region33: #{hybrid_mp_block.2} parent=11 // pred_check
          %p677 = pneg %p444
        $region34: #{hybrid_mp_block.2} parent=11 // pred_check_branch
          %679 = sbr.rel (%p677) target = $region36
        $region35: #{hybrid_mp_block.2} parent=11 // pred_region
          _
        $region36: #{hybrid_mp_block.2} parent=11 // pred_fallthru
          _
        // Predicated region
        $region37: #{hybrid_mp_block.2} parent=11 // pred_check
          %p680 = pneg %p465
        $region38: #{hybrid_mp_block.2} parent=11 // pred_check_branch
          %682 = sbr.rel (%p680) target = $region40
        $region39: #{hybrid_mp_block.2} parent=11 // pred_region
          _
        $region40: #{hybrid_mp_block.2} parent=11 // pred_fallthru
          _
        // Predicated region
        $region41: #{hybrid_mp_block.2} parent=11 // pred_check
          %p683 = pneg %p486
        $region42: #{hybrid_mp_block.2} parent=11 // pred_check_branch
          %685 = sbr.rel (%p683) target = $region44
        $region43: #{hybrid_mp_block.2} parent=11 // pred_region
          _
        $region44: #{hybrid_mp_block.2} parent=11 // pred_fallthru
          _
        // Predicated region
        $region45: #{hybrid_mp_block.2} parent=11 // pred_check
          %p686 = pneg %p507
        $region46: #{hybrid_mp_block.2} parent=11 // pred_check_branch
          %688 = sbr.rel (%p686) target = $region48
        $region47: #{hybrid_mp_block.2} parent=11 // pred_region
          _
        $region48: #{hybrid_mp_block.2} parent=11 // pred_fallthru
          _
        // Predicated region
        $region49: #{hybrid_mp_block.2} parent=11 // pred_check
          %p689 = pneg %p528
        $region50: #{hybrid_mp_block.2} parent=11 // pred_check_branch
          %691 = sbr.rel (%p689) target = $region52
        $region51: #{hybrid_mp_block.2} parent=11 // pred_region
          _
        $region52: #{hybrid_mp_block.2} parent=11 // pred_fallthru
          _
        // Predicated region
        $region53: #{hybrid_mp_block.2} parent=11 // pred_check
          %p692 = pneg %p549
        $region54: #{hybrid_mp_block.2} parent=11 // pred_check_branch
          %694 = sbr.rel (%p692) target = $region56
        $region55: #{hybrid_mp_block.2} parent=11 // pred_region
          _
        $region56: #{hybrid_mp_block.2} parent=11 // pred_fallthru
          _
        // Predicated region
        $region57: #{hybrid_mp_block.2} parent=11 // pred_check
          %p695 = pneg %p570
        $region58: #{hybrid_mp_block.2} parent=11 // pred_check_branch
          %697 = sbr.rel (%p695) target = $region60
        $region59: #{hybrid_mp_block.2} parent=11 // pred_region
          _
        $region60: #{hybrid_mp_block.2} parent=11 // pred_fallthru
          _
        // Predicated region
        $region61: #{hybrid_mp_block.2} parent=11 // pred_check
          %p698 = pneg %p591
        $region62: #{hybrid_mp_block.2} parent=11 // pred_check_branch
          %700 = sbr.rel (%p698) target = $region64
        $region63: #{hybrid_mp_block.2} parent=11 // pred_region
          _
        $region64: #{hybrid_mp_block.2} parent=11 // pred_fallthru
          _
      $region12: #{hybrid_mp_block.2} parent=5 // pred_fallthru
        _
      %p701 = scmp.lt.s32.totalorder %s34, 4
      // Predicated region
      $region65: #{hybrid_mp_block.2} parent=5 // pred_check
        %p702 = pneg %p701
      $region66: #{hybrid_mp_block.2} parent=5 // pred_check_branch
        %704 = sbr.rel (%p702) target = $region68
      $region67: #{hybrid_mp_block.2} parent=5 // pred_region
        // Predicated region
        $region69: #{hybrid_mp_block.2} parent=67 // pred_check
          %p705 = pneg %p66
        $region70: #{hybrid_mp_block.2} parent=67 // pred_check_branch
          %707 = sbr.rel (%p705) target = $region72
        $region71: #{hybrid_mp_block.2} parent=67 // pred_region
          %p708 = scmp.lt.s32.totalorder %s41, 1
          %s709 = scalar_select %p708, %s41, 1
          %s710 = smul.addr %s709, 2
          %s711 = smul.addr %s710, 8
          %s712 = scalar_lea.vmem %s0, %s711
        $region72: #{hybrid_mp_block.2} parent=67 // pred_fallthru
          _
        // Predicated region
        $region73: #{hybrid_mp_block.2} parent=67 // pred_check
          %p713 = pneg %p94
        $region74: #{hybrid_mp_block.2} parent=67 // pred_check_branch
          %715 = sbr.rel (%p713) target = $region76
        $region75: #{hybrid_mp_block.2} parent=67 // pred_region
          %p716 = scmp.lt.s32.totalorder %s41, 1
          %s717 = scalar_select %p716, %s41, 1
          %p718 = scmp.lt.s32.totalorder %s42, 1
          %s719 = scalar_select %p718, %s42, 1
          %s720 = smul.addr %s717, 2
          %s721 = sadd.s32 %s719, %s720
          %s722 = smul.addr %s721, 8
          %s723 = scalar_lea.vmem %s1, %s722
        $region76: #{hybrid_mp_block.2} parent=67 // pred_fallthru
          _
        // Predicated region
        $region77: #{hybrid_mp_block.2} parent=67 // pred_check
          %p724 = pneg %p122
        $region78: #{hybrid_mp_block.2} parent=67 // pred_check_branch
          %726 = sbr.rel (%p724) target = $region80
        $region79: #{hybrid_mp_block.2} parent=67 // pred_region
          %p727 = scmp.lt.s32.totalorder %s41, 1
          %s728 = scalar_select %p727, %s41, 1
          %p729 = scmp.lt.s32.totalorder %s42, 1
          %s730 = scalar_select %p729, %s42, 1
          %s731 = smul.addr %s728, 2
          %s732 = sadd.s32 %s730, %s731
          %s733 = smul.addr %s732, 8
          %s734 = scalar_lea.vmem %s2, %s733
        $region80: #{hybrid_mp_block.2} parent=67 // pred_fallthru
          _
        // Predicated region
        $region81: #{hybrid_mp_block.2} parent=67 // pred_check
          %p735 = pneg %p150
        $region82: #{hybrid_mp_block.2} parent=67 // pred_check_branch
          %737 = sbr.rel (%p735) target = $region84
        $region83: #{hybrid_mp_block.2} parent=67 // pred_region
          %p738 = scmp.lt.s32.totalorder %s41, 1
          %s739 = scalar_select %p738, %s41, 1
          %p740 = scmp.lt.s32.totalorder %s42, 1
          %s741 = scalar_select %p740, %s42, 1
          %s742 = smul.addr %s739, 2
          %s743 = sadd.s32 %s741, %s742
          %s744 = smul.addr %s743, 8
          %s745 = scalar_lea.vmem %s3, %s744
        $region84: #{hybrid_mp_block.2} parent=67 // pred_fallthru
          _
        // Predicated region
        $region85: #{hybrid_mp_block.2} parent=67 // pred_check
          %p746 = pneg %p176
        $region86: #{hybrid_mp_block.2} parent=67 // pred_check_branch
          %748 = sbr.rel (%p746) target = $region88
        $region87: #{hybrid_mp_block.2} parent=67 // pred_region
          %p749 = scmp.lt.s32.totalorder %s41, 1
          %s750 = scalar_select %p749, %s41, 1
          %s751 = smul.addr %s750, 2
          %s752 = smul.addr %s751, 8
          %s753 = scalar_lea.vmem %s4, %s752
        $region88: #{hybrid_mp_block.2} parent=67 // pred_fallthru
          _
        // Predicated region
        $region89: #{hybrid_mp_block.2} parent=67 // pred_check
          %p754 = pneg %p204
        $region90: #{hybrid_mp_block.2} parent=67 // pred_check_branch
          %756 = sbr.rel (%p754) target = $region92
        $region91: #{hybrid_mp_block.2} parent=67 // pred_region
          %s757 = sand.u32 %s194, 1
          %s758 = sand.u32 %s194, 1
          %s759 = smul.addr %s758, 64
          %s760 = scalar_lea.vmem [#allocation2], %s759
          %s761 = smul.addr %s41, 32
          %s762 = sadd.s32 %s42, %s761
          %s763 = smul.addr %s762, 4
          %s764 = scalar_lea.vmem %s5, %s763
          // Predicated region
          $region93: #{hybrid_mp_block.2} parent=91 // pred_check
            _
          $region94: #{hybrid_mp_block.2} parent=91 // pred_check_branch
            %766 = sbr.rel (0) target = $region96
          $region95: #{hybrid_mp_block.2} parent=91 // pred_region
            // Predicated region
            $region97: #{hybrid_mp_block.2} parent=95 // pred_check
              _
            $region98: #{hybrid_mp_block.2} parent=95 // pred_check_branch
              %768 = sbr.rel target = $region100
            $region99: #{hybrid_mp_block.2} parent=95 // pred_region
              // Predicated region
              $region112: #{hybrid_mp_block.2} parent=99 // pred_check
                _
              $region113: #{hybrid_mp_block.2} parent=99 // pred_check_branch
                %813 = sbr.rel (0) target = $region115
              $region114: #{hybrid_mp_block.2} parent=99 // pred_region
                loop: start=0, step=1, limit=1
                $region116: #{hybrid_mp_block.2} parent=114 // loop_pre_header
                  _
                $region117: #{hybrid_mp_block.2} parent=114 // loop_header
                  %s815 = sphi 0, %s819
                  %p816 = scmp.ge.s32.totalorder %s815, 1
                  %s820 = sphi %s764, %s764
                  %s821 = sphi %s760, %s760
                $region118: #{hybrid_mp_block.2} parent=114 // loop_header_branch
                  %818 = sbr.rel (%p816) target = $region122
                $region119: #{hybrid_mp_block.2} parent=114 // loop_body
                  _
                $region120: #{hybrid_mp_block.2} parent=114 // loop_footer
                  %s819 = sadd.s32 1, %s815
                $region121: #{hybrid_mp_block.2} parent=114 // loop_footer_branch
                  %814 = sbr.rel target = $region117
                $region122: #{hybrid_mp_block.2} parent=114 // loop_exit
                  _
                loop: start=0, step=1, limit=1
                $region123: #{hybrid_mp_block.2} parent=114 // loop_pre_header
                  _
                $region124: #{hybrid_mp_block.2} parent=114 // loop_header
                  %s824 = sphi 0, %s828
                  %p825 = scmp.ge.s32.totalorder %s824, 1
                  %s829 = sphi %s764, %s764
                  %s830 = sphi %s760, %s760
                $region125: #{hybrid_mp_block.2} parent=114 // loop_header_branch
                  %827 = sbr.rel (%p825) target = $region129
                $region126: #{hybrid_mp_block.2} parent=114 // loop_body
                  %v831 = vld [vmem:[%s829] sm:$0xf]
                  %832 = vst [vmem:[%s830] sm:$0xf] %v831
                  %v833 = vld [vmem:[%s829 + $0x8] sm:$0xf]
                  %834 = vst [vmem:[%s830 + $0x4] sm:$0xf] %v833
                  %v835 = vld [vmem:[%s829 + $0x10] sm:$0xf]
                  %836 = vst [vmem:[%s830 + $0x8] sm:$0xf] %v835
                  %v837 = vld [vmem:[%s829 + $0x18] sm:$0xf]
                  %838 = vst [vmem:[%s830 + $0xc] sm:$0xf] %v837
                  %v839 = vld [vmem:[%s829 + $0x20] sm:$0xf]
                  %840 = vst [vmem:[%s830 + $0x10] sm:$0xf] %v839
                  %v841 = vld [vmem:[%s829 + $0x28] sm:$0xf]
                  %842 = vst [vmem:[%s830 + $0x14] sm:$0xf] %v841
                  %v843 = vld [vmem:[%s829 + $0x30] sm:$0xf]
                  %844 = vst [vmem:[%s830 + $0x18] sm:$0xf] %v843
                  %v845 = vld [vmem:[%s829 + $0x38] sm:$0xf]
                  %846 = vst [vmem:[%s830 + $0x1c] sm:$0xf] %v845
                  %v847 = vld [vmem:[%s829 + $0x40] sm:$0xf]
                  %848 = vst [vmem:[%s830 + $0x20] sm:$0xf] %v847
                  %v849 = vld [vmem:[%s829 + $0x48] sm:$0xf]
                  %850 = vst [vmem:[%s830 + $0x24] sm:$0xf] %v849
                  %v851 = vld [vmem:[%s829 + $0x50] sm:$0xf]
                  %852 = vst [vmem:[%s830 + $0x28] sm:$0xf] %v851
                  %v853 = vld [vmem:[%s829 + $0x58] sm:$0xf]
                  %854 = vst [vmem:[%s830 + $0x2c] sm:$0xf] %v853
                  %v855 = vld [vmem:[%s829 + $0x60] sm:$0xf]
                  %856 = vst [vmem:[%s830 + $0x30] sm:$0xf] %v855
                  %v857 = vld [vmem:[%s829 + $0x68] sm:$0xf]
                  %858 = vst [vmem:[%s830 + $0x34] sm:$0xf] %v857
                  %v859 = vld [vmem:[%s829 + $0x70] sm:$0xf]
                  %860 = vst [vmem:[%s830 + $0x38] sm:$0xf] %v859
                  %v861 = vld [vmem:[%s829 + $0x78] sm:$0xf]
                  %862 = vst [vmem:[%s830 + $0x3c] sm:$0xf] %v861
                $region127: #{hybrid_mp_block.2} parent=114 // loop_footer
                  %s828 = sadd.s32 1, %s824
                $region128: #{hybrid_mp_block.2} parent=114 // loop_footer_branch
                  %823 = sbr.rel target = $region124
                $region129: #{hybrid_mp_block.2} parent=114 // loop_exit
                  _
              $region115: #{hybrid_mp_block.2} parent=99 // pred_fallthru
                _
            $region100: #{hybrid_mp_block.2} parent=95 // pred_fallthru
              _
            // Predicated region
            $region101: #{hybrid_mp_block.2} parent=95 // pred_check
              _
            $region102: #{hybrid_mp_block.2} parent=95 // pred_check_branch
              %770 = sbr.rel (0) target = $region104
            $region103: #{hybrid_mp_block.2} parent=95 // pred_region
              loop: start=0, step=1, limit=1
              $region105: #{hybrid_mp_block.2} parent=103 // loop_pre_header
                _
              $region106: #{hybrid_mp_block.2} parent=103 // loop_header
                %s773 = sphi 0, %s777
                %p774 = scmp.ge.s32.totalorder %s773, 1
                %s778 = sphi %s764, %s764
                %s779 = sphi %s760, %s760
              $region107: #{hybrid_mp_block.2} parent=103 // loop_header_branch
                %776 = sbr.rel (%p774) target = $region111
              $region108: #{hybrid_mp_block.2} parent=103 // loop_body
                %v780 = vld [vmem:[%s778] sm:$0xf]
                %781 = vst [vmem:[%s779] sm:$0xf] %v780
                %v782 = vld [vmem:[%s778 + $0x8] sm:$0xf]
                %783 = vst [vmem:[%s779 + $0x4] sm:$0xf] %v782
                %v784 = vld [vmem:[%s778 + $0x10] sm:$0xf]
                %785 = vst [vmem:[%s779 + $0x8] sm:$0xf] %v784
                %v786 = vld [vmem:[%s778 + $0x18] sm:$0xf]
                %787 = vst [vmem:[%s779 + $0xc] sm:$0xf] %v786
                %v788 = vld [vmem:[%s778 + $0x20] sm:$0xf]
                %789 = vst [vmem:[%s779 + $0x10] sm:$0xf] %v788
                %v790 = vld [vmem:[%s778 + $0x28] sm:$0xf]
                %791 = vst [vmem:[%s779 + $0x14] sm:$0xf] %v790
                %v792 = vld [vmem:[%s778 + $0x30] sm:$0xf]
                %793 = vst [vmem:[%s779 + $0x18] sm:$0xf] %v792
                %v794 = vld [vmem:[%s778 + $0x38] sm:$0xf]
                %795 = vst [vmem:[%s779 + $0x1c] sm:$0xf] %v794
                %v796 = vld [vmem:[%s778 + $0x40] sm:$0xf]
                %797 = vst [vmem:[%s779 + $0x20] sm:$0xf] %v796
                %v798 = vld [vmem:[%s778 + $0x48] sm:$0xf]
                %799 = vst [vmem:[%s779 + $0x24] sm:$0xf] %v798
                %v800 = vld [vmem:[%s778 + $0x50] sm:$0xf]
                %801 = vst [vmem:[%s779 + $0x28] sm:$0xf] %v800
                %v802 = vld [vmem:[%s778 + $0x58] sm:$0xf]
                %803 = vst [vmem:[%s779 + $0x2c] sm:$0xf] %v802
                %v804 = vld [vmem:[%s778 + $0x60] sm:$0xf]
                %805 = vst [vmem:[%s779 + $0x30] sm:$0xf] %v804
                %v806 = vld [vmem:[%s778 + $0x68] sm:$0xf]
                %807 = vst [vmem:[%s779 + $0x34] sm:$0xf] %v806
                %v808 = vld [vmem:[%s778 + $0x70] sm:$0xf]
                %809 = vst [vmem:[%s779 + $0x38] sm:$0xf] %v808
                %v810 = vld [vmem:[%s778 + $0x78] sm:$0xf]
                %811 = vst [vmem:[%s779 + $0x3c] sm:$0xf] %v810
              $region109: #{hybrid_mp_block.2} parent=103 // loop_footer
                %s777 = sadd.s32 1, %s773
              $region110: #{hybrid_mp_block.2} parent=103 // loop_footer_branch
                %772 = sbr.rel target = $region106
              $region111: #{hybrid_mp_block.2} parent=103 // loop_exit
                _
            $region104: #{hybrid_mp_block.2} parent=95 // pred_fallthru
              _
          $region96: #{hybrid_mp_block.2} parent=91 // pred_fallthru
            _
          %863 = vnop
        $region92: #{hybrid_mp_block.2} parent=67 // pred_fallthru
          _
        // Predicated region
        $region130: #{hybrid_mp_block.2} parent=67 // pred_check
          %p864 = pneg %p232
        $region131: #{hybrid_mp_block.2} parent=67 // pred_check_branch
          %866 = sbr.rel (%p864) target = $region133
        $region132: #{hybrid_mp_block.2} parent=67 // pred_region
          %p867 = scmp.lt.s32.totalorder %s41, 1
          %s868 = scalar_select %p867, %s41, 1
          %p869 = scmp.lt.s32.totalorder %s42, 1
          %s870 = scalar_select %p869, %s42, 1
          %s871 = smul.addr %s870, 2
          %s872 = smul.addr %s868, 4
          %s873 = sadd.s32 %s871, %s872
          %s874 = smul.addr %s873, 4
          %s875 = scalar_lea.vmem %s6, %s874
        $region133: #{hybrid_mp_block.2} parent=67 // pred_fallthru
          _
        // Predicated region
        $region134: #{hybrid_mp_block.2} parent=67 // pred_check
          %p876 = pneg %p260
        $region135: #{hybrid_mp_block.2} parent=67 // pred_check_branch
          %878 = sbr.rel (%p876) target = $region137
        $region136: #{hybrid_mp_block.2} parent=67 // pred_region
          %p879 = scmp.lt.s32.totalorder %s41, 1
          %s880 = scalar_select %p879, %s41, 1
          %p881 = scmp.lt.s32.totalorder %s42, 1
          %s882 = scalar_select %p881, %s42, 1
          %s883 = smul.addr %s882, 2
          %s884 = smul.addr %s880, 4
          %s885 = sadd.s32 %s883, %s884
          %s886 = smul.addr %s885, 4
          %s887 = scalar_lea.vmem %s7, %s886
        $region137: #{hybrid_mp_block.2} parent=67 // pred_fallthru
          _
        // Predicated region
        $region138: #{hybrid_mp_block.2} parent=67 // pred_check
          %p888 = pneg %p286
        $region139: #{hybrid_mp_block.2} parent=67 // pred_check_branch
          %890 = sbr.rel (%p888) target = $region141
        $region140: #{hybrid_mp_block.2} parent=67 // pred_region
          %p891 = scmp.lt.s32.totalorder %s41, 1
          %s892 = scalar_select %p891, %s41, 1
          %s893 = scalar_lea.vmem %s8, %s892
        $region141: #{hybrid_mp_block.2} parent=67 // pred_fallthru
          _
        // Predicated region
        $region142: #{hybrid_mp_block.2} parent=67 // pred_check
          %p894 = pneg %p312
        $region143: #{hybrid_mp_block.2} parent=67 // pred_check_branch
          %896 = sbr.rel (%p894) target = $region145
        $region144: #{hybrid_mp_block.2} parent=67 // pred_region
          %p897 = scmp.lt.s32.totalorder %s41, 1
          %s898 = scalar_select %p897, %s41, 1
          %s899 = scalar_lea.vmem %s9, %s898
        $region145: #{hybrid_mp_block.2} parent=67 // pred_fallthru
          _
      $region68: #{hybrid_mp_block.2} parent=5 // pred_fallthru
        _
      %p900 = scmp.le.s32.totalorder 1, %s34
      %p901 = scmp.lt.s32.totalorder %s34, 5
      %p902 = pnand %p900, %p901
      %p903 = pneg %p902
      // Predicated region
      $region146: #{hybrid_mp_block.2} parent=5 // pred_check
        _
      $region147: #{hybrid_mp_block.2} parent=5 // pred_check_branch
        %905 = sbr.rel (%p902) target = $region149
      $region148: #{hybrid_mp_block.2} parent=5 // pred_region
        %s906 = ssub.s32 %s34, 1
        %s907 = sand.u32 %s197, 1
        %s908 = sand.u32 %s197, 1
        %s909 = smul.addr %s908, 64
        %s910 = scalar_lea.vmem [#allocation2], %s909
        // Predicated region
        $region150: #{hybrid_mp_block.2} parent=148 // pred_check
          %p911 = pneg %p210
        $region151: #{hybrid_mp_block.2} parent=148 // pred_check_branch
          %913 = sbr.rel (%p911) target = $region153
        $region152: #{hybrid_mp_block.2} parent=148 // pred_region
          _
        $region153: #{hybrid_mp_block.2} parent=148 // pred_fallthru
          _
        %p914 = scmp.lt.s32.totalorder %s43, 1
        %s915 = scalar_select %p914, %s43, 1
        %s916 = smul.addr %s915, 2
        %s917 = smul.addr %s916, 8
        %s918 = scalar_lea.vmem %s0, %s917
        %p919 = pneg %p72
        %p920 = pneg %p69
        %p921 = scmp.lt.s32.totalorder %s43, 1
        %s922 = scalar_select %p921, %s43, 1
        %p923 = scmp.lt.s32.totalorder %s44, 1
        %s924 = scalar_select %p923, %s44, 1
        %s925 = smul.addr %s922, 2
        %s926 = sadd.s32 %s924, %s925
        %s927 = smul.addr %s926, 8
        %s928 = scalar_lea.vmem %s1, %s927
        %p929 = pneg %p100
        %p930 = pneg %p97
        %p931 = scmp.lt.s32.totalorder %s43, 1
        %s932 = scalar_select %p931, %s43, 1
        %p933 = scmp.lt.s32.totalorder %s44, 1
        %s934 = scalar_select %p933, %s44, 1
        %s935 = smul.addr %s932, 2
        %s936 = sadd.s32 %s934, %s935
        %s937 = smul.addr %s936, 8
        %s938 = scalar_lea.vmem %s2, %s937
        %p939 = pneg %p128
        %p940 = pneg %p125
        %p941 = scmp.lt.s32.totalorder %s43, 1
        %s942 = scalar_select %p941, %s43, 1
        %p943 = scmp.lt.s32.totalorder %s44, 1
        %s944 = scalar_select %p943, %s44, 1
        %s945 = smul.addr %s942, 2
        %s946 = sadd.s32 %s944, %s945
        %s947 = smul.addr %s946, 8
        %s948 = scalar_lea.vmem %s3, %s947
        %p949 = pneg %p156
        %p950 = pneg %p153
        %p951 = scmp.lt.s32.totalorder %s43, 1
        %s952 = scalar_select %p951, %s43, 1
        %s953 = smul.addr %s952, 2
        %s954 = smul.addr %s953, 8
        %s955 = scalar_lea.vmem %s4, %s954
        %p956 = pneg %p182
        %p957 = pneg %p179
        %s958 = sand.u32 %s197, 1
        %s959 = sand.u32 %s197, 1
        %s960 = smul.addr %s959, 64
        %s961 = scalar_lea.vmem [#allocation2], %s960
        %p962 = pneg %p210
        %p963 = pneg %p207
        %p964 = scmp.lt.s32.totalorder %s43, 1
        %s965 = scalar_select %p964, %s43, 1
        %p966 = scmp.lt.s32.totalorder %s44, 1
        %s967 = scalar_select %p966, %s44, 1
        %s968 = smul.addr %s967, 2
        %s969 = smul.addr %s965, 4
        %s970 = sadd.s32 %s968, %s969
        %s971 = smul.addr %s970, 4
        %s972 = scalar_lea.vmem %s6, %s971
        %p973 = pneg %p238
        %p974 = pneg %p235
        %p975 = scmp.lt.s32.totalorder %s43, 1
        %s976 = scalar_select %p975, %s43, 1
        %p977 = scmp.lt.s32.totalorder %s44, 1
        %s978 = scalar_select %p977, %s44, 1
        %s979 = smul.addr %s978, 2
        %s980 = smul.addr %s976, 4
        %s981 = sadd.s32 %s979, %s980
        %s982 = smul.addr %s981, 4
        %s983 = scalar_lea.vmem %s7, %s982
        %p984 = pneg %p266
        %p985 = pneg %p263
        %p986 = scmp.lt.s32.totalorder %s43, 1
        %s987 = scalar_select %p986, %s43, 1
        %s988 = scalar_lea.vmem %s8, %s987
        %p989 = pneg %p292
        %p990 = pneg %p289
        %p991 = scmp.lt.s32.totalorder %s43, 1
        %s992 = scalar_select %p991, %s43, 1
        %s993 = scalar_lea.vmem %s9, %s992
        %p994 = pneg %p318
        %p995 = pneg %p315
        %p996 = pneg %p339
        %p997 = pneg %p336
        %p998 = pneg %p360
        %p999 = pneg %p357
        %p1000 = pneg %p381
        %p1001 = pneg %p378
        %p1002 = pneg %p402
        %p1003 = pneg %p399
        %p1004 = pneg %p423
        %p1005 = pneg %p420
        %p1006 = pneg %p444
        %p1007 = pneg %p441
        %p1008 = pneg %p465
        %p1009 = pneg %p462
        %p1010 = pneg %p486
        %p1011 = pneg %p483
        %p1012 = pneg %p507
        %p1013 = pneg %p504
        %p1014 = pneg %p528
        %p1015 = pneg %p525
        %p1016 = pneg %p549
        %p1017 = pneg %p546
        %p1018 = pneg %p570
        %p1019 = pneg %p567
        %p1020 = pneg %p591
        %p1021 = pneg %p588
        %p1022 = pneg %p619
        %p1023 = pneg %p616
        %s1024 = sand.u32 %s606, 1
        %s1025 = scalar_lea.sflag [#allocation4], %s1024
        %s1026 = sand.u32 %s606, 1
        %s1027 = smul.addr %s1026, 8
        %s1028 = scalar_lea.vmem [#allocation3], %s1027
        %p1029 = pneg %p647
        %p1030 = pneg %p644
        %p1031 = scmp.lt.s32.totalorder %s43, 1
        %s1032 = scalar_select %p1031, %s43, 1
        %p1033 = scmp.lt.s32.totalorder %s44, 1
        %s1034 = scalar_select %p1033, %s44, 1
        %s1035 = smul.addr %s1032, 2
        %s1036 = sadd.s32 %s1034, %s1035
        %s1037 = smul.addr %s1036, 8
        %s1038 = scalar_lea.vmem %s24, %s1037
        %p1039 = scmp.lt.s32.totalorder %s43, 1
        %s1040 = scalar_select %p1039, %s43, 1
        %s1041 = smul.addr %s1040, 2
        %s1042 = smul.addr %s1041, 8
        %s1043 = scalar_lea.vmem %s0, %s1042
        %p1044 = scmp.lt.s32.totalorder %s43, 1
        %s1045 = scalar_select %p1044, %s43, 1
        %p1046 = scmp.lt.s32.totalorder %s44, 1
        %s1047 = scalar_select %p1046, %s44, 1
        %s1048 = smul.addr %s1045, 2
        %s1049 = sadd.s32 %s1047, %s1048
        %s1050 = smul.addr %s1049, 8
        %s1051 = scalar_lea.vmem %s1, %s1050
        %p1052 = scmp.lt.s32.totalorder %s43, 1
        %s1053 = scalar_select %p1052, %s43, 1
        %p1054 = scmp.lt.s32.totalorder %s44, 1
        %s1055 = scalar_select %p1054, %s44, 1
        %s1056 = smul.addr %s1053, 2
        %s1057 = sadd.s32 %s1055, %s1056
        %s1058 = smul.addr %s1057, 8
        %s1059 = scalar_lea.vmem %s2, %s1058
        %p1060 = scmp.lt.s32.totalorder %s43, 1
        %s1061 = scalar_select %p1060, %s43, 1
        %p1062 = scmp.lt.s32.totalorder %s44, 1
        %s1063 = scalar_select %p1062, %s44, 1
        %s1064 = smul.addr %s1061, 2
        %s1065 = sadd.s32 %s1063, %s1064
        %s1066 = smul.addr %s1065, 8
        %s1067 = scalar_lea.vmem %s3, %s1066
        %p1068 = scmp.lt.s32.totalorder %s43, 1
        %s1069 = scalar_select %p1068, %s43, 1
        %s1070 = smul.addr %s1069, 2
        %s1071 = smul.addr %s1070, 8
        %s1072 = scalar_lea.vmem %s4, %s1071
        %p1073 = scmp.lt.s32.totalorder %s43, 1
        %s1074 = scalar_select %p1073, %s43, 1
        %p1075 = scmp.lt.s32.totalorder %s44, 1
        %s1076 = scalar_select %p1075, %s44, 1
        %s1077 = smul.addr %s1076, 2
        %s1078 = smul.addr %s1074, 4
        %s1079 = sadd.s32 %s1077, %s1078
        %s1080 = smul.addr %s1079, 4
        %s1081 = scalar_lea.vmem %s6, %s1080
        %p1082 = scmp.lt.s32.totalorder %s43, 1
        %s1083 = scalar_select %p1082, %s43, 1
        %p1084 = scmp.lt.s32.totalorder %s44, 1
        %s1085 = scalar_select %p1084, %s44, 1
        %s1086 = smul.addr %s1085, 2
        %s1087 = smul.addr %s1083, 4
        %s1088 = sadd.s32 %s1086, %s1087
        %s1089 = smul.addr %s1088, 4
        %s1090 = scalar_lea.vmem %s7, %s1089
        %p1091 = scmp.lt.s32.totalorder %s43, 1
        %s1092 = scalar_select %p1091, %s43, 1
        %s1093 = scalar_lea.vmem %s8, %s1092
        %p1094 = scmp.lt.s32.totalorder %s43, 1
        %s1095 = scalar_select %p1094, %s43, 1
        %s1096 = scalar_lea.vmem %s9, %s1095
        %p1097 = scmp.lt.s32.totalorder %s43, 1
        %s1098 = scalar_select %p1097, %s43, 1
        %p1099 = scmp.lt.s32.totalorder %s44, 1
        %s1100 = scalar_select %p1099, %s44, 1
        %s1101 = smul.addr %s1098, 2
        %s1102 = sadd.s32 %s1100, %s1101
        %s1103 = smul.addr %s1102, 8
        %s1104 = scalar_lea.vmem %s24, %s1103
        %s1106 = smul.u32 %s44, 8
        %v1107 = vld [vmem:[%s1043] sm:$0xff]
        %v1108 = vld [vmem:[%s1043 + $0x8] sm:$0xff]
        %s1109 = scalar_lea.vmem %s1043, %s1106
        %v1110 = vld [vmem:[%s1109] sm:$0xff]
        %v1111 = vld [vmem:[%s1051] sm:$0xff]
        %v1112 = vld [vmem:[%s1059] sm:$0xff]
        %v1113 = vld [vmem:[%s1067] sm:$0xff]
        %v1114 = vld [vmem:[%s1072] sm:$0xff]
        %v1115 = vld [vmem:[%s1072 + $0x8] sm:$0xff]
        %v1116 = vld [vmem:[%s910] sm:$0xf]
        %v1117 = vld [vmem:[%s910 + $0x4] sm:$0xf]
        %v1118 = vld [vmem:[%s910 + $0x8] sm:$0xf]
        %v1119 = vld [vmem:[%s910 + $0xc] sm:$0xf]
        %v1120 = vld [vmem:[%s910 + $0x10] sm:$0xf]
        %v1121 = vld [vmem:[%s910 + $0x14] sm:$0xf]
        %v1122 = vld [vmem:[%s910 + $0x18] sm:$0xf]
        %v1123 = vld [vmem:[%s910 + $0x1c] sm:$0xf]
        %v1124 = vld [vmem:[%s910 + $0x20] sm:$0xf]
        %v1125 = vld [vmem:[%s910 + $0x24] sm:$0xf]
        %v1126 = vld [vmem:[%s910 + $0x28] sm:$0xf]
        %v1127 = vld [vmem:[%s910 + $0x2c] sm:$0xf]
        %v1128 = vld [vmem:[%s910 + $0x30] sm:$0xf]
        %v1129 = vld [vmem:[%s910 + $0x34] sm:$0xf]
        %v1130 = vld [vmem:[%s910 + $0x38] sm:$0xf]
        %v1131 = vld [vmem:[%s910 + $0x3c] sm:$0xf]
        %v1132 = vld [vmem:[%s1081] sm:$0xf]
        %v1133 = vld [vmem:[%s1081 + $0x4] sm:$0xf]
        %v1134 = vunpack.c.l.bf16 %v1132
        %v1135 = vunpack.c.l.bf16 %v1133
        %v1136 = vld [vmem:[%s1090] sm:$0xf]
        %v1137 = vld [vmem:[%s1090 + $0x4] sm:$0xf]
        %v1138 = vunpack.c.l.bf16 %v1136
        %v1139 = vunpack.c.l.bf16 %v1137
        %v1140 = vld [vmem:[%s1093] sm:$0x1]
        %v1141 = vld [vmem:[%s1096] sm:$0x1]
        %v1142 = vunpack.c.l.bf16 %v1116
        %v1143 = vunpack.c.l.bf16 %v1117
        %v1144 = vunpack.c.l.bf16 %v1118
        %v1145 = vunpack.c.l.bf16 %v1119
        %v1146 = vunpack.c.l.bf16 %v1120
        %v1147 = vunpack.c.l.bf16 %v1121
        %v1148 = vunpack.c.l.bf16 %v1122
        %v1149 = vunpack.c.l.bf16 %v1123
        %v1150 = vunpack.c.l.bf16 %v1124
        %v1151 = vunpack.c.l.bf16 %v1125
        %v1152 = vunpack.c.l.bf16 %v1126
        %v1153 = vunpack.c.l.bf16 %v1127
        %v1154 = vunpack.c.l.bf16 %v1128
        %v1155 = vunpack.c.l.bf16 %v1129
        %v1156 = vunpack.c.l.bf16 %v1130
        %v1157 = vunpack.c.l.bf16 %v1131
        %v1159 = vlaneseq
        %v1160 = vshrl.u32 %v1159, 7
        %v1161 = vsub.s32 0, %v1160
        %v1162 = vrot.slane %v1140, %v1161
        %v1164 = vadd.f32 %v1142, %v1162
        %v1165 = vadd.f32 %v1143, %v1162
        %v1166 = vadd.f32 %v1144, %v1162
        %v1167 = vadd.f32 %v1145, %v1162
        %v1168 = vadd.f32 %v1146, %v1162
        %v1169 = vadd.f32 %v1147, %v1162
        %v1170 = vadd.f32 %v1148, %v1162
        %v1171 = vadd.f32 %v1149, %v1162
        %v1172 = vadd.f32 %v1150, %v1162
        %v1173 = vadd.f32 %v1151, %v1162
        %v1174 = vadd.f32 %v1152, %v1162
        %v1175 = vadd.f32 %v1153, %v1162
        %v1176 = vadd.f32 %v1154, %v1162
        %v1177 = vadd.f32 %v1155, %v1162
        %v1178 = vadd.f32 %v1156, %v1162
        %v1179 = vadd.f32 %v1157, %v1162
        %v1180 = vlaneseq
        %v1181 = vshrl.u32 %v1180, 7
        %v1182 = vsub.s32 0, %v1181
        %v1183 = vrot.slane %v1134, %v1182
        %1185 = vbcast.lane.b32.xlu0 %v1183, 256
        %v1186 = vpop.permute.xlu0 %1185
        %v1187 = vlaneseq
        %v1188 = vshrl.u32 %v1187, 7
        %v1189 = vsub.s32 1, %v1188
        %v1190 = vrot.slane %v1134, %v1189
        %1192 = vbcast.lane.b32.xlu0 %v1190, 256
        %v1193 = vpop.permute.xlu0 %1192
        %v1194 = vlaneseq
        %v1195 = vshrl.u32 %v1194, 7
        %v1196 = vsub.s32 2, %v1195
        %v1197 = vrot.slane %v1134, %v1196
        %1199 = vbcast.lane.b32.xlu0 %v1197, 256
        %v1200 = vpop.permute.xlu0 %1199
        %v1201 = vlaneseq
        %v1202 = vshrl.u32 %v1201, 7
        %v1203 = vsub.s32 3, %v1202
        %v1204 = vrot.slane %v1134, %v1203
        %1206 = vbcast.lane.b32.xlu0 %v1204, 256
        %v1207 = vpop.permute.xlu0 %1206
        %v1208 = vlaneseq
        %v1209 = vshrl.u32 %v1208, 7
        %v1210 = vsub.s32 4, %v1209
        %v1211 = vrot.slane %v1134, %v1210
        %1213 = vbcast.lane.b32.xlu0 %v1211, 256
        %v1214 = vpop.permute.xlu0 %1213
        %v1215 = vlaneseq
        %v1216 = vshrl.u32 %v1215, 7
        %v1217 = vsub.s32 5, %v1216
        %v1218 = vrot.slane %v1134, %v1217
        %1220 = vbcast.lane.b32.xlu0 %v1218, 256
        %v1221 = vpop.permute.xlu0 %1220
        %v1222 = vlaneseq
        %v1223 = vshrl.u32 %v1222, 7
        %v1224 = vsub.s32 6, %v1223
        %v1225 = vrot.slane %v1134, %v1224
        %1227 = vbcast.lane.b32.xlu0 %v1225, 256
        %v1228 = vpop.permute.xlu0 %1227
        %v1229 = vlaneseq
        %v1230 = vshrl.u32 %v1229, 7
        %v1231 = vsub.s32 7, %v1230
        %v1232 = vrot.slane %v1134, %v1231
        %1234 = vbcast.lane.b32.xlu0 %v1232, 256
        %v1235 = vpop.permute.xlu0 %1234
        %v1236 = vlaneseq
        %v1237 = vshrl.u32 %v1236, 7
        %v1238 = vsub.s32 0, %v1237
        %v1239 = vrot.slane %v1135, %v1238
        %1241 = vbcast.lane.b32.xlu0 %v1239, 256
        %v1242 = vpop.permute.xlu0 %1241
        %v1243 = vlaneseq
        %v1244 = vshrl.u32 %v1243, 7
        %v1245 = vsub.s32 1, %v1244
        %v1246 = vrot.slane %v1135, %v1245
        %1248 = vbcast.lane.b32.xlu0 %v1246, 256
        %v1249 = vpop.permute.xlu0 %1248
        %v1250 = vlaneseq
        %v1251 = vshrl.u32 %v1250, 7
        %v1252 = vsub.s32 2, %v1251
        %v1253 = vrot.slane %v1135, %v1252
        %1255 = vbcast.lane.b32.xlu0 %v1253, 256
        %v1256 = vpop.permute.xlu0 %1255
        %v1257 = vlaneseq
        %v1258 = vshrl.u32 %v1257, 7
        %v1259 = vsub.s32 3, %v1258
        %v1260 = vrot.slane %v1135, %v1259
        %1262 = vbcast.lane.b32.xlu0 %v1260, 256
        %v1263 = vpop.permute.xlu0 %1262
        %v1264 = vlaneseq
        %v1265 = vshrl.u32 %v1264, 7
        %v1266 = vsub.s32 4, %v1265
        %v1267 = vrot.slane %v1135, %v1266
        %1269 = vbcast.lane.b32.xlu0 %v1267, 256
        %v1270 = vpop.permute.xlu0 %1269
        %v1271 = vlaneseq
        %v1272 = vshrl.u32 %v1271, 7
        %v1273 = vsub.s32 5, %v1272
        %v1274 = vrot.slane %v1135, %v1273
        %1276 = vbcast.lane.b32.xlu0 %v1274, 256
        %v1277 = vpop.permute.xlu0 %1276
        %v1278 = vlaneseq
        %v1279 = vshrl.u32 %v1278, 7
        %v1280 = vsub.s32 6, %v1279
        %v1281 = vrot.slane %v1135, %v1280
        %1283 = vbcast.lane.b32.xlu0 %v1281, 256
        %v1284 = vpop.permute.xlu0 %1283
        %v1285 = vlaneseq
        %v1286 = vshrl.u32 %v1285, 7
        %v1287 = vsub.s32 7, %v1286
        %v1288 = vrot.slane %v1135, %v1287
        %1290 = vbcast.lane.b32.xlu0 %v1288, 256
        %v1291 = vpop.permute.xlu0 %1290
        %v1292 = vmul.f32 %v1164, %v1186
        %v1293 = vmul.f32 %v1165, %v1193
        %v1294 = vmul.f32 %v1166, %v1200
        %v1295 = vmul.f32 %v1167, %v1207
        %v1296 = vmul.f32 %v1168, %v1214
        %v1297 = vmul.f32 %v1169, %v1221
        %v1298 = vmul.f32 %v1170, %v1228
        %v1299 = vmul.f32 %v1171, %v1235
        %v1300 = vmul.f32 %v1172, %v1242
        %v1301 = vmul.f32 %v1173, %v1249
        %v1302 = vmul.f32 %v1174, %v1256
        %v1303 = vmul.f32 %v1175, %v1263
        %v1304 = vmul.f32 %v1176, %v1270
        %v1305 = vmul.f32 %v1177, %v1277
        %v1306 = vmul.f32 %v1178, %v1284
        %v1307 = vmul.f32 %v1179, %v1291
        %v1310 = vcombine.high %v1107, %v1107
        %v1312 = vunpack.c.l.s4 1966171168
        %v1313 = vunpack.c.0.s8 %v1312
        %v1314 = vlaneseq
        %v1315 = vshrl.u32 %v1314, 7
        %v1316 = vsub.s32 %v1313, %v1315
        %v1317 = vrot.slane %v1107, %v1316
        %v1319 = vunpack.c.l.s4 1966171168
        %v1320 = vunpack.c.0.s8 %v1319
        %v1321 = vlaneseq
        %v1322 = vshrl.u32 %v1321, 7
        %v1323 = vsub.s32 %v1320, %v1322
        %v1324 = vrot.slane %v1310, %v1323
        %v1325 = vcombine.high %v1317, %v1317
        %v1326 = vcombine.high %v1324, %v1324
        %v1328 = vunpack.c.l.s4 1966171168
        %v1329 = vunpack.c.0.s8 %v1328
        %v1330 = vlaneseq
        %v1331 = vshrl.u32 %v1330, 7
        %v1332 = vsub.s32 %v1329, %v1331
        %v1333 = vrot.slane %v1317, %v1332
        %v1335 = vunpack.c.l.s4 1966171168
        %v1336 = vunpack.c.0.s8 %v1335
        %v1337 = vlaneseq
        %v1338 = vshrl.u32 %v1337, 7
        %v1339 = vsub.s32 %v1336, %v1338
        %v1340 = vrot.slane %v1324, %v1339
        %v1342 = vunpack.c.l.s4 1966171168
        %v1343 = vunpack.c.0.s8 %v1342
        %v1344 = vlaneseq
        %v1345 = vshrl.u32 %v1344, 7
        %v1346 = vsub.s32 %v1343, %v1345
        %v1347 = vrot.slane %v1325, %v1346
        %v1349 = vunpack.c.l.s4 1966171168
        %v1350 = vunpack.c.0.s8 %v1349
        %v1351 = vlaneseq
        %v1352 = vshrl.u32 %v1351, 7
        %v1353 = vsub.s32 %v1350, %v1352
        %v1354 = vrot.slane %v1326, %v1353
        %v1355 = vcombine.high %v1333, %v1333
        %v1356 = vcombine.high %v1340, %v1340
        %v1357 = vcombine.high %v1347, %v1347
        %v1358 = vcombine.high %v1354, %v1354
        %v1359 = vcombine.high %v1108, %v1108
        %v1361 = vunpack.c.l.s4 1966171168
        %v1362 = vunpack.c.0.s8 %v1361
        %v1363 = vlaneseq
        %v1364 = vshrl.u32 %v1363, 7
        %v1365 = vsub.s32 %v1362, %v1364
        %v1366 = vrot.slane %v1108, %v1365
        %v1368 = vunpack.c.l.s4 1966171168
        %v1369 = vunpack.c.0.s8 %v1368
        %v1370 = vlaneseq
        %v1371 = vshrl.u32 %v1370, 7
        %v1372 = vsub.s32 %v1369, %v1371
        %v1373 = vrot.slane %v1359, %v1372
        %v1374 = vcombine.high %v1366, %v1366
        %v1375 = vcombine.high %v1373, %v1373
        %v1377 = vunpack.c.l.s4 1966171168
        %v1378 = vunpack.c.0.s8 %v1377
        %v1379 = vlaneseq
        %v1380 = vshrl.u32 %v1379, 7
        %v1381 = vsub.s32 %v1378, %v1380
        %v1382 = vrot.slane %v1366, %v1381
        %v1384 = vunpack.c.l.s4 1966171168
        %v1385 = vunpack.c.0.s8 %v1384
        %v1386 = vlaneseq
        %v1387 = vshrl.u32 %v1386, 7
        %v1388 = vsub.s32 %v1385, %v1387
        %v1389 = vrot.slane %v1373, %v1388
        %v1391 = vunpack.c.l.s4 1966171168
        %v1392 = vunpack.c.0.s8 %v1391
        %v1393 = vlaneseq
        %v1394 = vshrl.u32 %v1393, 7
        %v1395 = vsub.s32 %v1392, %v1394
        %v1396 = vrot.slane %v1374, %v1395
        %v1398 = vunpack.c.l.s4 1966171168
        %v1399 = vunpack.c.0.s8 %v1398
        %v1400 = vlaneseq
        %v1401 = vshrl.u32 %v1400, 7
        %v1402 = vsub.s32 %v1399, %v1401
        %v1403 = vrot.slane %v1375, %v1402
        %v1404 = vcombine.high %v1382, %v1382
        %v1405 = vcombine.high %v1389, %v1389
        %v1406 = vcombine.high %v1396, %v1396
        %v1407 = vcombine.high %v1403, %v1403
        %v1408 = vlaneseq
        %v1409 = vshrl.u32 %v1408, 7
        %v1410 = vsub.s32 0, %v1409
        %v1411 = vrot.slane %v1333, %v1410
        %v1412 = vlaneseq
        %v1413 = vshrl.u32 %v1412, 7
        %v1414 = vsub.s32 0, %v1413
        %v1415 = vrot.slane %v1347, %v1414
        %v1416 = vlaneseq
        %v1417 = vshrl.u32 %v1416, 7
        %v1418 = vsub.s32 0, %v1417
        %v1419 = vrot.slane %v1355, %v1418
        %v1420 = vlaneseq
        %v1421 = vshrl.u32 %v1420, 7
        %v1422 = vsub.s32 0, %v1421
        %v1423 = vrot.slane %v1357, %v1422
        %v1424 = vlaneseq
        %v1425 = vshrl.u32 %v1424, 7
        %v1426 = vsub.s32 0, %v1425
        %v1427 = vrot.slane %v1340, %v1426
        %v1428 = vlaneseq
        %v1429 = vshrl.u32 %v1428, 7
        %v1430 = vsub.s32 0, %v1429
        %v1431 = vrot.slane %v1354, %v1430
        %v1432 = vlaneseq
        %v1433 = vshrl.u32 %v1432, 7
        %v1434 = vsub.s32 0, %v1433
        %v1435 = vrot.slane %v1356, %v1434
        %v1436 = vlaneseq
        %v1437 = vshrl.u32 %v1436, 7
        %v1438 = vsub.s32 0, %v1437
        %v1439 = vrot.slane %v1358, %v1438
        %v1440 = vlaneseq
        %v1441 = vshrl.u32 %v1440, 7
        %v1442 = vsub.s32 0, %v1441
        %v1443 = vrot.slane %v1382, %v1442
        %v1444 = vlaneseq
        %v1445 = vshrl.u32 %v1444, 7
        %v1446 = vsub.s32 0, %v1445
        %v1447 = vrot.slane %v1396, %v1446
        %v1448 = vlaneseq
        %v1449 = vshrl.u32 %v1448, 7
        %v1450 = vsub.s32 0, %v1449
        %v1451 = vrot.slane %v1404, %v1450
        %v1452 = vlaneseq
        %v1453 = vshrl.u32 %v1452, 7
        %v1454 = vsub.s32 0, %v1453
        %v1455 = vrot.slane %v1406, %v1454
        %v1456 = vlaneseq
        %v1457 = vshrl.u32 %v1456, 7
        %v1458 = vsub.s32 0, %v1457
        %v1459 = vrot.slane %v1389, %v1458
        %v1460 = vlaneseq
        %v1461 = vshrl.u32 %v1460, 7
        %v1462 = vsub.s32 0, %v1461
        %v1463 = vrot.slane %v1403, %v1462
        %v1464 = vlaneseq
        %v1465 = vshrl.u32 %v1464, 7
        %v1466 = vsub.s32 0, %v1465
        %v1467 = vrot.slane %v1405, %v1466
        %v1468 = vlaneseq
        %v1469 = vshrl.u32 %v1468, 7
        %v1470 = vsub.s32 0, %v1469
        %v1471 = vrot.slane %v1407, %v1470
        %v1488 = vadd.f32 %v1411, %v1292
        %v1489 = vadd.f32 %v1415, %v1293
        %v1490 = vadd.f32 %v1419, %v1294
        %v1491 = vadd.f32 %v1423, %v1295
        %v1492 = vadd.f32 %v1427, %v1296
        %v1493 = vadd.f32 %v1431, %v1297
        %v1494 = vadd.f32 %v1435, %v1298
        %v1495 = vadd.f32 %v1439, %v1299
        %v1496 = vadd.f32 %v1443, %v1300
        %v1497 = vadd.f32 %v1447, %v1301
        %v1498 = vadd.f32 %v1451, %v1302
        %v1499 = vadd.f32 %v1455, %v1303
        %v1500 = vadd.f32 %v1459, %v1304
        %v1501 = vadd.f32 %v1463, %v1305
        %v1502 = vadd.f32 %v1467, %v1306
        %v1503 = vadd.f32 %v1471, %v1307
        %v1504 = vmax.f32 %v1488, 0.0
        %v1505 = vmax.f32 %v1489, 0.0
        %v1506 = vmax.f32 %v1490, 0.0
        %v1507 = vmax.f32 %v1491, 0.0
        %v1508 = vmax.f32 %v1492, 0.0
        %v1509 = vmax.f32 %v1493, 0.0
        %v1510 = vmax.f32 %v1494, 0.0
        %v1511 = vmax.f32 %v1495, 0.0
        %v1512 = vmax.f32 %v1496, 0.0
        %v1513 = vmax.f32 %v1497, 0.0
        %v1514 = vmax.f32 %v1498, 0.0
        %v1515 = vmax.f32 %v1499, 0.0
        %v1516 = vmax.f32 %v1500, 0.0
        %v1517 = vmax.f32 %v1501, 0.0
        %v1518 = vmax.f32 %v1502, 0.0
        %v1519 = vmax.f32 %v1503, 0.0
        %v1520 = vlaneseq
        %v1521 = vshrl.u32 %v1520, 7
        %v1522 = vsub.s32 0, %v1521
        %v1523 = vrot.slane %v1138, %v1522
        %1525 = vbcast.lane.b32.xlu0 %v1523, 256
        %v1526 = vpop.permute.xlu0 %1525
        %v1527 = vlaneseq
        %v1528 = vshrl.u32 %v1527, 7
        %v1529 = vsub.s32 1, %v1528
        %v1530 = vrot.slane %v1138, %v1529
        %1532 = vbcast.lane.b32.xlu0 %v1530, 256
        %v1533 = vpop.permute.xlu0 %1532
        %v1534 = vlaneseq
        %v1535 = vshrl.u32 %v1534, 7
        %v1536 = vsub.s32 2, %v1535
        %v1537 = vrot.slane %v1138, %v1536
        %1539 = vbcast.lane.b32.xlu0 %v1537, 256
        %v1540 = vpop.permute.xlu0 %1539
        %v1541 = vlaneseq
        %v1542 = vshrl.u32 %v1541, 7
        %v1543 = vsub.s32 3, %v1542
        %v1544 = vrot.slane %v1138, %v1543
        %1546 = vbcast.lane.b32.xlu0 %v1544, 256
        %v1547 = vpop.permute.xlu0 %1546
        %v1548 = vlaneseq
        %v1549 = vshrl.u32 %v1548, 7
        %v1550 = vsub.s32 4, %v1549
        %v1551 = vrot.slane %v1138, %v1550
        %1553 = vbcast.lane.b32.xlu0 %v1551, 256
        %v1554 = vpop.permute.xlu0 %1553
        %v1555 = vlaneseq
        %v1556 = vshrl.u32 %v1555, 7
        %v1557 = vsub.s32 5, %v1556
        %v1558 = vrot.slane %v1138, %v1557
        %1560 = vbcast.lane.b32.xlu0 %v1558, 256
        %v1561 = vpop.permute.xlu0 %1560
        %v1562 = vlaneseq
        %v1563 = vshrl.u32 %v1562, 7
        %v1564 = vsub.s32 6, %v1563
        %v1565 = vrot.slane %v1138, %v1564
        %1567 = vbcast.lane.b32.xlu0 %v1565, 256
        %v1568 = vpop.permute.xlu0 %1567
        %v1569 = vlaneseq
        %v1570 = vshrl.u32 %v1569, 7
        %v1571 = vsub.s32 7, %v1570
        %v1572 = vrot.slane %v1138, %v1571
        %1574 = vbcast.lane.b32.xlu0 %v1572, 256
        %v1575 = vpop.permute.xlu0 %1574
        %v1576 = vlaneseq
        %v1577 = vshrl.u32 %v1576, 7
        %v1578 = vsub.s32 0, %v1577
        %v1579 = vrot.slane %v1139, %v1578
        %1581 = vbcast.lane.b32.xlu0 %v1579, 256
        %v1582 = vpop.permute.xlu0 %1581
        %v1583 = vlaneseq
        %v1584 = vshrl.u32 %v1583, 7
        %v1585 = vsub.s32 1, %v1584
        %v1586 = vrot.slane %v1139, %v1585
        %1588 = vbcast.lane.b32.xlu0 %v1586, 256
        %v1589 = vpop.permute.xlu0 %1588
        %v1590 = vlaneseq
        %v1591 = vshrl.u32 %v1590, 7
        %v1592 = vsub.s32 2, %v1591
        %v1593 = vrot.slane %v1139, %v1592
        %1595 = vbcast.lane.b32.xlu0 %v1593, 256
        %v1596 = vpop.permute.xlu0 %1595
        %v1597 = vlaneseq
        %v1598 = vshrl.u32 %v1597, 7
        %v1599 = vsub.s32 3, %v1598
        %v1600 = vrot.slane %v1139, %v1599
        %1602 = vbcast.lane.b32.xlu0 %v1600, 256
        %v1603 = vpop.permute.xlu0 %1602
        %v1604 = vlaneseq
        %v1605 = vshrl.u32 %v1604, 7
        %v1606 = vsub.s32 4, %v1605
        %v1607 = vrot.slane %v1139, %v1606
        %1609 = vbcast.lane.b32.xlu0 %v1607, 256
        %v1610 = vpop.permute.xlu0 %1609
        %v1611 = vlaneseq
        %v1612 = vshrl.u32 %v1611, 7
        %v1613 = vsub.s32 5, %v1612
        %v1614 = vrot.slane %v1139, %v1613
        %1616 = vbcast.lane.b32.xlu0 %v1614, 256
        %v1617 = vpop.permute.xlu0 %1616
        %v1618 = vlaneseq
        %v1619 = vshrl.u32 %v1618, 7
        %v1620 = vsub.s32 6, %v1619
        %v1621 = vrot.slane %v1139, %v1620
        %1623 = vbcast.lane.b32.xlu0 %v1621, 256
        %v1624 = vpop.permute.xlu0 %1623
        %v1625 = vlaneseq
        %v1626 = vshrl.u32 %v1625, 7
        %v1627 = vsub.s32 7, %v1626
        %v1628 = vrot.slane %v1139, %v1627
        %1630 = vbcast.lane.b32.xlu0 %v1628, 256
        %v1631 = vpop.permute.xlu0 %1630
        %v1632 = vmul.f32 %v1504, %v1526
        %v1633 = vmul.f32 %v1505, %v1533
        %v1634 = vmul.f32 %v1506, %v1540
        %v1635 = vmul.f32 %v1507, %v1547
        %v1636 = vmul.f32 %v1508, %v1554
        %v1637 = vmul.f32 %v1509, %v1561
        %v1638 = vmul.f32 %v1510, %v1568
        %v1639 = vmul.f32 %v1511, %v1575
        %v1640 = vmul.f32 %v1512, %v1582
        %v1641 = vmul.f32 %v1513, %v1589
        %v1642 = vmul.f32 %v1514, %v1596
        %v1643 = vmul.f32 %v1515, %v1603
        %v1644 = vmul.f32 %v1516, %v1610
        %v1645 = vmul.f32 %v1517, %v1617
        %v1646 = vmul.f32 %v1518, %v1624
        %v1647 = vmul.f32 %v1519, %v1631
        %vm1648 = vcmask 261120
        %v1649 = vsel %vm1648, %v1632, 0.0
        %v1650 = vsel %vm1648, %v1633, 0.0
        %v1651 = vadd.f32 %v1649, %v1650
        %v1652 = vsel %vm1648, %v1634, 0.0
        %v1653 = vadd.f32 %v1651, %v1652
        %v1654 = vsel %vm1648, %v1635, 0.0
        %v1655 = vadd.f32 %v1653, %v1654
        %v1656 = vsel %vm1648, %v1636, 0.0
        %v1657 = vadd.f32 %v1655, %v1656
        %v1658 = vsel %vm1648, %v1637, 0.0
        %v1659 = vadd.f32 %v1657, %v1658
        %v1660 = vsel %vm1648, %v1638, 0.0
        %v1661 = vadd.f32 %v1659, %v1660
        %v1662 = vsel %vm1648, %v1639, 0.0
        %v1663 = vadd.f32 %v1661, %v1662
        %v1664 = vsel %vm1648, %v1640, 0.0
        %v1665 = vadd.f32 %v1663, %v1664
        %v1666 = vsel %vm1648, %v1641, 0.0
        %v1667 = vadd.f32 %v1665, %v1666
        %v1668 = vsel %vm1648, %v1642, 0.0
        %v1669 = vadd.f32 %v1667, %v1668
        %v1670 = vsel %vm1648, %v1643, 0.0
        %v1671 = vadd.f32 %v1669, %v1670
        %v1672 = vsel %vm1648, %v1644, 0.0
        %v1673 = vadd.f32 %v1671, %v1672
        %v1674 = vsel %vm1648, %v1645, 0.0
        %v1675 = vadd.f32 %v1673, %v1674
        %v1676 = vsel %vm1648, %v1646, 0.0
        %v1677 = vadd.f32 %v1675, %v1676
        %v1678 = vsel %vm1648, %v1647, 0.0
        %v1679 = vadd.f32 %v1677, %v1678
        %v1680 = vld [vmem:[%s10] sm:$0xf]
        %v1681 = vld [vmem:[%s10 + $0x4] sm:$0xf]
        %v1682 = vld [vmem:[%s10 + $0x8] sm:$0xf]
        %v1683 = vld [vmem:[%s10 + $0xc] sm:$0xf]
        %v1684 = vld [vmem:[%s10 + $0x10] sm:$0xf]
        %v1685 = vld [vmem:[%s10 + $0x14] sm:$0xf]
        %v1686 = vld [vmem:[%s10 + $0x18] sm:$0xf]
        %v1687 = vld [vmem:[%s10 + $0x1c] sm:$0xf]
        %v1688 = vadd.f32 %v1679, %v1110
        %v1689 = vpack.c.bf16 %v1688, %v1688
        %v1690 = vld [vmem:[%s11] sm:$0x1]
        %v1691 = vlaneseq
        %v1692 = vshrl.u32 %v1691, 7
        %v1693 = vsub.s32 0, %v1692
        %v1694 = vrot.slane %v1690, %v1693
        %v1699 = vunpack.c.l.b16 %v1680
        %v1700 = vunpack.c.l.b16 %v1681
        %v1701 = vunpack.c.l.b16 %v1682
        %v1702 = vunpack.c.l.b16 %v1683
        %v1703 = vpack.c.b16 %v1700, %v1699
        %v1704 = vpack.c.b16 %v1702, %v1701
        %v1708 = vsel %vm1648, %v1689, 0
        %1710 = vmatprep.subr.bf16.mxu0 0
        %1711 = vmatpush1.bf16.msra.mxu0 %v1703
        %1712 = vmatprep.subr.bf16.mxu0 0
        %1713 = vmatpush1.bf16.msra.mxu0 %v1704
        %1714 = vmatprep.subr.bf16.mxu0 0
        %1715 = vmatpush1.bf16.msra.mxu0 0
        %1716 = vmatprep.subr.bf16.mxu0 0
        %1717 = vmatpush1.bf16.msra.mxu0 0
        %1718 = vmatprep.subr.bf16.mxu0 0
        %1719 = vmatpush1.bf16.msra.mxu0 0
        %1720 = vmatprep.subr.bf16.mxu0 0
        %1721 = vmatpush1.bf16.msra.mxu0 0
        %1722 = vmatprep.subr.bf16.mxu0 0
        %1723 = vmatpush1.bf16.msra.mxu0 0
        %1724 = vmatprep.subr.bf16.mxu0 0
        %1725 = vmatpush1.bf16.msra.mxu0 0
        %1726 = vmatprep.subr.bf16.mxu0 0
        %1727 = vmatpush1.bf16.msra.mxu0 0
        %1728 = vmatprep.subr.bf16.mxu0 0
        %1729 = vmatpush1.bf16.msra.mxu0 0
        %1730 = vmatprep.subr.bf16.mxu0 0
        %1731 = vmatpush1.bf16.msra.mxu0 0
        %1732 = vmatprep.subr.bf16.mxu0 0
        %1733 = vmatpush1.bf16.msra.mxu0 0
        %1734 = vmatprep.subr.bf16.mxu0 0
        %1735 = vmatpush1.bf16.msra.mxu0 0
        %1736 = vmatprep.subr.bf16.mxu0 0
        %1737 = vmatpush1.bf16.msra.mxu0 0
        %1738 = vmatprep.subr.bf16.mxu0 0
        %1739 = vmatpush1.bf16.msra.mxu0 0
        %1740 = vmatprep.subr.bf16.mxu0 0
        %1741 = vmatpush1.bf16.msra.mxu0 0
        %1742 = vmatprep.mubr.bf16.mxu0 0
        %1743 = vmatmul.mubr.bf16.gmra.mrb[0].mxu0 %v1708
        %v1744 = vpop.f32.mrb[0].mxu0
        %v1745 = vadd.f32 %v1694, %v1744
        %v1746 = vpop.f32.mrb[0].mxu0
        %v1747 = vpop.f32.mrb[0].mxu0
        %v1748 = vpop.f32.mrb[0].mxu0
        %1749 = vdwg.mxu0
        %v1750 = vmax.f32 %v1745, 0.0
        %v1751 = vpack.c.bf16 %v1750, %v1750
        %v1752 = vld [vmem:[%s11 + $0x1] sm:$0x1]
        %v1753 = vlaneseq
        %v1754 = vshrl.u32 %v1753, 7
        %v1755 = vsub.s32 0, %v1754
        %v1756 = vrot.slane %v1752, %v1755
        %v1761 = vunpack.c.l.b16 %v1684
        %v1762 = vunpack.c.l.b16 %v1685
        %v1763 = vunpack.c.l.b16 %v1686
        %v1764 = vunpack.c.l.b16 %v1687
        %v1765 = vpack.c.b16 %v1762, %v1761
        %v1766 = vpack.c.b16 %v1764, %v1763
        %v1770 = vsel %vm1648, %v1751, 0
        %1772 = vmatprep.subr.bf16.mxu0 0
        %1773 = vmatpush1.bf16.msra.mxu0 %v1765
        %1774 = vmatprep.subr.bf16.mxu0 0
        %1775 = vmatpush1.bf16.msra.mxu0 %v1766
        %1776 = vmatprep.subr.bf16.mxu0 0
        %1777 = vmatpush1.bf16.msra.mxu0 0
        %1778 = vmatprep.subr.bf16.mxu0 0
        %1779 = vmatpush1.bf16.msra.mxu0 0
        %1780 = vmatprep.subr.bf16.mxu0 0
        %1781 = vmatpush1.bf16.msra.mxu0 0
        %1782 = vmatprep.subr.bf16.mxu0 0
        %1783 = vmatpush1.bf16.msra.mxu0 0
        %1784 = vmatprep.subr.bf16.mxu0 0
        %1785 = vmatpush1.bf16.msra.mxu0 0
        %1786 = vmatprep.subr.bf16.mxu0 0
        %1787 = vmatpush1.bf16.msra.mxu0 0
        %1788 = vmatprep.subr.bf16.mxu0 0
        %1789 = vmatpush1.bf16.msra.mxu0 0
        %1790 = vmatprep.subr.bf16.mxu0 0
        %1791 = vmatpush1.bf16.msra.mxu0 0
        %1792 = vmatprep.subr.bf16.mxu0 0
        %1793 = vmatpush1.bf16.msra.mxu0 0
        %1794 = vmatprep.subr.bf16.mxu0 0
        %1795 = vmatpush1.bf16.msra.mxu0 0
        %1796 = vmatprep.subr.bf16.mxu0 0
        %1797 = vmatpush1.bf16.msra.mxu0 0
        %1798 = vmatprep.subr.bf16.mxu0 0
        %1799 = vmatpush1.bf16.msra.mxu0 0
        %1800 = vmatprep.subr.bf16.mxu0 0
        %1801 = vmatpush1.bf16.msra.mxu0 0
        %1802 = vmatprep.subr.bf16.mxu0 0
        %1803 = vmatpush1.bf16.msra.mxu0 0
        %1804 = vmatprep.mubr.bf16.mxu0 0
        %1805 = vmatmul.mubr.bf16.gmra.mrb[0].mxu0 %v1770
        %v1806 = vpop.f32.mrb[0].mxu0
        %v1807 = vadd.f32 %v1756, %v1806
        %v1808 = vpop.f32.mrb[0].mxu0
        %v1809 = vpop.f32.mrb[0].mxu0
        %v1810 = vpop.f32.mrb[0].mxu0
        %1811 = vdwg.mxu0
        %1813 = vset.pattern.permute.xlu0 0
        %1814 = vperm.xlu0 %1813, %v1112
        %v1815 = vpop.permute.xlu0 %1814
        %v1817 = vmul.f32 %v1807, %v1815
        %v1818 = vadd.f32 %v1111, %v1817
        %v1819 = vld [vmem:[%s17] sm:$0x1]
        %v1820 = vld [vmem:[%s18] sm:$0x1]
        %v1821 = vld [vmem:[%s19] sm:$0xff]
        %v1822 = vld [vmem:[%s19 + $0x8] sm:$0xff]
        %v1823 = vld [vmem:[%s19 + $0x10] sm:$0xff]
        %v1824 = vld [vmem:[%s19 + $0x18] sm:$0xff]
        %v1826 = vsel %vm1648, %v1818, 0
        %1828 = vmatprep.subr.mxu0 0.0
        %1829 = vmatpush1.msra.mxu0 %v1821
        %1830 = vmatprep.subr.mxu0 0.0
        %1831 = vmatpush1.msra.mxu0 %v1822
        %1832 = vmatprep.subr.mxu0 0.0
        %1833 = vmatpush1.msra.mxu0 %v1823
        %1834 = vmatprep.subr.mxu0 0.0
        %1835 = vmatpush1.msra.mxu0 %v1824
        %1836 = vmatprep.subr.mxu0 0.0
        %1837 = vmatpush1.msra.mxu0 0.0
        %1838 = vmatprep.subr.mxu0 0.0
        %1839 = vmatpush1.msra.mxu0 0.0
        %1840 = vmatprep.subr.mxu0 0.0
        %1841 = vmatpush1.msra.mxu0 0.0
        %1842 = vmatprep.subr.mxu0 0.0
        %1843 = vmatpush1.msra.mxu0 0.0
        %1844 = vmatprep.subr.mxu0 0.0
        %1845 = vmatpush1.msra.mxu0 0.0
        %1846 = vmatprep.subr.mxu0 0.0
        %1847 = vmatpush1.msra.mxu0 0.0
        %1848 = vmatprep.subr.mxu0 0.0
        %1849 = vmatpush1.msra.mxu0 0.0
        %1850 = vmatprep.subr.mxu0 0.0
        %1851 = vmatpush1.msra.mxu0 0.0
        %1852 = vmatprep.subr.mxu0 0.0
        %1853 = vmatpush1.msra.mxu0 0.0
        %1854 = vmatprep.subr.mxu0 0.0
        %1855 = vmatpush1.msra.mxu0 0.0
        %1856 = vmatprep.subr.mxu0 0.0
        %1857 = vmatpush1.msra.mxu0 0.0
        %1858 = vmatprep.subr.mxu0 0.0
        %1859 = vmatpush1.msra.mxu0 0.0
        %1860 = vmatprep.subr.mxu0 0.0
        %1861 = vmatpush1.msra.mxu0 0.0
        %1862 = vmatprep.subr.mxu0 0.0
        %1863 = vmatpush1.msra.mxu0 0.0
        %1864 = vmatprep.subr.mxu0 0.0
        %1865 = vmatpush1.msra.mxu0 0.0
        %1866 = vmatprep.subr.mxu0 0.0
        %1867 = vmatpush1.msra.mxu0 0.0
        %1868 = vmatprep.subr.mxu0 0.0
        %1869 = vmatpush1.msra.mxu0 0.0
        %1870 = vmatprep.subr.mxu0 0.0
        %1871 = vmatpush1.msra.mxu0 0.0
        %1872 = vmatprep.subr.mxu0 0.0
        %1873 = vmatpush1.msra.mxu0 0.0
        %1874 = vmatprep.subr.mxu0 0.0
        %1875 = vmatpush1.msra.mxu0 0.0
        %1876 = vmatprep.subr.mxu0 0.0
        %1877 = vmatpush1.msra.mxu0 0.0
        %1878 = vmatprep.subr.mxu0 0.0
        %1879 = vmatpush1.msra.mxu0 0.0
        %1880 = vmatprep.subr.mxu0 0.0
        %1881 = vmatpush1.msra.mxu0 0.0
        %1882 = vmatprep.subr.mxu0 0.0
        %1883 = vmatpush1.msra.mxu0 0.0
        %1884 = vmatprep.subr.mxu0 0.0
        %1885 = vmatpush1.msra.mxu0 0.0
        %1886 = vmatprep.subr.mxu0 0.0
        %1887 = vmatpush1.msra.mxu0 0.0
        %1888 = vmatprep.subr.mxu0 0.0
        %1889 = vmatpush1.msra.mxu0 0.0
        %1890 = vmatprep.subr.mxu0 0.0
        %1891 = vmatpush1.msra.mxu0 0.0
        %1892 = vmatprep.mubr.f32.mxu0 0.0
        %1893 = vmatmul.mubr.f32.gmra.mrb[0].mxu0 %v1826
        %v1894 = vpop.f32.mrb[0].mxu0
        %v1895 = vadd.f32 0.0, %v1894
        %v1896 = vpop.f32.mrb[0].mxu0
        %1897 = vdwg.mxu0
        %v1898 = vmul.f32 %v1895, 0.25
        %v1899 = vld [vmem:[%s20] sm:$0xff]
        %vm1900 = vcmask 64512
        %v1902 = vsel %vm1900, %v1898, 0
        %1904 = vmatprep.subr.mxu0 0.0
        %1905 = vmatpush1.msra.mxu0 %v1899
        %1906 = vmatprep.subr.mxu0 0.0
        %1907 = vmatpush1.msra.mxu0 0.0
        %1908 = vmatprep.subr.mxu0 0.0
        %1909 = vmatpush1.msra.mxu0 0.0
        %1910 = vmatprep.subr.mxu0 0.0
        %1911 = vmatpush1.msra.mxu0 0.0
        %1912 = vmatprep.subr.mxu0 0.0
        %1913 = vmatpush1.msra.mxu0 0.0
        %1914 = vmatprep.subr.mxu0 0.0
        %1915 = vmatpush1.msra.mxu0 0.0
        %1916 = vmatprep.subr.mxu0 0.0
        %1917 = vmatpush1.msra.mxu0 0.0
        %1918 = vmatprep.subr.mxu0 0.0
        %1919 = vmatpush1.msra.mxu0 0.0
        %1920 = vmatprep.subr.mxu0 0.0
        %1921 = vmatpush1.msra.mxu0 0.0
        %1922 = vmatprep.subr.mxu0 0.0
        %1923 = vmatpush1.msra.mxu0 0.0
        %1924 = vmatprep.subr.mxu0 0.0
        %1925 = vmatpush1.msra.mxu0 0.0
        %1926 = vmatprep.subr.mxu0 0.0
        %1927 = vmatpush1.msra.mxu0 0.0
        %1928 = vmatprep.subr.mxu0 0.0
        %1929 = vmatpush1.msra.mxu0 0.0
        %1930 = vmatprep.subr.mxu0 0.0
        %1931 = vmatpush1.msra.mxu0 0.0
        %1932 = vmatprep.subr.mxu0 0.0
        %1933 = vmatpush1.msra.mxu0 0.0
        %1934 = vmatprep.subr.mxu0 0.0
        %1935 = vmatpush1.msra.mxu0 0.0
        %1936 = vmatprep.subr.mxu0 0.0
        %1937 = vmatpush1.msra.mxu0 0.0
        %1938 = vmatprep.subr.mxu0 0.0
        %1939 = vmatpush1.msra.mxu0 0.0
        %1940 = vmatprep.subr.mxu0 0.0
        %1941 = vmatpush1.msra.mxu0 0.0
        %1942 = vmatprep.subr.mxu0 0.0
        %1943 = vmatpush1.msra.mxu0 0.0
        %1944 = vmatprep.subr.mxu0 0.0
        %1945 = vmatpush1.msra.mxu0 0.0
        %1946 = vmatprep.subr.mxu0 0.0
        %1947 = vmatpush1.msra.mxu0 0.0
        %1948 = vmatprep.subr.mxu0 0.0
        %1949 = vmatpush1.msra.mxu0 0.0
        %1950 = vmatprep.subr.mxu0 0.0
        %1951 = vmatpush1.msra.mxu0 0.0
        %1952 = vmatprep.subr.mxu0 0.0
        %1953 = vmatpush1.msra.mxu0 0.0
        %1954 = vmatprep.subr.mxu0 0.0
        %1955 = vmatpush1.msra.mxu0 0.0
        %1956 = vmatprep.subr.mxu0 0.0
        %1957 = vmatpush1.msra.mxu0 0.0
        %1958 = vmatprep.subr.mxu0 0.0
        %1959 = vmatpush1.msra.mxu0 0.0
        %1960 = vmatprep.subr.mxu0 0.0
        %1961 = vmatpush1.msra.mxu0 0.0
        %1962 = vmatprep.subr.mxu0 0.0
        %1963 = vmatpush1.msra.mxu0 0.0
        %1964 = vmatprep.subr.mxu0 0.0
        %1965 = vmatpush1.msra.mxu0 0.0
        %1966 = vmatprep.subr.mxu0 0.0
        %1967 = vmatpush1.msra.mxu0 0.0
        %1968 = vmatprep.mubr.f32.mxu0 0.0
        %1969 = vmatmul.mubr.f32.gmra.mrb[0].mxu0 %v1902
        %v1970 = vpop.f32.mrb[0].mxu0
        %v1971 = vadd.f32 0.0, %v1970
        %v1972 = vpop.f32.mrb[0].mxu0
        %1973 = vdwg.mxu0
        %v1974 = vsub.f32 %v1818, %v1971
        %v1975 = vmul.f32 %v1974, %v1974
        %v1977 = vsel %vm1648, %v1975, 0
        %1979 = vmatprep.subr.mxu0 0.0
        %1980 = vmatpush1.msra.mxu0 %v1821
        %1981 = vmatprep.subr.mxu0 0.0
        %1982 = vmatpush1.msra.mxu0 %v1822
        %1983 = vmatprep.subr.mxu0 0.0
        %1984 = vmatpush1.msra.mxu0 %v1823
        %1985 = vmatprep.subr.mxu0 0.0
        %1986 = vmatpush1.msra.mxu0 %v1824
        %1987 = vmatprep.subr.mxu0 0.0
        %1988 = vmatpush1.msra.mxu0 0.0
        %1989 = vmatprep.subr.mxu0 0.0
        %1990 = vmatpush1.msra.mxu0 0.0
        %1991 = vmatprep.subr.mxu0 0.0
        %1992 = vmatpush1.msra.mxu0 0.0
        %1993 = vmatprep.subr.mxu0 0.0
        %1994 = vmatpush1.msra.mxu0 0.0
        %1995 = vmatprep.subr.mxu0 0.0
        %1996 = vmatpush1.msra.mxu0 0.0
        %1997 = vmatprep.subr.mxu0 0.0
        %1998 = vmatpush1.msra.mxu0 0.0
        %1999 = vmatprep.subr.mxu0 0.0
        %2000 = vmatpush1.msra.mxu0 0.0
        %2001 = vmatprep.subr.mxu0 0.0
        %2002 = vmatpush1.msra.mxu0 0.0
        %2003 = vmatprep.subr.mxu0 0.0
        %2004 = vmatpush1.msra.mxu0 0.0
        %2005 = vmatprep.subr.mxu0 0.0
        %2006 = vmatpush1.msra.mxu0 0.0
        %2007 = vmatprep.subr.mxu0 0.0
        %2008 = vmatpush1.msra.mxu0 0.0
        %2009 = vmatprep.subr.mxu0 0.0
        %2010 = vmatpush1.msra.mxu0 0.0
        %2011 = vmatprep.subr.mxu0 0.0
        %2012 = vmatpush1.msra.mxu0 0.0
        %2013 = vmatprep.subr.mxu0 0.0
        %2014 = vmatpush1.msra.mxu0 0.0
        %2015 = vmatprep.subr.mxu0 0.0
        %2016 = vmatpush1.msra.mxu0 0.0
        %2017 = vmatprep.subr.mxu0 0.0
        %2018 = vmatpush1.msra.mxu0 0.0
        %2019 = vmatprep.subr.mxu0 0.0
        %2020 = vmatpush1.msra.mxu0 0.0
        %2021 = vmatprep.subr.mxu0 0.0
        %2022 = vmatpush1.msra.mxu0 0.0
        %2023 = vmatprep.subr.mxu0 0.0
        %2024 = vmatpush1.msra.mxu0 0.0
        %2025 = vmatprep.subr.mxu0 0.0
        %2026 = vmatpush1.msra.mxu0 0.0
        %2027 = vmatprep.subr.mxu0 0.0
        %2028 = vmatpush1.msra.mxu0 0.0
        %2029 = vmatprep.subr.mxu0 0.0
        %2030 = vmatpush1.msra.mxu0 0.0
        %2031 = vmatprep.subr.mxu0 0.0
        %2032 = vmatpush1.msra.mxu0 0.0
        %2033 = vmatprep.subr.mxu0 0.0
        %2034 = vmatpush1.msra.mxu0 0.0
        %2035 = vmatprep.subr.mxu0 0.0
        %2036 = vmatpush1.msra.mxu0 0.0
        %2037 = vmatprep.subr.mxu0 0.0
        %2038 = vmatpush1.msra.mxu0 0.0
        %2039 = vmatprep.subr.mxu0 0.0
        %2040 = vmatpush1.msra.mxu0 0.0
        %2041 = vmatprep.subr.mxu0 0.0
        %2042 = vmatpush1.msra.mxu0 0.0
        %2043 = vmatprep.mubr.f32.mxu0 0.0
        %2044 = vmatmul.mubr.f32.gmra.mrb[0].mxu0 %v1977
        %v2045 = vpop.f32.mrb[0].mxu0
        %v2046 = vadd.f32 0.0, %v2045
        %v2047 = vpop.f32.mrb[0].mxu0
        %2048 = vdwg.mxu0
        %v2049 = vmul.f32 %v2046, 0.25
        %v2051 = vsel %vm1900, %v2049, 0
        %2053 = vmatprep.subr.mxu0 0.0
        %2054 = vmatpush1.msra.mxu0 %v1899
        %2055 = vmatprep.subr.mxu0 0.0
        %2056 = vmatpush1.msra.mxu0 0.0
        %2057 = vmatprep.subr.mxu0 0.0
        %2058 = vmatpush1.msra.mxu0 0.0
        %2059 = vmatprep.subr.mxu0 0.0
        %2060 = vmatpush1.msra.mxu0 0.0
        %2061 = vmatprep.subr.mxu0 0.0
        %2062 = vmatpush1.msra.mxu0 0.0
        %2063 = vmatprep.subr.mxu0 0.0
        %2064 = vmatpush1.msra.mxu0 0.0
        %2065 = vmatprep.subr.mxu0 0.0
        %2066 = vmatpush1.msra.mxu0 0.0
        %2067 = vmatprep.subr.mxu0 0.0
        %2068 = vmatpush1.msra.mxu0 0.0
        %2069 = vmatprep.subr.mxu0 0.0
        %2070 = vmatpush1.msra.mxu0 0.0
        %2071 = vmatprep.subr.mxu0 0.0
        %2072 = vmatpush1.msra.mxu0 0.0
        %2073 = vmatprep.subr.mxu0 0.0
        %2074 = vmatpush1.msra.mxu0 0.0
        %2075 = vmatprep.subr.mxu0 0.0
        %2076 = vmatpush1.msra.mxu0 0.0
        %2077 = vmatprep.subr.mxu0 0.0
        %2078 = vmatpush1.msra.mxu0 0.0
        %2079 = vmatprep.subr.mxu0 0.0
        %2080 = vmatpush1.msra.mxu0 0.0
        %2081 = vmatprep.subr.mxu0 0.0
        %2082 = vmatpush1.msra.mxu0 0.0
        %2083 = vmatprep.subr.mxu0 0.0
        %2084 = vmatpush1.msra.mxu0 0.0
        %2085 = vmatprep.subr.mxu0 0.0
        %2086 = vmatpush1.msra.mxu0 0.0
        %2087 = vmatprep.subr.mxu0 0.0
        %2088 = vmatpush1.msra.mxu0 0.0
        %2089 = vmatprep.subr.mxu0 0.0
        %2090 = vmatpush1.msra.mxu0 0.0
        %2091 = vmatprep.subr.mxu0 0.0
        %2092 = vmatpush1.msra.mxu0 0.0
        %2093 = vmatprep.subr.mxu0 0.0
        %2094 = vmatpush1.msra.mxu0 0.0
        %2095 = vmatprep.subr.mxu0 0.0
        %2096 = vmatpush1.msra.mxu0 0.0
        %2097 = vmatprep.subr.mxu0 0.0
        %2098 = vmatpush1.msra.mxu0 0.0
        %2099 = vmatprep.subr.mxu0 0.0
        %2100 = vmatpush1.msra.mxu0 0.0
        %2101 = vmatprep.subr.mxu0 0.0
        %2102 = vmatpush1.msra.mxu0 0.0
        %2103 = vmatprep.subr.mxu0 0.0
        %2104 = vmatpush1.msra.mxu0 0.0
        %2105 = vmatprep.subr.mxu0 0.0
        %2106 = vmatpush1.msra.mxu0 0.0
        %2107 = vmatprep.subr.mxu0 0.0
        %2108 = vmatpush1.msra.mxu0 0.0
        %2109 = vmatprep.subr.mxu0 0.0
        %2110 = vmatpush1.msra.mxu0 0.0
        %2111 = vmatprep.subr.mxu0 0.0
        %2112 = vmatpush1.msra.mxu0 0.0
        %2113 = vmatprep.subr.mxu0 0.0
        %2114 = vmatpush1.msra.mxu0 0.0
        %2115 = vmatprep.subr.mxu0 0.0
        %2116 = vmatpush1.msra.mxu0 0.0
        %2117 = vmatprep.mubr.f32.mxu0 0.0
        %2118 = vmatmul.mubr.f32.gmra.mrb[0].mxu0 %v2051
        %v2119 = vpop.f32.mrb[0].mxu0
        %v2120 = vadd.f32 1e-06, %v2119
        %v2121 = vpop.f32.mrb[0].mxu0
        %2122 = vdwg.mxu0
        %v2123 = vrsqrt.pop %v2120
        %v2124 = vmul.f32 %v1974, %v2123
        %v2125 = vlaneseq
        %v2126 = vshrl.u32 %v2125, 7
        %v2127 = vsub.s32 0, %v2126
        %v2128 = vrot.slane %v1819, %v2127
        %v2129 = vmul.f32 %v2124, %v2128
        %v2130 = vlaneseq
        %v2131 = vshrl.u32 %v2130, 7
        %v2132 = vsub.s32 0, %v2131
        %v2133 = vrot.slane %v1820, %v2132
        %v2134 = vadd.f32 %v2129, %v2133
        %v2135 = vld [vmem:[%s12] sm:$0xf]
        %v2136 = vld [vmem:[%s12 + $0x4] sm:$0xf]
        %v2137 = vld [vmem:[%s12 + $0x8] sm:$0xf]
        %v2138 = vld [vmem:[%s12 + $0xc] sm:$0xf]
        %v2140 = vlaneseq
        %v2141 = vshrl.u32 %v2140, 7
        %v2142 = vsub.s32 0, %v2141
        %v2143 = vrot.slane %v1141, %v2142
        %v2161 = vunpack.c.l.b16 %v1116
        %v2162 = vunpack.c.l.b16 %v1117
        %v2163 = vunpack.c.l.b16 %v1118
        %v2164 = vunpack.c.l.b16 %v1119
        %v2165 = vunpack.c.l.b16 %v1120
        %v2166 = vunpack.c.l.b16 %v1121
        %v2167 = vunpack.c.l.b16 %v1122
        %v2168 = vunpack.c.l.b16 %v1123
        %v2169 = vunpack.c.l.b16 %v1124
        %v2170 = vunpack.c.l.b16 %v1125
        %v2171 = vunpack.c.l.b16 %v1126
        %v2172 = vunpack.c.l.b16 %v1127
        %v2173 = vunpack.c.l.b16 %v1128
        %v2174 = vunpack.c.l.b16 %v1129
        %v2175 = vunpack.c.l.b16 %v1130
        %v2176 = vunpack.c.l.b16 %v1131
        %v2177 = vpack.c.b16 %v2162, %v2161
        %v2178 = vpack.c.b16 %v2164, %v2163
        %v2179 = vpack.c.b16 %v2166, %v2165
        %v2180 = vpack.c.b16 %v2168, %v2167
        %v2181 = vpack.c.b16 %v2170, %v2169
        %v2182 = vpack.c.b16 %v2172, %v2171
        %v2183 = vpack.c.b16 %v2174, %v2173
        %v2184 = vpack.c.b16 %v2176, %v2175
        %v2189 = vunpack.c.l.b16 %v2135
        %v2190 = vunpack.c.l.b16 %v2136
        %v2191 = vunpack.c.l.b16 %v2137
        %v2192 = vunpack.c.l.b16 %v2138
        %v2193 = vpack.c.b16 %v2190, %v2189
        %v2194 = vpack.c.b16 %v2192, %v2191
        %v2198 = vsel %vm1648, %v2177, 0
        %v2201 = vsel %vm1648, %v2178, 0
        %v2204 = vsel %vm1648, %v2179, 0
        %v2207 = vsel %vm1648, %v2180, 0
        %v2210 = vsel %vm1648, %v2181, 0
        %v2213 = vsel %vm1648, %v2182, 0
        %v2216 = vsel %vm1648, %v2183, 0
        %v2219 = vsel %vm1648, %v2184, 0
        %2221 = vmatprep.subr.bf16.mxu0 0
        %2222 = vmatpush1.bf16.msra.mxu0 %v2193
        %2223 = vmatprep.subr.bf16.mxu0 0
        %2224 = vmatpush1.bf16.msra.mxu0 %v2194
        %2225 = vmatprep.subr.bf16.mxu0 0
        %2226 = vmatpush1.bf16.msra.mxu0 0
        %2227 = vmatprep.subr.bf16.mxu0 0
        %2228 = vmatpush1.bf16.msra.mxu0 0
        %2229 = vmatprep.subr.bf16.mxu0 0
        %2230 = vmatpush1.bf16.msra.mxu0 0
        %2231 = vmatprep.subr.bf16.mxu0 0
        %2232 = vmatpush1.bf16.msra.mxu0 0
        %2233 = vmatprep.subr.bf16.mxu0 0
        %2234 = vmatpush1.bf16.msra.mxu0 0
        %2235 = vmatprep.subr.bf16.mxu0 0
        %2236 = vmatpush1.bf16.msra.mxu0 0
        %2237 = vmatprep.subr.bf16.mxu0 0
        %2238 = vmatpush1.bf16.msra.mxu0 0
        %2239 = vmatprep.subr.bf16.mxu0 0
        %2240 = vmatpush1.bf16.msra.mxu0 0
        %2241 = vmatprep.subr.bf16.mxu0 0
        %2242 = vmatpush1.bf16.msra.mxu0 0
        %2243 = vmatprep.subr.bf16.mxu0 0
        %2244 = vmatpush1.bf16.msra.mxu0 0
        %2245 = vmatprep.subr.bf16.mxu0 0
        %2246 = vmatpush1.bf16.msra.mxu0 0
        %2247 = vmatprep.subr.bf16.mxu0 0
        %2248 = vmatpush1.bf16.msra.mxu0 0
        %2249 = vmatprep.subr.bf16.mxu0 0
        %2250 = vmatpush1.bf16.msra.mxu0 0
        %2251 = vmatprep.subr.bf16.mxu0 0
        %2252 = vmatpush1.bf16.msra.mxu0 0
        %2253 = vmatprep.mubr.bf16.mxu0 0
        %2254 = vmatmul.mubr.bf16.gmra.mrb[0].mxu0 %v2198
        %v2255 = vpop.f32.mrb[0].mxu0
        %v2256 = vadd.f32 %v2143, %v2255
        %v2257 = vpop.f32.mrb[0].mxu0
        %v2258 = vpop.f32.mrb[0].mxu0
        %v2259 = vadd.f32 %v2143, %v2258
        %v2260 = vpop.f32.mrb[0].mxu0
        %2261 = vmatprep.mubr.bf16.mxu0 0
        %2262 = vmatmul.mubr.bf16.gmra.mrb[0].mxu0 %v2201
        %v2263 = vpop.f32.mrb[0].mxu0
        %v2264 = vadd.f32 %v2143, %v2263
        %v2265 = vpop.f32.mrb[0].mxu0
        %v2266 = vpop.f32.mrb[0].mxu0
        %v2267 = vadd.f32 %v2143, %v2266
        %v2268 = vpop.f32.mrb[0].mxu0
        %2269 = vmatprep.mubr.bf16.mxu0 0
        %2270 = vmatmul.mubr.bf16.gmra.mrb[0].mxu0 %v2204
        %v2271 = vpop.f32.mrb[0].mxu0
        %v2272 = vadd.f32 %v2143, %v2271
        %v2273 = vpop.f32.mrb[0].mxu0
        %v2274 = vpop.f32.mrb[0].mxu0
        %v2275 = vadd.f32 %v2143, %v2274
        %v2276 = vpop.f32.mrb[0].mxu0
        %2277 = vmatprep.mubr.bf16.mxu0 0
        %2278 = vmatmul.mubr.bf16.gmra.mrb[0].mxu0 %v2207
        %v2279 = vpop.f32.mrb[0].mxu0
        %v2280 = vadd.f32 %v2143, %v2279
        %v2281 = vpop.f32.mrb[0].mxu0
        %v2282 = vpop.f32.mrb[0].mxu0
        %v2283 = vadd.f32 %v2143, %v2282
        %v2284 = vpop.f32.mrb[0].mxu0
        %2285 = vmatprep.mubr.bf16.mxu0 0
        %2286 = vmatmul.mubr.bf16.gmra.mrb[0].mxu0 %v2210
        %v2287 = vpop.f32.mrb[0].mxu0
        %v2288 = vadd.f32 %v2143, %v2287
        %v2289 = vpop.f32.mrb[0].mxu0
        %v2290 = vpop.f32.mrb[0].mxu0
        %v2291 = vadd.f32 %v2143, %v2290
        %v2292 = vpop.f32.mrb[0].mxu0
        %2293 = vmatprep.mubr.bf16.mxu0 0
        %2294 = vmatmul.mubr.bf16.gmra.mrb[0].mxu0 %v2213
        %v2295 = vpop.f32.mrb[0].mxu0
        %v2296 = vadd.f32 %v2143, %v2295
        %v2297 = vpop.f32.mrb[0].mxu0
        %v2298 = vpop.f32.mrb[0].mxu0
        %v2299 = vadd.f32 %v2143, %v2298
        %v2300 = vpop.f32.mrb[0].mxu0
        %2301 = vmatprep.mubr.bf16.mxu0 0
        %2302 = vmatmul.mubr.bf16.gmra.mrb[0].mxu0 %v2216
        %v2303 = vpop.f32.mrb[0].mxu0
        %v2304 = vadd.f32 %v2143, %v2303
        %v2305 = vpop.f32.mrb[0].mxu0
        %v2306 = vpop.f32.mrb[0].mxu0
        %v2307 = vadd.f32 %v2143, %v2306
        %v2308 = vpop.f32.mrb[0].mxu0
        %2309 = vmatprep.mubr.bf16.mxu0 0
        %2310 = vmatmul.mubr.bf16.gmra.mrb[0].mxu0 %v2219
        %v2311 = vpop.f32.mrb[0].mxu0
        %v2312 = vadd.f32 %v2143, %v2311
        %v2313 = vpop.f32.mrb[0].mxu0
        %v2314 = vpop.f32.mrb[0].mxu0
        %v2315 = vadd.f32 %v2143, %v2314
        %v2316 = vpop.f32.mrb[0].mxu0
        %2317 = vdwg.mxu0
        %v2318 = vxor.u32 %v2256, 2147483648
        %v2319 = vxor.u32 %v2259, 2147483648
        %v2320 = vxor.u32 %v2264, 2147483648
        %v2321 = vxor.u32 %v2267, 2147483648
        %v2322 = vxor.u32 %v2272, 2147483648
        %v2323 = vxor.u32 %v2275, 2147483648
        %v2324 = vxor.u32 %v2280, 2147483648
        %v2325 = vxor.u32 %v2283, 2147483648
        %v2326 = vxor.u32 %v2288, 2147483648
        %v2327 = vxor.u32 %v2291, 2147483648
        %v2328 = vxor.u32 %v2296, 2147483648
        %v2329 = vxor.u32 %v2299, 2147483648
        %v2330 = vxor.u32 %v2304, 2147483648
        %v2331 = vxor.u32 %v2307, 2147483648
        %v2332 = vxor.u32 %v2312, 2147483648
        %v2333 = vxor.u32 %v2315, 2147483648
        %v2334 = vmul.f32 %v2318, 1.442695
        %v2335 = vpow.pop %v2334
        %v2336 = vmul.f32 %v2319, 1.442695
        %v2337 = vpow.pop %v2336
        %v2338 = vmul.f32 %v2320, 1.442695
        %v2339 = vpow.pop %v2338
        %v2340 = vmul.f32 %v2321, 1.442695
        %v2341 = vpow.pop %v2340
        %v2342 = vmul.f32 %v2322, 1.442695
        %v2343 = vpow.pop %v2342
        %v2344 = vmul.f32 %v2323, 1.442695
        %v2345 = vpow.pop %v2344
        %v2346 = vmul.f32 %v2324, 1.442695
        %v2347 = vpow.pop %v2346
        %v2348 = vmul.f32 %v2325, 1.442695
        %v2349 = vpow.pop %v2348
        %v2350 = vmul.f32 %v2326, 1.442695
        %v2351 = vpow.pop %v2350
        %v2352 = vmul.f32 %v2327, 1.442695
        %v2353 = vpow.pop %v2352
        %v2354 = vmul.f32 %v2328, 1.442695
        %v2355 = vpow.pop %v2354
        %v2356 = vmul.f32 %v2329, 1.442695
        %v2357 = vpow.pop %v2356
        %v2358 = vmul.f32 %v2330, 1.442695
        %v2359 = vpow.pop %v2358
        %v2360 = vmul.f32 %v2331, 1.442695
        %v2361 = vpow.pop %v2360
        %v2362 = vmul.f32 %v2332, 1.442695
        %v2363 = vpow.pop %v2362
        %v2364 = vmul.f32 %v2333, 1.442695
        %v2365 = vpow.pop %v2364
        %v2366 = vadd.f32 %v2335, 1.0
        %v2367 = vadd.f32 %v2337, 1.0
        %v2368 = vadd.f32 %v2339, 1.0
        %v2369 = vadd.f32 %v2341, 1.0
        %v2370 = vadd.f32 %v2343, 1.0
        %v2371 = vadd.f32 %v2345, 1.0
        %v2372 = vadd.f32 %v2347, 1.0
        %v2373 = vadd.f32 %v2349, 1.0
        %v2374 = vadd.f32 %v2351, 1.0
        %v2375 = vadd.f32 %v2353, 1.0
        %v2376 = vadd.f32 %v2355, 1.0
        %v2377 = vadd.f32 %v2357, 1.0
        %v2378 = vadd.f32 %v2359, 1.0
        %v2379 = vadd.f32 %v2361, 1.0
        %v2380 = vadd.f32 %v2363, 1.0
        %v2381 = vadd.f32 %v2365, 1.0
        %v2382 = vrcp.pop %v2366
        %v2383 = vmul.f32 1.0, %v2382
        %v2384 = vrcp.pop %v2367
        %v2385 = vmul.f32 1.0, %v2384
        %v2386 = vrcp.pop %v2368
        %v2387 = vmul.f32 1.0, %v2386
        %v2388 = vrcp.pop %v2369
        %v2389 = vmul.f32 1.0, %v2388
        %v2390 = vrcp.pop %v2370
        %v2391 = vmul.f32 1.0, %v2390
        %v2392 = vrcp.pop %v2371
        %v2393 = vmul.f32 1.0, %v2392
        %v2394 = vrcp.pop %v2372
        %v2395 = vmul.f32 1.0, %v2394
        %v2396 = vrcp.pop %v2373
        %v2397 = vmul.f32 1.0, %v2396
        %v2398 = vrcp.pop %v2374
        %v2399 = vmul.f32 1.0, %v2398
        %v2400 = vrcp.pop %v2375
        %v2401 = vmul.f32 1.0, %v2400
        %v2402 = vrcp.pop %v2376
        %v2403 = vmul.f32 1.0, %v2402
        %v2404 = vrcp.pop %v2377
        %v2405 = vmul.f32 1.0, %v2404
        %v2406 = vrcp.pop %v2378
        %v2407 = vmul.f32 1.0, %v2406
        %v2408 = vrcp.pop %v2379
        %v2409 = vmul.f32 1.0, %v2408
        %v2410 = vrcp.pop %v2380
        %v2411 = vmul.f32 1.0, %v2410
        %v2412 = vrcp.pop %v2381
        %v2413 = vmul.f32 1.0, %v2412
        %v2416 = vcombine.high %v1114, %v1114
        %v2418 = vunpack.c.l.s4 1966171168
        %v2419 = vunpack.c.0.s8 %v2418
        %v2420 = vlaneseq
        %v2421 = vshrl.u32 %v2420, 7
        %v2422 = vsub.s32 %v2419, %v2421
        %v2423 = vrot.slane %v1114, %v2422
        %v2425 = vunpack.c.l.s4 1966171168
        %v2426 = vunpack.c.0.s8 %v2425
        %v2427 = vlaneseq
        %v2428 = vshrl.u32 %v2427, 7
        %v2429 = vsub.s32 %v2426, %v2428
        %v2430 = vrot.slane %v2416, %v2429
        %v2431 = vcombine.high %v2423, %v2423
        %v2432 = vcombine.high %v2430, %v2430
        %v2434 = vunpack.c.l.s4 1966171168
        %v2435 = vunpack.c.0.s8 %v2434
        %v2436 = vlaneseq
        %v2437 = vshrl.u32 %v2436, 7
        %v2438 = vsub.s32 %v2435, %v2437
        %v2439 = vrot.slane %v2423, %v2438
        %v2441 = vunpack.c.l.s4 1966171168
        %v2442 = vunpack.c.0.s8 %v2441
        %v2443 = vlaneseq
        %v2444 = vshrl.u32 %v2443, 7
        %v2445 = vsub.s32 %v2442, %v2444
        %v2446 = vrot.slane %v2430, %v2445
        %v2448 = vunpack.c.l.s4 1966171168
        %v2449 = vunpack.c.0.s8 %v2448
        %v2450 = vlaneseq
        %v2451 = vshrl.u32 %v2450, 7
        %v2452 = vsub.s32 %v2449, %v2451
        %v2453 = vrot.slane %v2431, %v2452
        %v2455 = vunpack.c.l.s4 1966171168
        %v2456 = vunpack.c.0.s8 %v2455
        %v2457 = vlaneseq
        %v2458 = vshrl.u32 %v2457, 7
        %v2459 = vsub.s32 %v2456, %v2458
        %v2460 = vrot.slane %v2432, %v2459
        %v2461 = vcombine.high %v2439, %v2439
        %v2462 = vcombine.high %v2446, %v2446
        %v2463 = vcombine.high %v2453, %v2453
        %v2464 = vcombine.high %v2460, %v2460
        %v2465 = vcombine.high %v1115, %v1115
        %v2467 = vunpack.c.l.s4 1966171168
        %v2468 = vunpack.c.0.s8 %v2467
        %v2469 = vlaneseq
        %v2470 = vshrl.u32 %v2469, 7
        %v2471 = vsub.s32 %v2468, %v2470
        %v2472 = vrot.slane %v1115, %v2471
        %v2474 = vunpack.c.l.s4 1966171168
        %v2475 = vunpack.c.0.s8 %v2474
        %v2476 = vlaneseq
        %v2477 = vshrl.u32 %v2476, 7
        %v2478 = vsub.s32 %v2475, %v2477
        %v2479 = vrot.slane %v2465, %v2478
        %v2480 = vcombine.high %v2472, %v2472
        %v2481 = vcombine.high %v2479, %v2479
        %v2483 = vunpack.c.l.s4 1966171168
        %v2484 = vunpack.c.0.s8 %v2483
        %v2485 = vlaneseq
        %v2486 = vshrl.u32 %v2485, 7
        %v2487 = vsub.s32 %v2484, %v2486
        %v2488 = vrot.slane %v2472, %v2487
        %v2490 = vunpack.c.l.s4 1966171168
        %v2491 = vunpack.c.0.s8 %v2490
        %v2492 = vlaneseq
        %v2493 = vshrl.u32 %v2492, 7
        %v2494 = vsub.s32 %v2491, %v2493
        %v2495 = vrot.slane %v2479, %v2494
        %v2497 = vunpack.c.l.s4 1966171168
        %v2498 = vunpack.c.0.s8 %v2497
        %v2499 = vlaneseq
        %v2500 = vshrl.u32 %v2499, 7
        %v2501 = vsub.s32 %v2498, %v2500
        %v2502 = vrot.slane %v2480, %v2501
        %v2504 = vunpack.c.l.s4 1966171168
        %v2505 = vunpack.c.0.s8 %v2504
        %v2506 = vlaneseq
        %v2507 = vshrl.u32 %v2506, 7
        %v2508 = vsub.s32 %v2505, %v2507
        %v2509 = vrot.slane %v2481, %v2508
        %v2510 = vcombine.high %v2488, %v2488
        %v2511 = vcombine.high %v2495, %v2495
        %v2512 = vcombine.high %v2502, %v2502
        %v2513 = vcombine.high %v2509, %v2509
        %v2514 = vlaneseq
        %v2515 = vshrl.u32 %v2514, 7
        %v2516 = vsub.s32 0, %v2515
        %v2517 = vrot.slane %v2439, %v2516
        %v2518 = vlaneseq
        %v2519 = vshrl.u32 %v2518, 7
        %v2520 = vsub.s32 0, %v2519
        %v2521 = vrot.slane %v2453, %v2520
        %v2522 = vlaneseq
        %v2523 = vshrl.u32 %v2522, 7
        %v2524 = vsub.s32 0, %v2523
        %v2525 = vrot.slane %v2461, %v2524
        %v2526 = vlaneseq
        %v2527 = vshrl.u32 %v2526, 7
        %v2528 = vsub.s32 0, %v2527
        %v2529 = vrot.slane %v2463, %v2528
        %v2530 = vlaneseq
        %v2531 = vshrl.u32 %v2530, 7
        %v2532 = vsub.s32 0, %v2531
        %v2533 = vrot.slane %v2446, %v2532
        %v2534 = vlaneseq
        %v2535 = vshrl.u32 %v2534, 7
        %v2536 = vsub.s32 0, %v2535
        %v2537 = vrot.slane %v2460, %v2536
        %v2538 = vlaneseq
        %v2539 = vshrl.u32 %v2538, 7
        %v2540 = vsub.s32 0, %v2539
        %v2541 = vrot.slane %v2462, %v2540
        %v2542 = vlaneseq
        %v2543 = vshrl.u32 %v2542, 7
        %v2544 = vsub.s32 0, %v2543
        %v2545 = vrot.slane %v2464, %v2544
        %v2546 = vlaneseq
        %v2547 = vshrl.u32 %v2546, 7
        %v2548 = vsub.s32 0, %v2547
        %v2549 = vrot.slane %v2488, %v2548
        %v2550 = vlaneseq
        %v2551 = vshrl.u32 %v2550, 7
        %v2552 = vsub.s32 0, %v2551
        %v2553 = vrot.slane %v2502, %v2552
        %v2554 = vlaneseq
        %v2555 = vshrl.u32 %v2554, 7
        %v2556 = vsub.s32 0, %v2555
        %v2557 = vrot.slane %v2510, %v2556
        %v2558 = vlaneseq
        %v2559 = vshrl.u32 %v2558, 7
        %v2560 = vsub.s32 0, %v2559
        %v2561 = vrot.slane %v2512, %v2560
        %v2562 = vlaneseq
        %v2563 = vshrl.u32 %v2562, 7
        %v2564 = vsub.s32 0, %v2563
        %v2565 = vrot.slane %v2495, %v2564
        %v2566 = vlaneseq
        %v2567 = vshrl.u32 %v2566, 7
        %v2568 = vsub.s32 0, %v2567
        %v2569 = vrot.slane %v2509, %v2568
        %v2570 = vlaneseq
        %v2571 = vshrl.u32 %v2570, 7
        %v2572 = vsub.s32 0, %v2571
        %v2573 = vrot.slane %v2511, %v2572
        %v2574 = vlaneseq
        %v2575 = vshrl.u32 %v2574, 7
        %v2576 = vsub.s32 0, %v2575
        %v2577 = vrot.slane %v2513, %v2576
        %v2594 = vmul.f32 %v2256, %v2517
        %v2595 = vmul.f32 %v2259, %v2521
        %v2596 = vmul.f32 %v2264, %v2525
        %v2597 = vmul.f32 %v2267, %v2529
        %v2598 = vmul.f32 %v2272, %v2533
        %v2599 = vmul.f32 %v2275, %v2537
        %v2600 = vmul.f32 %v2280, %v2541
        %v2601 = vmul.f32 %v2283, %v2545
        %v2602 = vmul.f32 %v2288, %v2549
        %v2603 = vmul.f32 %v2291, %v2553
        %v2604 = vmul.f32 %v2296, %v2557
        %v2605 = vmul.f32 %v2299, %v2561
        %v2606 = vmul.f32 %v2304, %v2565
        %v2607 = vmul.f32 %v2307, %v2569
        %v2608 = vmul.f32 %v2312, %v2573
        %v2609 = vmul.f32 %v2315, %v2577
        %v2610 = vmul.f32 %v2594, %v1113
        %v2611 = vmul.f32 %v2595, %v1113
        %v2612 = vmul.f32 %v2596, %v1113
        %v2613 = vmul.f32 %v2597, %v1113
        %v2614 = vmul.f32 %v2598, %v1113
        %v2615 = vmul.f32 %v2599, %v1113
        %v2616 = vmul.f32 %v2600, %v1113
        %v2617 = vmul.f32 %v2601, %v1113
        %v2618 = vmul.f32 %v2602, %v1113
        %v2619 = vmul.f32 %v2603, %v1113
        %v2620 = vmul.f32 %v2604, %v1113
        %v2621 = vmul.f32 %v2605, %v1113
        %v2622 = vmul.f32 %v2606, %v1113
        %v2623 = vmul.f32 %v2607, %v1113
        %v2624 = vmul.f32 %v2608, %v1113
        %v2625 = vmul.f32 %v2609, %v1113
        %v2626 = vld [vmem:[%s21] sm:$0xff]
        %v2627 = vld [vmem:[%s21 + $0x8] sm:$0xff]
        %v2628 = vld [vmem:[%s21 + $0x10] sm:$0xff]
        %v2629 = vld [vmem:[%s21 + $0x18] sm:$0xff]
        %v2631 = vsel %vm1648, %v2610, 0
        %v2634 = vsel %vm1648, %v2611, 0
        %v2637 = vsel %vm1648, %v2612, 0
        %v2640 = vsel %vm1648, %v2613, 0
        %v2643 = vsel %vm1648, %v2614, 0
        %v2646 = vsel %vm1648, %v2615, 0
        %v2649 = vsel %vm1648, %v2616, 0
        %v2652 = vsel %vm1648, %v2617, 0
        %v2655 = vsel %vm1648, %v2618, 0
        %v2658 = vsel %vm1648, %v2619, 0
        %v2661 = vsel %vm1648, %v2620, 0
        %v2664 = vsel %vm1648, %v2621, 0
        %v2667 = vsel %vm1648, %v2622, 0
        %v2670 = vsel %vm1648, %v2623, 0
        %v2673 = vsel %vm1648, %v2624, 0
        %v2676 = vsel %vm1648, %v2625, 0
        %2678 = vmatprep.subr.mxu0 0.0
        %2679 = vmatpush1.msra.mxu0 %v2626
        %2680 = vmatprep.subr.mxu0 0.0
        %2681 = vmatpush1.msra.mxu0 %v2627
        %2682 = vmatprep.subr.mxu0 0.0
        %2683 = vmatpush1.msra.mxu0 %v2628
        %2684 = vmatprep.subr.mxu0 0.0
        %2685 = vmatpush1.msra.mxu0 %v2629
        %2686 = vmatprep.subr.mxu0 0.0
        %2687 = vmatpush1.msra.mxu0 0.0
        %2688 = vmatprep.subr.mxu0 0.0
        %2689 = vmatpush1.msra.mxu0 0.0
        %2690 = vmatprep.subr.mxu0 0.0
        %2691 = vmatpush1.msra.mxu0 0.0
        %2692 = vmatprep.subr.mxu0 0.0
        %2693 = vmatpush1.msra.mxu0 0.0
        %2694 = vmatprep.subr.mxu0 0.0
        %2695 = vmatpush1.msra.mxu0 0.0
        %2696 = vmatprep.subr.mxu0 0.0
        %2697 = vmatpush1.msra.mxu0 0.0
        %2698 = vmatprep.subr.mxu0 0.0
        %2699 = vmatpush1.msra.mxu0 0.0
        %2700 = vmatprep.subr.mxu0 0.0
        %2701 = vmatpush1.msra.mxu0 0.0
        %2702 = vmatprep.subr.mxu0 0.0
        %2703 = vmatpush1.msra.mxu0 0.0
        %2704 = vmatprep.subr.mxu0 0.0
        %2705 = vmatpush1.msra.mxu0 0.0
        %2706 = vmatprep.subr.mxu0 0.0
        %2707 = vmatpush1.msra.mxu0 0.0
        %2708 = vmatprep.subr.mxu0 0.0
        %2709 = vmatpush1.msra.mxu0 0.0
        %2710 = vmatprep.subr.mxu0 0.0
        %2711 = vmatpush1.msra.mxu0 0.0
        %2712 = vmatprep.subr.mxu0 0.0
        %2713 = vmatpush1.msra.mxu0 0.0
        %2714 = vmatprep.subr.mxu0 0.0
        %2715 = vmatpush1.msra.mxu0 0.0
        %2716 = vmatprep.subr.mxu0 0.0
        %2717 = vmatpush1.msra.mxu0 0.0
        %2718 = vmatprep.subr.mxu0 0.0
        %2719 = vmatpush1.msra.mxu0 0.0
        %2720 = vmatprep.subr.mxu0 0.0
        %2721 = vmatpush1.msra.mxu0 0.0
        %2722 = vmatprep.subr.mxu0 0.0
        %2723 = vmatpush1.msra.mxu0 0.0
        %2724 = vmatprep.subr.mxu0 0.0
        %2725 = vmatpush1.msra.mxu0 0.0
        %2726 = vmatprep.subr.mxu0 0.0
        %2727 = vmatpush1.msra.mxu0 0.0
        %2728 = vmatprep.subr.mxu0 0.0
        %2729 = vmatpush1.msra.mxu0 0.0
        %2730 = vmatprep.subr.mxu0 0.0
        %2731 = vmatpush1.msra.mxu0 0.0
        %2732 = vmatprep.subr.mxu0 0.0
        %2733 = vmatpush1.msra.mxu0 0.0
        %2734 = vmatprep.subr.mxu0 0.0
        %2735 = vmatpush1.msra.mxu0 0.0
        %2736 = vmatprep.subr.mxu0 0.0
        %2737 = vmatpush1.msra.mxu0 0.0
        %2738 = vmatprep.subr.mxu0 0.0
        %2739 = vmatpush1.msra.mxu0 0.0
        %2740 = vmatprep.subr.mxu0 0.0
        %2741 = vmatpush1.msra.mxu0 0.0
        %2742 = vmatprep.mubr.f32.mxu0 0.0
        %2743 = vmatmul.mubr.f32.gmra.mrb[0].mxu0 %v2631
        %v2744 = vpop.f32.mrb[0].mxu0
        %v2745 = vadd.f32 0.0, %v2744
        %v2746 = vpop.f32.mrb[0].mxu0
        %2747 = vmatprep.mubr.f32.mxu0 0.0
        %2748 = vmatmul.mubr.f32.gmra.mrb[0].mxu0 %v2634
        %v2749 = vpop.f32.mrb[0].mxu0
        %v2750 = vadd.f32 0.0, %v2749
        %v2751 = vpop.f32.mrb[0].mxu0
        %2752 = vmatprep.mubr.f32.mxu0 0.0
        %2753 = vmatmul.mubr.f32.gmra.mrb[0].mxu0 %v2637
        %v2754 = vpop.f32.mrb[0].mxu0
        %v2755 = vadd.f32 0.0, %v2754
        %v2756 = vpop.f32.mrb[0].mxu0
        %2757 = vmatprep.mubr.f32.mxu0 0.0
        %2758 = vmatmul.mubr.f32.gmra.mrb[0].mxu0 %v2640
        %v2759 = vpop.f32.mrb[0].mxu0
        %v2760 = vadd.f32 0.0, %v2759
        %v2761 = vpop.f32.mrb[0].mxu0
        %2762 = vmatprep.mubr.f32.mxu0 0.0
        %2763 = vmatmul.mubr.f32.gmra.mrb[0].mxu0 %v2643
        %v2764 = vpop.f32.mrb[0].mxu0
        %v2765 = vadd.f32 0.0, %v2764
        %v2766 = vpop.f32.mrb[0].mxu0
        %2767 = vmatprep.mubr.f32.mxu0 0.0
        %2768 = vmatmul.mubr.f32.gmra.mrb[0].mxu0 %v2646
        %v2769 = vpop.f32.mrb[0].mxu0
        %v2770 = vadd.f32 0.0, %v2769
        %v2771 = vpop.f32.mrb[0].mxu0
        %2772 = vmatprep.mubr.f32.mxu0 0.0
        %2773 = vmatmul.mubr.f32.gmra.mrb[0].mxu0 %v2649
        %v2774 = vpop.f32.mrb[0].mxu0
        %v2775 = vadd.f32 0.0, %v2774
        %v2776 = vpop.f32.mrb[0].mxu0
        %2777 = vmatprep.mubr.f32.mxu0 0.0
        %2778 = vmatmul.mubr.f32.gmra.mrb[0].mxu0 %v2652
        %v2779 = vpop.f32.mrb[0].mxu0
        %v2780 = vadd.f32 0.0, %v2779
        %v2781 = vpop.f32.mrb[0].mxu0
        %2782 = vmatprep.mubr.f32.mxu0 0.0
        %2783 = vmatmul.mubr.f32.gmra.mrb[0].mxu0 %v2655
        %v2784 = vpop.f32.mrb[0].mxu0
        %v2785 = vadd.f32 0.0, %v2784
        %v2786 = vpop.f32.mrb[0].mxu0
        %2787 = vmatprep.mubr.f32.mxu0 0.0
        %2788 = vmatmul.mubr.f32.gmra.mrb[0].mxu0 %v2658
        %v2789 = vpop.f32.mrb[0].mxu0
        %v2790 = vadd.f32 0.0, %v2789
        %v2791 = vpop.f32.mrb[0].mxu0
        %2792 = vmatprep.mubr.f32.mxu0 0.0
        %2793 = vmatmul.mubr.f32.gmra.mrb[0].mxu0 %v2661
        %v2794 = vpop.f32.mrb[0].mxu0
        %v2795 = vadd.f32 0.0, %v2794
        %v2796 = vpop.f32.mrb[0].mxu0
        %2797 = vmatprep.mubr.f32.mxu0 0.0
        %2798 = vmatmul.mubr.f32.gmra.mrb[0].mxu0 %v2664
        %v2799 = vpop.f32.mrb[0].mxu0
        %v2800 = vadd.f32 0.0, %v2799
        %v2801 = vpop.f32.mrb[0].mxu0
        %2802 = vmatprep.mubr.f32.mxu0 0.0
        %2803 = vmatmul.mubr.f32.gmra.mrb[0].mxu0 %v2667
        %v2804 = vpop.f32.mrb[0].mxu0
        %v2805 = vadd.f32 0.0, %v2804
        %v2806 = vpop.f32.mrb[0].mxu0
        %2807 = vmatprep.mubr.f32.mxu0 0.0
        %2808 = vmatmul.mubr.f32.gmra.mrb[0].mxu0 %v2670
        %v2809 = vpop.f32.mrb[0].mxu0
        %v2810 = vadd.f32 0.0, %v2809
        %v2811 = vpop.f32.mrb[0].mxu0
        %2812 = vmatprep.mubr.f32.mxu0 0.0
        %2813 = vmatmul.mubr.f32.gmra.mrb[0].mxu0 %v2673
        %v2814 = vpop.f32.mrb[0].mxu0
        %v2815 = vadd.f32 0.0, %v2814
        %v2816 = vpop.f32.mrb[0].mxu0
        %2817 = vmatprep.mubr.f32.mxu0 0.0
        %2818 = vmatmul.mubr.f32.gmra.mrb[0].mxu0 %v2676
        %v2819 = vpop.f32.mrb[0].mxu0
        %v2820 = vadd.f32 0.0, %v2819
        %v2821 = vpop.f32.mrb[0].mxu0
        %2822 = vdwg.mxu0
        %vm2823 = vcmp.gt.f32.partialorder %v1186, 0.0
        %vm2824 = vcmp.gt.f32.partialorder %v1193, 0.0
        %vm2825 = vcmp.gt.f32.partialorder %v1200, 0.0
        %vm2826 = vcmp.gt.f32.partialorder %v1207, 0.0
        %vm2827 = vcmp.gt.f32.partialorder %v1214, 0.0
        %vm2828 = vcmp.gt.f32.partialorder %v1221, 0.0
        %vm2829 = vcmp.gt.f32.partialorder %v1228, 0.0
        %vm2830 = vcmp.gt.f32.partialorder %v1235, 0.0
        %vm2831 = vcmp.gt.f32.partialorder %v1242, 0.0
        %vm2832 = vcmp.gt.f32.partialorder %v1249, 0.0
        %vm2833 = vcmp.gt.f32.partialorder %v1256, 0.0
        %vm2834 = vcmp.gt.f32.partialorder %v1263, 0.0
        %vm2835 = vcmp.gt.f32.partialorder %v1270, 0.0
        %vm2836 = vcmp.gt.f32.partialorder %v1277, 0.0
        %vm2837 = vcmp.gt.f32.partialorder %v1284, 0.0
        %vm2838 = vcmp.gt.f32.partialorder %v1291, 0.0
        %v2839 = vmul.f32 %v2745, 0.5
        %v2840 = vmul.f32 %v2750, 0.5
        %v2841 = vmul.f32 %v2755, 0.5
        %v2842 = vmul.f32 %v2760, 0.5
        %v2843 = vmul.f32 %v2765, 0.5
        %v2844 = vmul.f32 %v2770, 0.5
        %v2845 = vmul.f32 %v2775, 0.5
        %v2846 = vmul.f32 %v2780, 0.5
        %v2847 = vmul.f32 %v2785, 0.5
        %v2848 = vmul.f32 %v2790, 0.5
        %v2849 = vmul.f32 %v2795, 0.5
        %v2850 = vmul.f32 %v2800, 0.5
        %v2851 = vmul.f32 %v2805, 0.5
        %v2852 = vmul.f32 %v2810, 0.5
        %v2853 = vmul.f32 %v2815, 0.5
        %v2854 = vmul.f32 %v2820, 0.5
        %v2855 = vsel %vm2823, 1, 0
        %v2856 = vsel %vm2824, 1, 0
        %v2857 = vsel %vm2825, 1, 0
        %v2858 = vsel %vm2826, 1, 0
        %v2859 = vsel %vm2827, 1, 0
        %v2860 = vsel %vm2828, 1, 0
        %v2861 = vsel %vm2829, 1, 0
        %v2862 = vsel %vm2830, 1, 0
        %v2863 = vsel %vm2831, 1, 0
        %v2864 = vsel %vm2832, 1, 0
        %v2865 = vsel %vm2833, 1, 0
        %v2866 = vsel %vm2834, 1, 0
        %v2867 = vsel %vm2835, 1, 0
        %v2868 = vsel %vm2836, 1, 0
        %v2869 = vsel %vm2837, 1, 0
        %v2870 = vsel %vm2838, 1, 0
        %vm2871 = vcmp.eq.s32.totalorder %v2855, 1
        %vm2872 = vcmp.eq.s32.totalorder %v2856, 1
        %vm2873 = vcmp.eq.s32.totalorder %v2857, 1
        %vm2874 = vcmp.eq.s32.totalorder %v2858, 1
        %vm2875 = vcmp.eq.s32.totalorder %v2859, 1
        %vm2876 = vcmp.eq.s32.totalorder %v2860, 1
        %vm2877 = vcmp.eq.s32.totalorder %v2861, 1
        %vm2878 = vcmp.eq.s32.totalorder %v2862, 1
        %vm2879 = vcmp.eq.s32.totalorder %v2863, 1
        %vm2880 = vcmp.eq.s32.totalorder %v2864, 1
        %vm2881 = vcmp.eq.s32.totalorder %v2865, 1
        %vm2882 = vcmp.eq.s32.totalorder %v2866, 1
        %vm2883 = vcmp.eq.s32.totalorder %v2867, 1
        %vm2884 = vcmp.eq.s32.totalorder %v2868, 1
        %vm2885 = vcmp.eq.s32.totalorder %v2869, 1
        %vm2886 = vcmp.eq.s32.totalorder %v2870, 1
        %v2887 = vsel %vm2871, %v2839, -1e+30
        %v2888 = vsel %vm2872, %v2840, -1e+30
        %v2889 = vsel %vm2873, %v2841, -1e+30
        %v2890 = vsel %vm2874, %v2842, -1e+30
        %v2891 = vsel %vm2875, %v2843, -1e+30
        %v2892 = vsel %vm2876, %v2844, -1e+30
        %v2893 = vsel %vm2877, %v2845, -1e+30
        %v2894 = vsel %vm2878, %v2846, -1e+30
        %v2895 = vsel %vm2879, %v2847, -1e+30
        %v2896 = vsel %vm2880, %v2848, -1e+30
        %v2897 = vsel %vm2881, %v2849, -1e+30
        %v2898 = vsel %vm2882, %v2850, -1e+30
        %v2899 = vsel %vm2883, %v2851, -1e+30
        %v2900 = vsel %vm2884, %v2852, -1e+30
        %v2901 = vsel %vm2885, %v2853, -1e+30
        %v2902 = vsel %vm2886, %v2854, -1e+30
        %v2903 = vsel %vm1900, %v2887, -inf
        %v2904 = vsel %vm1900, %v2888, -inf
        %v2905 = vsel %vm1900, %v2889, -inf
        %v2906 = vsel %vm1900, %v2890, -inf
        %v2907 = vsel %vm1900, %v2891, -inf
        %v2908 = vmax.f32 %v2903, %v2907
        %v2909 = vsel %vm1900, %v2892, -inf
        %v2910 = vmax.f32 %v2904, %v2909
        %v2911 = vsel %vm1900, %v2893, -inf
        %v2912 = vmax.f32 %v2905, %v2911
        %v2913 = vsel %vm1900, %v2894, -inf
        %v2914 = vmax.f32 %v2906, %v2913
        %v2915 = vsel %vm1900, %v2895, -inf
        %v2916 = vmax.f32 %v2908, %v2915
        %v2917 = vsel %vm1900, %v2896, -inf
        %v2918 = vmax.f32 %v2910, %v2917
        %v2919 = vsel %vm1900, %v2897, -inf
        %v2920 = vmax.f32 %v2912, %v2919
        %v2921 = vsel %vm1900, %v2898, -inf
        %v2922 = vmax.f32 %v2914, %v2921
        %v2923 = vsel %vm1900, %v2899, -inf
        %v2924 = vmax.f32 %v2916, %v2923
        %v2925 = vsel %vm1900, %v2900, -inf
        %v2926 = vmax.f32 %v2918, %v2925
        %v2927 = vsel %vm1900, %v2901, -inf
        %v2928 = vmax.f32 %v2920, %v2927
        %v2929 = vsel %vm1900, %v2902, -inf
        %v2930 = vmax.f32 %v2922, %v2929
        %v2931 = vmax.f32 %v2924, %v2926
        %v2932 = vmax.f32 %v2928, %v2930
        %v2933 = vmax.f32 %v2931, %v2932
        %v2934 = vsub.f32 %v2887, %v2933
        %v2935 = vsub.f32 %v2888, %v2933
        %v2936 = vsub.f32 %v2889, %v2933
        %v2937 = vsub.f32 %v2890, %v2933
        %v2938 = vsub.f32 %v2891, %v2933
        %v2939 = vsub.f32 %v2892, %v2933
        %v2940 = vsub.f32 %v2893, %v2933
        %v2941 = vsub.f32 %v2894, %v2933
        %v2942 = vsub.f32 %v2895, %v2933
        %v2943 = vsub.f32 %v2896, %v2933
        %v2944 = vsub.f32 %v2897, %v2933
        %v2945 = vsub.f32 %v2898, %v2933
        %v2946 = vsub.f32 %v2899, %v2933
        %v2947 = vsub.f32 %v2900, %v2933
        %v2948 = vsub.f32 %v2901, %v2933
        %v2949 = vsub.f32 %v2902, %v2933
        %v2950 = vmul.f32 %v2934, 1.442695
        %v2951 = vpow.pop %v2950
        %v2952 = vmul.f32 %v2935, 1.442695
        %v2953 = vpow.pop %v2952
        %v2954 = vmul.f32 %v2936, 1.442695
        %v2955 = vpow.pop %v2954
        %v2956 = vmul.f32 %v2937, 1.442695
        %v2957 = vpow.pop %v2956
        %v2958 = vmul.f32 %v2938, 1.442695
        %v2959 = vpow.pop %v2958
        %v2960 = vmul.f32 %v2939, 1.442695
        %v2961 = vpow.pop %v2960
        %v2962 = vmul.f32 %v2940, 1.442695
        %v2963 = vpow.pop %v2962
        %v2964 = vmul.f32 %v2941, 1.442695
        %v2965 = vpow.pop %v2964
        %v2966 = vmul.f32 %v2942, 1.442695
        %v2967 = vpow.pop %v2966
        %v2968 = vmul.f32 %v2943, 1.442695
        %v2969 = vpow.pop %v2968
        %v2970 = vmul.f32 %v2944, 1.442695
        %v2971 = vpow.pop %v2970
        %v2972 = vmul.f32 %v2945, 1.442695
        %v2973 = vpow.pop %v2972
        %v2974 = vmul.f32 %v2946, 1.442695
        %v2975 = vpow.pop %v2974
        %v2976 = vmul.f32 %v2947, 1.442695
        %v2977 = vpow.pop %v2976
        %v2978 = vmul.f32 %v2948, 1.442695
        %v2979 = vpow.pop %v2978
        %v2980 = vmul.f32 %v2949, 1.442695
        %v2981 = vpow.pop %v2980
        %v2982 = vmul.f32 %v2951, %v1186
        %v2983 = vmul.f32 %v2953, %v1193
        %v2984 = vmul.f32 %v2955, %v1200
        %v2985 = vmul.f32 %v2957, %v1207
        %v2986 = vmul.f32 %v2959, %v1214
        %v2987 = vmul.f32 %v2961, %v1221
        %v2988 = vmul.f32 %v2963, %v1228
        %v2989 = vmul.f32 %v2965, %v1235
        %v2990 = vmul.f32 %v2967, %v1242
        %v2991 = vmul.f32 %v2969, %v1249
        %v2992 = vmul.f32 %v2971, %v1256
        %v2993 = vmul.f32 %v2973, %v1263
        %v2994 = vmul.f32 %v2975, %v1270
        %v2995 = vmul.f32 %v2977, %v1277
        %v2996 = vmul.f32 %v2979, %v1284
        %v2997 = vmul.f32 %v2981, %v1291
        %v2998 = vsel %vm1900, %v2982, 0.0
        %v2999 = vsel %vm1900, %v2983, 0.0
        %v3000 = vadd.f32 %v2998, %v2999
        %v3001 = vsel %vm1900, %v2984, 0.0
        %v3002 = vadd.f32 %v3000, %v3001
        %v3003 = vsel %vm1900, %v2985, 0.0
        %v3004 = vadd.f32 %v3002, %v3003
        %v3005 = vsel %vm1900, %v2986, 0.0
        %v3006 = vadd.f32 %v3004, %v3005
        %v3007 = vsel %vm1900, %v2987, 0.0
        %v3008 = vadd.f32 %v3006, %v3007
        %v3009 = vsel %vm1900, %v2988, 0.0
        %v3010 = vadd.f32 %v3008, %v3009
        %v3011 = vsel %vm1900, %v2989, 0.0
        %v3012 = vadd.f32 %v3010, %v3011
        %v3013 = vsel %vm1900, %v2990, 0.0
        %v3014 = vadd.f32 %v3012, %v3013
        %v3015 = vsel %vm1900, %v2991, 0.0
        %v3016 = vadd.f32 %v3014, %v3015
        %v3017 = vsel %vm1900, %v2992, 0.0
        %v3018 = vadd.f32 %v3016, %v3017
        %v3019 = vsel %vm1900, %v2993, 0.0
        %v3020 = vadd.f32 %v3018, %v3019
        %v3021 = vsel %vm1900, %v2994, 0.0
        %v3022 = vadd.f32 %v3020, %v3021
        %v3023 = vsel %vm1900, %v2995, 0.0
        %v3024 = vadd.f32 %v3022, %v3023
        %v3025 = vsel %vm1900, %v2996, 0.0
        %v3026 = vadd.f32 %v3024, %v3025
        %v3027 = vsel %vm1900, %v2997, 0.0
        %v3028 = vadd.f32 %v3026, %v3027
        %v3029 = vmax.f32 %v3028, 1e-30
        %v3030 = vrcp.pop %v3029
        %v3031 = vmul.f32 %v2982, %v3030
        %v3032 = vmul.f32 %v2983, %v3030
        %v3033 = vmul.f32 %v2984, %v3030
        %v3034 = vmul.f32 %v2985, %v3030
        %v3035 = vmul.f32 %v2986, %v3030
        %v3036 = vmul.f32 %v2987, %v3030
        %v3037 = vmul.f32 %v2988, %v3030
        %v3038 = vmul.f32 %v2989, %v3030
        %v3039 = vmul.f32 %v2990, %v3030
        %v3040 = vmul.f32 %v2991, %v3030
        %v3041 = vmul.f32 %v2992, %v3030
        %v3042 = vmul.f32 %v2993, %v3030
        %v3043 = vmul.f32 %v2994, %v3030
        %v3044 = vmul.f32 %v2995, %v3030
        %v3045 = vmul.f32 %v2996, %v3030
        %v3046 = vmul.f32 %v2997, %v3030
        %v3047 = vld [vmem:[%s22] sm:$0xff]
        %v3049 = vsel %vm1900, %v3031, 0
        %v3052 = vsel %vm1900, %v3032, 0
        %v3055 = vsel %vm1900, %v3033, 0
        %v3058 = vsel %vm1900, %v3034, 0
        %v3061 = vsel %vm1900, %v3035, 0
        %v3064 = vsel %vm1900, %v3036, 0
        %v3067 = vsel %vm1900, %v3037, 0
        %v3070 = vsel %vm1900, %v3038, 0
        %v3073 = vsel %vm1900, %v3039, 0
        %v3076 = vsel %vm1900, %v3040, 0
        %v3079 = vsel %vm1900, %v3041, 0
        %v3082 = vsel %vm1900, %v3042, 0
        %v3085 = vsel %vm1900, %v3043, 0
        %v3088 = vsel %vm1900, %v3044, 0
        %v3091 = vsel %vm1900, %v3045, 0
        %v3094 = vsel %vm1900, %v3046, 0
        %3096 = vmatprep.subr.mxu0 0.0
        %3097 = vmatpush1.msra.mxu0 %v3047
        %3098 = vmatprep.subr.mxu0 0.0
        %3099 = vmatpush1.msra.mxu0 0.0
        %3100 = vmatprep.subr.mxu0 0.0
        %3101 = vmatpush1.msra.mxu0 0.0
        %3102 = vmatprep.subr.mxu0 0.0
        %3103 = vmatpush1.msra.mxu0 0.0
        %3104 = vmatprep.subr.mxu0 0.0
        %3105 = vmatpush1.msra.mxu0 0.0
        %3106 = vmatprep.subr.mxu0 0.0
        %3107 = vmatpush1.msra.mxu0 0.0
        %3108 = vmatprep.subr.mxu0 0.0
        %3109 = vmatpush1.msra.mxu0 0.0
        %3110 = vmatprep.subr.mxu0 0.0
        %3111 = vmatpush1.msra.mxu0 0.0
        %3112 = vmatprep.subr.mxu0 0.0
        %3113 = vmatpush1.msra.mxu0 0.0
        %3114 = vmatprep.subr.mxu0 0.0
        %3115 = vmatpush1.msra.mxu0 0.0
        %3116 = vmatprep.subr.mxu0 0.0
        %3117 = vmatpush1.msra.mxu0 0.0
        %3118 = vmatprep.subr.mxu0 0.0
        %3119 = vmatpush1.msra.mxu0 0.0
        %3120 = vmatprep.subr.mxu0 0.0
        %3121 = vmatpush1.msra.mxu0 0.0
        %3122 = vmatprep.subr.mxu0 0.0
        %3123 = vmatpush1.msra.mxu0 0.0
        %3124 = vmatprep.subr.mxu0 0.0
        %3125 = vmatpush1.msra.mxu0 0.0
        %3126 = vmatprep.subr.mxu0 0.0
        %3127 = vmatpush1.msra.mxu0 0.0
        %3128 = vmatprep.subr.mxu0 0.0
        %3129 = vmatpush1.msra.mxu0 0.0
        %3130 = vmatprep.subr.mxu0 0.0
        %3131 = vmatpush1.msra.mxu0 0.0
        %3132 = vmatprep.subr.mxu0 0.0
        %3133 = vmatpush1.msra.mxu0 0.0
        %3134 = vmatprep.subr.mxu0 0.0
        %3135 = vmatpush1.msra.mxu0 0.0
        %3136 = vmatprep.subr.mxu0 0.0
        %3137 = vmatpush1.msra.mxu0 0.0
        %3138 = vmatprep.subr.mxu0 0.0
        %3139 = vmatpush1.msra.mxu0 0.0
        %3140 = vmatprep.subr.mxu0 0.0
        %3141 = vmatpush1.msra.mxu0 0.0
        %3142 = vmatprep.subr.mxu0 0.0
        %3143 = vmatpush1.msra.mxu0 0.0
        %3144 = vmatprep.subr.mxu0 0.0
        %3145 = vmatpush1.msra.mxu0 0.0
        %3146 = vmatprep.subr.mxu0 0.0
        %3147 = vmatpush1.msra.mxu0 0.0
        %3148 = vmatprep.subr.mxu0 0.0
        %3149 = vmatpush1.msra.mxu0 0.0
        %3150 = vmatprep.subr.mxu0 0.0
        %3151 = vmatpush1.msra.mxu0 0.0
        %3152 = vmatprep.subr.mxu0 0.0
        %3153 = vmatpush1.msra.mxu0 0.0
        %3154 = vmatprep.subr.mxu0 0.0
        %3155 = vmatpush1.msra.mxu0 0.0
        %3156 = vmatprep.subr.mxu0 0.0
        %3157 = vmatpush1.msra.mxu0 0.0
        %3158 = vmatprep.subr.mxu0 0.0
        %3159 = vmatpush1.msra.mxu0 0.0
        %3160 = vmatprep.mubr.f32.mxu0 0.0
        %3161 = vmatmul.mubr.f32.gmra.mrb[0].mxu0 %v3049
        %v3162 = vpop.f32.mrb[0].mxu0
        %v3163 = vadd.f32 0.0, %v3162
        %v3164 = vpop.f32.mrb[0].mxu0
        %3165 = vmatprep.mubr.f32.mxu0 0.0
        %3166 = vmatmul.mubr.f32.gmra.mrb[0].mxu0 %v3052
        %v3167 = vpop.f32.mrb[0].mxu0
        %v3168 = vadd.f32 0.0, %v3167
        %v3169 = vpop.f32.mrb[0].mxu0
        %3170 = vmatprep.mubr.f32.mxu0 0.0
        %3171 = vmatmul.mubr.f32.gmra.mrb[0].mxu0 %v3055
        %v3172 = vpop.f32.mrb[0].mxu0
        %v3173 = vadd.f32 0.0, %v3172
        %v3174 = vpop.f32.mrb[0].mxu0
        %3175 = vmatprep.mubr.f32.mxu0 0.0
        %3176 = vmatmul.mubr.f32.gmra.mrb[0].mxu0 %v3058
        %v3177 = vpop.f32.mrb[0].mxu0
        %v3178 = vadd.f32 0.0, %v3177
        %v3179 = vpop.f32.mrb[0].mxu0
        %3180 = vmatprep.mubr.f32.mxu0 0.0
        %3181 = vmatmul.mubr.f32.gmra.mrb[0].mxu0 %v3061
        %v3182 = vpop.f32.mrb[0].mxu0
        %v3183 = vadd.f32 0.0, %v3182
        %v3184 = vpop.f32.mrb[0].mxu0
        %3185 = vmatprep.mubr.f32.mxu0 0.0
        %3186 = vmatmul.mubr.f32.gmra.mrb[0].mxu0 %v3064
        %v3187 = vpop.f32.mrb[0].mxu0
        %v3188 = vadd.f32 0.0, %v3187
        %v3189 = vpop.f32.mrb[0].mxu0
        %3190 = vmatprep.mubr.f32.mxu0 0.0
        %3191 = vmatmul.mubr.f32.gmra.mrb[0].mxu0 %v3067
        %v3192 = vpop.f32.mrb[0].mxu0
        %v3193 = vadd.f32 0.0, %v3192
        %v3194 = vpop.f32.mrb[0].mxu0
        %3195 = vmatprep.mubr.f32.mxu0 0.0
        %3196 = vmatmul.mubr.f32.gmra.mrb[0].mxu0 %v3070
        %v3197 = vpop.f32.mrb[0].mxu0
        %v3198 = vadd.f32 0.0, %v3197
        %v3199 = vpop.f32.mrb[0].mxu0
        %3200 = vmatprep.mubr.f32.mxu0 0.0
        %3201 = vmatmul.mubr.f32.gmra.mrb[0].mxu0 %v3073
        %v3202 = vpop.f32.mrb[0].mxu0
        %v3203 = vadd.f32 0.0, %v3202
        %v3204 = vpop.f32.mrb[0].mxu0
        %3205 = vmatprep.mubr.f32.mxu0 0.0
        %3206 = vmatmul.mubr.f32.gmra.mrb[0].mxu0 %v3076
        %v3207 = vpop.f32.mrb[0].mxu0
        %v3208 = vadd.f32 0.0, %v3207
        %v3209 = vpop.f32.mrb[0].mxu0
        %3210 = vmatprep.mubr.f32.mxu0 0.0
        %3211 = vmatmul.mubr.f32.gmra.mrb[0].mxu0 %v3079
        %v3212 = vpop.f32.mrb[0].mxu0
        %v3213 = vadd.f32 0.0, %v3212
        %v3214 = vpop.f32.mrb[0].mxu0
        %3215 = vmatprep.mubr.f32.mxu0 0.0
        %3216 = vmatmul.mubr.f32.gmra.mrb[0].mxu0 %v3082
        %v3217 = vpop.f32.mrb[0].mxu0
        %v3218 = vadd.f32 0.0, %v3217
        %v3219 = vpop.f32.mrb[0].mxu0
        %3220 = vmatprep.mubr.f32.mxu0 0.0
        %3221 = vmatmul.mubr.f32.gmra.mrb[0].mxu0 %v3085
        %v3222 = vpop.f32.mrb[0].mxu0
        %v3223 = vadd.f32 0.0, %v3222
        %v3224 = vpop.f32.mrb[0].mxu0
        %3225 = vmatprep.mubr.f32.mxu0 0.0
        %3226 = vmatmul.mubr.f32.gmra.mrb[0].mxu0 %v3088
        %v3227 = vpop.f32.mrb[0].mxu0
        %v3228 = vadd.f32 0.0, %v3227
        %v3229 = vpop.f32.mrb[0].mxu0
        %3230 = vmatprep.mubr.f32.mxu0 0.0
        %3231 = vmatmul.mubr.f32.gmra.mrb[0].mxu0 %v3091
        %v3232 = vpop.f32.mrb[0].mxu0
        %v3233 = vadd.f32 0.0, %v3232
        %v3234 = vpop.f32.mrb[0].mxu0
        %3235 = vmatprep.mubr.f32.mxu0 0.0
        %3236 = vmatmul.mubr.f32.gmra.mrb[0].mxu0 %v3094
        %v3237 = vpop.f32.mrb[0].mxu0
        %v3238 = vadd.f32 0.0, %v3237
        %v3239 = vpop.f32.mrb[0].mxu0
        %3240 = vdwg.mxu0
        %3257 = vrot.lane.b32.xlu0 %v2383, 96
        %v3258 = vpop.permute.xlu0 %3257
        %3259 = vrot.lane.b32.xlu0 %v2385, 96
        %v3260 = vpop.permute.xlu0 %3259
        %3261 = vrot.lane.b32.xlu0 %v2387, 96
        %v3262 = vpop.permute.xlu0 %3261
        %3263 = vrot.lane.b32.xlu0 %v2389, 96
        %v3264 = vpop.permute.xlu0 %3263
        %3265 = vrot.lane.b32.xlu0 %v2391, 96
        %v3266 = vpop.permute.xlu0 %3265
        %3267 = vrot.lane.b32.xlu0 %v2393, 96
        %v3268 = vpop.permute.xlu0 %3267
        %3269 = vrot.lane.b32.xlu0 %v2395, 96
        %v3270 = vpop.permute.xlu0 %3269
        %3271 = vrot.lane.b32.xlu0 %v2397, 96
        %v3272 = vpop.permute.xlu0 %3271
        %3273 = vrot.lane.b32.xlu0 %v2399, 96
        %v3274 = vpop.permute.xlu0 %3273
        %3275 = vrot.lane.b32.xlu0 %v2401, 96
        %v3276 = vpop.permute.xlu0 %3275
        %3277 = vrot.lane.b32.xlu0 %v2403, 96
        %v3278 = vpop.permute.xlu0 %3277
        %3279 = vrot.lane.b32.xlu0 %v2405, 96
        %v3280 = vpop.permute.xlu0 %3279
        %3281 = vrot.lane.b32.xlu0 %v2407, 96
        %v3282 = vpop.permute.xlu0 %3281
        %3283 = vrot.lane.b32.xlu0 %v2409, 96
        %v3284 = vpop.permute.xlu0 %3283
        %3285 = vrot.lane.b32.xlu0 %v2411, 96
        %v3286 = vpop.permute.xlu0 %3285
        %3287 = vrot.lane.b32.xlu0 %v2413, 96
        %v3288 = vpop.permute.xlu0 %3287
        %v3305 = vmul.f32 %v3163, %v3258
        %v3306 = vmul.f32 %v3168, %v3260
        %v3307 = vmul.f32 %v3173, %v3262
        %v3308 = vmul.f32 %v3178, %v3264
        %v3309 = vmul.f32 %v3183, %v3266
        %v3310 = vmul.f32 %v3188, %v3268
        %v3311 = vmul.f32 %v3193, %v3270
        %v3312 = vmul.f32 %v3198, %v3272
        %v3313 = vmul.f32 %v3203, %v3274
        %v3314 = vmul.f32 %v3208, %v3276
        %v3315 = vmul.f32 %v3213, %v3278
        %v3316 = vmul.f32 %v3218, %v3280
        %v3317 = vmul.f32 %v3223, %v3282
        %v3318 = vmul.f32 %v3228, %v3284
        %v3319 = vmul.f32 %v3233, %v3286
        %v3320 = vmul.f32 %v3238, %v3288
        %3321 = vrot.lane.b32.xlu0 %v2517, 96
        %v3322 = vpop.permute.xlu0 %3321
        %3323 = vrot.lane.b32.xlu0 %v2521, 96
        %v3324 = vpop.permute.xlu0 %3323
        %3325 = vrot.lane.b32.xlu0 %v2525, 96
        %v3326 = vpop.permute.xlu0 %3325
        %3327 = vrot.lane.b32.xlu0 %v2529, 96
        %v3328 = vpop.permute.xlu0 %3327
        %3329 = vrot.lane.b32.xlu0 %v2533, 96
        %v3330 = vpop.permute.xlu0 %3329
        %3331 = vrot.lane.b32.xlu0 %v2537, 96
        %v3332 = vpop.permute.xlu0 %3331
        %3333 = vrot.lane.b32.xlu0 %v2541, 96
        %v3334 = vpop.permute.xlu0 %3333
        %3335 = vrot.lane.b32.xlu0 %v2545, 96
        %v3336 = vpop.permute.xlu0 %3335
        %3337 = vrot.lane.b32.xlu0 %v2549, 96
        %v3338 = vpop.permute.xlu0 %3337
        %3339 = vrot.lane.b32.xlu0 %v2553, 96
        %v3340 = vpop.permute.xlu0 %3339
        %3341 = vrot.lane.b32.xlu0 %v2557, 96
        %v3342 = vpop.permute.xlu0 %3341
        %3343 = vrot.lane.b32.xlu0 %v2561, 96
        %v3344 = vpop.permute.xlu0 %3343
        %3345 = vrot.lane.b32.xlu0 %v2565, 96
        %v3346 = vpop.permute.xlu0 %3345
        %3347 = vrot.lane.b32.xlu0 %v2569, 96
        %v3348 = vpop.permute.xlu0 %3347
        %3349 = vrot.lane.b32.xlu0 %v2573, 96
        %v3350 = vpop.permute.xlu0 %3349
        %3351 = vrot.lane.b32.xlu0 %v2577, 96
        %v3352 = vpop.permute.xlu0 %3351
        %v3369 = vmul.f32 %v3305, %v3322
        %v3370 = vmul.f32 %v3306, %v3324
        %v3371 = vmul.f32 %v3307, %v3326
        %v3372 = vmul.f32 %v3308, %v3328
        %v3373 = vmul.f32 %v3309, %v3330
        %v3374 = vmul.f32 %v3310, %v3332
        %v3375 = vmul.f32 %v3311, %v3334
        %v3376 = vmul.f32 %v3312, %v3336
        %v3377 = vmul.f32 %v3313, %v3338
        %v3378 = vmul.f32 %v3314, %v3340
        %v3379 = vmul.f32 %v3315, %v3342
        %v3380 = vmul.f32 %v3316, %v3344
        %v3381 = vmul.f32 %v3317, %v3346
        %v3382 = vmul.f32 %v3318, %v3348
        %v3383 = vmul.f32 %v3319, %v3350
        %v3384 = vmul.f32 %v3320, %v3352
        %v3385 = vsel %vm1648, %v3369, 0.0
        %v3386 = vsel %vm1648, %v3370, 0.0
        %v3387 = vadd.f32 %v3385, %v3386
        %v3388 = vsel %vm1648, %v3371, 0.0
        %v3389 = vadd.f32 %v3387, %v3388
        %v3390 = vsel %vm1648, %v3372, 0.0
        %v3391 = vadd.f32 %v3389, %v3390
        %v3392 = vsel %vm1648, %v3373, 0.0
        %v3393 = vadd.f32 %v3391, %v3392
        %v3394 = vsel %vm1648, %v3374, 0.0
        %v3395 = vadd.f32 %v3393, %v3394
        %v3396 = vsel %vm1648, %v3375, 0.0
        %v3397 = vadd.f32 %v3395, %v3396
        %v3398 = vsel %vm1648, %v3376, 0.0
        %v3399 = vadd.f32 %v3397, %v3398
        %v3400 = vsel %vm1648, %v3377, 0.0
        %v3401 = vadd.f32 %v3399, %v3400
        %v3402 = vsel %vm1648, %v3378, 0.0
        %v3403 = vadd.f32 %v3401, %v3402
        %v3404 = vsel %vm1648, %v3379, 0.0
        %v3405 = vadd.f32 %v3403, %v3404
        %v3406 = vsel %vm1648, %v3380, 0.0
        %v3407 = vadd.f32 %v3405, %v3406
        %v3408 = vsel %vm1648, %v3381, 0.0
        %v3409 = vadd.f32 %v3407, %v3408
        %v3410 = vsel %vm1648, %v3382, 0.0
        %v3411 = vadd.f32 %v3409, %v3410
        %v3412 = vsel %vm1648, %v3383, 0.0
        %v3413 = vadd.f32 %v3411, %v3412
        %v3414 = vsel %vm1648, %v3384, 0.0
        %v3415 = vadd.f32 %v3413, %v3414
        %v3416 = vadd.f32 %v1111, %v3415
        %v3417 = vld [vmem:[%s17 + $0x1] sm:$0x1]
        %v3418 = vld [vmem:[%s18 + $0x1] sm:$0x1]
        %v3420 = vsel %vm1648, %v3416, 0
        %3422 = vmatprep.subr.mxu0 0.0
        %3423 = vmatpush1.msra.mxu0 %v1821
        %3424 = vmatprep.subr.mxu0 0.0
        %3425 = vmatpush1.msra.mxu0 %v1822
        %3426 = vmatprep.subr.mxu0 0.0
        %3427 = vmatpush1.msra.mxu0 %v1823
        %3428 = vmatprep.subr.mxu0 0.0
        %3429 = vmatpush1.msra.mxu0 %v1824
        %3430 = vmatprep.subr.mxu0 0.0
        %3431 = vmatpush1.msra.mxu0 0.0
        %3432 = vmatprep.subr.mxu0 0.0
        %3433 = vmatpush1.msra.mxu0 0.0
        %3434 = vmatprep.subr.mxu0 0.0
        %3435 = vmatpush1.msra.mxu0 0.0
        %3436 = vmatprep.subr.mxu0 0.0
        %3437 = vmatpush1.msra.mxu0 0.0
        %3438 = vmatprep.subr.mxu0 0.0
        %3439 = vmatpush1.msra.mxu0 0.0
        %3440 = vmatprep.subr.mxu0 0.0
        %3441 = vmatpush1.msra.mxu0 0.0
        %3442 = vmatprep.subr.mxu0 0.0
        %3443 = vmatpush1.msra.mxu0 0.0
        %3444 = vmatprep.subr.mxu0 0.0
        %3445 = vmatpush1.msra.mxu0 0.0
        %3446 = vmatprep.subr.mxu0 0.0
        %3447 = vmatpush1.msra.mxu0 0.0
        %3448 = vmatprep.subr.mxu0 0.0
        %3449 = vmatpush1.msra.mxu0 0.0
        %3450 = vmatprep.subr.mxu0 0.0
        %3451 = vmatpush1.msra.mxu0 0.0
        %3452 = vmatprep.subr.mxu0 0.0
        %3453 = vmatpush1.msra.mxu0 0.0
        %3454 = vmatprep.subr.mxu0 0.0
        %3455 = vmatpush1.msra.mxu0 0.0
        %3456 = vmatprep.subr.mxu0 0.0
        %3457 = vmatpush1.msra.mxu0 0.0
        %3458 = vmatprep.subr.mxu0 0.0
        %3459 = vmatpush1.msra.mxu0 0.0
        %3460 = vmatprep.subr.mxu0 0.0
        %3461 = vmatpush1.msra.mxu0 0.0
        %3462 = vmatprep.subr.mxu0 0.0
        %3463 = vmatpush1.msra.mxu0 0.0
        %3464 = vmatprep.subr.mxu0 0.0
        %3465 = vmatpush1.msra.mxu0 0.0
        %3466 = vmatprep.subr.mxu0 0.0
        %3467 = vmatpush1.msra.mxu0 0.0
        %3468 = vmatprep.subr.mxu0 0.0
        %3469 = vmatpush1.msra.mxu0 0.0
        %3470 = vmatprep.subr.mxu0 0.0
        %3471 = vmatpush1.msra.mxu0 0.0
        %3472 = vmatprep.subr.mxu0 0.0
        %3473 = vmatpush1.msra.mxu0 0.0
        %3474 = vmatprep.subr.mxu0 0.0
        %3475 = vmatpush1.msra.mxu0 0.0
        %3476 = vmatprep.subr.mxu0 0.0
        %3477 = vmatpush1.msra.mxu0 0.0
        %3478 = vmatprep.subr.mxu0 0.0
        %3479 = vmatpush1.msra.mxu0 0.0
        %3480 = vmatprep.subr.mxu0 0.0
        %3481 = vmatpush1.msra.mxu0 0.0
        %3482 = vmatprep.subr.mxu0 0.0
        %3483 = vmatpush1.msra.mxu0 0.0
        %3484 = vmatprep.subr.mxu0 0.0
        %3485 = vmatpush1.msra.mxu0 0.0
        %3486 = vmatprep.mubr.f32.mxu0 0.0
        %3487 = vmatmul.mubr.f32.gmra.mrb[0].mxu0 %v3420
        %v3488 = vpop.f32.mrb[0].mxu0
        %v3489 = vadd.f32 0.0, %v3488
        %v3490 = vpop.f32.mrb[0].mxu0
        %3491 = vdwg.mxu0
        %v3492 = vmul.f32 %v3489, 0.25
        %v3494 = vsel %vm1900, %v3492, 0
        %3496 = vmatprep.subr.mxu0 0.0
        %3497 = vmatpush1.msra.mxu0 %v1899
        %3498 = vmatprep.subr.mxu0 0.0
        %3499 = vmatpush1.msra.mxu0 0.0
        %3500 = vmatprep.subr.mxu0 0.0
        %3501 = vmatpush1.msra.mxu0 0.0
        %3502 = vmatprep.subr.mxu0 0.0
        %3503 = vmatpush1.msra.mxu0 0.0
        %3504 = vmatprep.subr.mxu0 0.0
        %3505 = vmatpush1.msra.mxu0 0.0
        %3506 = vmatprep.subr.mxu0 0.0
        %3507 = vmatpush1.msra.mxu0 0.0
        %3508 = vmatprep.subr.mxu0 0.0
        %3509 = vmatpush1.msra.mxu0 0.0
        %3510 = vmatprep.subr.mxu0 0.0
        %3511 = vmatpush1.msra.mxu0 0.0
        %3512 = vmatprep.subr.mxu0 0.0
        %3513 = vmatpush1.msra.mxu0 0.0
        %3514 = vmatprep.subr.mxu0 0.0
        %3515 = vmatpush1.msra.mxu0 0.0
        %3516 = vmatprep.subr.mxu0 0.0
        %3517 = vmatpush1.msra.mxu0 0.0
        %3518 = vmatprep.subr.mxu0 0.0
        %3519 = vmatpush1.msra.mxu0 0.0
        %3520 = vmatprep.subr.mxu0 0.0
        %3521 = vmatpush1.msra.mxu0 0.0
        %3522 = vmatprep.subr.mxu0 0.0
        %3523 = vmatpush1.msra.mxu0 0.0
        %3524 = vmatprep.subr.mxu0 0.0
        %3525 = vmatpush1.msra.mxu0 0.0
        %3526 = vmatprep.subr.mxu0 0.0
        %3527 = vmatpush1.msra.mxu0 0.0
        %3528 = vmatprep.subr.mxu0 0.0
        %3529 = vmatpush1.msra.mxu0 0.0
        %3530 = vmatprep.subr.mxu0 0.0
        %3531 = vmatpush1.msra.mxu0 0.0
        %3532 = vmatprep.subr.mxu0 0.0
        %3533 = vmatpush1.msra.mxu0 0.0
        %3534 = vmatprep.subr.mxu0 0.0
        %3535 = vmatpush1.msra.mxu0 0.0
        %3536 = vmatprep.subr.mxu0 0.0
        %3537 = vmatpush1.msra.mxu0 0.0
        %3538 = vmatprep.subr.mxu0 0.0
        %3539 = vmatpush1.msra.mxu0 0.0
        %3540 = vmatprep.subr.mxu0 0.0
        %3541 = vmatpush1.msra.mxu0 0.0
        %3542 = vmatprep.subr.mxu0 0.0
        %3543 = vmatpush1.msra.mxu0 0.0
        %3544 = vmatprep.subr.mxu0 0.0
        %3545 = vmatpush1.msra.mxu0 0.0
        %3546 = vmatprep.subr.mxu0 0.0
        %3547 = vmatpush1.msra.mxu0 0.0
        %3548 = vmatprep.subr.mxu0 0.0
        %3549 = vmatpush1.msra.mxu0 0.0
        %3550 = vmatprep.subr.mxu0 0.0
        %3551 = vmatpush1.msra.mxu0 0.0
        %3552 = vmatprep.subr.mxu0 0.0
        %3553 = vmatpush1.msra.mxu0 0.0
        %3554 = vmatprep.subr.mxu0 0.0
        %3555 = vmatpush1.msra.mxu0 0.0
        %3556 = vmatprep.subr.mxu0 0.0
        %3557 = vmatpush1.msra.mxu0 0.0
        %3558 = vmatprep.subr.mxu0 0.0
        %3559 = vmatpush1.msra.mxu0 0.0
        %3560 = vmatprep.mubr.f32.mxu0 0.0
        %3561 = vmatmul.mubr.f32.gmra.mrb[0].mxu0 %v3494
        %v3562 = vpop.f32.mrb[0].mxu0
        %v3563 = vadd.f32 0.0, %v3562
        %v3564 = vpop.f32.mrb[0].mxu0
        %3565 = vdwg.mxu0
        %v3566 = vsub.f32 %v3416, %v3563
        %v3567 = vmul.f32 %v3566, %v3566
        %v3569 = vsel %vm1648, %v3567, 0
        %3571 = vmatprep.subr.mxu0 0.0
        %3572 = vmatpush1.msra.mxu0 %v1821
        %3573 = vmatprep.subr.mxu0 0.0
        %3574 = vmatpush1.msra.mxu0 %v1822
        %3575 = vmatprep.subr.mxu0 0.0
        %3576 = vmatpush1.msra.mxu0 %v1823
        %3577 = vmatprep.subr.mxu0 0.0
        %3578 = vmatpush1.msra.mxu0 %v1824
        %3579 = vmatprep.subr.mxu0 0.0
        %3580 = vmatpush1.msra.mxu0 0.0
        %3581 = vmatprep.subr.mxu0 0.0
        %3582 = vmatpush1.msra.mxu0 0.0
        %3583 = vmatprep.subr.mxu0 0.0
        %3584 = vmatpush1.msra.mxu0 0.0
        %3585 = vmatprep.subr.mxu0 0.0
        %3586 = vmatpush1.msra.mxu0 0.0
        %3587 = vmatprep.subr.mxu0 0.0
        %3588 = vmatpush1.msra.mxu0 0.0
        %3589 = vmatprep.subr.mxu0 0.0
        %3590 = vmatpush1.msra.mxu0 0.0
        %3591 = vmatprep.subr.mxu0 0.0
        %3592 = vmatpush1.msra.mxu0 0.0
        %3593 = vmatprep.subr.mxu0 0.0
        %3594 = vmatpush1.msra.mxu0 0.0
        %3595 = vmatprep.subr.mxu0 0.0
        %3596 = vmatpush1.msra.mxu0 0.0
        %3597 = vmatprep.subr.mxu0 0.0
        %3598 = vmatpush1.msra.mxu0 0.0
        %3599 = vmatprep.subr.mxu0 0.0
        %3600 = vmatpush1.msra.mxu0 0.0
        %3601 = vmatprep.subr.mxu0 0.0
        %3602 = vmatpush1.msra.mxu0 0.0
        %3603 = vmatprep.subr.mxu0 0.0
        %3604 = vmatpush1.msra.mxu0 0.0
        %3605 = vmatprep.subr.mxu0 0.0
        %3606 = vmatpush1.msra.mxu0 0.0
        %3607 = vmatprep.subr.mxu0 0.0
        %3608 = vmatpush1.msra.mxu0 0.0
        %3609 = vmatprep.subr.mxu0 0.0
        %3610 = vmatpush1.msra.mxu0 0.0
        %3611 = vmatprep.subr.mxu0 0.0
        %3612 = vmatpush1.msra.mxu0 0.0
        %3613 = vmatprep.subr.mxu0 0.0
        %3614 = vmatpush1.msra.mxu0 0.0
        %3615 = vmatprep.subr.mxu0 0.0
        %3616 = vmatpush1.msra.mxu0 0.0
        %3617 = vmatprep.subr.mxu0 0.0
        %3618 = vmatpush1.msra.mxu0 0.0
        %3619 = vmatprep.subr.mxu0 0.0
        %3620 = vmatpush1.msra.mxu0 0.0
        %3621 = vmatprep.subr.mxu0 0.0
        %3622 = vmatpush1.msra.mxu0 0.0
        %3623 = vmatprep.subr.mxu0 0.0
        %3624 = vmatpush1.msra.mxu0 0.0
        %3625 = vmatprep.subr.mxu0 0.0
        %3626 = vmatpush1.msra.mxu0 0.0
        %3627 = vmatprep.subr.mxu0 0.0
        %3628 = vmatpush1.msra.mxu0 0.0
        %3629 = vmatprep.subr.mxu0 0.0
        %3630 = vmatpush1.msra.mxu0 0.0
        %3631 = vmatprep.subr.mxu0 0.0
        %3632 = vmatpush1.msra.mxu0 0.0
        %3633 = vmatprep.subr.mxu0 0.0
        %3634 = vmatpush1.msra.mxu0 0.0
        %3635 = vmatprep.mubr.f32.mxu0 0.0
        %3636 = vmatmul.mubr.f32.gmra.mrb[0].mxu0 %v3569
        %v3637 = vpop.f32.mrb[0].mxu0
        %v3638 = vadd.f32 0.0, %v3637
        %v3639 = vpop.f32.mrb[0].mxu0
        %3640 = vdwg.mxu0
        %v3641 = vmul.f32 %v3638, 0.25
        %v3643 = vsel %vm1900, %v3641, 0
        %3645 = vmatprep.subr.mxu0 0.0
        %3646 = vmatpush1.msra.mxu0 %v1899
        %3647 = vmatprep.subr.mxu0 0.0
        %3648 = vmatpush1.msra.mxu0 0.0
        %3649 = vmatprep.subr.mxu0 0.0
        %3650 = vmatpush1.msra.mxu0 0.0
        %3651 = vmatprep.subr.mxu0 0.0
        %3652 = vmatpush1.msra.mxu0 0.0
        %3653 = vmatprep.subr.mxu0 0.0
        %3654 = vmatpush1.msra.mxu0 0.0
        %3655 = vmatprep.subr.mxu0 0.0
        %3656 = vmatpush1.msra.mxu0 0.0
        %3657 = vmatprep.subr.mxu0 0.0
        %3658 = vmatpush1.msra.mxu0 0.0
        %3659 = vmatprep.subr.mxu0 0.0
        %3660 = vmatpush1.msra.mxu0 0.0
        %3661 = vmatprep.subr.mxu0 0.0
        %3662 = vmatpush1.msra.mxu0 0.0
        %3663 = vmatprep.subr.mxu0 0.0
        %3664 = vmatpush1.msra.mxu0 0.0
        %3665 = vmatprep.subr.mxu0 0.0
        %3666 = vmatpush1.msra.mxu0 0.0
        %3667 = vmatprep.subr.mxu0 0.0
        %3668 = vmatpush1.msra.mxu0 0.0
        %3669 = vmatprep.subr.mxu0 0.0
        %3670 = vmatpush1.msra.mxu0 0.0
        %3671 = vmatprep.subr.mxu0 0.0
        %3672 = vmatpush1.msra.mxu0 0.0
        %3673 = vmatprep.subr.mxu0 0.0
        %3674 = vmatpush1.msra.mxu0 0.0
        %3675 = vmatprep.subr.mxu0 0.0
        %3676 = vmatpush1.msra.mxu0 0.0
        %3677 = vmatprep.subr.mxu0 0.0
        %3678 = vmatpush1.msra.mxu0 0.0
        %3679 = vmatprep.subr.mxu0 0.0
        %3680 = vmatpush1.msra.mxu0 0.0
        %3681 = vmatprep.subr.mxu0 0.0
        %3682 = vmatpush1.msra.mxu0 0.0
        %3683 = vmatprep.subr.mxu0 0.0
        %3684 = vmatpush1.msra.mxu0 0.0
        %3685 = vmatprep.subr.mxu0 0.0
        %3686 = vmatpush1.msra.mxu0 0.0
        %3687 = vmatprep.subr.mxu0 0.0
        %3688 = vmatpush1.msra.mxu0 0.0
        %3689 = vmatprep.subr.mxu0 0.0
        %3690 = vmatpush1.msra.mxu0 0.0
        %3691 = vmatprep.subr.mxu0 0.0
        %3692 = vmatpush1.msra.mxu0 0.0
        %3693 = vmatprep.subr.mxu0 0.0
        %3694 = vmatpush1.msra.mxu0 0.0
        %3695 = vmatprep.subr.mxu0 0.0
        %3696 = vmatpush1.msra.mxu0 0.0
        %3697 = vmatprep.subr.mxu0 0.0
        %3698 = vmatpush1.msra.mxu0 0.0
        %3699 = vmatprep.subr.mxu0 0.0
        %3700 = vmatpush1.msra.mxu0 0.0
        %3701 = vmatprep.subr.mxu0 0.0
        %3702 = vmatpush1.msra.mxu0 0.0
        %3703 = vmatprep.subr.mxu0 0.0
        %3704 = vmatpush1.msra.mxu0 0.0
        %3705 = vmatprep.subr.mxu0 0.0
        %3706 = vmatpush1.msra.mxu0 0.0
        %3707 = vmatprep.subr.mxu0 0.0
        %3708 = vmatpush1.msra.mxu0 0.0
        %3709 = vmatprep.mubr.f32.mxu0 0.0
        %3710 = vmatmul.mubr.f32.gmra.mrb[0].mxu0 %v3643
        %v3711 = vpop.f32.mrb[0].mxu0
        %v3712 = vadd.f32 1e-06, %v3711
        %v3713 = vpop.f32.mrb[0].mxu0
        %3714 = vdwg.mxu0
        %v3715 = vrsqrt.pop %v3712
        %v3716 = vmul.f32 %v3566, %v3715
        %v3717 = vlaneseq
        %v3718 = vshrl.u32 %v3717, 7
        %v3719 = vsub.s32 0, %v3718
        %v3720 = vrot.slane %v3417, %v3719
        %v3721 = vmul.f32 %v3716, %v3720
        %v3722 = vlaneseq
        %v3723 = vshrl.u32 %v3722, 7
        %v3724 = vsub.s32 0, %v3723
        %v3725 = vrot.slane %v3418, %v3724
        %v3726 = vadd.f32 %v3721, %v3725
        %v3727 = vadd.f32 %v2134, %v3726
        %v3728 = vmul.f32 %v3727, %v1815
        %v3729 = vpack.c.bf16 %v3728, %v3728
        %v3730 = vld [vmem:[%s13] sm:$0xf]
        %v3731 = vld [vmem:[%s13 + $0x4] sm:$0xf]
        %v3732 = vld [vmem:[%s13 + $0x8] sm:$0xf]
        %v3733 = vld [vmem:[%s13 + $0xc] sm:$0xf]
        %v3734 = vld [vmem:[%s14] sm:$0x1]
        %v3736 = vlaneseq
        %v3737 = vshrl.u32 %v3736, 7
        %v3738 = vsub.s32 0, %v3737
        %v3739 = vrot.slane %v3734, %v3738
        %v3745 = vunpack.c.l.b16 %v3730
        %v3746 = vunpack.c.l.b16 %v3731
        %v3747 = vunpack.c.l.b16 %v3732
        %v3748 = vunpack.c.l.b16 %v3733
        %v3749 = vpack.c.b16 %v3746, %v3745
        %v3750 = vpack.c.b16 %v3748, %v3747
        %v3754 = vsel %vm1648, %v3729, 0
        %3756 = vmatprep.subr.bf16.mxu0 0
        %3757 = vmatpush1.bf16.msra.mxu0 %v3749
        %3758 = vmatprep.subr.bf16.mxu0 0
        %3759 = vmatpush1.bf16.msra.mxu0 %v3750
        %3760 = vmatprep.subr.bf16.mxu0 0
        %3761 = vmatpush1.bf16.msra.mxu0 0
        %3762 = vmatprep.subr.bf16.mxu0 0
        %3763 = vmatpush1.bf16.msra.mxu0 0
        %3764 = vmatprep.subr.bf16.mxu0 0
        %3765 = vmatpush1.bf16.msra.mxu0 0
        %3766 = vmatprep.subr.bf16.mxu0 0
        %3767 = vmatpush1.bf16.msra.mxu0 0
        %3768 = vmatprep.subr.bf16.mxu0 0
        %3769 = vmatpush1.bf16.msra.mxu0 0
        %3770 = vmatprep.subr.bf16.mxu0 0
        %3771 = vmatpush1.bf16.msra.mxu0 0
        %3772 = vmatprep.subr.bf16.mxu0 0
        %3773 = vmatpush1.bf16.msra.mxu0 0
        %3774 = vmatprep.subr.bf16.mxu0 0
        %3775 = vmatpush1.bf16.msra.mxu0 0
        %3776 = vmatprep.subr.bf16.mxu0 0
        %3777 = vmatpush1.bf16.msra.mxu0 0
        %3778 = vmatprep.subr.bf16.mxu0 0
        %3779 = vmatpush1.bf16.msra.mxu0 0
        %3780 = vmatprep.subr.bf16.mxu0 0
        %3781 = vmatpush1.bf16.msra.mxu0 0
        %3782 = vmatprep.subr.bf16.mxu0 0
        %3783 = vmatpush1.bf16.msra.mxu0 0
        %3784 = vmatprep.subr.bf16.mxu0 0
        %3785 = vmatpush1.bf16.msra.mxu0 0
        %3786 = vmatprep.subr.bf16.mxu0 0
        %3787 = vmatpush1.bf16.msra.mxu0 0
        %3788 = vmatprep.mubr.bf16.mxu0 0
        %3789 = vmatmul.mubr.bf16.gmra.mrb[0].mxu0 %v3754
        %v3790 = vpop.f32.mrb[0].mxu0
        %v3791 = vadd.f32 %v3739, %v3790
        %v3792 = vpop.f32.mrb[0].mxu0
        %v3793 = vpop.f32.mrb[0].mxu0
        %v3794 = vpop.f32.mrb[0].mxu0
        %3795 = vdwg.mxu0
        %v3796 = vmax.f32 %v3791, 0.0
        %v3797 = vpack.c.bf16 %v3796, %v3796
        %v3798 = vld [vmem:[%s15] sm:$0xf]
        %v3799 = vld [vmem:[%s15 + $0x4] sm:$0xf]
        %v3800 = vld [vmem:[%s15 + $0x8] sm:$0xf]
        %v3801 = vld [vmem:[%s15 + $0xc] sm:$0xf]
        %v3802 = vld [vmem:[%s15 + $0x10] sm:$0xf]
        %v3803 = vld [vmem:[%s15 + $0x14] sm:$0xf]
        %v3804 = vld [vmem:[%s15 + $0x18] sm:$0xf]
        %v3805 = vld [vmem:[%s15 + $0x1c] sm:$0xf]
        %v3806 = vld [vmem:[%s16] sm:$0x1]
        %v3808 = vlaneseq
        %v3809 = vshrl.u32 %v3808, 7
        %v3810 = vsub.s32 0, %v3809
        %v3811 = vrot.slane %v3806, %v3810
        %v3821 = vunpack.c.l.b16 %v3798
        %v3822 = vunpack.c.l.b16 %v3799
        %v3823 = vunpack.c.l.b16 %v3800
        %v3824 = vunpack.c.l.b16 %v3801
        %v3825 = vunpack.c.l.b16 %v3802
        %v3826 = vunpack.c.l.b16 %v3803
        %v3827 = vunpack.c.l.b16 %v3804
        %v3828 = vunpack.c.l.b16 %v3805
        %v3829 = vpack.c.b16 %v3822, %v3821
        %v3830 = vpack.c.b16 %v3824, %v3823
        %v3831 = vpack.c.b16 %v3826, %v3825
        %v3832 = vpack.c.b16 %v3828, %v3827
        %vm3837 = vcmask 523264
        %v3839 = vsel %vm3837, %v3797, 0
        %3841 = vmatprep.subr.bf16.mxu0 0
        %3842 = vmatpush1.bf16.msra.mxu0 %v3829
        %3843 = vmatprep.subr.bf16.mxu0 0
        %3844 = vmatpush1.bf16.msra.mxu0 %v3830
        %3845 = vmatprep.subr.bf16.mxu0 0
        %3846 = vmatpush1.bf16.msra.mxu0 %v3831
        %3847 = vmatprep.subr.bf16.mxu0 0
        %3848 = vmatpush1.bf16.msra.mxu0 %v3832
        %3849 = vmatprep.subr.bf16.mxu0 0
        %3850 = vmatpush1.bf16.msra.mxu0 0
        %3851 = vmatprep.subr.bf16.mxu0 0
        %3852 = vmatpush1.bf16.msra.mxu0 0
        %3853 = vmatprep.subr.bf16.mxu0 0
        %3854 = vmatpush1.bf16.msra.mxu0 0
        %3855 = vmatprep.subr.bf16.mxu0 0
        %3856 = vmatpush1.bf16.msra.mxu0 0
        %3857 = vmatprep.subr.bf16.mxu0 0
        %3858 = vmatpush1.bf16.msra.mxu0 0
        %3859 = vmatprep.subr.bf16.mxu0 0
        %3860 = vmatpush1.bf16.msra.mxu0 0
        %3861 = vmatprep.subr.bf16.mxu0 0
        %3862 = vmatpush1.bf16.msra.mxu0 0
        %3863 = vmatprep.subr.bf16.mxu0 0
        %3864 = vmatpush1.bf16.msra.mxu0 0
        %3865 = vmatprep.subr.bf16.mxu0 0
        %3866 = vmatpush1.bf16.msra.mxu0 0
        %3867 = vmatprep.subr.bf16.mxu0 0
        %3868 = vmatpush1.bf16.msra.mxu0 0
        %3869 = vmatprep.subr.bf16.mxu0 0
        %3870 = vmatpush1.bf16.msra.mxu0 0
        %3871 = vmatprep.subr.bf16.mxu0 0
        %3872 = vmatpush1.bf16.msra.mxu0 0
        %3873 = vmatprep.mubr.bf16.mxu0 0
        %3874 = vmatmul.mubr.bf16.gmra.mrb[0].mxu0 %v3839
        %v3875 = vpop.f32.mrb[0].mxu0
        %v3876 = vadd.f32 %v3811, %v3875
        %v3877 = vpop.f32.mrb[0].mxu0
        %v3878 = vpop.f32.mrb[0].mxu0
        %v3879 = vpop.f32.mrb[0].mxu0
        %3880 = vdwg.mxu0
        %v3881 = vadd.f32 %v3728, %v3876
        %v3882 = vld [vmem:[%s17 + $0x2] sm:$0x1]
        %v3883 = vld [vmem:[%s18 + $0x2] sm:$0x1]
        %v3885 = vsel %vm1648, %v3881, 0
        %3887 = vmatprep.subr.mxu0 0.0
        %3888 = vmatpush1.msra.mxu0 %v1821
        %3889 = vmatprep.subr.mxu0 0.0
        %3890 = vmatpush1.msra.mxu0 %v1822
        %3891 = vmatprep.subr.mxu0 0.0
        %3892 = vmatpush1.msra.mxu0 %v1823
        %3893 = vmatprep.subr.mxu0 0.0
        %3894 = vmatpush1.msra.mxu0 %v1824
        %3895 = vmatprep.subr.mxu0 0.0
        %3896 = vmatpush1.msra.mxu0 0.0
        %3897 = vmatprep.subr.mxu0 0.0
        %3898 = vmatpush1.msra.mxu0 0.0
        %3899 = vmatprep.subr.mxu0 0.0
        %3900 = vmatpush1.msra.mxu0 0.0
        %3901 = vmatprep.subr.mxu0 0.0
        %3902 = vmatpush1.msra.mxu0 0.0
        %3903 = vmatprep.subr.mxu0 0.0
        %3904 = vmatpush1.msra.mxu0 0.0
        %3905 = vmatprep.subr.mxu0 0.0
        %3906 = vmatpush1.msra.mxu0 0.0
        %3907 = vmatprep.subr.mxu0 0.0
        %3908 = vmatpush1.msra.mxu0 0.0
        %3909 = vmatprep.subr.mxu0 0.0
        %3910 = vmatpush1.msra.mxu0 0.0
        %3911 = vmatprep.subr.mxu0 0.0
        %3912 = vmatpush1.msra.mxu0 0.0
        %3913 = vmatprep.subr.mxu0 0.0
        %3914 = vmatpush1.msra.mxu0 0.0
        %3915 = vmatprep.subr.mxu0 0.0
        %3916 = vmatpush1.msra.mxu0 0.0
        %3917 = vmatprep.subr.mxu0 0.0
        %3918 = vmatpush1.msra.mxu0 0.0
        %3919 = vmatprep.subr.mxu0 0.0
        %3920 = vmatpush1.msra.mxu0 0.0
        %3921 = vmatprep.subr.mxu0 0.0
        %3922 = vmatpush1.msra.mxu0 0.0
        %3923 = vmatprep.subr.mxu0 0.0
        %3924 = vmatpush1.msra.mxu0 0.0
        %3925 = vmatprep.subr.mxu0 0.0
        %3926 = vmatpush1.msra.mxu0 0.0
        %3927 = vmatprep.subr.mxu0 0.0
        %3928 = vmatpush1.msra.mxu0 0.0
        %3929 = vmatprep.subr.mxu0 0.0
        %3930 = vmatpush1.msra.mxu0 0.0
        %3931 = vmatprep.subr.mxu0 0.0
        %3932 = vmatpush1.msra.mxu0 0.0
        %3933 = vmatprep.subr.mxu0 0.0
        %3934 = vmatpush1.msra.mxu0 0.0
        %3935 = vmatprep.subr.mxu0 0.0
        %3936 = vmatpush1.msra.mxu0 0.0
        %3937 = vmatprep.subr.mxu0 0.0
        %3938 = vmatpush1.msra.mxu0 0.0
        %3939 = vmatprep.subr.mxu0 0.0
        %3940 = vmatpush1.msra.mxu0 0.0
        %3941 = vmatprep.subr.mxu0 0.0
        %3942 = vmatpush1.msra.mxu0 0.0
        %3943 = vmatprep.subr.mxu0 0.0
        %3944 = vmatpush1.msra.mxu0 0.0
        %3945 = vmatprep.subr.mxu0 0.0
        %3946 = vmatpush1.msra.mxu0 0.0
        %3947 = vmatprep.subr.mxu0 0.0
        %3948 = vmatpush1.msra.mxu0 0.0
        %3949 = vmatprep.subr.mxu0 0.0
        %3950 = vmatpush1.msra.mxu0 0.0
        %3951 = vmatprep.mubr.f32.mxu0 0.0
        %3952 = vmatmul.mubr.f32.gmra.mrb[0].mxu0 %v3885
        %v3953 = vpop.f32.mrb[0].mxu0
        %v3954 = vadd.f32 0.0, %v3953
        %v3955 = vpop.f32.mrb[0].mxu0
        %3956 = vdwg.mxu0
        %v3957 = vmul.f32 %v3954, 0.25
        %v3959 = vsel %vm1900, %v3957, 0
        %3961 = vmatprep.subr.mxu0 0.0
        %3962 = vmatpush1.msra.mxu0 %v1899
        %3963 = vmatprep.subr.mxu0 0.0
        %3964 = vmatpush1.msra.mxu0 0.0
        %3965 = vmatprep.subr.mxu0 0.0
        %3966 = vmatpush1.msra.mxu0 0.0
        %3967 = vmatprep.subr.mxu0 0.0
        %3968 = vmatpush1.msra.mxu0 0.0
        %3969 = vmatprep.subr.mxu0 0.0
        %3970 = vmatpush1.msra.mxu0 0.0
        %3971 = vmatprep.subr.mxu0 0.0
        %3972 = vmatpush1.msra.mxu0 0.0
        %3973 = vmatprep.subr.mxu0 0.0
        %3974 = vmatpush1.msra.mxu0 0.0
        %3975 = vmatprep.subr.mxu0 0.0
        %3976 = vmatpush1.msra.mxu0 0.0
        %3977 = vmatprep.subr.mxu0 0.0
        %3978 = vmatpush1.msra.mxu0 0.0
        %3979 = vmatprep.subr.mxu0 0.0
        %3980 = vmatpush1.msra.mxu0 0.0
        %3981 = vmatprep.subr.mxu0 0.0
        %3982 = vmatpush1.msra.mxu0 0.0
        %3983 = vmatprep.subr.mxu0 0.0
        %3984 = vmatpush1.msra.mxu0 0.0
        %3985 = vmatprep.subr.mxu0 0.0
        %3986 = vmatpush1.msra.mxu0 0.0
        %3987 = vmatprep.subr.mxu0 0.0
        %3988 = vmatpush1.msra.mxu0 0.0
        %3989 = vmatprep.subr.mxu0 0.0
        %3990 = vmatpush1.msra.mxu0 0.0
        %3991 = vmatprep.subr.mxu0 0.0
        %3992 = vmatpush1.msra.mxu0 0.0
        %3993 = vmatprep.subr.mxu0 0.0
        %3994 = vmatpush1.msra.mxu0 0.0
        %3995 = vmatprep.subr.mxu0 0.0
        %3996 = vmatpush1.msra.mxu0 0.0
        %3997 = vmatprep.subr.mxu0 0.0
        %3998 = vmatpush1.msra.mxu0 0.0
        %3999 = vmatprep.subr.mxu0 0.0
        %4000 = vmatpush1.msra.mxu0 0.0
        %4001 = vmatprep.subr.mxu0 0.0
        %4002 = vmatpush1.msra.mxu0 0.0
        %4003 = vmatprep.subr.mxu0 0.0
        %4004 = vmatpush1.msra.mxu0 0.0
        %4005 = vmatprep.subr.mxu0 0.0
        %4006 = vmatpush1.msra.mxu0 0.0
        %4007 = vmatprep.subr.mxu0 0.0
        %4008 = vmatpush1.msra.mxu0 0.0
        %4009 = vmatprep.subr.mxu0 0.0
        %4010 = vmatpush1.msra.mxu0 0.0
        %4011 = vmatprep.subr.mxu0 0.0
        %4012 = vmatpush1.msra.mxu0 0.0
        %4013 = vmatprep.subr.mxu0 0.0
        %4014 = vmatpush1.msra.mxu0 0.0
        %4015 = vmatprep.subr.mxu0 0.0
        %4016 = vmatpush1.msra.mxu0 0.0
        %4017 = vmatprep.subr.mxu0 0.0
        %4018 = vmatpush1.msra.mxu0 0.0
        %4019 = vmatprep.subr.mxu0 0.0
        %4020 = vmatpush1.msra.mxu0 0.0
        %4021 = vmatprep.subr.mxu0 0.0
        %4022 = vmatpush1.msra.mxu0 0.0
        %4023 = vmatprep.subr.mxu0 0.0
        %4024 = vmatpush1.msra.mxu0 0.0
        %4025 = vmatprep.mubr.f32.mxu0 0.0
        %4026 = vmatmul.mubr.f32.gmra.mrb[0].mxu0 %v3959
        %v4027 = vpop.f32.mrb[0].mxu0
        %v4028 = vadd.f32 0.0, %v4027
        %v4029 = vpop.f32.mrb[0].mxu0
        %4030 = vdwg.mxu0
        %v4031 = vsub.f32 %v3881, %v4028
        %v4032 = vmul.f32 %v4031, %v4031
        %v4034 = vsel %vm1648, %v4032, 0
        %4036 = vmatprep.subr.mxu0 0.0
        %4037 = vmatpush1.msra.mxu0 %v1821
        %4038 = vmatprep.subr.mxu0 0.0
        %4039 = vmatpush1.msra.mxu0 %v1822
        %4040 = vmatprep.subr.mxu0 0.0
        %4041 = vmatpush1.msra.mxu0 %v1823
        %4042 = vmatprep.subr.mxu0 0.0
        %4043 = vmatpush1.msra.mxu0 %v1824
        %4044 = vmatprep.subr.mxu0 0.0
        %4045 = vmatpush1.msra.mxu0 0.0
        %4046 = vmatprep.subr.mxu0 0.0
        %4047 = vmatpush1.msra.mxu0 0.0
        %4048 = vmatprep.subr.mxu0 0.0
        %4049 = vmatpush1.msra.mxu0 0.0
        %4050 = vmatprep.subr.mxu0 0.0
        %4051 = vmatpush1.msra.mxu0 0.0
        %4052 = vmatprep.subr.mxu0 0.0
        %4053 = vmatpush1.msra.mxu0 0.0
        %4054 = vmatprep.subr.mxu0 0.0
        %4055 = vmatpush1.msra.mxu0 0.0
        %4056 = vmatprep.subr.mxu0 0.0
        %4057 = vmatpush1.msra.mxu0 0.0
        %4058 = vmatprep.subr.mxu0 0.0
        %4059 = vmatpush1.msra.mxu0 0.0
        %4060 = vmatprep.subr.mxu0 0.0
        %4061 = vmatpush1.msra.mxu0 0.0
        %4062 = vmatprep.subr.mxu0 0.0
        %4063 = vmatpush1.msra.mxu0 0.0
        %4064 = vmatprep.subr.mxu0 0.0
        %4065 = vmatpush1.msra.mxu0 0.0
        %4066 = vmatprep.subr.mxu0 0.0
        %4067 = vmatpush1.msra.mxu0 0.0
        %4068 = vmatprep.subr.mxu0 0.0
        %4069 = vmatpush1.msra.mxu0 0.0
        %4070 = vmatprep.subr.mxu0 0.0
        %4071 = vmatpush1.msra.mxu0 0.0
        %4072 = vmatprep.subr.mxu0 0.0
        %4073 = vmatpush1.msra.mxu0 0.0
        %4074 = vmatprep.subr.mxu0 0.0
        %4075 = vmatpush1.msra.mxu0 0.0
        %4076 = vmatprep.subr.mxu0 0.0
        %4077 = vmatpush1.msra.mxu0 0.0
        %4078 = vmatprep.subr.mxu0 0.0
        %4079 = vmatpush1.msra.mxu0 0.0
        %4080 = vmatprep.subr.mxu0 0.0
        %4081 = vmatpush1.msra.mxu0 0.0
        %4082 = vmatprep.subr.mxu0 0.0
        %4083 = vmatpush1.msra.mxu0 0.0
        %4084 = vmatprep.subr.mxu0 0.0
        %4085 = vmatpush1.msra.mxu0 0.0
        %4086 = vmatprep.subr.mxu0 0.0
        %4087 = vmatpush1.msra.mxu0 0.0
        %4088 = vmatprep.subr.mxu0 0.0
        %4089 = vmatpush1.msra.mxu0 0.0
        %4090 = vmatprep.subr.mxu0 0.0
        %4091 = vmatpush1.msra.mxu0 0.0
        %4092 = vmatprep.subr.mxu0 0.0
        %4093 = vmatpush1.msra.mxu0 0.0
        %4094 = vmatprep.subr.mxu0 0.0
        %4095 = vmatpush1.msra.mxu0 0.0
        %4096 = vmatprep.subr.mxu0 0.0
        %4097 = vmatpush1.msra.mxu0 0.0
        %4098 = vmatprep.subr.mxu0 0.0
        %4099 = vmatpush1.msra.mxu0 0.0
        %4100 = vmatprep.mubr.f32.mxu0 0.0
        %4101 = vmatmul.mubr.f32.gmra.mrb[0].mxu0 %v4034
        %v4102 = vpop.f32.mrb[0].mxu0
        %v4103 = vadd.f32 0.0, %v4102
        %v4104 = vpop.f32.mrb[0].mxu0
        %4105 = vdwg.mxu0
        %v4106 = vmul.f32 %v4103, 0.25
        %v4108 = vsel %vm1900, %v4106, 0
        %4110 = vmatprep.subr.mxu0 0.0
        %4111 = vmatpush1.msra.mxu0 %v1899
        %4112 = vmatprep.subr.mxu0 0.0
        %4113 = vmatpush1.msra.mxu0 0.0
        %4114 = vmatprep.subr.mxu0 0.0
        %4115 = vmatpush1.msra.mxu0 0.0
        %4116 = vmatprep.subr.mxu0 0.0
        %4117 = vmatpush1.msra.mxu0 0.0
        %4118 = vmatprep.subr.mxu0 0.0
        %4119 = vmatpush1.msra.mxu0 0.0
        %4120 = vmatprep.subr.mxu0 0.0
        %4121 = vmatpush1.msra.mxu0 0.0
        %4122 = vmatprep.subr.mxu0 0.0
        %4123 = vmatpush1.msra.mxu0 0.0
        %4124 = vmatprep.subr.mxu0 0.0
        %4125 = vmatpush1.msra.mxu0 0.0
        %4126 = vmatprep.subr.mxu0 0.0
        %4127 = vmatpush1.msra.mxu0 0.0
        %4128 = vmatprep.subr.mxu0 0.0
        %4129 = vmatpush1.msra.mxu0 0.0
        %4130 = vmatprep.subr.mxu0 0.0
        %4131 = vmatpush1.msra.mxu0 0.0
        %4132 = vmatprep.subr.mxu0 0.0
        %4133 = vmatpush1.msra.mxu0 0.0
        %4134 = vmatprep.subr.mxu0 0.0
        %4135 = vmatpush1.msra.mxu0 0.0
        %4136 = vmatprep.subr.mxu0 0.0
        %4137 = vmatpush1.msra.mxu0 0.0
        %4138 = vmatprep.subr.mxu0 0.0
        %4139 = vmatpush1.msra.mxu0 0.0
        %4140 = vmatprep.subr.mxu0 0.0
        %4141 = vmatpush1.msra.mxu0 0.0
        %4142 = vmatprep.subr.mxu0 0.0
        %4143 = vmatpush1.msra.mxu0 0.0
        %4144 = vmatprep.subr.mxu0 0.0
        %4145 = vmatpush1.msra.mxu0 0.0
        %4146 = vmatprep.subr.mxu0 0.0
        %4147 = vmatpush1.msra.mxu0 0.0
        %4148 = vmatprep.subr.mxu0 0.0
        %4149 = vmatpush1.msra.mxu0 0.0
        %4150 = vmatprep.subr.mxu0 0.0
        %4151 = vmatpush1.msra.mxu0 0.0
        %4152 = vmatprep.subr.mxu0 0.0
        %4153 = vmatpush1.msra.mxu0 0.0
        %4154 = vmatprep.subr.mxu0 0.0
        %4155 = vmatpush1.msra.mxu0 0.0
        %4156 = vmatprep.subr.mxu0 0.0
        %4157 = vmatpush1.msra.mxu0 0.0
        %4158 = vmatprep.subr.mxu0 0.0
        %4159 = vmatpush1.msra.mxu0 0.0
        %4160 = vmatprep.subr.mxu0 0.0
        %4161 = vmatpush1.msra.mxu0 0.0
        %4162 = vmatprep.subr.mxu0 0.0
        %4163 = vmatpush1.msra.mxu0 0.0
        %4164 = vmatprep.subr.mxu0 0.0
        %4165 = vmatpush1.msra.mxu0 0.0
        %4166 = vmatprep.subr.mxu0 0.0
        %4167 = vmatpush1.msra.mxu0 0.0
        %4168 = vmatprep.subr.mxu0 0.0
        %4169 = vmatpush1.msra.mxu0 0.0
        %4170 = vmatprep.subr.mxu0 0.0
        %4171 = vmatpush1.msra.mxu0 0.0
        %4172 = vmatprep.subr.mxu0 0.0
        %4173 = vmatpush1.msra.mxu0 0.0
        %4174 = vmatprep.mubr.f32.mxu0 0.0
        %4175 = vmatmul.mubr.f32.gmra.mrb[0].mxu0 %v4108
        %v4176 = vpop.f32.mrb[0].mxu0
        %v4177 = vadd.f32 1e-06, %v4176
        %v4178 = vpop.f32.mrb[0].mxu0
        %4179 = vdwg.mxu0
        %v4180 = vrsqrt.pop %v4177
        %v4181 = vmul.f32 %v4031, %v4180
        %v4182 = vlaneseq
        %v4183 = vshrl.u32 %v4182, 7
        %v4184 = vsub.s32 0, %v4183
        %v4185 = vrot.slane %v3882, %v4184
        %v4186 = vmul.f32 %v4181, %v4185
        %v4187 = vlaneseq
        %v4188 = vshrl.u32 %v4187, 7
        %v4189 = vsub.s32 0, %v4188
        %v4190 = vrot.slane %v3883, %v4189
        %v4191 = vadd.f32 %v4186, %v4190
        %v4192 = vmul.f32 %v4191, %v1815
        %4193 = vst.msk [vmem:[%s1028] sm:$0xff] %vm1648, %v4192
        %4194 = vst.msk [vmem:[%s1104] sm:$0xff] %vm1648, %v3728
        %s4195 = sand.u32 %s606, 1
        %s4196 = scalar_lea.sflag [#allocation4], %s4195
        %s4197 = sand.u32 %s606, 1
        %s4198 = smul.addr %s4197, 8
        %s4199 = scalar_lea.vmem [#allocation3], %s4198
        %p4200 = scmp.lt.s32.totalorder %s43, 1
        %s4201 = scalar_select %p4200, %s43, 1
        %p4202 = scmp.lt.s32.totalorder %s44, 1
        %s4203 = scalar_select %p4202, %s44, 1
        %s4204 = smul.addr %s4201, 2
        %s4205 = sadd.s32 %s4203, %s4204
        %s4206 = smul.addr %s4205, 8
        %s4207 = scalar_lea.vmem %s24, %s4206
        // Predicated region
        $region154: #{hybrid_mp_block.2} parent=148 // pred_check
          %p4208 = pneg %p616
        $region155: #{hybrid_mp_block.2} parent=148 // pred_check_branch
          %4210 = sbr.rel (%p4208) target = $region157
        $region156: #{hybrid_mp_block.2} parent=148 // pred_region
          %s4212 = ssub.s32 128, 128
          %4213 = vsyncadd %s4196, %s4212
          %s4214 = smul.addr %s43, 2
          %s4215 = sadd.s32 %s44, %s4214
          %s4216 = smul.addr %s4215, 128
          %s4217 = scalar_lea.hbm %s23, %s4216
          %s4219 = sshll.u32 %s4199, 4
          %s4220 = int_to_ptr.vmem [resolvable:$true] %s4219
          %4222 = dma.vmem_to_hbm [thread:$0]  %s4220, 128, %s4217, %s4196
        $region157: #{hybrid_mp_block.2} parent=148 // pred_fallthru
          _
        // Predicated region
        $region158: #{hybrid_mp_block.2} parent=148 // pred_check
          %p4223 = pneg %p644
        $region159: #{hybrid_mp_block.2} parent=148 // pred_check_branch
          %4225 = sbr.rel (%p4223) target = $region161
        $region160: #{hybrid_mp_block.2} parent=148 // pred_region
          _
        $region161: #{hybrid_mp_block.2} parent=148 // pred_fallthru
          _
      $region149: #{hybrid_mp_block.2} parent=5 // pred_fallthru
        _
      %p4226 = scmp.le.s32.totalorder 2, %s34
      // Predicated region
      $region162: #{hybrid_mp_block.2} parent=5 // pred_check
        %p4227 = pneg %p4226
      $region163: #{hybrid_mp_block.2} parent=5 // pred_check_branch
        %4229 = sbr.rel (%p4227) target = $region165
      $region164: #{hybrid_mp_block.2} parent=5 // pred_region
        %s4230 = ssub.s32 %s34, 2
        // Predicated region
        $region166: #{hybrid_mp_block.2} parent=164 // pred_check
          %p4231 = pneg %p622
        $region167: #{hybrid_mp_block.2} parent=164 // pred_check_branch
          %4233 = sbr.rel (%p4231) target = $region169
        $region168: #{hybrid_mp_block.2} parent=164 // pred_region
          %s4234 = sand.u32 %s607, 1
          %s4235 = scalar_lea.sflag [#allocation4], %s4234
          %s4236 = sand.u32 %s607, 1
          %s4237 = smul.addr %s4236, 8
          %s4238 = scalar_lea.vmem [#allocation3], %s4237
          %4239 = dma.done %s4235, 128
        $region169: #{hybrid_mp_block.2} parent=164 // pred_fallthru
          _
        // Predicated region
        $region170: #{hybrid_mp_block.2} parent=164 // pred_check
          %p4240 = pneg %p650
        $region171: #{hybrid_mp_block.2} parent=164 // pred_check_branch
          %4242 = sbr.rel (%p4240) target = $region173
        $region172: #{hybrid_mp_block.2} parent=164 // pred_region
          %p4243 = scmp.lt.s32.totalorder %s45, 1
          %s4244 = scalar_select %p4243, %s45, 1
          %p4245 = scmp.lt.s32.totalorder %s46, 1
          %s4246 = scalar_select %p4245, %s46, 1
          %s4247 = smul.addr %s4244, 2
          %s4248 = sadd.s32 %s4246, %s4247
          %s4249 = smul.addr %s4248, 8
          %s4250 = scalar_lea.vmem %s24, %s4249
        $region173: #{hybrid_mp_block.2} parent=164 // pred_fallthru
          _
      $region165: #{hybrid_mp_block.2} parent=5 // pred_fallthru
        _
    $region6: #{hybrid_mp_block.2} parent=1 // loop_footer
      %s38 = sadd.s32 1, %s34
    $region7: #{hybrid_mp_block.2} parent=1 // loop_footer_branch
      %33 = sbr.rel target = $region3
    $region8: #{hybrid_mp_block.2} parent=1 // loop_exit
      _
    %4251 = vsyncpa [#allocation4], 1
    %s4252 = scalar_lea.sflag [#allocation4], 1
    %4253 = vsyncpa %s4252, 1

</llo_original>
